<compile_context>
chip_gen: v6e
topology: v6e:2x2x1
jax: 0.10.0
libtpu: 0.0.40
codegen_flags: <defaults>
</compile_context>

<pallas_src>
import jax
import jax.numpy as jnp
from jax.experimental import pallas as pl
from jax.experimental.pallas import tpu as pltpu

MATMUL_DTYPE = jnp.bfloat16   # MXU-native operand dtype (v6e/v7x); accum stays f32
FC_HIDDEN = 512
C1 = 32                       # conv1 output channels (fixed by the module)


def _mm(a, b):
    """MXU matmul: bf16 operands, f32 accumulation."""
    return jnp.dot(a.astype(MATMUL_DTYPE), b.astype(MATMUL_DTYPE),
                   preferred_element_type=jnp.float32)


def _spec(shape):
    """Full-array block spec for a grid of (1,)."""
    zeros = (0,) * len(shape)
    return pl.BlockSpec(shape, lambda i, _z=zeros: _z)


# ----------------------------------------------------------------------------
# fused kernel
# ----------------------------------------------------------------------------
def _make_fused_kernel(*, B, Cin, Hb, Wb, conv_features, num_layers, hidden):
    F = conv_features          # conv2/conv3 channels == pool bins == GRU input size
    T = conv_features          # GRU sequence length == conv3 channel count
    H = hidden
    L = num_layers

    # static conv geometry (input image = 4*Hb x 4*Wb)
    Ho1, Wo1 = Hb - 1, Wb - 1                    # conv1 out (k=8, s=4)
    H2f, W2f = Ho1 - 3, Wo1 - 3                  # conv2 computed at stride 1 (k=4)
    H2s, W2s = (Ho1 - 4) // 2 + 1, (Wo1 - 4) // 2 + 1   # true stride-2 positions
    H3, W3 = H2s - 2, W2s - 2                    # conv3 out (k=3, s=1)
    assert Ho1 >= 4 and Wo1 >= 4 and H3 >= 1 and W3 >= 1

    def kernel(*refs):
        x_ref, w1_ref, w2_ref, w3_ref = refs[0:4]
        gru_refs = refs[4:4 + 3 * L]
        h0_ref = refs[4 + 3 * L]
        fc1w_ref, fc1b_ref, fc2w_ref, fc2b_ref = refs[4 + 3 * L + 1:4 + 3 * L + 5]
        q_ref, hn_ref = refs[-2], refs[-1]

        # -------- conv1 + ReLU : 2x2 unit-stride conv over the s2d block grid
        a1 = None
        for qh in range(2):
            for qw in range(2):
                xs = x_ref[:, qh:qh + Ho1, qw:qw + Wo1, :]        # (B,Ho1,Wo1,16*Cin)
                xs2 = xs.reshape(B * Ho1 * Wo1, 16 * Cin)
                t = _mm(xs2, w1_ref[qh, qw])                      # (B*Ho1*Wo1, 32)
                a1 = t if a1 is None else a1 + t
        a1 = jnp.maximum(a1, 0.0).reshape(B, Ho1, Wo1, C1)

        # -------- conv2 + ReLU : stride-1 shift-sum, accumulated in f32
        acc2 = jnp.zeros((B, H2f, W2f, F), jnp.float32)
        for kh in range(4):
            xs2 = a1[:, kh:kh + H2f, :, :].reshape(B * H2f * Wo1, C1)
            for kw in range(4):
                t = _mm(xs2, w2_ref[kh, kw])                      # (B*H2f*Wo1, F)
                t4 = t.reshape(B, H2f, Wo1, F)
                acc2 = acc2 + t4[:, :, kw:kw + W2f, :]
        acc2 = jnp.maximum(acc2, 0.0)                              # (B,H2f,W2f,F)

        # -------- conv3 + ReLU : per output position, on the stride-2 subset
        pos3 = []                                                  # pos3[h][w] -> (B,F)
        for oh in range(H3):
            row = []
            for ow in range(W3):
                acc = None
                for kh in range(3):
                    for kw in range(3):
                        v = acc2[:, 2 * (oh + kh), 2 * (ow + kw), :]   # (B,F)
                        t = _mm(v, w3_ref[kh, kw])
                        acc = t if acc is None else acc + t
                row.append(jnp.maximum(acc, 0.0))
            pos3.append(row)

        # -------- AdaptiveMaxPool2d((F, 1)) followed by [..., -1]
        bins = []                                                  # bins[i] -> (B,F)
        for i in range(F):
            lo = (i * H3) // F
            hi = -(-((i + 1) * H3) // F)                           # ceil
            m = None
            for h in range(lo, hi):
                for w in range(W3):
                    v = pos3[h][w]
                    m = v if m is None else jnp.maximum(m, v)
            bins.append(m)

        # GRU input x_t[b, f] = pooled[b, channel=t, bin=f] = bins[f][b, t]
        seq = []
        for t in range(T):
            seq.append(jnp.concatenate([bins[f][:, t:t + 1] for f in range(F)],
                                       axis=1))                    # (B, F)

        # -------- multi-layer GRU (batch_first), PyTorch gate order (r, z, n)
        for l in range(L):
            wx_ref, wh_ref, b_ref = gru_refs[3 * l:3 * l + 3]
            wxr, wxz, wxn = wx_ref[0], wx_ref[1], wx_ref[2]        # (in_l, H)
            whr, whz, whn = wh_ref[0], wh_ref[1], wh_ref[2]        # (H, H)
            br, bz, b_in, b_hn = b_ref[0], b_ref[1], b_ref[2], b_ref[3]   # (1, H)
            h = h0_ref[l]                                          # (B, H)
            nxt = []
            for t in range(T):
                xt = seq[t]
                r = jax.nn.sigmoid(_mm(xt, wxr) + _mm(h, whr) + br)
                z = jax.nn.sigmoid(_mm(xt, wxz) + _mm(h, whz) + bz)
                n = jnp.tanh(_mm(xt, wxn) + b_in + r * (_mm(h, whn) + b_hn))
                h = (1.0 - z) * n + z * h
                nxt.append(h)
            hn_ref[l] = h
            seq = nxt

        # -------- FC head: ReLU(GRU out) -> Flatten -> Linear -> ReLU -> Linear
        # Flatten + Linear(fc_in, 512) folded into a sum of per-timestep matmuls.
        acc = None
        for t in range(T):
            term = _mm(jnp.maximum(seq[t], 0.0), fc1w_ref[t])      # (B, 512)
            acc = term if acc is None else acc + term
        h1 = jnp.maximum(acc + fc1b_ref[...], 0.0)
        q_ref[...] = _mm(h1, fc2w_ref[...]) + fc2b_ref[...]

    return kernel


# ----------------------------------------------------------------------------
# forward wrapper
# ----------------------------------------------------------------------------
def drqnet_forward(x, hidden, params):
    """x: (B, C, H, W) image (NCHW, like PyTorch); hidden: (L, B, hidden_size)."""
    B, Cin, Himg, Wimg = x.shape
    L, _, H = hidden.shape
    F = params["w3"].shape[-1]
    A = params["fc2_w"].shape[-1]
    assert Himg % 4 == 0 and Wimg % 4 == 0

    # Input layout prep only (no patch materialisation, no duplication):
    # channels-last + stride-4 space-to-depth so conv1 becomes unit-stride.
    Hb, Wb = Himg // 4, Wimg // 4
    fx = x.astype(jnp.float32)                        # /255 folded into conv1 weights
    fx = jnp.transpose(fx, (0, 2, 3, 1))              # NHWC (channels-last)
    fx = fx.reshape(B, Hb, 4, Wb, 4, Cin)
    fx = fx.transpose(0, 1, 3, 2, 4, 5).reshape(B, Hb, Wb, 16 * Cin)
    fx = fx.astype(MATMUL_DTYPE)                      # pixels 0..255 exact in bf16

    args = [fx, params["w1"], params["w2"], params["w3"]]
    for l in range(L):
        args += [params["gru_wx"][l], params["gru_wh"][l], params["gru_b"][l]]
    args += [hidden, params["fc1_w"], params["fc1_b"], params["fc2_w"], params["fc2_b"]]

    kernel = _make_fused_kernel(B=B, Cin=Cin, Hb=Hb, Wb=Wb, conv_features=F,
                                num_layers=L, hidden=H)
    q, hn = pl.pallas_call(
        kernel,
        grid=(1,),
        in_specs=[_spec(a.shape) for a in args],
        out_specs=(_spec((B, A)), _spec((L, B, H))),
        out_shape=(jax.ShapeDtypeStruct((B, A), jnp.float32),
                   jax.ShapeDtypeStruct((L, B, H), jnp.float32)),
        compiler_params=pltpu.CompilerParams(dimension_semantics=("arbitrary",)),
    )(*args)
    return q, hn


# ----------------------------------------------------------------------------
# deterministic parameter init (PyTorch-like uniform bounds, synthetic),
# with all kernel-side weight layouts prepared ONCE here.
# ----------------------------------------------------------------------------
def init_params(key, shape, actions, conv_features, num_layers, hidden_size):
    c_in = shape[0]
    F, H = conv_features, hidden_size
    keys = iter(jax.random.split(key, 8 + 4 * num_layers + 4))

    def u(k, s, fan_in):
        b = 1.0 / (fan_in ** 0.5)
        return jax.random.uniform(k, s, jnp.float32, -b, b)

    # torch-layout conv weights (Cout, Cin, kh, kw), bias=False
    w1 = u(next(keys), (C1, c_in, 8, 8), c_in * 64)
    w2 = u(next(keys), (F, C1, 4, 4), C1 * 16)
    w3 = u(next(keys), (F, F, 3, 3), F * 9)

    # conv1: fold 1/255 and re-block for the 2x2 conv over the s2d grid:
    #   w1b[qh, qw, (rh, rw, c), cout] = (w1/255)[cout, c, 4*qh+rh, 4*qw+rw]
    w1s = (w1 / 255.0).reshape(C1, c_in, 2, 4, 2, 4)
    w1b = w1s.transpose(2, 4, 3, 5, 1, 0).reshape(2, 2, 16 * c_in, C1)
    w2r = w2.transpose(2, 3, 1, 0)                    # (kh, kw, 32, F)
    w3r = w3.transpose(2, 3, 1, 0)                    # (kh, kw, F, F)

    # GRU: per-gate, pre-transposed weights; biases combined where PyTorch allows.
    gru_wx, gru_wh, gru_b = [], [], []
    for l in range(num_layers):
        in_l = F if l == 0 else H
        w_ih = u(next(keys), (3 * H, in_l), H)
        w_hh = u(next(keys), (3 * H, H), H)
        b_ih = u(next(keys), (3 * H,), H)
        b_hh = u(next(keys), (3 * H,), H)
        wx = jnp.stack([w_ih[g * H:(g + 1) * H, :].T for g in range(3)])   # (3,in_l,H)
        wh = jnp.stack([w_hh[g * H:(g + 1) * H, :].T for g in range(3)])   # (3,H,H)
        b = jnp.stack([
            (b_ih[0:H] + b_hh[0:H]).reshape(1, H),              # r
            (b_ih[H:2 * H] + b_hh[H:2 * H]).reshape(1, H),      # z
            b_ih[2 * H:3 * H].reshape(1, H),                    # n (input side)
            b_hh[2 * H:3 * H].reshape(1, H),                    # n (hidden side)
        ])                                                      # (4,1,H)
        gru_wx.append(wx.astype(MATMUL_DTYPE))
        gru_wh.append(wh.astype(MATMUL_DTYPE))
        gru_b.append(b)

    fc_in = H * F
    fc1_w = u(next(keys), (FC_HIDDEN, fc_in), fc_in)
    fc1_b = u(next(keys), (FC_HIDDEN,), fc_in)
    fc2_w = u(next(keys), (actions, FC_HIDDEN), FC_HIDDEN)
    fc2_b = u(next(keys), (actions,), FC_HIDDEN)

    return {
        "w1": w1b.astype(MATMUL_DTYPE),
        "w2": w2r.astype(MATMUL_DTYPE),
        "w3": w3r.astype(MATMUL_DTYPE),
        "gru_wx": gru_wx, "gru_wh": gru_wh, "gru_b": gru_b,
        # fc1 split per GRU timestep: fc1_w_r[t, h, :] = fc1_w[:, t*H + h]
        "fc1_w": fc1_w.T.reshape(F, H, FC_HIDDEN).astype(MATMUL_DTYPE),
        "fc1_b": fc1_b.reshape(1, FC_HIDDEN),
        "fc2_w": fc2_w.T.astype(MATMUL_DTYPE),        # (512, A)
        "fc2_b": fc2_b.reshape(1, actions),
    }


# ----------------------------------------------------------------------------
if __name__ == "__main__":
    B = 2
    SHAPE = (4, 36, 36)        # (C, H, W): minimal spatial size for the conv stack
    ACTIONS = 4
    CONV_FEATURES = 8
    NUM_LAYERS = 2
    HIDDEN = 16

    key = jax.random.PRNGKey(0)
    pkey, xkey = jax.random.split(key)
    params = init_params(pkey, SHAPE, ACTIONS, CONV_FEATURES, NUM_LAYERS, HIDDEN)

    x = jax.random.randint(xkey, (B,) + SHAPE, 0, 256, dtype=jnp.int32).astype(jnp.uint8)
    hidden = jnp.zeros((NUM_LAYERS, B, HIDDEN), jnp.float32)   # init_hidden()

    fwd = jax.jit(drqnet_forward)
    q, new_hidden = fwd(x, hidden, params)
    jax.block_until_ready((q, new_hidden))

    assert q.shape == (B, ACTIONS), q.shape
    assert new_hidden.shape == (NUM_LAYERS, B, HIDDEN), new_hidden.shape
    assert bool(jnp.all(jnp.isfinite(q))) and bool(jnp.all(jnp.isfinite(new_hidden)))
    print("KERNEL_OK")
</pallas_src>

<mosaic_0001>
module attributes {stable_mosaic.version = 11 : i64} {
  func.func @kernel(%arg0: i32, %arg1: memref<2x9x9x64xbf16, #tpu.memory_space<vmem>>, %arg2: memref<2x2x64x32xbf16, #tpu.memory_space<vmem>>, %arg3: memref<4x4x32x8xbf16, #tpu.memory_space<vmem>>, %arg4: memref<3x3x8x8xbf16, #tpu.memory_space<vmem>>, %arg5: memref<3x8x16xbf16, #tpu.memory_space<vmem>>, %arg6: memref<3x16x16xbf16, #tpu.memory_space<vmem>>, %arg7: memref<4x1x16xf32, #tpu.memory_space<vmem>>, %arg8: memref<3x16x16xbf16, #tpu.memory_space<vmem>>, %arg9: memref<3x16x16xbf16, #tpu.memory_space<vmem>>, %arg10: memref<4x1x16xf32, #tpu.memory_space<vmem>>, %arg11: memref<2x2x16xf32, #tpu.memory_space<vmem>>, %arg12: memref<8x16x512xbf16, #tpu.memory_space<vmem>>, %arg13: memref<1x512xf32, #tpu.memory_space<vmem>>, %arg14: memref<512x4xbf16, #tpu.memory_space<vmem>>, %arg15: memref<1x4xf32, #tpu.memory_space<vmem>>, %arg16: memref<2x4xf32, #tpu.memory_space<vmem>>, %arg17: memref<2x2x16xf32, #tpu.memory_space<vmem>>) attributes {dimension_semantics = [#tpu.dimension_semantics<arbitrary>], iteration_bounds = array<i64: 1>, scalar_prefetch = 0 : i64, scratch_operands = 0 : i64, tpu.core_type = #tpu.core_type<tc>, window_params = [{pipeline_mode = #tpu.pipeline_mode<synchronous>, transform_indices = @transform_0, window_bounds = array<i64: 2, 9, 9, 64>}, {pipeline_mode = #tpu.pipeline_mode<synchronous>, transform_indices = @transform_1, window_bounds = array<i64: 2, 2, 64, 32>}, {pipeline_mode = #tpu.pipeline_mode<synchronous>, transform_indices = @transform_2, window_bounds = array<i64: 4, 4, 32, 8>}, {pipeline_mode = #tpu.pipeline_mode<synchronous>, transform_indices = @transform_3, window_bounds = array<i64: 3, 3, 8, 8>}, {pipeline_mode = #tpu.pipeline_mode<synchronous>, transform_indices = @transform_4, window_bounds = array<i64: 3, 8, 16>}, {pipeline_mode = #tpu.pipeline_mode<synchronous>, transform_indices = @transform_5, window_bounds = array<i64: 3, 16, 16>}, {pipeline_mode = #tpu.pipeline_mode<synchronous>, transform_indices = @transform_6, window_bounds = array<i64: 4, 1, 16>}, {pipeline_mode = #tpu.pipeline_mode<synchronous>, transform_indices = @transform_7, window_bounds = array<i64: 3, 16, 16>}, {pipeline_mode = #tpu.pipeline_mode<synchronous>, transform_indices = @transform_8, window_bounds = array<i64: 3, 16, 16>}, {pipeline_mode = #tpu.pipeline_mode<synchronous>, transform_indices = @transform_9, window_bounds = array<i64: 4, 1, 16>}, {pipeline_mode = #tpu.pipeline_mode<synchronous>, transform_indices = @transform_10, window_bounds = array<i64: 2, 2, 16>}, {pipeline_mode = #tpu.pipeline_mode<synchronous>, transform_indices = @transform_11, window_bounds = array<i64: 8, 16, 512>}, {pipeline_mode = #tpu.pipeline_mode<synchronous>, transform_indices = @transform_12, window_bounds = array<i64: 1, 512>}, {pipeline_mode = #tpu.pipeline_mode<synchronous>, transform_indices = @transform_13, window_bounds = array<i64: 512, 4>}, {pipeline_mode = #tpu.pipeline_mode<synchronous>, transform_indices = @transform_14, window_bounds = array<i64: 1, 4>}, {pipeline_mode = #tpu.pipeline_mode<synchronous>, transform_indices = @transform_15, window_bounds = array<i64: 2, 4>}, {pipeline_mode = #tpu.pipeline_mode<synchronous>, transform_indices = @transform_16, window_bounds = array<i64: 2, 2, 16>}]} {
    %c0 = arith.constant 0 : index
    %c0_0 = arith.constant 0 : index
    %c0_1 = arith.constant 0 : index
    %c0_2 = arith.constant 0 : index
    %0 = vector.load %arg1[%c0, %c0_0, %c0_1, %c0_2] : memref<2x9x9x64xbf16, #tpu.memory_space<vmem>>, vector<2x8x8x64xbf16>
    %1 = vector.shape_cast %0 : vector<2x8x8x64xbf16> to vector<128x64xbf16>
    %c0_3 = arith.constant 0 : index
    %c0_4 = arith.constant 0 : index
    %c0_5 = arith.constant 0 : index
    %c0_6 = arith.constant 0 : index
    %2 = vector.load %arg2[%c0_3, %c0_4, %c0_5, %c0_6] : memref<2x2x64x32xbf16, #tpu.memory_space<vmem>>, vector<1x1x64x32xbf16>
    %3 = vector.shape_cast %2 : vector<1x1x64x32xbf16> to vector<64x32xbf16>
    %cst = arith.constant dense<0.000000e+00> : vector<128x32xf32>
    %4 = tpu.matmul %1, %3, %cst {dimension_numbers = #tpu.dot_dimension_numbers<[1], [0], [0], [1], [0, 0, 1, 1], [], []>} : vector<128x64xbf16>, vector<64x32xbf16>, vector<128x32xf32> -> vector<128x32xf32>
    %c0_7 = arith.constant 0 : index
    %c0_8 = arith.constant 0 : index
    %c1 = arith.constant 1 : index
    %c0_9 = arith.constant 0 : index
    %5 = vector.load %arg1[%c0_7, %c0_8, %c1, %c0_9] : memref<2x9x9x64xbf16, #tpu.memory_space<vmem>>, vector<2x8x8x64xbf16>
    %6 = vector.shape_cast %5 : vector<2x8x8x64xbf16> to vector<128x64xbf16>
    %c0_10 = arith.constant 0 : index
    %c1_11 = arith.constant 1 : index
    %c0_12 = arith.constant 0 : index
    %c0_13 = arith.constant 0 : index
    %7 = vector.load %arg2[%c0_10, %c1_11, %c0_12, %c0_13] : memref<2x2x64x32xbf16, #tpu.memory_space<vmem>>, vector<1x1x64x32xbf16>
    %8 = vector.shape_cast %7 : vector<1x1x64x32xbf16> to vector<64x32xbf16>
    %cst_14 = arith.constant dense<0.000000e+00> : vector<128x32xf32>
    %9 = tpu.matmul %6, %8, %cst_14 {dimension_numbers = #tpu.dot_dimension_numbers<[1], [0], [0], [1], [0, 0, 1, 1], [], []>} : vector<128x64xbf16>, vector<64x32xbf16>, vector<128x32xf32> -> vector<128x32xf32>
    %10 = arith.addf %4, %9 : vector<128x32xf32>
    %c0_15 = arith.constant 0 : index
    %c1_16 = arith.constant 1 : index
    %c0_17 = arith.constant 0 : index
    %c0_18 = arith.constant 0 : index
    %11 = vector.load %arg1[%c0_15, %c1_16, %c0_17, %c0_18] : memref<2x9x9x64xbf16, #tpu.memory_space<vmem>>, vector<2x8x8x64xbf16>
    %12 = vector.shape_cast %11 : vector<2x8x8x64xbf16> to vector<128x64xbf16>
    %c1_19 = arith.constant 1 : index
    %c0_20 = arith.constant 0 : index
    %c0_21 = arith.constant 0 : index
    %c0_22 = arith.constant 0 : index
    %13 = vector.load %arg2[%c1_19, %c0_20, %c0_21, %c0_22] : memref<2x2x64x32xbf16, #tpu.memory_space<vmem>>, vector<1x1x64x32xbf16>
    %14 = vector.shape_cast %13 : vector<1x1x64x32xbf16> to vector<64x32xbf16>
    %cst_23 = arith.constant dense<0.000000e+00> : vector<128x32xf32>
    %15 = tpu.matmul %12, %14, %cst_23 {dimension_numbers = #tpu.dot_dimension_numbers<[1], [0], [0], [1], [0, 0, 1, 1], [], []>} : vector<128x64xbf16>, vector<64x32xbf16>, vector<128x32xf32> -> vector<128x32xf32>
    %16 = arith.addf %10, %15 : vector<128x32xf32>
    %c0_24 = arith.constant 0 : index
    %c1_25 = arith.constant 1 : index
    %c1_26 = arith.constant 1 : index
    %c0_27 = arith.constant 0 : index
    %17 = vector.load %arg1[%c0_24, %c1_25, %c1_26, %c0_27] : memref<2x9x9x64xbf16, #tpu.memory_space<vmem>>, vector<2x8x8x64xbf16>
    %18 = vector.shape_cast %17 : vector<2x8x8x64xbf16> to vector<128x64xbf16>
    %c1_28 = arith.constant 1 : index
    %c1_29 = arith.constant 1 : index
    %c0_30 = arith.constant 0 : index
    %c0_31 = arith.constant 0 : index
    %19 = vector.load %arg2[%c1_28, %c1_29, %c0_30, %c0_31] : memref<2x2x64x32xbf16, #tpu.memory_space<vmem>>, vector<1x1x64x32xbf16>
    %20 = vector.shape_cast %19 : vector<1x1x64x32xbf16> to vector<64x32xbf16>
    %cst_32 = arith.constant dense<0.000000e+00> : vector<128x32xf32>
    %21 = tpu.matmul %18, %20, %cst_32 {dimension_numbers = #tpu.dot_dimension_numbers<[1], [0], [0], [1], [0, 0, 1, 1], [], []>} : vector<128x64xbf16>, vector<64x32xbf16>, vector<128x32xf32> -> vector<128x32xf32>
    %22 = arith.addf %16, %21 : vector<128x32xf32>
    %cst_33 = arith.constant 0.000000e+00 : f32
    %23 = vector.broadcast %cst_33 : f32 to vector<128x32xf32>
    %24 = arith.maximumf %22, %23 : vector<128x32xf32>
    %25 = vector.shape_cast %24 : vector<128x32xf32> to vector<2x8x8x32xf32>
    %cst_34 = arith.constant 0.000000e+00 : f32
    %26 = vector.broadcast %cst_34 : f32 to vector<2x5x5x8xf32>
    %27 = vector.extract_strided_slice %25 {offsets = [0, 0, 0, 0], sizes = [2, 5, 8, 32], strides = [1, 1, 1, 1]} : vector<2x8x8x32xf32> to vector<2x5x8x32xf32>
    %28 = vector.shape_cast %27 : vector<2x5x8x32xf32> to vector<80x32xf32>
    %c0_35 = arith.constant 0 : index
    %c0_36 = arith.constant 0 : index
    %c0_37 = arith.constant 0 : index
    %c0_38 = arith.constant 0 : index
    %29 = vector.load %arg3[%c0_35, %c0_36, %c0_37, %c0_38] : memref<4x4x32x8xbf16, #tpu.memory_space<vmem>>, vector<1x1x32x8xbf16>
    %30 = vector.shape_cast %29 : vector<1x1x32x8xbf16> to vector<32x8xbf16>
    %31 = arith.truncf %28 : vector<80x32xf32> to vector<80x32xbf16>
    %cst_39 = arith.constant dense<0.000000e+00> : vector<80x8xf32>
    %32 = tpu.matmul %31, %30, %cst_39 {dimension_numbers = #tpu.dot_dimension_numbers<[1], [0], [0], [1], [0, 0, 1, 1], [], []>} : vector<80x32xbf16>, vector<32x8xbf16>, vector<80x8xf32> -> vector<80x8xf32>
    %33 = vector.shape_cast %32 : vector<80x8xf32> to vector<2x5x8x8xf32>
    %34 = vector.extract_strided_slice %33 {offsets = [0, 0, 0, 0], sizes = [2, 5, 5, 8], strides = [1, 1, 1, 1]} : vector<2x5x8x8xf32> to vector<2x5x5x8xf32>
    %35 = arith.addf %26, %34 : vector<2x5x5x8xf32>
    %c0_40 = arith.constant 0 : index
    %c1_41 = arith.constant 1 : index
    %c0_42 = arith.constant 0 : index
    %c0_43 = arith.constant 0 : index
    %36 = vector.load %arg3[%c0_40, %c1_41, %c0_42, %c0_43] : memref<4x4x32x8xbf16, #tpu.memory_space<vmem>>, vector<1x1x32x8xbf16>
    %37 = vector.shape_cast %36 : vector<1x1x32x8xbf16> to vector<32x8xbf16>
    %38 = arith.truncf %28 : vector<80x32xf32> to vector<80x32xbf16>
    %cst_44 = arith.constant dense<0.000000e+00> : vector<80x8xf32>
    %39 = tpu.matmul %38, %37, %cst_44 {dimension_numbers = #tpu.dot_dimension_numbers<[1], [0], [0], [1], [0, 0, 1, 1], [], []>} : vector<80x32xbf16>, vector<32x8xbf16>, vector<80x8xf32> -> vector<80x8xf32>
    %40 = vector.shape_cast %39 : vector<80x8xf32> to vector<2x5x8x8xf32>
    %41 = vector.extract_strided_slice %40 {offsets = [0, 0, 1, 0], sizes = [2, 5, 5, 8], strides = [1, 1, 1, 1]} : vector<2x5x8x8xf32> to vector<2x5x5x8xf32>
    %42 = arith.addf %35, %41 : vector<2x5x5x8xf32>
    %c0_45 = arith.constant 0 : index
    %c2 = arith.constant 2 : index
    %c0_46 = arith.constant 0 : index
    %c0_47 = arith.constant 0 : index
    %43 = vector.load %arg3[%c0_45, %c2, %c0_46, %c0_47] : memref<4x4x32x8xbf16, #tpu.memory_space<vmem>>, vector<1x1x32x8xbf16>
    %44 = vector.shape_cast %43 : vector<1x1x32x8xbf16> to vector<32x8xbf16>
    %45 = arith.truncf %28 : vector<80x32xf32> to vector<80x32xbf16>
    %cst_48 = arith.constant dense<0.000000e+00> : vector<80x8xf32>
    %46 = tpu.matmul %45, %44, %cst_48 {dimension_numbers = #tpu.dot_dimension_numbers<[1], [0], [0], [1], [0, 0, 1, 1], [], []>} : vector<80x32xbf16>, vector<32x8xbf16>, vector<80x8xf32> -> vector<80x8xf32>
    %47 = vector.shape_cast %46 : vector<80x8xf32> to vector<2x5x8x8xf32>
    %48 = vector.extract_strided_slice %47 {offsets = [0, 0, 2, 0], sizes = [2, 5, 5, 8], strides = [1, 1, 1, 1]} : vector<2x5x8x8xf32> to vector<2x5x5x8xf32>
    %49 = arith.addf %42, %48 : vector<2x5x5x8xf32>
    %c0_49 = arith.constant 0 : index
    %c3 = arith.constant 3 : index
    %c0_50 = arith.constant 0 : index
    %c0_51 = arith.constant 0 : index
    %50 = vector.load %arg3[%c0_49, %c3, %c0_50, %c0_51] : memref<4x4x32x8xbf16, #tpu.memory_space<vmem>>, vector<1x1x32x8xbf16>
    %51 = vector.shape_cast %50 : vector<1x1x32x8xbf16> to vector<32x8xbf16>
    %52 = arith.truncf %28 : vector<80x32xf32> to vector<80x32xbf16>
    %cst_52 = arith.constant dense<0.000000e+00> : vector<80x8xf32>
    %53 = tpu.matmul %52, %51, %cst_52 {dimension_numbers = #tpu.dot_dimension_numbers<[1], [0], [0], [1], [0, 0, 1, 1], [], []>} : vector<80x32xbf16>, vector<32x8xbf16>, vector<80x8xf32> -> vector<80x8xf32>
    %54 = vector.shape_cast %53 : vector<80x8xf32> to vector<2x5x8x8xf32>
    %55 = vector.extract_strided_slice %54 {offsets = [0, 0, 3, 0], sizes = [2, 5, 5, 8], strides = [1, 1, 1, 1]} : vector<2x5x8x8xf32> to vector<2x5x5x8xf32>
    %56 = arith.addf %49, %55 : vector<2x5x5x8xf32>
    %57 = vector.extract_strided_slice %25 {offsets = [0, 1, 0, 0], sizes = [2, 5, 8, 32], strides = [1, 1, 1, 1]} : vector<2x8x8x32xf32> to vector<2x5x8x32xf32>
    %58 = vector.shape_cast %57 : vector<2x5x8x32xf32> to vector<80x32xf32>
    %c1_53 = arith.constant 1 : index
    %c0_54 = arith.constant 0 : index
    %c0_55 = arith.constant 0 : index
    %c0_56 = arith.constant 0 : index
    %59 = vector.load %arg3[%c1_53, %c0_54, %c0_55, %c0_56] : memref<4x4x32x8xbf16, #tpu.memory_space<vmem>>, vector<1x1x32x8xbf16>
    %60 = vector.shape_cast %59 : vector<1x1x32x8xbf16> to vector<32x8xbf16>
    %61 = arith.truncf %58 : vector<80x32xf32> to vector<80x32xbf16>
    %cst_57 = arith.constant dense<0.000000e+00> : vector<80x8xf32>
    %62 = tpu.matmul %61, %60, %cst_57 {dimension_numbers = #tpu.dot_dimension_numbers<[1], [0], [0], [1], [0, 0, 1, 1], [], []>} : vector<80x32xbf16>, vector<32x8xbf16>, vector<80x8xf32> -> vector<80x8xf32>
    %63 = vector.shape_cast %62 : vector<80x8xf32> to vector<2x5x8x8xf32>
    %64 = vector.extract_strided_slice %63 {offsets = [0, 0, 0, 0], sizes = [2, 5, 5, 8], strides = [1, 1, 1, 1]} : vector<2x5x8x8xf32> to vector<2x5x5x8xf32>
    %65 = arith.addf %56, %64 : vector<2x5x5x8xf32>
    %c1_58 = arith.constant 1 : index
    %c1_59 = arith.constant 1 : index
    %c0_60 = arith.constant 0 : index
    %c0_61 = arith.constant 0 : index
    %66 = vector.load %arg3[%c1_58, %c1_59, %c0_60, %c0_61] : memref<4x4x32x8xbf16, #tpu.memory_space<vmem>>, vector<1x1x32x8xbf16>
    %67 = vector.shape_cast %66 : vector<1x1x32x8xbf16> to vector<32x8xbf16>
    %68 = arith.truncf %58 : vector<80x32xf32> to vector<80x32xbf16>
    %cst_62 = arith.constant dense<0.000000e+00> : vector<80x8xf32>
    %69 = tpu.matmul %68, %67, %cst_62 {dimension_numbers = #tpu.dot_dimension_numbers<[1], [0], [0], [1], [0, 0, 1, 1], [], []>} : vector<80x32xbf16>, vector<32x8xbf16>, vector<80x8xf32> -> vector<80x8xf32>
    %70 = vector.shape_cast %69 : vector<80x8xf32> to vector<2x5x8x8xf32>
    %71 = vector.extract_strided_slice %70 {offsets = [0, 0, 1, 0], sizes = [2, 5, 5, 8], strides = [1, 1, 1, 1]} : vector<2x5x8x8xf32> to vector<2x5x5x8xf32>
    %72 = arith.addf %65, %71 : vector<2x5x5x8xf32>
    %c1_63 = arith.constant 1 : index
    %c2_64 = arith.constant 2 : index
    %c0_65 = arith.constant 0 : index
    %c0_66 = arith.constant 0 : index
    %73 = vector.load %arg3[%c1_63, %c2_64, %c0_65, %c0_66] : memref<4x4x32x8xbf16, #tpu.memory_space<vmem>>, vector<1x1x32x8xbf16>
    %74 = vector.shape_cast %73 : vector<1x1x32x8xbf16> to vector<32x8xbf16>
    %75 = arith.truncf %58 : vector<80x32xf32> to vector<80x32xbf16>
    %cst_67 = arith.constant dense<0.000000e+00> : vector<80x8xf32>
    %76 = tpu.matmul %75, %74, %cst_67 {dimension_numbers = #tpu.dot_dimension_numbers<[1], [0], [0], [1], [0, 0, 1, 1], [], []>} : vector<80x32xbf16>, vector<32x8xbf16>, vector<80x8xf32> -> vector<80x8xf32>
    %77 = vector.shape_cast %76 : vector<80x8xf32> to vector<2x5x8x8xf32>
    %78 = vector.extract_strided_slice %77 {offsets = [0, 0, 2, 0], sizes = [2, 5, 5, 8], strides = [1, 1, 1, 1]} : vector<2x5x8x8xf32> to vector<2x5x5x8xf32>
    %79 = arith.addf %72, %78 : vector<2x5x5x8xf32>
    %c1_68 = arith.constant 1 : index
    %c3_69 = arith.constant 3 : index
    %c0_70 = arith.constant 0 : index
    %c0_71 = arith.constant 0 : index
    %80 = vector.load %arg3[%c1_68, %c3_69, %c0_70, %c0_71] : memref<4x4x32x8xbf16, #tpu.memory_space<vmem>>, vector<1x1x32x8xbf16>
    %81 = vector.shape_cast %80 : vector<1x1x32x8xbf16> to vector<32x8xbf16>
    %82 = arith.truncf %58 : vector<80x32xf32> to vector<80x32xbf16>
    %cst_72 = arith.constant dense<0.000000e+00> : vector<80x8xf32>
    %83 = tpu.matmul %82, %81, %cst_72 {dimension_numbers = #tpu.dot_dimension_numbers<[1], [0], [0], [1], [0, 0, 1, 1], [], []>} : vector<80x32xbf16>, vector<32x8xbf16>, vector<80x8xf32> -> vector<80x8xf32>
    %84 = vector.shape_cast %83 : vector<80x8xf32> to vector<2x5x8x8xf32>
    %85 = vector.extract_strided_slice %84 {offsets = [0, 0, 3, 0], sizes = [2, 5, 5, 8], strides = [1, 1, 1, 1]} : vector<2x5x8x8xf32> to vector<2x5x5x8xf32>
    %86 = arith.addf %79, %85 : vector<2x5x5x8xf32>
    %87 = vector.extract_strided_slice %25 {offsets = [0, 2, 0, 0], sizes = [2, 5, 8, 32], strides = [1, 1, 1, 1]} : vector<2x8x8x32xf32> to vector<2x5x8x32xf32>
    %88 = vector.shape_cast %87 : vector<2x5x8x32xf32> to vector<80x32xf32>
    %c2_73 = arith.constant 2 : index
    %c0_74 = arith.constant 0 : index
    %c0_75 = arith.constant 0 : index
    %c0_76 = arith.constant 0 : index
    %89 = vector.load %arg3[%c2_73, %c0_74, %c0_75, %c0_76] : memref<4x4x32x8xbf16, #tpu.memory_space<vmem>>, vector<1x1x32x8xbf16>
    %90 = vector.shape_cast %89 : vector<1x1x32x8xbf16> to vector<32x8xbf16>
    %91 = arith.truncf %88 : vector<80x32xf32> to vector<80x32xbf16>
    %cst_77 = arith.constant dense<0.000000e+00> : vector<80x8xf32>
    %92 = tpu.matmul %91, %90, %cst_77 {dimension_numbers = #tpu.dot_dimension_numbers<[1], [0], [0], [1], [0, 0, 1, 1], [], []>} : vector<80x32xbf16>, vector<32x8xbf16>, vector<80x8xf32> -> vector<80x8xf32>
    %93 = vector.shape_cast %92 : vector<80x8xf32> to vector<2x5x8x8xf32>
    %94 = vector.extract_strided_slice %93 {offsets = [0, 0, 0, 0], sizes = [2, 5, 5, 8], strides = [1, 1, 1, 1]} : vector<2x5x8x8xf32> to vector<2x5x5x8xf32>
    %95 = arith.addf %86, %94 : vector<2x5x5x8xf32>
    %c2_78 = arith.constant 2 : index
    %c1_79 = arith.constant 1 : index
    %c0_80 = arith.constant 0 : index
    %c0_81 = arith.constant 0 : index
    %96 = vector.load %arg3[%c2_78, %c1_79, %c0_80, %c0_81] : memref<4x4x32x8xbf16, #tpu.memory_space<vmem>>, vector<1x1x32x8xbf16>
    %97 = vector.shape_cast %96 : vector<1x1x32x8xbf16> to vector<32x8xbf16>
    %98 = arith.truncf %88 : vector<80x32xf32> to vector<80x32xbf16>
    %cst_82 = arith.constant dense<0.000000e+00> : vector<80x8xf32>
    %99 = tpu.matmul %98, %97, %cst_82 {dimension_numbers = #tpu.dot_dimension_numbers<[1], [0], [0], [1], [0, 0, 1, 1], [], []>} : vector<80x32xbf16>, vector<32x8xbf16>, vector<80x8xf32> -> vector<80x8xf32>
    %100 = vector.shape_cast %99 : vector<80x8xf32> to vector<2x5x8x8xf32>
    %101 = vector.extract_strided_slice %100 {offsets = [0, 0, 1, 0], sizes = [2, 5, 5, 8], strides = [1, 1, 1, 1]} : vector<2x5x8x8xf32> to vector<2x5x5x8xf32>
    %102 = arith.addf %95, %101 : vector<2x5x5x8xf32>
    %c2_83 = arith.constant 2 : index
    %c2_84 = arith.constant 2 : index
    %c0_85 = arith.constant 0 : index
    %c0_86 = arith.constant 0 : index
    %103 = vector.load %arg3[%c2_83, %c2_84, %c0_85, %c0_86] : memref<4x4x32x8xbf16, #tpu.memory_space<vmem>>, vector<1x1x32x8xbf16>
    %104 = vector.shape_cast %103 : vector<1x1x32x8xbf16> to vector<32x8xbf16>
    %105 = arith.truncf %88 : vector<80x32xf32> to vector<80x32xbf16>
    %cst_87 = arith.constant dense<0.000000e+00> : vector<80x8xf32>
    %106 = tpu.matmul %105, %104, %cst_87 {dimension_numbers = #tpu.dot_dimension_numbers<[1], [0], [0], [1], [0, 0, 1, 1], [], []>} : vector<80x32xbf16>, vector<32x8xbf16>, vector<80x8xf32> -> vector<80x8xf32>
    %107 = vector.shape_cast %106 : vector<80x8xf32> to vector<2x5x8x8xf32>
    %108 = vector.extract_strided_slice %107 {offsets = [0, 0, 2, 0], sizes = [2, 5, 5, 8], strides = [1, 1, 1, 1]} : vector<2x5x8x8xf32> to vector<2x5x5x8xf32>
    %109 = arith.addf %102, %108 : vector<2x5x5x8xf32>
    %c2_88 = arith.constant 2 : index
    %c3_89 = arith.constant 3 : index
    %c0_90 = arith.constant 0 : index
    %c0_91 = arith.constant 0 : index
    %110 = vector.load %arg3[%c2_88, %c3_89, %c0_90, %c0_91] : memref<4x4x32x8xbf16, #tpu.memory_space<vmem>>, vector<1x1x32x8xbf16>
    %111 = vector.shape_cast %110 : vector<1x1x32x8xbf16> to vector<32x8xbf16>
    %112 = arith.truncf %88 : vector<80x32xf32> to vector<80x32xbf16>
    %cst_92 = arith.constant dense<0.000000e+00> : vector<80x8xf32>
    %113 = tpu.matmul %112, %111, %cst_92 {dimension_numbers = #tpu.dot_dimension_numbers<[1], [0], [0], [1], [0, 0, 1, 1], [], []>} : vector<80x32xbf16>, vector<32x8xbf16>, vector<80x8xf32> -> vector<80x8xf32>
    %114 = vector.shape_cast %113 : vector<80x8xf32> to vector<2x5x8x8xf32>
    %115 = vector.extract_strided_slice %114 {offsets = [0, 0, 3, 0], sizes = [2, 5, 5, 8], strides = [1, 1, 1, 1]} : vector<2x5x8x8xf32> to vector<2x5x5x8xf32>
    %116 = arith.addf %109, %115 : vector<2x5x5x8xf32>
    %117 = vector.extract_strided_slice %25 {offsets = [0, 3, 0, 0], sizes = [2, 5, 8, 32], strides = [1, 1, 1, 1]} : vector<2x8x8x32xf32> to vector<2x5x8x32xf32>
    %118 = vector.shape_cast %117 : vector<2x5x8x32xf32> to vector<80x32xf32>
    %c3_93 = arith.constant 3 : index
    %c0_94 = arith.constant 0 : index
    %c0_95 = arith.constant 0 : index
    %c0_96 = arith.constant 0 : index
    %119 = vector.load %arg3[%c3_93, %c0_94, %c0_95, %c0_96] : memref<4x4x32x8xbf16, #tpu.memory_space<vmem>>, vector<1x1x32x8xbf16>
    %120 = vector.shape_cast %119 : vector<1x1x32x8xbf16> to vector<32x8xbf16>
    %121 = arith.truncf %118 : vector<80x32xf32> to vector<80x32xbf16>
    %cst_97 = arith.constant dense<0.000000e+00> : vector<80x8xf32>
    %122 = tpu.matmul %121, %120, %cst_97 {dimension_numbers = #tpu.dot_dimension_numbers<[1], [0], [0], [1], [0, 0, 1, 1], [], []>} : vector<80x32xbf16>, vector<32x8xbf16>, vector<80x8xf32> -> vector<80x8xf32>
    %123 = vector.shape_cast %122 : vector<80x8xf32> to vector<2x5x8x8xf32>
    %124 = vector.extract_strided_slice %123 {offsets = [0, 0, 0, 0], sizes = [2, 5, 5, 8], strides = [1, 1, 1, 1]} : vector<2x5x8x8xf32> to vector<2x5x5x8xf32>
    %125 = arith.addf %116, %124 : vector<2x5x5x8xf32>
    %c3_98 = arith.constant 3 : index
    %c1_99 = arith.constant 1 : index
    %c0_100 = arith.constant 0 : index
    %c0_101 = arith.constant 0 : index
    %126 = vector.load %arg3[%c3_98, %c1_99, %c0_100, %c0_101] : memref<4x4x32x8xbf16, #tpu.memory_space<vmem>>, vector<1x1x32x8xbf16>
    %127 = vector.shape_cast %126 : vector<1x1x32x8xbf16> to vector<32x8xbf16>
    %128 = arith.truncf %118 : vector<80x32xf32> to vector<80x32xbf16>
    %cst_102 = arith.constant dense<0.000000e+00> : vector<80x8xf32>
    %129 = tpu.matmul %128, %127, %cst_102 {dimension_numbers = #tpu.dot_dimension_numbers<[1], [0], [0], [1], [0, 0, 1, 1], [], []>} : vector<80x32xbf16>, vector<32x8xbf16>, vector<80x8xf32> -> vector<80x8xf32>
    %130 = vector.shape_cast %129 : vector<80x8xf32> to vector<2x5x8x8xf32>
    %131 = vector.extract_strided_slice %130 {offsets = [0, 0, 1, 0], sizes = [2, 5, 5, 8], strides = [1, 1, 1, 1]} : vector<2x5x8x8xf32> to vector<2x5x5x8xf32>
    %132 = arith.addf %125, %131 : vector<2x5x5x8xf32>
    %c3_103 = arith.constant 3 : index
    %c2_104 = arith.constant 2 : index
    %c0_105 = arith.constant 0 : index
    %c0_106 = arith.constant 0 : index
    %133 = vector.load %arg3[%c3_103, %c2_104, %c0_105, %c0_106] : memref<4x4x32x8xbf16, #tpu.memory_space<vmem>>, vector<1x1x32x8xbf16>
    %134 = vector.shape_cast %133 : vector<1x1x32x8xbf16> to vector<32x8xbf16>
    %135 = arith.truncf %118 : vector<80x32xf32> to vector<80x32xbf16>
    %cst_107 = arith.constant dense<0.000000e+00> : vector<80x8xf32>
    %136 = tpu.matmul %135, %134, %cst_107 {dimension_numbers = #tpu.dot_dimension_numbers<[1], [0], [0], [1], [0, 0, 1, 1], [], []>} : vector<80x32xbf16>, vector<32x8xbf16>, vector<80x8xf32> -> vector<80x8xf32>
    %137 = vector.shape_cast %136 : vector<80x8xf32> to vector<2x5x8x8xf32>
    %138 = vector.extract_strided_slice %137 {offsets = [0, 0, 2, 0], sizes = [2, 5, 5, 8], strides = [1, 1, 1, 1]} : vector<2x5x8x8xf32> to vector<2x5x5x8xf32>
    %139 = arith.addf %132, %138 : vector<2x5x5x8xf32>
    %c3_108 = arith.constant 3 : index
    %c3_109 = arith.constant 3 : index
    %c0_110 = arith.constant 0 : index
    %c0_111 = arith.constant 0 : index
    %140 = vector.load %arg3[%c3_108, %c3_109, %c0_110, %c0_111] : memref<4x4x32x8xbf16, #tpu.memory_space<vmem>>, vector<1x1x32x8xbf16>
    %141 = vector.shape_cast %140 : vector<1x1x32x8xbf16> to vector<32x8xbf16>
    %142 = arith.truncf %118 : vector<80x32xf32> to vector<80x32xbf16>
    %cst_112 = arith.constant dense<0.000000e+00> : vector<80x8xf32>
    %143 = tpu.matmul %142, %141, %cst_112 {dimension_numbers = #tpu.dot_dimension_numbers<[1], [0], [0], [1], [0, 0, 1, 1], [], []>} : vector<80x32xbf16>, vector<32x8xbf16>, vector<80x8xf32> -> vector<80x8xf32>
    %144 = vector.shape_cast %143 : vector<80x8xf32> to vector<2x5x8x8xf32>
    %145 = vector.extract_strided_slice %144 {offsets = [0, 0, 3, 0], sizes = [2, 5, 5, 8], strides = [1, 1, 1, 1]} : vector<2x5x8x8xf32> to vector<2x5x5x8xf32>
    %146 = arith.addf %139, %145 : vector<2x5x5x8xf32>
    %cst_113 = arith.constant 0.000000e+00 : f32
    %147 = vector.broadcast %cst_113 : f32 to vector<2x5x5x8xf32>
    %148 = arith.maximumf %146, %147 : vector<2x5x5x8xf32>
    %149 = vector.extract_strided_slice %148 {offsets = [0, 0, 0, 0], sizes = [2, 1, 1, 8], strides = [1, 1, 1, 1]} : vector<2x5x5x8xf32> to vector<2x1x1x8xf32>
    %150 = vector.shape_cast %149 : vector<2x1x1x8xf32> to vector<2x8xf32>
    %c0_114 = arith.constant 0 : index
    %c0_115 = arith.constant 0 : index
    %c0_116 = arith.constant 0 : index
    %c0_117 = arith.constant 0 : index
    %151 = vector.load %arg4[%c0_114, %c0_115, %c0_116, %c0_117] : memref<3x3x8x8xbf16, #tpu.memory_space<vmem>>, vector<1x1x8x8xbf16>
    %152 = vector.shape_cast %151 : vector<1x1x8x8xbf16> to vector<8x8xbf16>
    %153 = arith.truncf %150 : vector<2x8xf32> to vector<2x8xbf16>
    %cst_118 = arith.constant dense<0.000000e+00> : vector<2x8xf32>
    %154 = tpu.matmul %153, %152, %cst_118 {dimension_numbers = #tpu.dot_dimension_numbers<[1], [0], [0], [1], [0, 0, 1, 1], [], []>} : vector<2x8xbf16>, vector<8x8xbf16>, vector<2x8xf32> -> vector<2x8xf32>
    %155 = vector.extract_strided_slice %148 {offsets = [0, 0, 2, 0], sizes = [2, 1, 1, 8], strides = [1, 1, 1, 1]} : vector<2x5x5x8xf32> to vector<2x1x1x8xf32>
    %156 = vector.shape_cast %155 : vector<2x1x1x8xf32> to vector<2x8xf32>
    %c0_119 = arith.constant 0 : index
    %c1_120 = arith.constant 1 : index
    %c0_121 = arith.constant 0 : index
    %c0_122 = arith.constant 0 : index
    %157 = vector.load %arg4[%c0_119, %c1_120, %c0_121, %c0_122] : memref<3x3x8x8xbf16, #tpu.memory_space<vmem>>, vector<1x1x8x8xbf16>
    %158 = vector.shape_cast %157 : vector<1x1x8x8xbf16> to vector<8x8xbf16>
    %159 = arith.truncf %156 : vector<2x8xf32> to vector<2x8xbf16>
    %cst_123 = arith.constant dense<0.000000e+00> : vector<2x8xf32>
    %160 = tpu.matmul %159, %158, %cst_123 {dimension_numbers = #tpu.dot_dimension_numbers<[1], [0], [0], [1], [0, 0, 1, 1], [], []>} : vector<2x8xbf16>, vector<8x8xbf16>, vector<2x8xf32> -> vector<2x8xf32>
    %161 = arith.addf %154, %160 : vector<2x8xf32>
    %162 = vector.extract_strided_slice %148 {offsets = [0, 0, 4, 0], sizes = [2, 1, 1, 8], strides = [1, 1, 1, 1]} : vector<2x5x5x8xf32> to vector<2x1x1x8xf32>
    %163 = vector.shape_cast %162 : vector<2x1x1x8xf32> to vector<2x8xf32>
    %c0_124 = arith.constant 0 : index
    %c2_125 = arith.constant 2 : index
    %c0_126 = arith.constant 0 : index
    %c0_127 = arith.constant 0 : index
    %164 = vector.load %arg4[%c0_124, %c2_125, %c0_126, %c0_127] : memref<3x3x8x8xbf16, #tpu.memory_space<vmem>>, vector<1x1x8x8xbf16>
    %165 = vector.shape_cast %164 : vector<1x1x8x8xbf16> to vector<8x8xbf16>
    %166 = arith.truncf %163 : vector<2x8xf32> to vector<2x8xbf16>
    %cst_128 = arith.constant dense<0.000000e+00> : vector<2x8xf32>
    %167 = tpu.matmul %166, %165, %cst_128 {dimension_numbers = #tpu.dot_dimension_numbers<[1], [0], [0], [1], [0, 0, 1, 1], [], []>} : vector<2x8xbf16>, vector<8x8xbf16>, vector<2x8xf32> -> vector<2x8xf32>
    %168 = arith.addf %161, %167 : vector<2x8xf32>
    %169 = vector.extract_strided_slice %148 {offsets = [0, 2, 0, 0], sizes = [2, 1, 1, 8], strides = [1, 1, 1, 1]} : vector<2x5x5x8xf32> to vector<2x1x1x8xf32>
    %170 = vector.shape_cast %169 : vector<2x1x1x8xf32> to vector<2x8xf32>
    %c1_129 = arith.constant 1 : index
    %c0_130 = arith.constant 0 : index
    %c0_131 = arith.constant 0 : index
    %c0_132 = arith.constant 0 : index
    %171 = vector.load %arg4[%c1_129, %c0_130, %c0_131, %c0_132] : memref<3x3x8x8xbf16, #tpu.memory_space<vmem>>, vector<1x1x8x8xbf16>
    %172 = vector.shape_cast %171 : vector<1x1x8x8xbf16> to vector<8x8xbf16>
    %173 = arith.truncf %170 : vector<2x8xf32> to vector<2x8xbf16>
    %cst_133 = arith.constant dense<0.000000e+00> : vector<2x8xf32>
    %174 = tpu.matmul %173, %172, %cst_133 {dimension_numbers = #tpu.dot_dimension_numbers<[1], [0], [0], [1], [0, 0, 1, 1], [], []>} : vector<2x8xbf16>, vector<8x8xbf16>, vector<2x8xf32> -> vector<2x8xf32>
    %175 = arith.addf %168, %174 : vector<2x8xf32>
    %176 = vector.extract_strided_slice %148 {offsets = [0, 2, 2, 0], sizes = [2, 1, 1, 8], strides = [1, 1, 1, 1]} : vector<2x5x5x8xf32> to vector<2x1x1x8xf32>
    %177 = vector.shape_cast %176 : vector<2x1x1x8xf32> to vector<2x8xf32>
    %c1_134 = arith.constant 1 : index
    %c1_135 = arith.constant 1 : index
    %c0_136 = arith.constant 0 : index
    %c0_137 = arith.constant 0 : index
    %178 = vector.load %arg4[%c1_134, %c1_135, %c0_136, %c0_137] : memref<3x3x8x8xbf16, #tpu.memory_space<vmem>>, vector<1x1x8x8xbf16>
    %179 = vector.shape_cast %178 : vector<1x1x8x8xbf16> to vector<8x8xbf16>
    %180 = arith.truncf %177 : vector<2x8xf32> to vector<2x8xbf16>
    %cst_138 = arith.constant dense<0.000000e+00> : vector<2x8xf32>
    %181 = tpu.matmul %180, %179, %cst_138 {dimension_numbers = #tpu.dot_dimension_numbers<[1], [0], [0], [1], [0, 0, 1, 1], [], []>} : vector<2x8xbf16>, vector<8x8xbf16>, vector<2x8xf32> -> vector<2x8xf32>
    %182 = arith.addf %175, %181 : vector<2x8xf32>
    %183 = vector.extract_strided_slice %148 {offsets = [0, 2, 4, 0], sizes = [2, 1, 1, 8], strides = [1, 1, 1, 1]} : vector<2x5x5x8xf32> to vector<2x1x1x8xf32>
    %184 = vector.shape_cast %183 : vector<2x1x1x8xf32> to vector<2x8xf32>
    %c1_139 = arith.constant 1 : index
    %c2_140 = arith.constant 2 : index
    %c0_141 = arith.constant 0 : index
    %c0_142 = arith.constant 0 : index
    %185 = vector.load %arg4[%c1_139, %c2_140, %c0_141, %c0_142] : memref<3x3x8x8xbf16, #tpu.memory_space<vmem>>, vector<1x1x8x8xbf16>
    %186 = vector.shape_cast %185 : vector<1x1x8x8xbf16> to vector<8x8xbf16>
    %187 = arith.truncf %184 : vector<2x8xf32> to vector<2x8xbf16>
    %cst_143 = arith.constant dense<0.000000e+00> : vector<2x8xf32>
    %188 = tpu.matmul %187, %186, %cst_143 {dimension_numbers = #tpu.dot_dimension_numbers<[1], [0], [0], [1], [0, 0, 1, 1], [], []>} : vector<2x8xbf16>, vector<8x8xbf16>, vector<2x8xf32> -> vector<2x8xf32>
    %189 = arith.addf %182, %188 : vector<2x8xf32>
    %190 = vector.extract_strided_slice %148 {offsets = [0, 4, 0, 0], sizes = [2, 1, 1, 8], strides = [1, 1, 1, 1]} : vector<2x5x5x8xf32> to vector<2x1x1x8xf32>
    %191 = vector.shape_cast %190 : vector<2x1x1x8xf32> to vector<2x8xf32>
    %c2_144 = arith.constant 2 : index
    %c0_145 = arith.constant 0 : index
    %c0_146 = arith.constant 0 : index
    %c0_147 = arith.constant 0 : index
    %192 = vector.load %arg4[%c2_144, %c0_145, %c0_146, %c0_147] : memref<3x3x8x8xbf16, #tpu.memory_space<vmem>>, vector<1x1x8x8xbf16>
    %193 = vector.shape_cast %192 : vector<1x1x8x8xbf16> to vector<8x8xbf16>
    %194 = arith.truncf %191 : vector<2x8xf32> to vector<2x8xbf16>
    %cst_148 = arith.constant dense<0.000000e+00> : vector<2x8xf32>
    %195 = tpu.matmul %194, %193, %cst_148 {dimension_numbers = #tpu.dot_dimension_numbers<[1], [0], [0], [1], [0, 0, 1, 1], [], []>} : vector<2x8xbf16>, vector<8x8xbf16>, vector<2x8xf32> -> vector<2x8xf32>
    %196 = arith.addf %189, %195 : vector<2x8xf32>
    %197 = vector.extract_strided_slice %148 {offsets = [0, 4, 2, 0], sizes = [2, 1, 1, 8], strides = [1, 1, 1, 1]} : vector<2x5x5x8xf32> to vector<2x1x1x8xf32>
    %198 = vector.shape_cast %197 : vector<2x1x1x8xf32> to vector<2x8xf32>
    %c2_149 = arith.constant 2 : index
    %c1_150 = arith.constant 1 : index
    %c0_151 = arith.constant 0 : index
    %c0_152 = arith.constant 0 : index
    %199 = vector.load %arg4[%c2_149, %c1_150, %c0_151, %c0_152] : memref<3x3x8x8xbf16, #tpu.memory_space<vmem>>, vector<1x1x8x8xbf16>
    %200 = vector.shape_cast %199 : vector<1x1x8x8xbf16> to vector<8x8xbf16>
    %201 = arith.truncf %198 : vector<2x8xf32> to vector<2x8xbf16>
    %cst_153 = arith.constant dense<0.000000e+00> : vector<2x8xf32>
    %202 = tpu.matmul %201, %200, %cst_153 {dimension_numbers = #tpu.dot_dimension_numbers<[1], [0], [0], [1], [0, 0, 1, 1], [], []>} : vector<2x8xbf16>, vector<8x8xbf16>, vector<2x8xf32> -> vector<2x8xf32>
    %203 = arith.addf %196, %202 : vector<2x8xf32>
    %204 = vector.extract_strided_slice %148 {offsets = [0, 4, 4, 0], sizes = [2, 1, 1, 8], strides = [1, 1, 1, 1]} : vector<2x5x5x8xf32> to vector<2x1x1x8xf32>
    %205 = vector.shape_cast %204 : vector<2x1x1x8xf32> to vector<2x8xf32>
    %c2_154 = arith.constant 2 : index
    %c2_155 = arith.constant 2 : index
    %c0_156 = arith.constant 0 : index
    %c0_157 = arith.constant 0 : index
    %206 = vector.load %arg4[%c2_154, %c2_155, %c0_156, %c0_157] : memref<3x3x8x8xbf16, #tpu.memory_space<vmem>>, vector<1x1x8x8xbf16>
    %207 = vector.shape_cast %206 : vector<1x1x8x8xbf16> to vector<8x8xbf16>
    %208 = arith.truncf %205 : vector<2x8xf32> to vector<2x8xbf16>
    %cst_158 = arith.constant dense<0.000000e+00> : vector<2x8xf32>
    %209 = tpu.matmul %208, %207, %cst_158 {dimension_numbers = #tpu.dot_dimension_numbers<[1], [0], [0], [1], [0, 0, 1, 1], [], []>} : vector<2x8xbf16>, vector<8x8xbf16>, vector<2x8xf32> -> vector<2x8xf32>
    %210 = arith.addf %203, %209 : vector<2x8xf32>
    %cst_159 = arith.constant 0.000000e+00 : f32
    %211 = vector.broadcast %cst_159 : f32 to vector<2x8xf32>
    %212 = arith.maximumf %210, %211 : vector<2x8xf32>
    %213 = vector.extract_strided_slice %212 {offsets = [0, 0], sizes = [2, 1], strides = [1, 1]} : vector<2x8xf32> to vector<2x1xf32>
    %214 = vector.extract_strided_slice %212 {offsets = [0, 0], sizes = [2, 1], strides = [1, 1]} : vector<2x8xf32> to vector<2x1xf32>
    %215 = vector.extract_strided_slice %212 {offsets = [0, 0], sizes = [2, 1], strides = [1, 1]} : vector<2x8xf32> to vector<2x1xf32>
    %216 = vector.extract_strided_slice %212 {offsets = [0, 0], sizes = [2, 1], strides = [1, 1]} : vector<2x8xf32> to vector<2x1xf32>
    %217 = vector.extract_strided_slice %212 {offsets = [0, 0], sizes = [2, 1], strides = [1, 1]} : vector<2x8xf32> to vector<2x1xf32>
    %218 = vector.extract_strided_slice %212 {offsets = [0, 0], sizes = [2, 1], strides = [1, 1]} : vector<2x8xf32> to vector<2x1xf32>
    %219 = vector.extract_strided_slice %212 {offsets = [0, 0], sizes = [2, 1], strides = [1, 1]} : vector<2x8xf32> to vector<2x1xf32>
    %220 = vector.extract_strided_slice %212 {offsets = [0, 0], sizes = [2, 1], strides = [1, 1]} : vector<2x8xf32> to vector<2x1xf32>
    %221 = tpu.concatenate %213, %214, %215, %216, %217, %218, %219, %220 in 1 : vector<2x1xf32>, vector<2x1xf32>, vector<2x1xf32>, vector<2x1xf32>, vector<2x1xf32>, vector<2x1xf32>, vector<2x1xf32>, vector<2x1xf32> -> vector<2x8xf32>
    %222 = vector.extract_strided_slice %212 {offsets = [0, 1], sizes = [2, 1], strides = [1, 1]} : vector<2x8xf32> to vector<2x1xf32>
    %223 = vector.extract_strided_slice %212 {offsets = [0, 1], sizes = [2, 1], strides = [1, 1]} : vector<2x8xf32> to vector<2x1xf32>
    %224 = vector.extract_strided_slice %212 {offsets = [0, 1], sizes = [2, 1], strides = [1, 1]} : vector<2x8xf32> to vector<2x1xf32>
    %225 = vector.extract_strided_slice %212 {offsets = [0, 1], sizes = [2, 1], strides = [1, 1]} : vector<2x8xf32> to vector<2x1xf32>
    %226 = vector.extract_strided_slice %212 {offsets = [0, 1], sizes = [2, 1], strides = [1, 1]} : vector<2x8xf32> to vector<2x1xf32>
    %227 = vector.extract_strided_slice %212 {offsets = [0, 1], sizes = [2, 1], strides = [1, 1]} : vector<2x8xf32> to vector<2x1xf32>
    %228 = vector.extract_strided_slice %212 {offsets = [0, 1], sizes = [2, 1], strides = [1, 1]} : vector<2x8xf32> to vector<2x1xf32>
    %229 = vector.extract_strided_slice %212 {offsets = [0, 1], sizes = [2, 1], strides = [1, 1]} : vector<2x8xf32> to vector<2x1xf32>
    %230 = tpu.concatenate %222, %223, %224, %225, %226, %227, %228, %229 in 1 : vector<2x1xf32>, vector<2x1xf32>, vector<2x1xf32>, vector<2x1xf32>, vector<2x1xf32>, vector<2x1xf32>, vector<2x1xf32>, vector<2x1xf32> -> vector<2x8xf32>
    %231 = vector.extract_strided_slice %212 {offsets = [0, 2], sizes = [2, 1], strides = [1, 1]} : vector<2x8xf32> to vector<2x1xf32>
    %232 = vector.extract_strided_slice %212 {offsets = [0, 2], sizes = [2, 1], strides = [1, 1]} : vector<2x8xf32> to vector<2x1xf32>
    %233 = vector.extract_strided_slice %212 {offsets = [0, 2], sizes = [2, 1], strides = [1, 1]} : vector<2x8xf32> to vector<2x1xf32>
    %234 = vector.extract_strided_slice %212 {offsets = [0, 2], sizes = [2, 1], strides = [1, 1]} : vector<2x8xf32> to vector<2x1xf32>
    %235 = vector.extract_strided_slice %212 {offsets = [0, 2], sizes = [2, 1], strides = [1, 1]} : vector<2x8xf32> to vector<2x1xf32>
    %236 = vector.extract_strided_slice %212 {offsets = [0, 2], sizes = [2, 1], strides = [1, 1]} : vector<2x8xf32> to vector<2x1xf32>
    %237 = vector.extract_strided_slice %212 {offsets = [0, 2], sizes = [2, 1], strides = [1, 1]} : vector<2x8xf32> to vector<2x1xf32>
    %238 = vector.extract_strided_slice %212 {offsets = [0, 2], sizes = [2, 1], strides = [1, 1]} : vector<2x8xf32> to vector<2x1xf32>
    %239 = tpu.concatenate %231, %232, %233, %234, %235, %236, %237, %238 in 1 : vector<2x1xf32>, vector<2x1xf32>, vector<2x1xf32>, vector<2x1xf32>, vector<2x1xf32>, vector<2x1xf32>, vector<2x1xf32>, vector<2x1xf32> -> vector<2x8xf32>
    %240 = vector.extract_strided_slice %212 {offsets = [0, 3], sizes = [2, 1], strides = [1, 1]} : vector<2x8xf32> to vector<2x1xf32>
    %241 = vector.extract_strided_slice %212 {offsets = [0, 3], sizes = [2, 1], strides = [1, 1]} : vector<2x8xf32> to vector<2x1xf32>
    %242 = vector.extract_strided_slice %212 {offsets = [0, 3], sizes = [2, 1], strides = [1, 1]} : vector<2x8xf32> to vector<2x1xf32>
    %243 = vector.extract_strided_slice %212 {offsets = [0, 3], sizes = [2, 1], strides = [1, 1]} : vector<2x8xf32> to vector<2x1xf32>
    %244 = vector.extract_strided_slice %212 {offsets = [0, 3], sizes = [2, 1], strides = [1, 1]} : vector<2x8xf32> to vector<2x1xf32>
    %245 = vector.extract_strided_slice %212 {offsets = [0, 3], sizes = [2, 1], strides = [1, 1]} : vector<2x8xf32> to vector<2x1xf32>
    %246 = vector.extract_strided_slice %212 {offsets = [0, 3], sizes = [2, 1], strides = [1, 1]} : vector<2x8xf32> to vector<2x1xf32>
    %247 = vector.extract_strided_slice %212 {offsets = [0, 3], sizes = [2, 1], strides = [1, 1]} : vector<2x8xf32> to vector<2x1xf32>
    %248 = tpu.concatenate %240, %241, %242, %243, %244, %245, %246, %247 in 1 : vector<2x1xf32>, vector<2x1xf32>, vector<2x1xf32>, vector<2x1xf32>, vector<2x1xf32>, vector<2x1xf32>, vector<2x1xf32>, vector<2x1xf32> -> vector<2x8xf32>
    %249 = vector.extract_strided_slice %212 {offsets = [0, 4], sizes = [2, 1], strides = [1, 1]} : vector<2x8xf32> to vector<2x1xf32>
    %250 = vector.extract_strided_slice %212 {offsets = [0, 4], sizes = [2, 1], strides = [1, 1]} : vector<2x8xf32> to vector<2x1xf32>
    %251 = vector.extract_strided_slice %212 {offsets = [0, 4], sizes = [2, 1], strides = [1, 1]} : vector<2x8xf32> to vector<2x1xf32>
    %252 = vector.extract_strided_slice %212 {offsets = [0, 4], sizes = [2, 1], strides = [1, 1]} : vector<2x8xf32> to vector<2x1xf32>
    %253 = vector.extract_strided_slice %212 {offsets = [0, 4], sizes = [2, 1], strides = [1, 1]} : vector<2x8xf32> to vector<2x1xf32>
    %254 = vector.extract_strided_slice %212 {offsets = [0, 4], sizes = [2, 1], strides = [1, 1]} : vector<2x8xf32> to vector<2x1xf32>
    %255 = vector.extract_strided_slice %212 {offsets = [0, 4], sizes = [2, 1], strides = [1, 1]} : vector<2x8xf32> to vector<2x1xf32>
    %256 = vector.extract_strided_slice %212 {offsets = [0, 4], sizes = [2, 1], strides = [1, 1]} : vector<2x8xf32> to vector<2x1xf32>
    %257 = tpu.concatenate %249, %250, %251, %252, %253, %254, %255, %256 in 1 : vector<2x1xf32>, vector<2x1xf32>, vector<2x1xf32>, vector<2x1xf32>, vector<2x1xf32>, vector<2x1xf32>, vector<2x1xf32>, vector<2x1xf32> -> vector<2x8xf32>
    %258 = vector.extract_strided_slice %212 {offsets = [0, 5], sizes = [2, 1], strides = [1, 1]} : vector<2x8xf32> to vector<2x1xf32>
    %259 = vector.extract_strided_slice %212 {offsets = [0, 5], sizes = [2, 1], strides = [1, 1]} : vector<2x8xf32> to vector<2x1xf32>
    %260 = vector.extract_strided_slice %212 {offsets = [0, 5], sizes = [2, 1], strides = [1, 1]} : vector<2x8xf32> to vector<2x1xf32>
    %261 = vector.extract_strided_slice %212 {offsets = [0, 5], sizes = [2, 1], strides = [1, 1]} : vector<2x8xf32> to vector<2x1xf32>
    %262 = vector.extract_strided_slice %212 {offsets = [0, 5], sizes = [2, 1], strides = [1, 1]} : vector<2x8xf32> to vector<2x1xf32>
    %263 = vector.extract_strided_slice %212 {offsets = [0, 5], sizes = [2, 1], strides = [1, 1]} : vector<2x8xf32> to vector<2x1xf32>
    %264 = vector.extract_strided_slice %212 {offsets = [0, 5], sizes = [2, 1], strides = [1, 1]} : vector<2x8xf32> to vector<2x1xf32>
    %265 = vector.extract_strided_slice %212 {offsets = [0, 5], sizes = [2, 1], strides = [1, 1]} : vector<2x8xf32> to vector<2x1xf32>
    %266 = tpu.concatenate %258, %259, %260, %261, %262, %263, %264, %265 in 1 : vector<2x1xf32>, vector<2x1xf32>, vector<2x1xf32>, vector<2x1xf32>, vector<2x1xf32>, vector<2x1xf32>, vector<2x1xf32>, vector<2x1xf32> -> vector<2x8xf32>
    %267 = vector.extract_strided_slice %212 {offsets = [0, 6], sizes = [2, 1], strides = [1, 1]} : vector<2x8xf32> to vector<2x1xf32>
    %268 = vector.extract_strided_slice %212 {offsets = [0, 6], sizes = [2, 1], strides = [1, 1]} : vector<2x8xf32> to vector<2x1xf32>
    %269 = vector.extract_strided_slice %212 {offsets = [0, 6], sizes = [2, 1], strides = [1, 1]} : vector<2x8xf32> to vector<2x1xf32>
    %270 = vector.extract_strided_slice %212 {offsets = [0, 6], sizes = [2, 1], strides = [1, 1]} : vector<2x8xf32> to vector<2x1xf32>
    %271 = vector.extract_strided_slice %212 {offsets = [0, 6], sizes = [2, 1], strides = [1, 1]} : vector<2x8xf32> to vector<2x1xf32>
    %272 = vector.extract_strided_slice %212 {offsets = [0, 6], sizes = [2, 1], strides = [1, 1]} : vector<2x8xf32> to vector<2x1xf32>
    %273 = vector.extract_strided_slice %212 {offsets = [0, 6], sizes = [2, 1], strides = [1, 1]} : vector<2x8xf32> to vector<2x1xf32>
    %274 = vector.extract_strided_slice %212 {offsets = [0, 6], sizes = [2, 1], strides = [1, 1]} : vector<2x8xf32> to vector<2x1xf32>
    %275 = tpu.concatenate %267, %268, %269, %270, %271, %272, %273, %274 in 1 : vector<2x1xf32>, vector<2x1xf32>, vector<2x1xf32>, vector<2x1xf32>, vector<2x1xf32>, vector<2x1xf32>, vector<2x1xf32>, vector<2x1xf32> -> vector<2x8xf32>
    %276 = vector.extract_strided_slice %212 {offsets = [0, 7], sizes = [2, 1], strides = [1, 1]} : vector<2x8xf32> to vector<2x1xf32>
    %277 = vector.extract_strided_slice %212 {offsets = [0, 7], sizes = [2, 1], strides = [1, 1]} : vector<2x8xf32> to vector<2x1xf32>
    %278 = vector.extract_strided_slice %212 {offsets = [0, 7], sizes = [2, 1], strides = [1, 1]} : vector<2x8xf32> to vector<2x1xf32>
    %279 = vector.extract_strided_slice %212 {offsets = [0, 7], sizes = [2, 1], strides = [1, 1]} : vector<2x8xf32> to vector<2x1xf32>
    %280 = vector.extract_strided_slice %212 {offsets = [0, 7], sizes = [2, 1], strides = [1, 1]} : vector<2x8xf32> to vector<2x1xf32>
    %281 = vector.extract_strided_slice %212 {offsets = [0, 7], sizes = [2, 1], strides = [1, 1]} : vector<2x8xf32> to vector<2x1xf32>
    %282 = vector.extract_strided_slice %212 {offsets = [0, 7], sizes = [2, 1], strides = [1, 1]} : vector<2x8xf32> to vector<2x1xf32>
    %283 = vector.extract_strided_slice %212 {offsets = [0, 7], sizes = [2, 1], strides = [1, 1]} : vector<2x8xf32> to vector<2x1xf32>
    %284 = tpu.concatenate %276, %277, %278, %279, %280, %281, %282, %283 in 1 : vector<2x1xf32>, vector<2x1xf32>, vector<2x1xf32>, vector<2x1xf32>, vector<2x1xf32>, vector<2x1xf32>, vector<2x1xf32>, vector<2x1xf32> -> vector<2x8xf32>
    %c0_160 = arith.constant 0 : index
    %c0_161 = arith.constant 0 : index
    %c0_162 = arith.constant 0 : index
    %285 = vector.load %arg5[%c0_160, %c0_161, %c0_162] : memref<3x8x16xbf16, #tpu.memory_space<vmem>>, vector<1x8x16xbf16>
    %286 = vector.shape_cast %285 : vector<1x8x16xbf16> to vector<8x16xbf16>
    %c1_163 = arith.constant 1 : index
    %c0_164 = arith.constant 0 : index
    %c0_165 = arith.constant 0 : index
    %287 = vector.load %arg5[%c1_163, %c0_164, %c0_165] : memref<3x8x16xbf16, #tpu.memory_space<vmem>>, vector<1x8x16xbf16>
    %288 = vector.shape_cast %287 : vector<1x8x16xbf16> to vector<8x16xbf16>
    %c2_166 = arith.constant 2 : index
    %c0_167 = arith.constant 0 : index
    %c0_168 = arith.constant 0 : index
    %289 = vector.load %arg5[%c2_166, %c0_167, %c0_168] : memref<3x8x16xbf16, #tpu.memory_space<vmem>>, vector<1x8x16xbf16>
    %290 = vector.shape_cast %289 : vector<1x8x16xbf16> to vector<8x16xbf16>
    %c0_169 = arith.constant 0 : index
    %c0_170 = arith.constant 0 : index
    %c0_171 = arith.constant 0 : index
    %291 = vector.load %arg6[%c0_169, %c0_170, %c0_171] : memref<3x16x16xbf16, #tpu.memory_space<vmem>>, vector<1x16x16xbf16>
    %292 = vector.shape_cast %291 : vector<1x16x16xbf16> to vector<16x16xbf16>
    %c1_172 = arith.constant 1 : index
    %c0_173 = arith.constant 0 : index
    %c0_174 = arith.constant 0 : index
    %293 = vector.load %arg6[%c1_172, %c0_173, %c0_174] : memref<3x16x16xbf16, #tpu.memory_space<vmem>>, vector<1x16x16xbf16>
    %294 = vector.shape_cast %293 : vector<1x16x16xbf16> to vector<16x16xbf16>
    %c2_175 = arith.constant 2 : index
    %c0_176 = arith.constant 0 : index
    %c0_177 = arith.constant 0 : index
    %295 = vector.load %arg6[%c2_175, %c0_176, %c0_177] : memref<3x16x16xbf16, #tpu.memory_space<vmem>>, vector<1x16x16xbf16>
    %296 = vector.shape_cast %295 : vector<1x16x16xbf16> to vector<16x16xbf16>
    %c0_178 = arith.constant 0 : index
    %c0_179 = arith.constant 0 : index
    %c0_180 = arith.constant 0 : index
    %297 = vector.load %arg7[%c0_178, %c0_179, %c0_180] : memref<4x1x16xf32, #tpu.memory_space<vmem>>, vector<1x1x16xf32>
    %298 = vector.shape_cast %297 : vector<1x1x16xf32> to vector<1x16xf32>
    %c1_181 = arith.constant 1 : index
    %c0_182 = arith.constant 0 : index
    %c0_183 = arith.constant 0 : index
    %299 = vector.load %arg7[%c1_181, %c0_182, %c0_183] : memref<4x1x16xf32, #tpu.memory_space<vmem>>, vector<1x1x16xf32>
    %300 = vector.shape_cast %299 : vector<1x1x16xf32> to vector<1x16xf32>
    %c2_184 = arith.constant 2 : index
    %c0_185 = arith.constant 0 : index
    %c0_186 = arith.constant 0 : index
    %301 = vector.load %arg7[%c2_184, %c0_185, %c0_186] : memref<4x1x16xf32, #tpu.memory_space<vmem>>, vector<1x1x16xf32>
    %302 = vector.shape_cast %301 : vector<1x1x16xf32> to vector<1x16xf32>
    %c3_187 = arith.constant 3 : index
    %c0_188 = arith.constant 0 : index
    %c0_189 = arith.constant 0 : index
    %303 = vector.load %arg7[%c3_187, %c0_188, %c0_189] : memref<4x1x16xf32, #tpu.memory_space<vmem>>, vector<1x1x16xf32>
    %304 = vector.shape_cast %303 : vector<1x1x16xf32> to vector<1x16xf32>
    %c0_190 = arith.constant 0 : index
    %c0_191 = arith.constant 0 : index
    %c0_192 = arith.constant 0 : index
    %305 = vector.load %arg11[%c0_190, %c0_191, %c0_192] : memref<2x2x16xf32, #tpu.memory_space<vmem>>, vector<1x2x16xf32>
    %306 = vector.shape_cast %305 : vector<1x2x16xf32> to vector<2x16xf32>
    %307 = arith.truncf %221 : vector<2x8xf32> to vector<2x8xbf16>
    %cst_193 = arith.constant dense<0.000000e+00> : vector<2x16xf32>
    %308 = tpu.matmul %307, %286, %cst_193 {dimension_numbers = #tpu.dot_dimension_numbers<[1], [0], [0], [1], [0, 0, 1, 1], [], []>} : vector<2x8xbf16>, vector<8x16xbf16>, vector<2x16xf32> -> vector<2x16xf32>
    %309 = arith.truncf %306 : vector<2x16xf32> to vector<2x16xbf16>
    %cst_194 = arith.constant dense<0.000000e+00> : vector<2x16xf32>
    %310 = tpu.matmul %309, %292, %cst_194 {dimension_numbers = #tpu.dot_dimension_numbers<[1], [0], [0], [1], [0, 0, 1, 1], [], []>} : vector<2x16xbf16>, vector<16x16xbf16>, vector<2x16xf32> -> vector<2x16xf32>
    %311 = arith.addf %308, %310 : vector<2x16xf32>
    %312 = vector.broadcast %298 : vector<1x16xf32> to vector<2x16xf32>
    %313 = arith.addf %311, %312 : vector<2x16xf32>
    %314 = arith.negf %313 : vector<2x16xf32>
    %315 = math.exp %314 : vector<2x16xf32>
    %cst_195 = arith.constant 1.000000e+00 : f32
    %316 = vector.broadcast %cst_195 : f32 to vector<2x16xf32>
    %317 = arith.addf %316, %315 : vector<2x16xf32>
    %318 = arith.divf %316, %317 : vector<2x16xf32>
    %319 = arith.truncf %221 : vector<2x8xf32> to vector<2x8xbf16>
    %cst_196 = arith.constant dense<0.000000e+00> : vector<2x16xf32>
    %320 = tpu.matmul %319, %288, %cst_196 {dimension_numbers = #tpu.dot_dimension_numbers<[1], [0], [0], [1], [0, 0, 1, 1], [], []>} : vector<2x8xbf16>, vector<8x16xbf16>, vector<2x16xf32> -> vector<2x16xf32>
    %321 = arith.truncf %306 : vector<2x16xf32> to vector<2x16xbf16>
    %cst_197 = arith.constant dense<0.000000e+00> : vector<2x16xf32>
    %322 = tpu.matmul %321, %294, %cst_197 {dimension_numbers = #tpu.dot_dimension_numbers<[1], [0], [0], [1], [0, 0, 1, 1], [], []>} : vector<2x16xbf16>, vector<16x16xbf16>, vector<2x16xf32> -> vector<2x16xf32>
    %323 = arith.addf %320, %322 : vector<2x16xf32>
    %324 = vector.broadcast %300 : vector<1x16xf32> to vector<2x16xf32>
    %325 = arith.addf %323, %324 : vector<2x16xf32>
    %326 = arith.negf %325 : vector<2x16xf32>
    %327 = math.exp %326 : vector<2x16xf32>
    %cst_198 = arith.constant 1.000000e+00 : f32
    %328 = vector.broadcast %cst_198 : f32 to vector<2x16xf32>
    %329 = arith.addf %328, %327 : vector<2x16xf32>
    %330 = arith.divf %328, %329 : vector<2x16xf32>
    %331 = arith.truncf %221 : vector<2x8xf32> to vector<2x8xbf16>
    %cst_199 = arith.constant dense<0.000000e+00> : vector<2x16xf32>
    %332 = tpu.matmul %331, %290, %cst_199 {dimension_numbers = #tpu.dot_dimension_numbers<[1], [0], [0], [1], [0, 0, 1, 1], [], []>} : vector<2x8xbf16>, vector<8x16xbf16>, vector<2x16xf32> -> vector<2x16xf32>
    %333 = vector.broadcast %302 : vector<1x16xf32> to vector<2x16xf32>
    %334 = arith.addf %332, %333 : vector<2x16xf32>
    %335 = arith.truncf %306 : vector<2x16xf32> to vector<2x16xbf16>
    %cst_200 = arith.constant dense<0.000000e+00> : vector<2x16xf32>
    %336 = tpu.matmul %335, %296, %cst_200 {dimension_numbers = #tpu.dot_dimension_numbers<[1], [0], [0], [1], [0, 0, 1, 1], [], []>} : vector<2x16xbf16>, vector<16x16xbf16>, vector<2x16xf32> -> vector<2x16xf32>
    %337 = vector.broadcast %304 : vector<1x16xf32> to vector<2x16xf32>
    %338 = arith.addf %336, %337 : vector<2x16xf32>
    %339 = arith.mulf %318, %338 : vector<2x16xf32>
    %340 = arith.addf %334, %339 : vector<2x16xf32>
    %341 = math.tanh %340 : vector<2x16xf32>
    %cst_201 = arith.constant 1.000000e+00 : f32
    %342 = vector.broadcast %cst_201 : f32 to vector<2x16xf32>
    %343 = arith.subf %342, %330 : vector<2x16xf32>
    %344 = arith.mulf %343, %341 : vector<2x16xf32>
    %345 = arith.mulf %330, %306 : vector<2x16xf32>
    %346 = arith.addf %344, %345 : vector<2x16xf32>
    %347 = arith.truncf %230 : vector<2x8xf32> to vector<2x8xbf16>
    %cst_202 = arith.constant dense<0.000000e+00> : vector<2x16xf32>
    %348 = tpu.matmul %347, %286, %cst_202 {dimension_numbers = #tpu.dot_dimension_numbers<[1], [0], [0], [1], [0, 0, 1, 1], [], []>} : vector<2x8xbf16>, vector<8x16xbf16>, vector<2x16xf32> -> vector<2x16xf32>
    %349 = arith.truncf %346 : vector<2x16xf32> to vector<2x16xbf16>
    %cst_203 = arith.constant dense<0.000000e+00> : vector<2x16xf32>
    %350 = tpu.matmul %349, %292, %cst_203 {dimension_numbers = #tpu.dot_dimension_numbers<[1], [0], [0], [1], [0, 0, 1, 1], [], []>} : vector<2x16xbf16>, vector<16x16xbf16>, vector<2x16xf32> -> vector<2x16xf32>
    %351 = arith.addf %348, %350 : vector<2x16xf32>
    %352 = vector.broadcast %298 : vector<1x16xf32> to vector<2x16xf32>
    %353 = arith.addf %351, %352 : vector<2x16xf32>
    %354 = arith.negf %353 : vector<2x16xf32>
    %355 = math.exp %354 : vector<2x16xf32>
    %cst_204 = arith.constant 1.000000e+00 : f32
    %356 = vector.broadcast %cst_204 : f32 to vector<2x16xf32>
    %357 = arith.addf %356, %355 : vector<2x16xf32>
    %358 = arith.divf %356, %357 : vector<2x16xf32>
    %359 = arith.truncf %230 : vector<2x8xf32> to vector<2x8xbf16>
    %cst_205 = arith.constant dense<0.000000e+00> : vector<2x16xf32>
    %360 = tpu.matmul %359, %288, %cst_205 {dimension_numbers = #tpu.dot_dimension_numbers<[1], [0], [0], [1], [0, 0, 1, 1], [], []>} : vector<2x8xbf16>, vector<8x16xbf16>, vector<2x16xf32> -> vector<2x16xf32>
    %361 = arith.truncf %346 : vector<2x16xf32> to vector<2x16xbf16>
    %cst_206 = arith.constant dense<0.000000e+00> : vector<2x16xf32>
    %362 = tpu.matmul %361, %294, %cst_206 {dimension_numbers = #tpu.dot_dimension_numbers<[1], [0], [0], [1], [0, 0, 1, 1], [], []>} : vector<2x16xbf16>, vector<16x16xbf16>, vector<2x16xf32> -> vector<2x16xf32>
    %363 = arith.addf %360, %362 : vector<2x16xf32>
    %364 = vector.broadcast %300 : vector<1x16xf32> to vector<2x16xf32>
    %365 = arith.addf %363, %364 : vector<2x16xf32>
    %366 = arith.negf %365 : vector<2x16xf32>
    %367 = math.exp %366 : vector<2x16xf32>
    %cst_207 = arith.constant 1.000000e+00 : f32
    %368 = vector.broadcast %cst_207 : f32 to vector<2x16xf32>
    %369 = arith.addf %368, %367 : vector<2x16xf32>
    %370 = arith.divf %368, %369 : vector<2x16xf32>
    %371 = arith.truncf %230 : vector<2x8xf32> to vector<2x8xbf16>
    %cst_208 = arith.constant dense<0.000000e+00> : vector<2x16xf32>
    %372 = tpu.matmul %371, %290, %cst_208 {dimension_numbers = #tpu.dot_dimension_numbers<[1], [0], [0], [1], [0, 0, 1, 1], [], []>} : vector<2x8xbf16>, vector<8x16xbf16>, vector<2x16xf32> -> vector<2x16xf32>
    %373 = vector.broadcast %302 : vector<1x16xf32> to vector<2x16xf32>
    %374 = arith.addf %372, %373 : vector<2x16xf32>
    %375 = arith.truncf %346 : vector<2x16xf32> to vector<2x16xbf16>
    %cst_209 = arith.constant dense<0.000000e+00> : vector<2x16xf32>
    %376 = tpu.matmul %375, %296, %cst_209 {dimension_numbers = #tpu.dot_dimension_numbers<[1], [0], [0], [1], [0, 0, 1, 1], [], []>} : vector<2x16xbf16>, vector<16x16xbf16>, vector<2x16xf32> -> vector<2x16xf32>
    %377 = vector.broadcast %304 : vector<1x16xf32> to vector<2x16xf32>
    %378 = arith.addf %376, %377 : vector<2x16xf32>
    %379 = arith.mulf %358, %378 : vector<2x16xf32>
    %380 = arith.addf %374, %379 : vector<2x16xf32>
    %381 = math.tanh %380 : vector<2x16xf32>
    %cst_210 = arith.constant 1.000000e+00 : f32
    %382 = vector.broadcast %cst_210 : f32 to vector<2x16xf32>
    %383 = arith.subf %382, %370 : vector<2x16xf32>
    %384 = arith.mulf %383, %381 : vector<2x16xf32>
    %385 = arith.mulf %370, %346 : vector<2x16xf32>
    %386 = arith.addf %384, %385 : vector<2x16xf32>
    %387 = arith.truncf %239 : vector<2x8xf32> to vector<2x8xbf16>
    %cst_211 = arith.constant dense<0.000000e+00> : vector<2x16xf32>
    %388 = tpu.matmul %387, %286, %cst_211 {dimension_numbers = #tpu.dot_dimension_numbers<[1], [0], [0], [1], [0, 0, 1, 1], [], []>} : vector<2x8xbf16>, vector<8x16xbf16>, vector<2x16xf32> -> vector<2x16xf32>
    %389 = arith.truncf %386 : vector<2x16xf32> to vector<2x16xbf16>
    %cst_212 = arith.constant dense<0.000000e+00> : vector<2x16xf32>
    %390 = tpu.matmul %389, %292, %cst_212 {dimension_numbers = #tpu.dot_dimension_numbers<[1], [0], [0], [1], [0, 0, 1, 1], [], []>} : vector<2x16xbf16>, vector<16x16xbf16>, vector<2x16xf32> -> vector<2x16xf32>
    %391 = arith.addf %388, %390 : vector<2x16xf32>
    %392 = vector.broadcast %298 : vector<1x16xf32> to vector<2x16xf32>
    %393 = arith.addf %391, %392 : vector<2x16xf32>
    %394 = arith.negf %393 : vector<2x16xf32>
    %395 = math.exp %394 : vector<2x16xf32>
    %cst_213 = arith.constant 1.000000e+00 : f32
    %396 = vector.broadcast %cst_213 : f32 to vector<2x16xf32>
    %397 = arith.addf %396, %395 : vector<2x16xf32>
    %398 = arith.divf %396, %397 : vector<2x16xf32>
    %399 = arith.truncf %239 : vector<2x8xf32> to vector<2x8xbf16>
    %cst_214 = arith.constant dense<0.000000e+00> : vector<2x16xf32>
    %400 = tpu.matmul %399, %288, %cst_214 {dimension_numbers = #tpu.dot_dimension_numbers<[1], [0], [0], [1], [0, 0, 1, 1], [], []>} : vector<2x8xbf16>, vector<8x16xbf16>, vector<2x16xf32> -> vector<2x16xf32>
    %401 = arith.truncf %386 : vector<2x16xf32> to vector<2x16xbf16>
    %cst_215 = arith.constant dense<0.000000e+00> : vector<2x16xf32>
    %402 = tpu.matmul %401, %294, %cst_215 {dimension_numbers = #tpu.dot_dimension_numbers<[1], [0], [0], [1], [0, 0, 1, 1], [], []>} : vector<2x16xbf16>, vector<16x16xbf16>, vector<2x16xf32> -> vector<2x16xf32>
    %403 = arith.addf %400, %402 : vector<2x16xf32>
    %404 = vector.broadcast %300 : vector<1x16xf32> to vector<2x16xf32>
    %405 = arith.addf %403, %404 : vector<2x16xf32>
    %406 = arith.negf %405 : vector<2x16xf32>
    %407 = math.exp %406 : vector<2x16xf32>
    %cst_216 = arith.constant 1.000000e+00 : f32
    %408 = vector.broadcast %cst_216 : f32 to vector<2x16xf32>
    %409 = arith.addf %408, %407 : vector<2x16xf32>
    %410 = arith.divf %408, %409 : vector<2x16xf32>
    %411 = arith.truncf %239 : vector<2x8xf32> to vector<2x8xbf16>
    %cst_217 = arith.constant dense<0.000000e+00> : vector<2x16xf32>
    %412 = tpu.matmul %411, %290, %cst_217 {dimension_numbers = #tpu.dot_dimension_numbers<[1], [0], [0], [1], [0, 0, 1, 1], [], []>} : vector<2x8xbf16>, vector<8x16xbf16>, vector<2x16xf32> -> vector<2x16xf32>
    %413 = vector.broadcast %302 : vector<1x16xf32> to vector<2x16xf32>
    %414 = arith.addf %412, %413 : vector<2x16xf32>
    %415 = arith.truncf %386 : vector<2x16xf32> to vector<2x16xbf16>
    %cst_218 = arith.constant dense<0.000000e+00> : vector<2x16xf32>
    %416 = tpu.matmul %415, %296, %cst_218 {dimension_numbers = #tpu.dot_dimension_numbers<[1], [0], [0], [1], [0, 0, 1, 1], [], []>} : vector<2x16xbf16>, vector<16x16xbf16>, vector<2x16xf32> -> vector<2x16xf32>
    %417 = vector.broadcast %304 : vector<1x16xf32> to vector<2x16xf32>
    %418 = arith.addf %416, %417 : vector<2x16xf32>
    %419 = arith.mulf %398, %418 : vector<2x16xf32>
    %420 = arith.addf %414, %419 : vector<2x16xf32>
    %421 = math.tanh %420 : vector<2x16xf32>
    %cst_219 = arith.constant 1.000000e+00 : f32
    %422 = vector.broadcast %cst_219 : f32 to vector<2x16xf32>
    %423 = arith.subf %422, %410 : vector<2x16xf32>
    %424 = arith.mulf %423, %421 : vector<2x16xf32>
    %425 = arith.mulf %410, %386 : vector<2x16xf32>
    %426 = arith.addf %424, %425 : vector<2x16xf32>
    %427 = arith.truncf %248 : vector<2x8xf32> to vector<2x8xbf16>
    %cst_220 = arith.constant dense<0.000000e+00> : vector<2x16xf32>
    %428 = tpu.matmul %427, %286, %cst_220 {dimension_numbers = #tpu.dot_dimension_numbers<[1], [0], [0], [1], [0, 0, 1, 1], [], []>} : vector<2x8xbf16>, vector<8x16xbf16>, vector<2x16xf32> -> vector<2x16xf32>
    %429 = arith.truncf %426 : vector<2x16xf32> to vector<2x16xbf16>
    %cst_221 = arith.constant dense<0.000000e+00> : vector<2x16xf32>
    %430 = tpu.matmul %429, %292, %cst_221 {dimension_numbers = #tpu.dot_dimension_numbers<[1], [0], [0], [1], [0, 0, 1, 1], [], []>} : vector<2x16xbf16>, vector<16x16xbf16>, vector<2x16xf32> -> vector<2x16xf32>
    %431 = arith.addf %428, %430 : vector<2x16xf32>
    %432 = vector.broadcast %298 : vector<1x16xf32> to vector<2x16xf32>
    %433 = arith.addf %431, %432 : vector<2x16xf32>
    %434 = arith.negf %433 : vector<2x16xf32>
    %435 = math.exp %434 : vector<2x16xf32>
    %cst_222 = arith.constant 1.000000e+00 : f32
    %436 = vector.broadcast %cst_222 : f32 to vector<2x16xf32>
    %437 = arith.addf %436, %435 : vector<2x16xf32>
    %438 = arith.divf %436, %437 : vector<2x16xf32>
    %439 = arith.truncf %248 : vector<2x8xf32> to vector<2x8xbf16>
    %cst_223 = arith.constant dense<0.000000e+00> : vector<2x16xf32>
    %440 = tpu.matmul %439, %288, %cst_223 {dimension_numbers = #tpu.dot_dimension_numbers<[1], [0], [0], [1], [0, 0, 1, 1], [], []>} : vector<2x8xbf16>, vector<8x16xbf16>, vector<2x16xf32> -> vector<2x16xf32>
    %441 = arith.truncf %426 : vector<2x16xf32> to vector<2x16xbf16>
    %cst_224 = arith.constant dense<0.000000e+00> : vector<2x16xf32>
    %442 = tpu.matmul %441, %294, %cst_224 {dimension_numbers = #tpu.dot_dimension_numbers<[1], [0], [0], [1], [0, 0, 1, 1], [], []>} : vector<2x16xbf16>, vector<16x16xbf16>, vector<2x16xf32> -> vector<2x16xf32>
    %443 = arith.addf %440, %442 : vector<2x16xf32>
    %444 = vector.broadcast %300 : vector<1x16xf32> to vector<2x16xf32>
    %445 = arith.addf %443, %444 : vector<2x16xf32>
    %446 = arith.negf %445 : vector<2x16xf32>
    %447 = math.exp %446 : vector<2x16xf32>
    %cst_225 = arith.constant 1.000000e+00 : f32
    %448 = vector.broadcast %cst_225 : f32 to vector<2x16xf32>
    %449 = arith.addf %448, %447 : vector<2x16xf32>
    %450 = arith.divf %448, %449 : vector<2x16xf32>
    %451 = arith.truncf %248 : vector<2x8xf32> to vector<2x8xbf16>
    %cst_226 = arith.constant dense<0.000000e+00> : vector<2x16xf32>
    %452 = tpu.matmul %451, %290, %cst_226 {dimension_numbers = #tpu.dot_dimension_numbers<[1], [0], [0], [1], [0, 0, 1, 1], [], []>} : vector<2x8xbf16>, vector<8x16xbf16>, vector<2x16xf32> -> vector<2x16xf32>
    %453 = vector.broadcast %302 : vector<1x16xf32> to vector<2x16xf32>
    %454 = arith.addf %452, %453 : vector<2x16xf32>
    %455 = arith.truncf %426 : vector<2x16xf32> to vector<2x16xbf16>
    %cst_227 = arith.constant dense<0.000000e+00> : vector<2x16xf32>
    %456 = tpu.matmul %455, %296, %cst_227 {dimension_numbers = #tpu.dot_dimension_numbers<[1], [0], [0], [1], [0, 0, 1, 1], [], []>} : vector<2x16xbf16>, vector<16x16xbf16>, vector<2x16xf32> -> vector<2x16xf32>
    %457 = vector.broadcast %304 : vector<1x16xf32> to vector<2x16xf32>
    %458 = arith.addf %456, %457 : vector<2x16xf32>
    %459 = arith.mulf %438, %458 : vector<2x16xf32>
    %460 = arith.addf %454, %459 : vector<2x16xf32>
    %461 = math.tanh %460 : vector<2x16xf32>
    %cst_228 = arith.constant 1.000000e+00 : f32
    %462 = vector.broadcast %cst_228 : f32 to vector<2x16xf32>
    %463 = arith.subf %462, %450 : vector<2x16xf32>
    %464 = arith.mulf %463, %461 : vector<2x16xf32>
    %465 = arith.mulf %450, %426 : vector<2x16xf32>
    %466 = arith.addf %464, %465 : vector<2x16xf32>
    %467 = arith.truncf %257 : vector<2x8xf32> to vector<2x8xbf16>
    %cst_229 = arith.constant dense<0.000000e+00> : vector<2x16xf32>
    %468 = tpu.matmul %467, %286, %cst_229 {dimension_numbers = #tpu.dot_dimension_numbers<[1], [0], [0], [1], [0, 0, 1, 1], [], []>} : vector<2x8xbf16>, vector<8x16xbf16>, vector<2x16xf32> -> vector<2x16xf32>
    %469 = arith.truncf %466 : vector<2x16xf32> to vector<2x16xbf16>
    %cst_230 = arith.constant dense<0.000000e+00> : vector<2x16xf32>
    %470 = tpu.matmul %469, %292, %cst_230 {dimension_numbers = #tpu.dot_dimension_numbers<[1], [0], [0], [1], [0, 0, 1, 1], [], []>} : vector<2x16xbf16>, vector<16x16xbf16>, vector<2x16xf32> -> vector<2x16xf32>
    %471 = arith.addf %468, %470 : vector<2x16xf32>
    %472 = vector.broadcast %298 : vector<1x16xf32> to vector<2x16xf32>
    %473 = arith.addf %471, %472 : vector<2x16xf32>
    %474 = arith.negf %473 : vector<2x16xf32>
    %475 = math.exp %474 : vector<2x16xf32>
    %cst_231 = arith.constant 1.000000e+00 : f32
    %476 = vector.broadcast %cst_231 : f32 to vector<2x16xf32>
    %477 = arith.addf %476, %475 : vector<2x16xf32>
    %478 = arith.divf %476, %477 : vector<2x16xf32>
    %479 = arith.truncf %257 : vector<2x8xf32> to vector<2x8xbf16>
    %cst_232 = arith.constant dense<0.000000e+00> : vector<2x16xf32>
    %480 = tpu.matmul %479, %288, %cst_232 {dimension_numbers = #tpu.dot_dimension_numbers<[1], [0], [0], [1], [0, 0, 1, 1], [], []>} : vector<2x8xbf16>, vector<8x16xbf16>, vector<2x16xf32> -> vector<2x16xf32>
    %481 = arith.truncf %466 : vector<2x16xf32> to vector<2x16xbf16>
    %cst_233 = arith.constant dense<0.000000e+00> : vector<2x16xf32>
    %482 = tpu.matmul %481, %294, %cst_233 {dimension_numbers = #tpu.dot_dimension_numbers<[1], [0], [0], [1], [0, 0, 1, 1], [], []>} : vector<2x16xbf16>, vector<16x16xbf16>, vector<2x16xf32> -> vector<2x16xf32>
    %483 = arith.addf %480, %482 : vector<2x16xf32>
    %484 = vector.broadcast %300 : vector<1x16xf32> to vector<2x16xf32>
    %485 = arith.addf %483, %484 : vector<2x16xf32>
    %486 = arith.negf %485 : vector<2x16xf32>
    %487 = math.exp %486 : vector<2x16xf32>
    %cst_234 = arith.constant 1.000000e+00 : f32
    %488 = vector.broadcast %cst_234 : f32 to vector<2x16xf32>
    %489 = arith.addf %488, %487 : vector<2x16xf32>
    %490 = arith.divf %488, %489 : vector<2x16xf32>
    %491 = arith.truncf %257 : vector<2x8xf32> to vector<2x8xbf16>
    %cst_235 = arith.constant dense<0.000000e+00> : vector<2x16xf32>
    %492 = tpu.matmul %491, %290, %cst_235 {dimension_numbers = #tpu.dot_dimension_numbers<[1], [0], [0], [1], [0, 0, 1, 1], [], []>} : vector<2x8xbf16>, vector<8x16xbf16>, vector<2x16xf32> -> vector<2x16xf32>
    %493 = vector.broadcast %302 : vector<1x16xf32> to vector<2x16xf32>
    %494 = arith.addf %492, %493 : vector<2x16xf32>
    %495 = arith.truncf %466 : vector<2x16xf32> to vector<2x16xbf16>
    %cst_236 = arith.constant dense<0.000000e+00> : vector<2x16xf32>
    %496 = tpu.matmul %495, %296, %cst_236 {dimension_numbers = #tpu.dot_dimension_numbers<[1], [0], [0], [1], [0, 0, 1, 1], [], []>} : vector<2x16xbf16>, vector<16x16xbf16>, vector<2x16xf32> -> vector<2x16xf32>
    %497 = vector.broadcast %304 : vector<1x16xf32> to vector<2x16xf32>
    %498 = arith.addf %496, %497 : vector<2x16xf32>
    %499 = arith.mulf %478, %498 : vector<2x16xf32>
    %500 = arith.addf %494, %499 : vector<2x16xf32>
    %501 = math.tanh %500 : vector<2x16xf32>
    %cst_237 = arith.constant 1.000000e+00 : f32
    %502 = vector.broadcast %cst_237 : f32 to vector<2x16xf32>
    %503 = arith.subf %502, %490 : vector<2x16xf32>
    %504 = arith.mulf %503, %501 : vector<2x16xf32>
    %505 = arith.mulf %490, %466 : vector<2x16xf32>
    %506 = arith.addf %504, %505 : vector<2x16xf32>
    %507 = arith.truncf %266 : vector<2x8xf32> to vector<2x8xbf16>
    %cst_238 = arith.constant dense<0.000000e+00> : vector<2x16xf32>
    %508 = tpu.matmul %507, %286, %cst_238 {dimension_numbers = #tpu.dot_dimension_numbers<[1], [0], [0], [1], [0, 0, 1, 1], [], []>} : vector<2x8xbf16>, vector<8x16xbf16>, vector<2x16xf32> -> vector<2x16xf32>
    %509 = arith.truncf %506 : vector<2x16xf32> to vector<2x16xbf16>
    %cst_239 = arith.constant dense<0.000000e+00> : vector<2x16xf32>
    %510 = tpu.matmul %509, %292, %cst_239 {dimension_numbers = #tpu.dot_dimension_numbers<[1], [0], [0], [1], [0, 0, 1, 1], [], []>} : vector<2x16xbf16>, vector<16x16xbf16>, vector<2x16xf32> -> vector<2x16xf32>
    %511 = arith.addf %508, %510 : vector<2x16xf32>
    %512 = vector.broadcast %298 : vector<1x16xf32> to vector<2x16xf32>
    %513 = arith.addf %511, %512 : vector<2x16xf32>
    %514 = arith.negf %513 : vector<2x16xf32>
    %515 = math.exp %514 : vector<2x16xf32>
    %cst_240 = arith.constant 1.000000e+00 : f32
    %516 = vector.broadcast %cst_240 : f32 to vector<2x16xf32>
    %517 = arith.addf %516, %515 : vector<2x16xf32>
    %518 = arith.divf %516, %517 : vector<2x16xf32>
    %519 = arith.truncf %266 : vector<2x8xf32> to vector<2x8xbf16>
    %cst_241 = arith.constant dense<0.000000e+00> : vector<2x16xf32>
    %520 = tpu.matmul %519, %288, %cst_241 {dimension_numbers = #tpu.dot_dimension_numbers<[1], [0], [0], [1], [0, 0, 1, 1], [], []>} : vector<2x8xbf16>, vector<8x16xbf16>, vector<2x16xf32> -> vector<2x16xf32>
    %521 = arith.truncf %506 : vector<2x16xf32> to vector<2x16xbf16>
    %cst_242 = arith.constant dense<0.000000e+00> : vector<2x16xf32>
    %522 = tpu.matmul %521, %294, %cst_242 {dimension_numbers = #tpu.dot_dimension_numbers<[1], [0], [0], [1], [0, 0, 1, 1], [], []>} : vector<2x16xbf16>, vector<16x16xbf16>, vector<2x16xf32> -> vector<2x16xf32>
    %523 = arith.addf %520, %522 : vector<2x16xf32>
    %524 = vector.broadcast %300 : vector<1x16xf32> to vector<2x16xf32>
    %525 = arith.addf %523, %524 : vector<2x16xf32>
    %526 = arith.negf %525 : vector<2x16xf32>
    %527 = math.exp %526 : vector<2x16xf32>
    %cst_243 = arith.constant 1.000000e+00 : f32
    %528 = vector.broadcast %cst_243 : f32 to vector<2x16xf32>
    %529 = arith.addf %528, %527 : vector<2x16xf32>
    %530 = arith.divf %528, %529 : vector<2x16xf32>
    %531 = arith.truncf %266 : vector<2x8xf32> to vector<2x8xbf16>
    %cst_244 = arith.constant dense<0.000000e+00> : vector<2x16xf32>
    %532 = tpu.matmul %531, %290, %cst_244 {dimension_numbers = #tpu.dot_dimension_numbers<[1], [0], [0], [1], [0, 0, 1, 1], [], []>} : vector<2x8xbf16>, vector<8x16xbf16>, vector<2x16xf32> -> vector<2x16xf32>
    %533 = vector.broadcast %302 : vector<1x16xf32> to vector<2x16xf32>
    %534 = arith.addf %532, %533 : vector<2x16xf32>
    %535 = arith.truncf %506 : vector<2x16xf32> to vector<2x16xbf16>
    %cst_245 = arith.constant dense<0.000000e+00> : vector<2x16xf32>
    %536 = tpu.matmul %535, %296, %cst_245 {dimension_numbers = #tpu.dot_dimension_numbers<[1], [0], [0], [1], [0, 0, 1, 1], [], []>} : vector<2x16xbf16>, vector<16x16xbf16>, vector<2x16xf32> -> vector<2x16xf32>
    %537 = vector.broadcast %304 : vector<1x16xf32> to vector<2x16xf32>
    %538 = arith.addf %536, %537 : vector<2x16xf32>
    %539 = arith.mulf %518, %538 : vector<2x16xf32>
    %540 = arith.addf %534, %539 : vector<2x16xf32>
    %541 = math.tanh %540 : vector<2x16xf32>
    %cst_246 = arith.constant 1.000000e+00 : f32
    %542 = vector.broadcast %cst_246 : f32 to vector<2x16xf32>
    %543 = arith.subf %542, %530 : vector<2x16xf32>
    %544 = arith.mulf %543, %541 : vector<2x16xf32>
    %545 = arith.mulf %530, %506 : vector<2x16xf32>
    %546 = arith.addf %544, %545 : vector<2x16xf32>
    %547 = arith.truncf %275 : vector<2x8xf32> to vector<2x8xbf16>
    %cst_247 = arith.constant dense<0.000000e+00> : vector<2x16xf32>
    %548 = tpu.matmul %547, %286, %cst_247 {dimension_numbers = #tpu.dot_dimension_numbers<[1], [0], [0], [1], [0, 0, 1, 1], [], []>} : vector<2x8xbf16>, vector<8x16xbf16>, vector<2x16xf32> -> vector<2x16xf32>
    %549 = arith.truncf %546 : vector<2x16xf32> to vector<2x16xbf16>
    %cst_248 = arith.constant dense<0.000000e+00> : vector<2x16xf32>
    %550 = tpu.matmul %549, %292, %cst_248 {dimension_numbers = #tpu.dot_dimension_numbers<[1], [0], [0], [1], [0, 0, 1, 1], [], []>} : vector<2x16xbf16>, vector<16x16xbf16>, vector<2x16xf32> -> vector<2x16xf32>
    %551 = arith.addf %548, %550 : vector<2x16xf32>
    %552 = vector.broadcast %298 : vector<1x16xf32> to vector<2x16xf32>
    %553 = arith.addf %551, %552 : vector<2x16xf32>
    %554 = arith.negf %553 : vector<2x16xf32>
    %555 = math.exp %554 : vector<2x16xf32>
    %cst_249 = arith.constant 1.000000e+00 : f32
    %556 = vector.broadcast %cst_249 : f32 to vector<2x16xf32>
    %557 = arith.addf %556, %555 : vector<2x16xf32>
    %558 = arith.divf %556, %557 : vector<2x16xf32>
    %559 = arith.truncf %275 : vector<2x8xf32> to vector<2x8xbf16>
    %cst_250 = arith.constant dense<0.000000e+00> : vector<2x16xf32>
    %560 = tpu.matmul %559, %288, %cst_250 {dimension_numbers = #tpu.dot_dimension_numbers<[1], [0], [0], [1], [0, 0, 1, 1], [], []>} : vector<2x8xbf16>, vector<8x16xbf16>, vector<2x16xf32> -> vector<2x16xf32>
    %561 = arith.truncf %546 : vector<2x16xf32> to vector<2x16xbf16>
    %cst_251 = arith.constant dense<0.000000e+00> : vector<2x16xf32>
    %562 = tpu.matmul %561, %294, %cst_251 {dimension_numbers = #tpu.dot_dimension_numbers<[1], [0], [0], [1], [0, 0, 1, 1], [], []>} : vector<2x16xbf16>, vector<16x16xbf16>, vector<2x16xf32> -> vector<2x16xf32>
    %563 = arith.addf %560, %562 : vector<2x16xf32>
    %564 = vector.broadcast %300 : vector<1x16xf32> to vector<2x16xf32>
    %565 = arith.addf %563, %564 : vector<2x16xf32>
    %566 = arith.negf %565 : vector<2x16xf32>
    %567 = math.exp %566 : vector<2x16xf32>
    %cst_252 = arith.constant 1.000000e+00 : f32
    %568 = vector.broadcast %cst_252 : f32 to vector<2x16xf32>
    %569 = arith.addf %568, %567 : vector<2x16xf32>
    %570 = arith.divf %568, %569 : vector<2x16xf32>
    %571 = arith.truncf %275 : vector<2x8xf32> to vector<2x8xbf16>
    %cst_253 = arith.constant dense<0.000000e+00> : vector<2x16xf32>
    %572 = tpu.matmul %571, %290, %cst_253 {dimension_numbers = #tpu.dot_dimension_numbers<[1], [0], [0], [1], [0, 0, 1, 1], [], []>} : vector<2x8xbf16>, vector<8x16xbf16>, vector<2x16xf32> -> vector<2x16xf32>
    %573 = vector.broadcast %302 : vector<1x16xf32> to vector<2x16xf32>
    %574 = arith.addf %572, %573 : vector<2x16xf32>
    %575 = arith.truncf %546 : vector<2x16xf32> to vector<2x16xbf16>
    %cst_254 = arith.constant dense<0.000000e+00> : vector<2x16xf32>
    %576 = tpu.matmul %575, %296, %cst_254 {dimension_numbers = #tpu.dot_dimension_numbers<[1], [0], [0], [1], [0, 0, 1, 1], [], []>} : vector<2x16xbf16>, vector<16x16xbf16>, vector<2x16xf32> -> vector<2x16xf32>
    %577 = vector.broadcast %304 : vector<1x16xf32> to vector<2x16xf32>
    %578 = arith.addf %576, %577 : vector<2x16xf32>
    %579 = arith.mulf %558, %578 : vector<2x16xf32>
    %580 = arith.addf %574, %579 : vector<2x16xf32>
    %581 = math.tanh %580 : vector<2x16xf32>
    %cst_255 = arith.constant 1.000000e+00 : f32
    %582 = vector.broadcast %cst_255 : f32 to vector<2x16xf32>
    %583 = arith.subf %582, %570 : vector<2x16xf32>
    %584 = arith.mulf %583, %581 : vector<2x16xf32>
    %585 = arith.mulf %570, %546 : vector<2x16xf32>
    %586 = arith.addf %584, %585 : vector<2x16xf32>
    %587 = arith.truncf %284 : vector<2x8xf32> to vector<2x8xbf16>
    %cst_256 = arith.constant dense<0.000000e+00> : vector<2x16xf32>
    %588 = tpu.matmul %587, %286, %cst_256 {dimension_numbers = #tpu.dot_dimension_numbers<[1], [0], [0], [1], [0, 0, 1, 1], [], []>} : vector<2x8xbf16>, vector<8x16xbf16>, vector<2x16xf32> -> vector<2x16xf32>
    %589 = arith.truncf %586 : vector<2x16xf32> to vector<2x16xbf16>
    %cst_257 = arith.constant dense<0.000000e+00> : vector<2x16xf32>
    %590 = tpu.matmul %589, %292, %cst_257 {dimension_numbers = #tpu.dot_dimension_numbers<[1], [0], [0], [1], [0, 0, 1, 1], [], []>} : vector<2x16xbf16>, vector<16x16xbf16>, vector<2x16xf32> -> vector<2x16xf32>
    %591 = arith.addf %588, %590 : vector<2x16xf32>
    %592 = vector.broadcast %298 : vector<1x16xf32> to vector<2x16xf32>
    %593 = arith.addf %591, %592 : vector<2x16xf32>
    %594 = arith.negf %593 : vector<2x16xf32>
    %595 = math.exp %594 : vector<2x16xf32>
    %cst_258 = arith.constant 1.000000e+00 : f32
    %596 = vector.broadcast %cst_258 : f32 to vector<2x16xf32>
    %597 = arith.addf %596, %595 : vector<2x16xf32>
    %598 = arith.divf %596, %597 : vector<2x16xf32>
    %599 = arith.truncf %284 : vector<2x8xf32> to vector<2x8xbf16>
    %cst_259 = arith.constant dense<0.000000e+00> : vector<2x16xf32>
    %600 = tpu.matmul %599, %288, %cst_259 {dimension_numbers = #tpu.dot_dimension_numbers<[1], [0], [0], [1], [0, 0, 1, 1], [], []>} : vector<2x8xbf16>, vector<8x16xbf16>, vector<2x16xf32> -> vector<2x16xf32>
    %601 = arith.truncf %586 : vector<2x16xf32> to vector<2x16xbf16>
    %cst_260 = arith.constant dense<0.000000e+00> : vector<2x16xf32>
    %602 = tpu.matmul %601, %294, %cst_260 {dimension_numbers = #tpu.dot_dimension_numbers<[1], [0], [0], [1], [0, 0, 1, 1], [], []>} : vector<2x16xbf16>, vector<16x16xbf16>, vector<2x16xf32> -> vector<2x16xf32>
    %603 = arith.addf %600, %602 : vector<2x16xf32>
    %604 = vector.broadcast %300 : vector<1x16xf32> to vector<2x16xf32>
    %605 = arith.addf %603, %604 : vector<2x16xf32>
    %606 = arith.negf %605 : vector<2x16xf32>
    %607 = math.exp %606 : vector<2x16xf32>
    %cst_261 = arith.constant 1.000000e+00 : f32
    %608 = vector.broadcast %cst_261 : f32 to vector<2x16xf32>
    %609 = arith.addf %608, %607 : vector<2x16xf32>
    %610 = arith.divf %608, %609 : vector<2x16xf32>
    %611 = arith.truncf %284 : vector<2x8xf32> to vector<2x8xbf16>
    %cst_262 = arith.constant dense<0.000000e+00> : vector<2x16xf32>
    %612 = tpu.matmul %611, %290, %cst_262 {dimension_numbers = #tpu.dot_dimension_numbers<[1], [0], [0], [1], [0, 0, 1, 1], [], []>} : vector<2x8xbf16>, vector<8x16xbf16>, vector<2x16xf32> -> vector<2x16xf32>
    %613 = vector.broadcast %302 : vector<1x16xf32> to vector<2x16xf32>
    %614 = arith.addf %612, %613 : vector<2x16xf32>
    %615 = arith.truncf %586 : vector<2x16xf32> to vector<2x16xbf16>
    %cst_263 = arith.constant dense<0.000000e+00> : vector<2x16xf32>
    %616 = tpu.matmul %615, %296, %cst_263 {dimension_numbers = #tpu.dot_dimension_numbers<[1], [0], [0], [1], [0, 0, 1, 1], [], []>} : vector<2x16xbf16>, vector<16x16xbf16>, vector<2x16xf32> -> vector<2x16xf32>
    %617 = vector.broadcast %304 : vector<1x16xf32> to vector<2x16xf32>
    %618 = arith.addf %616, %617 : vector<2x16xf32>
    %619 = arith.mulf %598, %618 : vector<2x16xf32>
    %620 = arith.addf %614, %619 : vector<2x16xf32>
    %621 = math.tanh %620 : vector<2x16xf32>
    %cst_264 = arith.constant 1.000000e+00 : f32
    %622 = vector.broadcast %cst_264 : f32 to vector<2x16xf32>
    %623 = arith.subf %622, %610 : vector<2x16xf32>
    %624 = arith.mulf %623, %621 : vector<2x16xf32>
    %625 = arith.mulf %610, %586 : vector<2x16xf32>
    %626 = arith.addf %624, %625 : vector<2x16xf32>
    %c0_265 = arith.constant 0 : index
    %c0_266 = arith.constant 0 : index
    %c0_267 = arith.constant 0 : index
    %627 = vector.load %arg17[%c0_265, %c0_266, %c0_267] : memref<2x2x16xf32, #tpu.memory_space<vmem>>, vector<1x2x16xf32>
    %628 = vector.shape_cast %627 : vector<1x2x16xf32> to vector<2x16xf32>
    %629 = vector.shape_cast %626 : vector<2x16xf32> to vector<1x2x16xf32>
    tpu.vector_store %arg17[%c0_265, %c0_266, %c0_267], %629 {strides = array<i32>} : memref<2x2x16xf32, #tpu.memory_space<vmem>>, vector<1x2x16xf32>,
    %c0_268 = arith.constant 0 : index
    %c0_269 = arith.constant 0 : index
    %c0_270 = arith.constant 0 : index
    %630 = vector.load %arg8[%c0_268, %c0_269, %c0_270] : memref<3x16x16xbf16, #tpu.memory_space<vmem>>, vector<1x16x16xbf16>
    %631 = vector.shape_cast %630 : vector<1x16x16xbf16> to vector<16x16xbf16>
    %c1_271 = arith.constant 1 : index
    %c0_272 = arith.constant 0 : index
    %c0_273 = arith.constant 0 : index
    %632 = vector.load %arg8[%c1_271, %c0_272, %c0_273] : memref<3x16x16xbf16, #tpu.memory_space<vmem>>, vector<1x16x16xbf16>
    %633 = vector.shape_cast %632 : vector<1x16x16xbf16> to vector<16x16xbf16>
    %c2_274 = arith.constant 2 : index
    %c0_275 = arith.constant 0 : index
    %c0_276 = arith.constant 0 : index
    %634 = vector.load %arg8[%c2_274, %c0_275, %c0_276] : memref<3x16x16xbf16, #tpu.memory_space<vmem>>, vector<1x16x16xbf16>
    %635 = vector.shape_cast %634 : vector<1x16x16xbf16> to vector<16x16xbf16>
    %c0_277 = arith.constant 0 : index
    %c0_278 = arith.constant 0 : index
    %c0_279 = arith.constant 0 : index
    %636 = vector.load %arg9[%c0_277, %c0_278, %c0_279] : memref<3x16x16xbf16, #tpu.memory_space<vmem>>, vector<1x16x16xbf16>
    %637 = vector.shape_cast %636 : vector<1x16x16xbf16> to vector<16x16xbf16>
    %c1_280 = arith.constant 1 : index
    %c0_281 = arith.constant 0 : index
    %c0_282 = arith.constant 0 : index
    %638 = vector.load %arg9[%c1_280, %c0_281, %c0_282] : memref<3x16x16xbf16, #tpu.memory_space<vmem>>, vector<1x16x16xbf16>
    %639 = vector.shape_cast %638 : vector<1x16x16xbf16> to vector<16x16xbf16>
    %c2_283 = arith.constant 2 : index
    %c0_284 = arith.constant 0 : index
    %c0_285 = arith.constant 0 : index
    %640 = vector.load %arg9[%c2_283, %c0_284, %c0_285] : memref<3x16x16xbf16, #tpu.memory_space<vmem>>, vector<1x16x16xbf16>
    %641 = vector.shape_cast %640 : vector<1x16x16xbf16> to vector<16x16xbf16>
    %c0_286 = arith.constant 0 : index
    %c0_287 = arith.constant 0 : index
    %c0_288 = arith.constant 0 : index
    %642 = vector.load %arg10[%c0_286, %c0_287, %c0_288] : memref<4x1x16xf32, #tpu.memory_space<vmem>>, vector<1x1x16xf32>
    %643 = vector.shape_cast %642 : vector<1x1x16xf32> to vector<1x16xf32>
    %c1_289 = arith.constant 1 : index
    %c0_290 = arith.constant 0 : index
    %c0_291 = arith.constant 0 : index
    %644 = vector.load %arg10[%c1_289, %c0_290, %c0_291] : memref<4x1x16xf32, #tpu.memory_space<vmem>>, vector<1x1x16xf32>
    %645 = vector.shape_cast %644 : vector<1x1x16xf32> to vector<1x16xf32>
    %c2_292 = arith.constant 2 : index
    %c0_293 = arith.constant 0 : index
    %c0_294 = arith.constant 0 : index
    %646 = vector.load %arg10[%c2_292, %c0_293, %c0_294] : memref<4x1x16xf32, #tpu.memory_space<vmem>>, vector<1x1x16xf32>
    %647 = vector.shape_cast %646 : vector<1x1x16xf32> to vector<1x16xf32>
    %c3_295 = arith.constant 3 : index
    %c0_296 = arith.constant 0 : index
    %c0_297 = arith.constant 0 : index
    %648 = vector.load %arg10[%c3_295, %c0_296, %c0_297] : memref<4x1x16xf32, #tpu.memory_space<vmem>>, vector<1x1x16xf32>
    %649 = vector.shape_cast %648 : vector<1x1x16xf32> to vector<1x16xf32>
    %c1_298 = arith.constant 1 : index
    %c0_299 = arith.constant 0 : index
    %c0_300 = arith.constant 0 : index
    %650 = vector.load %arg11[%c1_298, %c0_299, %c0_300] : memref<2x2x16xf32, #tpu.memory_space<vmem>>, vector<1x2x16xf32>
    %651 = vector.shape_cast %650 : vector<1x2x16xf32> to vector<2x16xf32>
    %652 = arith.truncf %346 : vector<2x16xf32> to vector<2x16xbf16>
    %cst_301 = arith.constant dense<0.000000e+00> : vector<2x16xf32>
    %653 = tpu.matmul %652, %631, %cst_301 {dimension_numbers = #tpu.dot_dimension_numbers<[1], [0], [0], [1], [0, 0, 1, 1], [], []>} : vector<2x16xbf16>, vector<16x16xbf16>, vector<2x16xf32> -> vector<2x16xf32>
    %654 = arith.truncf %651 : vector<2x16xf32> to vector<2x16xbf16>
    %cst_302 = arith.constant dense<0.000000e+00> : vector<2x16xf32>
    %655 = tpu.matmul %654, %637, %cst_302 {dimension_numbers = #tpu.dot_dimension_numbers<[1], [0], [0], [1], [0, 0, 1, 1], [], []>} : vector<2x16xbf16>, vector<16x16xbf16>, vector<2x16xf32> -> vector<2x16xf32>
    %656 = arith.addf %653, %655 : vector<2x16xf32>
    %657 = vector.broadcast %643 : vector<1x16xf32> to vector<2x16xf32>
    %658 = arith.addf %656, %657 : vector<2x16xf32>
    %659 = arith.negf %658 : vector<2x16xf32>
    %660 = math.exp %659 : vector<2x16xf32>
    %cst_303 = arith.constant 1.000000e+00 : f32
    %661 = vector.broadcast %cst_303 : f32 to vector<2x16xf32>
    %662 = arith.addf %661, %660 : vector<2x16xf32>
    %663 = arith.divf %661, %662 : vector<2x16xf32>
    %664 = arith.truncf %346 : vector<2x16xf32> to vector<2x16xbf16>
    %cst_304 = arith.constant dense<0.000000e+00> : vector<2x16xf32>
    %665 = tpu.matmul %664, %633, %cst_304 {dimension_numbers = #tpu.dot_dimension_numbers<[1], [0], [0], [1], [0, 0, 1, 1], [], []>} : vector<2x16xbf16>, vector<16x16xbf16>, vector<2x16xf32> -> vector<2x16xf32>
    %666 = arith.truncf %651 : vector<2x16xf32> to vector<2x16xbf16>
    %cst_305 = arith.constant dense<0.000000e+00> : vector<2x16xf32>
    %667 = tpu.matmul %666, %639, %cst_305 {dimension_numbers = #tpu.dot_dimension_numbers<[1], [0], [0], [1], [0, 0, 1, 1], [], []>} : vector<2x16xbf16>, vector<16x16xbf16>, vector<2x16xf32> -> vector<2x16xf32>
    %668 = arith.addf %665, %667 : vector<2x16xf32>
    %669 = vector.broadcast %645 : vector<1x16xf32> to vector<2x16xf32>
    %670 = arith.addf %668, %669 : vector<2x16xf32>
    %671 = arith.negf %670 : vector<2x16xf32>
    %672 = math.exp %671 : vector<2x16xf32>
    %cst_306 = arith.constant 1.000000e+00 : f32
    %673 = vector.broadcast %cst_306 : f32 to vector<2x16xf32>
    %674 = arith.addf %673, %672 : vector<2x16xf32>
    %675 = arith.divf %673, %674 : vector<2x16xf32>
    %676 = arith.truncf %346 : vector<2x16xf32> to vector<2x16xbf16>
    %cst_307 = arith.constant dense<0.000000e+00> : vector<2x16xf32>
    %677 = tpu.matmul %676, %635, %cst_307 {dimension_numbers = #tpu.dot_dimension_numbers<[1], [0], [0], [1], [0, 0, 1, 1], [], []>} : vector<2x16xbf16>, vector<16x16xbf16>, vector<2x16xf32> -> vector<2x16xf32>
    %678 = vector.broadcast %647 : vector<1x16xf32> to vector<2x16xf32>
    %679 = arith.addf %677, %678 : vector<2x16xf32>
    %680 = arith.truncf %651 : vector<2x16xf32> to vector<2x16xbf16>
    %cst_308 = arith.constant dense<0.000000e+00> : vector<2x16xf32>
    %681 = tpu.matmul %680, %641, %cst_308 {dimension_numbers = #tpu.dot_dimension_numbers<[1], [0], [0], [1], [0, 0, 1, 1], [], []>} : vector<2x16xbf16>, vector<16x16xbf16>, vector<2x16xf32> -> vector<2x16xf32>
    %682 = vector.broadcast %649 : vector<1x16xf32> to vector<2x16xf32>
    %683 = arith.addf %681, %682 : vector<2x16xf32>
    %684 = arith.mulf %663, %683 : vector<2x16xf32>
    %685 = arith.addf %679, %684 : vector<2x16xf32>
    %686 = math.tanh %685 : vector<2x16xf32>
    %cst_309 = arith.constant 1.000000e+00 : f32
    %687 = vector.broadcast %cst_309 : f32 to vector<2x16xf32>
    %688 = arith.subf %687, %675 : vector<2x16xf32>
    %689 = arith.mulf %688, %686 : vector<2x16xf32>
    %690 = arith.mulf %675, %651 : vector<2x16xf32>
    %691 = arith.addf %689, %690 : vector<2x16xf32>
    %692 = arith.truncf %386 : vector<2x16xf32> to vector<2x16xbf16>
    %cst_310 = arith.constant dense<0.000000e+00> : vector<2x16xf32>
    %693 = tpu.matmul %692, %631, %cst_310 {dimension_numbers = #tpu.dot_dimension_numbers<[1], [0], [0], [1], [0, 0, 1, 1], [], []>} : vector<2x16xbf16>, vector<16x16xbf16>, vector<2x16xf32> -> vector<2x16xf32>
    %694 = arith.truncf %691 : vector<2x16xf32> to vector<2x16xbf16>
    %cst_311 = arith.constant dense<0.000000e+00> : vector<2x16xf32>
    %695 = tpu.matmul %694, %637, %cst_311 {dimension_numbers = #tpu.dot_dimension_numbers<[1], [0], [0], [1], [0, 0, 1, 1], [], []>} : vector<2x16xbf16>, vector<16x16xbf16>, vector<2x16xf32> -> vector<2x16xf32>
    %696 = arith.addf %693, %695 : vector<2x16xf32>
    %697 = vector.broadcast %643 : vector<1x16xf32> to vector<2x16xf32>
    %698 = arith.addf %696, %697 : vector<2x16xf32>
    %699 = arith.negf %698 : vector<2x16xf32>
    %700 = math.exp %699 : vector<2x16xf32>
    %cst_312 = arith.constant 1.000000e+00 : f32
    %701 = vector.broadcast %cst_312 : f32 to vector<2x16xf32>
    %702 = arith.addf %701, %700 : vector<2x16xf32>
    %703 = arith.divf %701, %702 : vector<2x16xf32>
    %704 = arith.truncf %386 : vector<2x16xf32> to vector<2x16xbf16>
    %cst_313 = arith.constant dense<0.000000e+00> : vector<2x16xf32>
    %705 = tpu.matmul %704, %633, %cst_313 {dimension_numbers = #tpu.dot_dimension_numbers<[1], [0], [0], [1], [0, 0, 1, 1], [], []>} : vector<2x16xbf16>, vector<16x16xbf16>, vector<2x16xf32> -> vector<2x16xf32>
    %706 = arith.truncf %691 : vector<2x16xf32> to vector<2x16xbf16>
    %cst_314 = arith.constant dense<0.000000e+00> : vector<2x16xf32>
    %707 = tpu.matmul %706, %639, %cst_314 {dimension_numbers = #tpu.dot_dimension_numbers<[1], [0], [0], [1], [0, 0, 1, 1], [], []>} : vector<2x16xbf16>, vector<16x16xbf16>, vector<2x16xf32> -> vector<2x16xf32>
    %708 = arith.addf %705, %707 : vector<2x16xf32>
    %709 = vector.broadcast %645 : vector<1x16xf32> to vector<2x16xf32>
    %710 = arith.addf %708, %709 : vector<2x16xf32>
    %711 = arith.negf %710 : vector<2x16xf32>
    %712 = math.exp %711 : vector<2x16xf32>
    %cst_315 = arith.constant 1.000000e+00 : f32
    %713 = vector.broadcast %cst_315 : f32 to vector<2x16xf32>
    %714 = arith.addf %713, %712 : vector<2x16xf32>
    %715 = arith.divf %713, %714 : vector<2x16xf32>
    %716 = arith.truncf %386 : vector<2x16xf32> to vector<2x16xbf16>
    %cst_316 = arith.constant dense<0.000000e+00> : vector<2x16xf32>
    %717 = tpu.matmul %716, %635, %cst_316 {dimension_numbers = #tpu.dot_dimension_numbers<[1], [0], [0], [1], [0, 0, 1, 1], [], []>} : vector<2x16xbf16>, vector<16x16xbf16>, vector<2x16xf32> -> vector<2x16xf32>
    %718 = vector.broadcast %647 : vector<1x16xf32> to vector<2x16xf32>
    %719 = arith.addf %717, %718 : vector<2x16xf32>
    %720 = arith.truncf %691 : vector<2x16xf32> to vector<2x16xbf16>
    %cst_317 = arith.constant dense<0.000000e+00> : vector<2x16xf32>
    %721 = tpu.matmul %720, %641, %cst_317 {dimension_numbers = #tpu.dot_dimension_numbers<[1], [0], [0], [1], [0, 0, 1, 1], [], []>} : vector<2x16xbf16>, vector<16x16xbf16>, vector<2x16xf32> -> vector<2x16xf32>
    %722 = vector.broadcast %649 : vector<1x16xf32> to vector<2x16xf32>
    %723 = arith.addf %721, %722 : vector<2x16xf32>
    %724 = arith.mulf %703, %723 : vector<2x16xf32>
    %725 = arith.addf %719, %724 : vector<2x16xf32>
    %726 = math.tanh %725 : vector<2x16xf32>
    %cst_318 = arith.constant 1.000000e+00 : f32
    %727 = vector.broadcast %cst_318 : f32 to vector<2x16xf32>
    %728 = arith.subf %727, %715 : vector<2x16xf32>
    %729 = arith.mulf %728, %726 : vector<2x16xf32>
    %730 = arith.mulf %715, %691 : vector<2x16xf32>
    %731 = arith.addf %729, %730 : vector<2x16xf32>
    %732 = arith.truncf %426 : vector<2x16xf32> to vector<2x16xbf16>
    %cst_319 = arith.constant dense<0.000000e+00> : vector<2x16xf32>
    %733 = tpu.matmul %732, %631, %cst_319 {dimension_numbers = #tpu.dot_dimension_numbers<[1], [0], [0], [1], [0, 0, 1, 1], [], []>} : vector<2x16xbf16>, vector<16x16xbf16>, vector<2x16xf32> -> vector<2x16xf32>
    %734 = arith.truncf %731 : vector<2x16xf32> to vector<2x16xbf16>
    %cst_320 = arith.constant dense<0.000000e+00> : vector<2x16xf32>
    %735 = tpu.matmul %734, %637, %cst_320 {dimension_numbers = #tpu.dot_dimension_numbers<[1], [0], [0], [1], [0, 0, 1, 1], [], []>} : vector<2x16xbf16>, vector<16x16xbf16>, vector<2x16xf32> -> vector<2x16xf32>
    %736 = arith.addf %733, %735 : vector<2x16xf32>
    %737 = vector.broadcast %643 : vector<1x16xf32> to vector<2x16xf32>
    %738 = arith.addf %736, %737 : vector<2x16xf32>
    %739 = arith.negf %738 : vector<2x16xf32>
    %740 = math.exp %739 : vector<2x16xf32>
    %cst_321 = arith.constant 1.000000e+00 : f32
    %741 = vector.broadcast %cst_321 : f32 to vector<2x16xf32>
    %742 = arith.addf %741, %740 : vector<2x16xf32>
    %743 = arith.divf %741, %742 : vector<2x16xf32>
    %744 = arith.truncf %426 : vector<2x16xf32> to vector<2x16xbf16>
    %cst_322 = arith.constant dense<0.000000e+00> : vector<2x16xf32>
    %745 = tpu.matmul %744, %633, %cst_322 {dimension_numbers = #tpu.dot_dimension_numbers<[1], [0], [0], [1], [0, 0, 1, 1], [], []>} : vector<2x16xbf16>, vector<16x16xbf16>, vector<2x16xf32> -> vector<2x16xf32>
    %746 = arith.truncf %731 : vector<2x16xf32> to vector<2x16xbf16>
    %cst_323 = arith.constant dense<0.000000e+00> : vector<2x16xf32>
    %747 = tpu.matmul %746, %639, %cst_323 {dimension_numbers = #tpu.dot_dimension_numbers<[1], [0], [0], [1], [0, 0, 1, 1], [], []>} : vector<2x16xbf16>, vector<16x16xbf16>, vector<2x16xf32> -> vector<2x16xf32>
    %748 = arith.addf %745, %747 : vector<2x16xf32>
    %749 = vector.broadcast %645 : vector<1x16xf32> to vector<2x16xf32>
    %750 = arith.addf %748, %749 : vector<2x16xf32>
    %751 = arith.negf %750 : vector<2x16xf32>
    %752 = math.exp %751 : vector<2x16xf32>
    %cst_324 = arith.constant 1.000000e+00 : f32
    %753 = vector.broadcast %cst_324 : f32 to vector<2x16xf32>
    %754 = arith.addf %753, %752 : vector<2x16xf32>
    %755 = arith.divf %753, %754 : vector<2x16xf32>
    %756 = arith.truncf %426 : vector<2x16xf32> to vector<2x16xbf16>
    %cst_325 = arith.constant dense<0.000000e+00> : vector<2x16xf32>
    %757 = tpu.matmul %756, %635, %cst_325 {dimension_numbers = #tpu.dot_dimension_numbers<[1], [0], [0], [1], [0, 0, 1, 1], [], []>} : vector<2x16xbf16>, vector<16x16xbf16>, vector<2x16xf32> -> vector<2x16xf32>
    %758 = vector.broadcast %647 : vector<1x16xf32> to vector<2x16xf32>
    %759 = arith.addf %757, %758 : vector<2x16xf32>
    %760 = arith.truncf %731 : vector<2x16xf32> to vector<2x16xbf16>
    %cst_326 = arith.constant dense<0.000000e+00> : vector<2x16xf32>
    %761 = tpu.matmul %760, %641, %cst_326 {dimension_numbers = #tpu.dot_dimension_numbers<[1], [0], [0], [1], [0, 0, 1, 1], [], []>} : vector<2x16xbf16>, vector<16x16xbf16>, vector<2x16xf32> -> vector<2x16xf32>
    %762 = vector.broadcast %649 : vector<1x16xf32> to vector<2x16xf32>
    %763 = arith.addf %761, %762 : vector<2x16xf32>
    %764 = arith.mulf %743, %763 : vector<2x16xf32>
    %765 = arith.addf %759, %764 : vector<2x16xf32>
    %766 = math.tanh %765 : vector<2x16xf32>
    %cst_327 = arith.constant 1.000000e+00 : f32
    %767 = vector.broadcast %cst_327 : f32 to vector<2x16xf32>
    %768 = arith.subf %767, %755 : vector<2x16xf32>
    %769 = arith.mulf %768, %766 : vector<2x16xf32>
    %770 = arith.mulf %755, %731 : vector<2x16xf32>
    %771 = arith.addf %769, %770 : vector<2x16xf32>
    %772 = arith.truncf %466 : vector<2x16xf32> to vector<2x16xbf16>
    %cst_328 = arith.constant dense<0.000000e+00> : vector<2x16xf32>
    %773 = tpu.matmul %772, %631, %cst_328 {dimension_numbers = #tpu.dot_dimension_numbers<[1], [0], [0], [1], [0, 0, 1, 1], [], []>} : vector<2x16xbf16>, vector<16x16xbf16>, vector<2x16xf32> -> vector<2x16xf32>
    %774 = arith.truncf %771 : vector<2x16xf32> to vector<2x16xbf16>
    %cst_329 = arith.constant dense<0.000000e+00> : vector<2x16xf32>
    %775 = tpu.matmul %774, %637, %cst_329 {dimension_numbers = #tpu.dot_dimension_numbers<[1], [0], [0], [1], [0, 0, 1, 1], [], []>} : vector<2x16xbf16>, vector<16x16xbf16>, vector<2x16xf32> -> vector<2x16xf32>
    %776 = arith.addf %773, %775 : vector<2x16xf32>
    %777 = vector.broadcast %643 : vector<1x16xf32> to vector<2x16xf32>
    %778 = arith.addf %776, %777 : vector<2x16xf32>
    %779 = arith.negf %778 : vector<2x16xf32>
    %780 = math.exp %779 : vector<2x16xf32>
    %cst_330 = arith.constant 1.000000e+00 : f32
    %781 = vector.broadcast %cst_330 : f32 to vector<2x16xf32>
    %782 = arith.addf %781, %780 : vector<2x16xf32>
    %783 = arith.divf %781, %782 : vector<2x16xf32>
    %784 = arith.truncf %466 : vector<2x16xf32> to vector<2x16xbf16>
    %cst_331 = arith.constant dense<0.000000e+00> : vector<2x16xf32>
    %785 = tpu.matmul %784, %633, %cst_331 {dimension_numbers = #tpu.dot_dimension_numbers<[1], [0], [0], [1], [0, 0, 1, 1], [], []>} : vector<2x16xbf16>, vector<16x16xbf16>, vector<2x16xf32> -> vector<2x16xf32>
    %786 = arith.truncf %771 : vector<2x16xf32> to vector<2x16xbf16>
    %cst_332 = arith.constant dense<0.000000e+00> : vector<2x16xf32>
    %787 = tpu.matmul %786, %639, %cst_332 {dimension_numbers = #tpu.dot_dimension_numbers<[1], [0], [0], [1], [0, 0, 1, 1], [], []>} : vector<2x16xbf16>, vector<16x16xbf16>, vector<2x16xf32> -> vector<2x16xf32>
    %788 = arith.addf %785, %787 : vector<2x16xf32>
    %789 = vector.broadcast %645 : vector<1x16xf32> to vector<2x16xf32>
    %790 = arith.addf %788, %789 : vector<2x16xf32>
    %791 = arith.negf %790 : vector<2x16xf32>
    %792 = math.exp %791 : vector<2x16xf32>
    %cst_333 = arith.constant 1.000000e+00 : f32
    %793 = vector.broadcast %cst_333 : f32 to vector<2x16xf32>
    %794 = arith.addf %793, %792 : vector<2x16xf32>
    %795 = arith.divf %793, %794 : vector<2x16xf32>
    %796 = arith.truncf %466 : vector<2x16xf32> to vector<2x16xbf16>
    %cst_334 = arith.constant dense<0.000000e+00> : vector<2x16xf32>
    %797 = tpu.matmul %796, %635, %cst_334 {dimension_numbers = #tpu.dot_dimension_numbers<[1], [0], [0], [1], [0, 0, 1, 1], [], []>} : vector<2x16xbf16>, vector<16x16xbf16>, vector<2x16xf32> -> vector<2x16xf32>
    %798 = vector.broadcast %647 : vector<1x16xf32> to vector<2x16xf32>
    %799 = arith.addf %797, %798 : vector<2x16xf32>
    %800 = arith.truncf %771 : vector<2x16xf32> to vector<2x16xbf16>
    %cst_335 = arith.constant dense<0.000000e+00> : vector<2x16xf32>
    %801 = tpu.matmul %800, %641, %cst_335 {dimension_numbers = #tpu.dot_dimension_numbers<[1], [0], [0], [1], [0, 0, 1, 1], [], []>} : vector<2x16xbf16>, vector<16x16xbf16>, vector<2x16xf32> -> vector<2x16xf32>
    %802 = vector.broadcast %649 : vector<1x16xf32> to vector<2x16xf32>
    %803 = arith.addf %801, %802 : vector<2x16xf32>
    %804 = arith.mulf %783, %803 : vector<2x16xf32>
    %805 = arith.addf %799, %804 : vector<2x16xf32>
    %806 = math.tanh %805 : vector<2x16xf32>
    %cst_336 = arith.constant 1.000000e+00 : f32
    %807 = vector.broadcast %cst_336 : f32 to vector<2x16xf32>
    %808 = arith.subf %807, %795 : vector<2x16xf32>
    %809 = arith.mulf %808, %806 : vector<2x16xf32>
    %810 = arith.mulf %795, %771 : vector<2x16xf32>
    %811 = arith.addf %809, %810 : vector<2x16xf32>
    %812 = arith.truncf %506 : vector<2x16xf32> to vector<2x16xbf16>
    %cst_337 = arith.constant dense<0.000000e+00> : vector<2x16xf32>
    %813 = tpu.matmul %812, %631, %cst_337 {dimension_numbers = #tpu.dot_dimension_numbers<[1], [0], [0], [1], [0, 0, 1, 1], [], []>} : vector<2x16xbf16>, vector<16x16xbf16>, vector<2x16xf32> -> vector<2x16xf32>
    %814 = arith.truncf %811 : vector<2x16xf32> to vector<2x16xbf16>
    %cst_338 = arith.constant dense<0.000000e+00> : vector<2x16xf32>
    %815 = tpu.matmul %814, %637, %cst_338 {dimension_numbers = #tpu.dot_dimension_numbers<[1], [0], [0], [1], [0, 0, 1, 1], [], []>} : vector<2x16xbf16>, vector<16x16xbf16>, vector<2x16xf32> -> vector<2x16xf32>
    %816 = arith.addf %813, %815 : vector<2x16xf32>
    %817 = vector.broadcast %643 : vector<1x16xf32> to vector<2x16xf32>
    %818 = arith.addf %816, %817 : vector<2x16xf32>
    %819 = arith.negf %818 : vector<2x16xf32>
    %820 = math.exp %819 : vector<2x16xf32>
    %cst_339 = arith.constant 1.000000e+00 : f32
    %821 = vector.broadcast %cst_339 : f32 to vector<2x16xf32>
    %822 = arith.addf %821, %820 : vector<2x16xf32>
    %823 = arith.divf %821, %822 : vector<2x16xf32>
    %824 = arith.truncf %506 : vector<2x16xf32> to vector<2x16xbf16>
    %cst_340 = arith.constant dense<0.000000e+00> : vector<2x16xf32>
    %825 = tpu.matmul %824, %633, %cst_340 {dimension_numbers = #tpu.dot_dimension_numbers<[1], [0], [0], [1], [0, 0, 1, 1], [], []>} : vector<2x16xbf16>, vector<16x16xbf16>, vector<2x16xf32> -> vector<2x16xf32>
    %826 = arith.truncf %811 : vector<2x16xf32> to vector<2x16xbf16>
    %cst_341 = arith.constant dense<0.000000e+00> : vector<2x16xf32>
    %827 = tpu.matmul %826, %639, %cst_341 {dimension_numbers = #tpu.dot_dimension_numbers<[1], [0], [0], [1], [0, 0, 1, 1], [], []>} : vector<2x16xbf16>, vector<16x16xbf16>, vector<2x16xf32> -> vector<2x16xf32>
    %828 = arith.addf %825, %827 : vector<2x16xf32>
    %829 = vector.broadcast %645 : vector<1x16xf32> to vector<2x16xf32>
    %830 = arith.addf %828, %829 : vector<2x16xf32>
    %831 = arith.negf %830 : vector<2x16xf32>
    %832 = math.exp %831 : vector<2x16xf32>
    %cst_342 = arith.constant 1.000000e+00 : f32
    %833 = vector.broadcast %cst_342 : f32 to vector<2x16xf32>
    %834 = arith.addf %833, %832 : vector<2x16xf32>
    %835 = arith.divf %833, %834 : vector<2x16xf32>
    %836 = arith.truncf %506 : vector<2x16xf32> to vector<2x16xbf16>
    %cst_343 = arith.constant dense<0.000000e+00> : vector<2x16xf32>
    %837 = tpu.matmul %836, %635, %cst_343 {dimension_numbers = #tpu.dot_dimension_numbers<[1], [0], [0], [1], [0, 0, 1, 1], [], []>} : vector<2x16xbf16>, vector<16x16xbf16>, vector<2x16xf32> -> vector<2x16xf32>
    %838 = vector.broadcast %647 : vector<1x16xf32> to vector<2x16xf32>
    %839 = arith.addf %837, %838 : vector<2x16xf32>
    %840 = arith.truncf %811 : vector<2x16xf32> to vector<2x16xbf16>
    %cst_344 = arith.constant dense<0.000000e+00> : vector<2x16xf32>
    %841 = tpu.matmul %840, %641, %cst_344 {dimension_numbers = #tpu.dot_dimension_numbers<[1], [0], [0], [1], [0, 0, 1, 1], [], []>} : vector<2x16xbf16>, vector<16x16xbf16>, vector<2x16xf32> -> vector<2x16xf32>
    %842 = vector.broadcast %649 : vector<1x16xf32> to vector<2x16xf32>
    %843 = arith.addf %841, %842 : vector<2x16xf32>
    %844 = arith.mulf %823, %843 : vector<2x16xf32>
    %845 = arith.addf %839, %844 : vector<2x16xf32>
    %846 = math.tanh %845 : vector<2x16xf32>
    %cst_345 = arith.constant 1.000000e+00 : f32
    %847 = vector.broadcast %cst_345 : f32 to vector<2x16xf32>
    %848 = arith.subf %847, %835 : vector<2x16xf32>
    %849 = arith.mulf %848, %846 : vector<2x16xf32>
    %850 = arith.mulf %835, %811 : vector<2x16xf32>
    %851 = arith.addf %849, %850 : vector<2x16xf32>
    %852 = arith.truncf %546 : vector<2x16xf32> to vector<2x16xbf16>
    %cst_346 = arith.constant dense<0.000000e+00> : vector<2x16xf32>
    %853 = tpu.matmul %852, %631, %cst_346 {dimension_numbers = #tpu.dot_dimension_numbers<[1], [0], [0], [1], [0, 0, 1, 1], [], []>} : vector<2x16xbf16>, vector<16x16xbf16>, vector<2x16xf32> -> vector<2x16xf32>
    %854 = arith.truncf %851 : vector<2x16xf32> to vector<2x16xbf16>
    %cst_347 = arith.constant dense<0.000000e+00> : vector<2x16xf32>
    %855 = tpu.matmul %854, %637, %cst_347 {dimension_numbers = #tpu.dot_dimension_numbers<[1], [0], [0], [1], [0, 0, 1, 1], [], []>} : vector<2x16xbf16>, vector<16x16xbf16>, vector<2x16xf32> -> vector<2x16xf32>
    %856 = arith.addf %853, %855 : vector<2x16xf32>
    %857 = vector.broadcast %643 : vector<1x16xf32> to vector<2x16xf32>
    %858 = arith.addf %856, %857 : vector<2x16xf32>
    %859 = arith.negf %858 : vector<2x16xf32>
    %860 = math.exp %859 : vector<2x16xf32>
    %cst_348 = arith.constant 1.000000e+00 : f32
    %861 = vector.broadcast %cst_348 : f32 to vector<2x16xf32>
    %862 = arith.addf %861, %860 : vector<2x16xf32>
    %863 = arith.divf %861, %862 : vector<2x16xf32>
    %864 = arith.truncf %546 : vector<2x16xf32> to vector<2x16xbf16>
    %cst_349 = arith.constant dense<0.000000e+00> : vector<2x16xf32>
    %865 = tpu.matmul %864, %633, %cst_349 {dimension_numbers = #tpu.dot_dimension_numbers<[1], [0], [0], [1], [0, 0, 1, 1], [], []>} : vector<2x16xbf16>, vector<16x16xbf16>, vector<2x16xf32> -> vector<2x16xf32>
    %866 = arith.truncf %851 : vector<2x16xf32> to vector<2x16xbf16>
    %cst_350 = arith.constant dense<0.000000e+00> : vector<2x16xf32>
    %867 = tpu.matmul %866, %639, %cst_350 {dimension_numbers = #tpu.dot_dimension_numbers<[1], [0], [0], [1], [0, 0, 1, 1], [], []>} : vector<2x16xbf16>, vector<16x16xbf16>, vector<2x16xf32> -> vector<2x16xf32>
    %868 = arith.addf %865, %867 : vector<2x16xf32>
    %869 = vector.broadcast %645 : vector<1x16xf32> to vector<2x16xf32>
    %870 = arith.addf %868, %869 : vector<2x16xf32>
    %871 = arith.negf %870 : vector<2x16xf32>
    %872 = math.exp %871 : vector<2x16xf32>
    %cst_351 = arith.constant 1.000000e+00 : f32
    %873 = vector.broadcast %cst_351 : f32 to vector<2x16xf32>
    %874 = arith.addf %873, %872 : vector<2x16xf32>
    %875 = arith.divf %873, %874 : vector<2x16xf32>
    %876 = arith.truncf %546 : vector<2x16xf32> to vector<2x16xbf16>
    %cst_352 = arith.constant dense<0.000000e+00> : vector<2x16xf32>
    %877 = tpu.matmul %876, %635, %cst_352 {dimension_numbers = #tpu.dot_dimension_numbers<[1], [0], [0], [1], [0, 0, 1, 1], [], []>} : vector<2x16xbf16>, vector<16x16xbf16>, vector<2x16xf32> -> vector<2x16xf32>
    %878 = vector.broadcast %647 : vector<1x16xf32> to vector<2x16xf32>
    %879 = arith.addf %877, %878 : vector<2x16xf32>
    %880 = arith.truncf %851 : vector<2x16xf32> to vector<2x16xbf16>
    %cst_353 = arith.constant dense<0.000000e+00> : vector<2x16xf32>
    %881 = tpu.matmul %880, %641, %cst_353 {dimension_numbers = #tpu.dot_dimension_numbers<[1], [0], [0], [1], [0, 0, 1, 1], [], []>} : vector<2x16xbf16>, vector<16x16xbf16>, vector<2x16xf32> -> vector<2x16xf32>
    %882 = vector.broadcast %649 : vector<1x16xf32> to vector<2x16xf32>
    %883 = arith.addf %881, %882 : vector<2x16xf32>
    %884 = arith.mulf %863, %883 : vector<2x16xf32>
    %885 = arith.addf %879, %884 : vector<2x16xf32>
    %886 = math.tanh %885 : vector<2x16xf32>
    %cst_354 = arith.constant 1.000000e+00 : f32
    %887 = vector.broadcast %cst_354 : f32 to vector<2x16xf32>
    %888 = arith.subf %887, %875 : vector<2x16xf32>
    %889 = arith.mulf %888, %886 : vector<2x16xf32>
    %890 = arith.mulf %875, %851 : vector<2x16xf32>
    %891 = arith.addf %889, %890 : vector<2x16xf32>
    %892 = arith.truncf %586 : vector<2x16xf32> to vector<2x16xbf16>
    %cst_355 = arith.constant dense<0.000000e+00> : vector<2x16xf32>
    %893 = tpu.matmul %892, %631, %cst_355 {dimension_numbers = #tpu.dot_dimension_numbers<[1], [0], [0], [1], [0, 0, 1, 1], [], []>} : vector<2x16xbf16>, vector<16x16xbf16>, vector<2x16xf32> -> vector<2x16xf32>
    %894 = arith.truncf %891 : vector<2x16xf32> to vector<2x16xbf16>
    %cst_356 = arith.constant dense<0.000000e+00> : vector<2x16xf32>
    %895 = tpu.matmul %894, %637, %cst_356 {dimension_numbers = #tpu.dot_dimension_numbers<[1], [0], [0], [1], [0, 0, 1, 1], [], []>} : vector<2x16xbf16>, vector<16x16xbf16>, vector<2x16xf32> -> vector<2x16xf32>
    %896 = arith.addf %893, %895 : vector<2x16xf32>
    %897 = vector.broadcast %643 : vector<1x16xf32> to vector<2x16xf32>
    %898 = arith.addf %896, %897 : vector<2x16xf32>
    %899 = arith.negf %898 : vector<2x16xf32>
    %900 = math.exp %899 : vector<2x16xf32>
    %cst_357 = arith.constant 1.000000e+00 : f32
    %901 = vector.broadcast %cst_357 : f32 to vector<2x16xf32>
    %902 = arith.addf %901, %900 : vector<2x16xf32>
    %903 = arith.divf %901, %902 : vector<2x16xf32>
    %904 = arith.truncf %586 : vector<2x16xf32> to vector<2x16xbf16>
    %cst_358 = arith.constant dense<0.000000e+00> : vector<2x16xf32>
    %905 = tpu.matmul %904, %633, %cst_358 {dimension_numbers = #tpu.dot_dimension_numbers<[1], [0], [0], [1], [0, 0, 1, 1], [], []>} : vector<2x16xbf16>, vector<16x16xbf16>, vector<2x16xf32> -> vector<2x16xf32>
    %906 = arith.truncf %891 : vector<2x16xf32> to vector<2x16xbf16>
    %cst_359 = arith.constant dense<0.000000e+00> : vector<2x16xf32>
    %907 = tpu.matmul %906, %639, %cst_359 {dimension_numbers = #tpu.dot_dimension_numbers<[1], [0], [0], [1], [0, 0, 1, 1], [], []>} : vector<2x16xbf16>, vector<16x16xbf16>, vector<2x16xf32> -> vector<2x16xf32>
    %908 = arith.addf %905, %907 : vector<2x16xf32>
    %909 = vector.broadcast %645 : vector<1x16xf32> to vector<2x16xf32>
    %910 = arith.addf %908, %909 : vector<2x16xf32>
    %911 = arith.negf %910 : vector<2x16xf32>
    %912 = math.exp %911 : vector<2x16xf32>
    %cst_360 = arith.constant 1.000000e+00 : f32
    %913 = vector.broadcast %cst_360 : f32 to vector<2x16xf32>
    %914 = arith.addf %913, %912 : vector<2x16xf32>
    %915 = arith.divf %913, %914 : vector<2x16xf32>
    %916 = arith.truncf %586 : vector<2x16xf32> to vector<2x16xbf16>
    %cst_361 = arith.constant dense<0.000000e+00> : vector<2x16xf32>
    %917 = tpu.matmul %916, %635, %cst_361 {dimension_numbers = #tpu.dot_dimension_numbers<[1], [0], [0], [1], [0, 0, 1, 1], [], []>} : vector<2x16xbf16>, vector<16x16xbf16>, vector<2x16xf32> -> vector<2x16xf32>
    %918 = vector.broadcast %647 : vector<1x16xf32> to vector<2x16xf32>
    %919 = arith.addf %917, %918 : vector<2x16xf32>
    %920 = arith.truncf %891 : vector<2x16xf32> to vector<2x16xbf16>
    %cst_362 = arith.constant dense<0.000000e+00> : vector<2x16xf32>
    %921 = tpu.matmul %920, %641, %cst_362 {dimension_numbers = #tpu.dot_dimension_numbers<[1], [0], [0], [1], [0, 0, 1, 1], [], []>} : vector<2x16xbf16>, vector<16x16xbf16>, vector<2x16xf32> -> vector<2x16xf32>
    %922 = vector.broadcast %649 : vector<1x16xf32> to vector<2x16xf32>
    %923 = arith.addf %921, %922 : vector<2x16xf32>
    %924 = arith.mulf %903, %923 : vector<2x16xf32>
    %925 = arith.addf %919, %924 : vector<2x16xf32>
    %926 = math.tanh %925 : vector<2x16xf32>
    %cst_363 = arith.constant 1.000000e+00 : f32
    %927 = vector.broadcast %cst_363 : f32 to vector<2x16xf32>
    %928 = arith.subf %927, %915 : vector<2x16xf32>
    %929 = arith.mulf %928, %926 : vector<2x16xf32>
    %930 = arith.mulf %915, %891 : vector<2x16xf32>
    %931 = arith.addf %929, %930 : vector<2x16xf32>
    %932 = arith.truncf %626 : vector<2x16xf32> to vector<2x16xbf16>
    %cst_364 = arith.constant dense<0.000000e+00> : vector<2x16xf32>
    %933 = tpu.matmul %932, %631, %cst_364 {dimension_numbers = #tpu.dot_dimension_numbers<[1], [0], [0], [1], [0, 0, 1, 1], [], []>} : vector<2x16xbf16>, vector<16x16xbf16>, vector<2x16xf32> -> vector<2x16xf32>
    %934 = arith.truncf %931 : vector<2x16xf32> to vector<2x16xbf16>
    %cst_365 = arith.constant dense<0.000000e+00> : vector<2x16xf32>
    %935 = tpu.matmul %934, %637, %cst_365 {dimension_numbers = #tpu.dot_dimension_numbers<[1], [0], [0], [1], [0, 0, 1, 1], [], []>} : vector<2x16xbf16>, vector<16x16xbf16>, vector<2x16xf32> -> vector<2x16xf32>
    %936 = arith.addf %933, %935 : vector<2x16xf32>
    %937 = vector.broadcast %643 : vector<1x16xf32> to vector<2x16xf32>
    %938 = arith.addf %936, %937 : vector<2x16xf32>
    %939 = arith.negf %938 : vector<2x16xf32>
    %940 = math.exp %939 : vector<2x16xf32>
    %cst_366 = arith.constant 1.000000e+00 : f32
    %941 = vector.broadcast %cst_366 : f32 to vector<2x16xf32>
    %942 = arith.addf %941, %940 : vector<2x16xf32>
    %943 = arith.divf %941, %942 : vector<2x16xf32>
    %944 = arith.truncf %626 : vector<2x16xf32> to vector<2x16xbf16>
    %cst_367 = arith.constant dense<0.000000e+00> : vector<2x16xf32>
    %945 = tpu.matmul %944, %633, %cst_367 {dimension_numbers = #tpu.dot_dimension_numbers<[1], [0], [0], [1], [0, 0, 1, 1], [], []>} : vector<2x16xbf16>, vector<16x16xbf16>, vector<2x16xf32> -> vector<2x16xf32>
    %946 = arith.truncf %931 : vector<2x16xf32> to vector<2x16xbf16>
    %cst_368 = arith.constant dense<0.000000e+00> : vector<2x16xf32>
    %947 = tpu.matmul %946, %639, %cst_368 {dimension_numbers = #tpu.dot_dimension_numbers<[1], [0], [0], [1], [0, 0, 1, 1], [], []>} : vector<2x16xbf16>, vector<16x16xbf16>, vector<2x16xf32> -> vector<2x16xf32>
    %948 = arith.addf %945, %947 : vector<2x16xf32>
    %949 = vector.broadcast %645 : vector<1x16xf32> to vector<2x16xf32>
    %950 = arith.addf %948, %949 : vector<2x16xf32>
    %951 = arith.negf %950 : vector<2x16xf32>
    %952 = math.exp %951 : vector<2x16xf32>
    %cst_369 = arith.constant 1.000000e+00 : f32
    %953 = vector.broadcast %cst_369 : f32 to vector<2x16xf32>
    %954 = arith.addf %953, %952 : vector<2x16xf32>
    %955 = arith.divf %953, %954 : vector<2x16xf32>
    %956 = arith.truncf %626 : vector<2x16xf32> to vector<2x16xbf16>
    %cst_370 = arith.constant dense<0.000000e+00> : vector<2x16xf32>
    %957 = tpu.matmul %956, %635, %cst_370 {dimension_numbers = #tpu.dot_dimension_numbers<[1], [0], [0], [1], [0, 0, 1, 1], [], []>} : vector<2x16xbf16>, vector<16x16xbf16>, vector<2x16xf32> -> vector<2x16xf32>
    %958 = vector.broadcast %647 : vector<1x16xf32> to vector<2x16xf32>
    %959 = arith.addf %957, %958 : vector<2x16xf32>
    %960 = arith.truncf %931 : vector<2x16xf32> to vector<2x16xbf16>
    %cst_371 = arith.constant dense<0.000000e+00> : vector<2x16xf32>
    %961 = tpu.matmul %960, %641, %cst_371 {dimension_numbers = #tpu.dot_dimension_numbers<[1], [0], [0], [1], [0, 0, 1, 1], [], []>} : vector<2x16xbf16>, vector<16x16xbf16>, vector<2x16xf32> -> vector<2x16xf32>
    %962 = vector.broadcast %649 : vector<1x16xf32> to vector<2x16xf32>
    %963 = arith.addf %961, %962 : vector<2x16xf32>
    %964 = arith.mulf %943, %963 : vector<2x16xf32>
    %965 = arith.addf %959, %964 : vector<2x16xf32>
    %966 = math.tanh %965 : vector<2x16xf32>
    %cst_372 = arith.constant 1.000000e+00 : f32
    %967 = vector.broadcast %cst_372 : f32 to vector<2x16xf32>
    %968 = arith.subf %967, %955 : vector<2x16xf32>
    %969 = arith.mulf %968, %966 : vector<2x16xf32>
    %970 = arith.mulf %955, %931 : vector<2x16xf32>
    %971 = arith.addf %969, %970 : vector<2x16xf32>
    %c1_373 = arith.constant 1 : index
    %c0_374 = arith.constant 0 : index
    %c0_375 = arith.constant 0 : index
    %972 = vector.load %arg17[%c1_373, %c0_374, %c0_375] : memref<2x2x16xf32, #tpu.memory_space<vmem>>, vector<1x2x16xf32>
    %973 = vector.shape_cast %972 : vector<1x2x16xf32> to vector<2x16xf32>
    %974 = vector.shape_cast %971 : vector<2x16xf32> to vector<1x2x16xf32>
    tpu.vector_store %arg17[%c1_373, %c0_374, %c0_375], %974 {strides = array<i32>} : memref<2x2x16xf32, #tpu.memory_space<vmem>>, vector<1x2x16xf32>,
    %cst_376 = arith.constant 0.000000e+00 : f32
    %975 = vector.broadcast %cst_376 : f32 to vector<2x16xf32>
    %976 = arith.maximumf %691, %975 : vector<2x16xf32>
    %c0_377 = arith.constant 0 : index
    %c0_378 = arith.constant 0 : index
    %c0_379 = arith.constant 0 : index
    %977 = vector.load %arg12[%c0_377, %c0_378, %c0_379] : memref<8x16x512xbf16, #tpu.memory_space<vmem>>, vector<1x16x512xbf16>
    %978 = vector.shape_cast %977 : vector<1x16x512xbf16> to vector<16x512xbf16>
    %979 = arith.truncf %976 : vector<2x16xf32> to vector<2x16xbf16>
    %cst_380 = arith.constant dense<0.000000e+00> : vector<2x512xf32>
    %980 = tpu.matmul %979, %978, %cst_380 {dimension_numbers = #tpu.dot_dimension_numbers<[1], [0], [0], [1], [0, 0, 1, 1], [], []>} : vector<2x16xbf16>, vector<16x512xbf16>, vector<2x512xf32> -> vector<2x512xf32>
    %cst_381 = arith.constant 0.000000e+00 : f32
    %981 = vector.broadcast %cst_381 : f32 to vector<2x16xf32>
    %982 = arith.maximumf %731, %981 : vector<2x16xf32>
    %c1_382 = arith.constant 1 : index
    %c0_383 = arith.constant 0 : index
    %c0_384 = arith.constant 0 : index
    %983 = vector.load %arg12[%c1_382, %c0_383, %c0_384] : memref<8x16x512xbf16, #tpu.memory_space<vmem>>, vector<1x16x512xbf16>
    %984 = vector.shape_cast %983 : vector<1x16x512xbf16> to vector<16x512xbf16>
    %985 = arith.truncf %982 : vector<2x16xf32> to vector<2x16xbf16>
    %cst_385 = arith.constant dense<0.000000e+00> : vector<2x512xf32>
    %986 = tpu.matmul %985, %984, %cst_385 {dimension_numbers = #tpu.dot_dimension_numbers<[1], [0], [0], [1], [0, 0, 1, 1], [], []>} : vector<2x16xbf16>, vector<16x512xbf16>, vector<2x512xf32> -> vector<2x512xf32>
    %987 = arith.addf %980, %986 : vector<2x512xf32>
    %cst_386 = arith.constant 0.000000e+00 : f32
    %988 = vector.broadcast %cst_386 : f32 to vector<2x16xf32>
    %989 = arith.maximumf %771, %988 : vector<2x16xf32>
    %c2_387 = arith.constant 2 : index
    %c0_388 = arith.constant 0 : index
    %c0_389 = arith.constant 0 : index
    %990 = vector.load %arg12[%c2_387, %c0_388, %c0_389] : memref<8x16x512xbf16, #tpu.memory_space<vmem>>, vector<1x16x512xbf16>
    %991 = vector.shape_cast %990 : vector<1x16x512xbf16> to vector<16x512xbf16>
    %992 = arith.truncf %989 : vector<2x16xf32> to vector<2x16xbf16>
    %cst_390 = arith.constant dense<0.000000e+00> : vector<2x512xf32>
    %993 = tpu.matmul %992, %991, %cst_390 {dimension_numbers = #tpu.dot_dimension_numbers<[1], [0], [0], [1], [0, 0, 1, 1], [], []>} : vector<2x16xbf16>, vector<16x512xbf16>, vector<2x512xf32> -> vector<2x512xf32>
    %994 = arith.addf %987, %993 : vector<2x512xf32>
    %cst_391 = arith.constant 0.000000e+00 : f32
    %995 = vector.broadcast %cst_391 : f32 to vector<2x16xf32>
    %996 = arith.maximumf %811, %995 : vector<2x16xf32>
    %c3_392 = arith.constant 3 : index
    %c0_393 = arith.constant 0 : index
    %c0_394 = arith.constant 0 : index
    %997 = vector.load %arg12[%c3_392, %c0_393, %c0_394] : memref<8x16x512xbf16, #tpu.memory_space<vmem>>, vector<1x16x512xbf16>
    %998 = vector.shape_cast %997 : vector<1x16x512xbf16> to vector<16x512xbf16>
    %999 = arith.truncf %996 : vector<2x16xf32> to vector<2x16xbf16>
    %cst_395 = arith.constant dense<0.000000e+00> : vector<2x512xf32>
    %1000 = tpu.matmul %999, %998, %cst_395 {dimension_numbers = #tpu.dot_dimension_numbers<[1], [0], [0], [1], [0, 0, 1, 1], [], []>} : vector<2x16xbf16>, vector<16x512xbf16>, vector<2x512xf32> -> vector<2x512xf32>
    %1001 = arith.addf %994, %1000 : vector<2x512xf32>
    %cst_396 = arith.constant 0.000000e+00 : f32
    %1002 = vector.broadcast %cst_396 : f32 to vector<2x16xf32>
    %1003 = arith.maximumf %851, %1002 : vector<2x16xf32>
    %c4 = arith.constant 4 : index
    %c0_397 = arith.constant 0 : index
    %c0_398 = arith.constant 0 : index
    %1004 = vector.load %arg12[%c4, %c0_397, %c0_398] : memref<8x16x512xbf16, #tpu.memory_space<vmem>>, vector<1x16x512xbf16>
    %1005 = vector.shape_cast %1004 : vector<1x16x512xbf16> to vector<16x512xbf16>
    %1006 = arith.truncf %1003 : vector<2x16xf32> to vector<2x16xbf16>
    %cst_399 = arith.constant dense<0.000000e+00> : vector<2x512xf32>
    %1007 = tpu.matmul %1006, %1005, %cst_399 {dimension_numbers = #tpu.dot_dimension_numbers<[1], [0], [0], [1], [0, 0, 1, 1], [], []>} : vector<2x16xbf16>, vector<16x512xbf16>, vector<2x512xf32> -> vector<2x512xf32>
    %1008 = arith.addf %1001, %1007 : vector<2x512xf32>
    %cst_400 = arith.constant 0.000000e+00 : f32
    %1009 = vector.broadcast %cst_400 : f32 to vector<2x16xf32>
    %1010 = arith.maximumf %891, %1009 : vector<2x16xf32>
    %c5 = arith.constant 5 : index
    %c0_401 = arith.constant 0 : index
    %c0_402 = arith.constant 0 : index
    %1011 = vector.load %arg12[%c5, %c0_401, %c0_402] : memref<8x16x512xbf16, #tpu.memory_space<vmem>>, vector<1x16x512xbf16>
    %1012 = vector.shape_cast %1011 : vector<1x16x512xbf16> to vector<16x512xbf16>
    %1013 = arith.truncf %1010 : vector<2x16xf32> to vector<2x16xbf16>
    %cst_403 = arith.constant dense<0.000000e+00> : vector<2x512xf32>
    %1014 = tpu.matmul %1013, %1012, %cst_403 {dimension_numbers = #tpu.dot_dimension_numbers<[1], [0], [0], [1], [0, 0, 1, 1], [], []>} : vector<2x16xbf16>, vector<16x512xbf16>, vector<2x512xf32> -> vector<2x512xf32>
    %1015 = arith.addf %1008, %1014 : vector<2x512xf32>
    %cst_404 = arith.constant 0.000000e+00 : f32
    %1016 = vector.broadcast %cst_404 : f32 to vector<2x16xf32>
    %1017 = arith.maximumf %931, %1016 : vector<2x16xf32>
    %c6 = arith.constant 6 : index
    %c0_405 = arith.constant 0 : index
    %c0_406 = arith.constant 0 : index
    %1018 = vector.load %arg12[%c6, %c0_405, %c0_406] : memref<8x16x512xbf16, #tpu.memory_space<vmem>>, vector<1x16x512xbf16>
    %1019 = vector.shape_cast %1018 : vector<1x16x512xbf16> to vector<16x512xbf16>
    %1020 = arith.truncf %1017 : vector<2x16xf32> to vector<2x16xbf16>
    %cst_407 = arith.constant dense<0.000000e+00> : vector<2x512xf32>
    %1021 = tpu.matmul %1020, %1019, %cst_407 {dimension_numbers = #tpu.dot_dimension_numbers<[1], [0], [0], [1], [0, 0, 1, 1], [], []>} : vector<2x16xbf16>, vector<16x512xbf16>, vector<2x512xf32> -> vector<2x512xf32>
    %1022 = arith.addf %1015, %1021 : vector<2x512xf32>
    %cst_408 = arith.constant 0.000000e+00 : f32
    %1023 = vector.broadcast %cst_408 : f32 to vector<2x16xf32>
    %1024 = arith.maximumf %971, %1023 : vector<2x16xf32>
    %c7 = arith.constant 7 : index
    %c0_409 = arith.constant 0 : index
    %c0_410 = arith.constant 0 : index
    %1025 = vector.load %arg12[%c7, %c0_409, %c0_410] : memref<8x16x512xbf16, #tpu.memory_space<vmem>>, vector<1x16x512xbf16>
    %1026 = vector.shape_cast %1025 : vector<1x16x512xbf16> to vector<16x512xbf16>
    %1027 = arith.truncf %1024 : vector<2x16xf32> to vector<2x16xbf16>
    %cst_411 = arith.constant dense<0.000000e+00> : vector<2x512xf32>
    %1028 = tpu.matmul %1027, %1026, %cst_411 {dimension_numbers = #tpu.dot_dimension_numbers<[1], [0], [0], [1], [0, 0, 1, 1], [], []>} : vector<2x16xbf16>, vector<16x512xbf16>, vector<2x512xf32> -> vector<2x512xf32>
    %1029 = arith.addf %1022, %1028 : vector<2x512xf32>
    %c0_412 = arith.constant 0 : index
    %c0_413 = arith.constant 0 : index
    %1030 = vector.load %arg13[%c0_412, %c0_413] : memref<1x512xf32, #tpu.memory_space<vmem>>, vector<1x512xf32>
    %1031 = vector.broadcast %1030 : vector<1x512xf32> to vector<2x512xf32>
    %1032 = arith.addf %1029, %1031 : vector<2x512xf32>
    %cst_414 = arith.constant 0.000000e+00 : f32
    %1033 = vector.broadcast %cst_414 : f32 to vector<2x512xf32>
    %1034 = arith.maximumf %1032, %1033 : vector<2x512xf32>
    %c0_415 = arith.constant 0 : index
    %c0_416 = arith.constant 0 : index
    %1035 = vector.load %arg14[%c0_415, %c0_416] : memref<512x4xbf16, #tpu.memory_space<vmem>>, vector<512x4xbf16>
    %1036 = arith.truncf %1034 : vector<2x512xf32> to vector<2x512xbf16>
    %cst_417 = arith.constant dense<0.000000e+00> : vector<2x4xf32>
    %1037 = tpu.matmul %1036, %1035, %cst_417 {dimension_numbers = #tpu.dot_dimension_numbers<[1], [0], [0], [1], [0, 0, 1, 1], [], []>} : vector<2x512xbf16>, vector<512x4xbf16>, vector<2x4xf32> -> vector<2x4xf32>
    %c0_418 = arith.constant 0 : index
    %c0_419 = arith.constant 0 : index
    %1038 = vector.load %arg15[%c0_418, %c0_419] : memref<1x4xf32, #tpu.memory_space<vmem>>, vector<1x4xf32>
    %1039 = vector.broadcast %1038 : vector<1x4xf32> to vector<2x4xf32>
    %1040 = arith.addf %1037, %1039 : vector<2x4xf32>
    %c0_420 = arith.constant 0 : index
    %c0_421 = arith.constant 0 : index
    %1041 = vector.load %arg16[%c0_420, %c0_421] : memref<2x4xf32, #tpu.memory_space<vmem>>, vector<2x4xf32>
    tpu.vector_store %arg16[%c0_420, %c0_421], %1040 {strides = array<i32>} : memref<2x4xf32, #tpu.memory_space<vmem>>, vector<2x4xf32>,
    return
  }
  func.func @transform_0(%arg0: i32) -> (i32, i32, i32, i32) {
    %c0_i32 = arith.constant 0 : i32
    %c0_i32_0 = arith.constant 0 : i32
    %c0_i32_1 = arith.constant 0 : i32
    %c0_i32_2 = arith.constant 0 : i32
    %c0_i32_3 = arith.constant 0 : i32
    return %c0_i32, %c0_i32_0, %c0_i32_1, %c0_i32_2 : i32, i32, i32, i32
  }
  func.func @transform_1(%arg0: i32) -> (i32, i32, i32, i32) {
    %c0_i32 = arith.constant 0 : i32
    %c0_i32_0 = arith.constant 0 : i32
    %c0_i32_1 = arith.constant 0 : i32
    %c0_i32_2 = arith.constant 0 : i32
    %c0_i32_3 = arith.constant 0 : i32
    return %c0_i32, %c0_i32_0, %c0_i32_1, %c0_i32_2 : i32, i32, i32, i32
  }
  func.func @transform_2(%arg0: i32) -> (i32, i32, i32, i32) {
    %c0_i32 = arith.constant 0 : i32
    %c0_i32_0 = arith.constant 0 : i32
    %c0_i32_1 = arith.constant 0 : i32
    %c0_i32_2 = arith.constant 0 : i32
    %c0_i32_3 = arith.constant 0 : i32
    return %c0_i32, %c0_i32_0, %c0_i32_1, %c0_i32_2 : i32, i32, i32, i32
  }
  func.func @transform_3(%arg0: i32) -> (i32, i32, i32, i32) {
    %c0_i32 = arith.constant 0 : i32
    %c0_i32_0 = arith.constant 0 : i32
    %c0_i32_1 = arith.constant 0 : i32
    %c0_i32_2 = arith.constant 0 : i32
    %c0_i32_3 = arith.constant 0 : i32
    return %c0_i32, %c0_i32_0, %c0_i32_1, %c0_i32_2 : i32, i32, i32, i32
  }
  func.func @transform_4(%arg0: i32) -> (i32, i32, i32) {
    %c0_i32 = arith.constant 0 : i32
    %c0_i32_0 = arith.constant 0 : i32
    %c0_i32_1 = arith.constant 0 : i32
    %c0_i32_2 = arith.constant 0 : i32
    return %c0_i32, %c0_i32_0, %c0_i32_1 : i32, i32, i32
  }
  func.func @transform_5(%arg0: i32) -> (i32, i32, i32) {
    %c0_i32 = arith.constant 0 : i32
    %c0_i32_0 = arith.constant 0 : i32
    %c0_i32_1 = arith.constant 0 : i32
    %c0_i32_2 = arith.constant 0 : i32
    return %c0_i32, %c0_i32_0, %c0_i32_1 : i32, i32, i32
  }
  func.func @transform_6(%arg0: i32) -> (i32, i32, i32) {
    %c0_i32 = arith.constant 0 : i32
    %c0_i32_0 = arith.constant 0 : i32
    %c0_i32_1 = arith.constant 0 : i32
    %c0_i32_2 = arith.constant 0 : i32
    return %c0_i32, %c0_i32_0, %c0_i32_1 : i32, i32, i32
  }
  func.func @transform_7(%arg0: i32) -> (i32, i32, i32) {
    %c0_i32 = arith.constant 0 : i32
    %c0_i32_0 = arith.constant 0 : i32
    %c0_i32_1 = arith.constant 0 : i32
    %c0_i32_2 = arith.constant 0 : i32
    return %c0_i32, %c0_i32_0, %c0_i32_1 : i32, i32, i32
  }
  func.func @transform_8(%arg0: i32) -> (i32, i32, i32) {
    %c0_i32 = arith.constant 0 : i32
    %c0_i32_0 = arith.constant 0 : i32
    %c0_i32_1 = arith.constant 0 : i32
    %c0_i32_2 = arith.constant 0 : i32
    return %c0_i32, %c0_i32_0, %c0_i32_1 : i32, i32, i32
  }
  func.func @transform_9(%arg0: i32) -> (i32, i32, i32) {
    %c0_i32 = arith.constant 0 : i32
    %c0_i32_0 = arith.constant 0 : i32
    %c0_i32_1 = arith.constant 0 : i32
    %c0_i32_2 = arith.constant 0 : i32
    return %c0_i32, %c0_i32_0, %c0_i32_1 : i32, i32, i32
  }
  func.func @transform_10(%arg0: i32) -> (i32, i32, i32) {
    %c0_i32 = arith.constant 0 : i32
    %c0_i32_0 = arith.constant 0 : i32
    %c0_i32_1 = arith.constant 0 : i32
    %c0_i32_2 = arith.constant 0 : i32
    return %c0_i32, %c0_i32_0, %c0_i32_1 : i32, i32, i32
  }
  func.func @transform_11(%arg0: i32) -> (i32, i32, i32) {
    %c0_i32 = arith.constant 0 : i32
    %c0_i32_0 = arith.constant 0 : i32
    %c0_i32_1 = arith.constant 0 : i32
    %c0_i32_2 = arith.constant 0 : i32
    return %c0_i32, %c0_i32_0, %c0_i32_1 : i32, i32, i32
  }
  func.func @transform_12(%arg0: i32) -> (i32, i32) {
    %c0_i32 = arith.constant 0 : i32
    %c0_i32_0 = arith.constant 0 : i32
    %c0_i32_1 = arith.constant 0 : i32
    return %c0_i32, %c0_i32_0 : i32, i32
  }
  func.func @transform_13(%arg0: i32) -> (i32, i32) {
    %c0_i32 = arith.constant 0 : i32
    %c0_i32_0 = arith.constant 0 : i32
    %c0_i32_1 = arith.constant 0 : i32
    return %c0_i32, %c0_i32_0 : i32, i32
  }
  func.func @transform_14(%arg0: i32) -> (i32, i32) {
    %c0_i32 = arith.constant 0 : i32
    %c0_i32_0 = arith.constant 0 : i32
    %c0_i32_1 = arith.constant 0 : i32
    return %c0_i32, %c0_i32_0 : i32, i32
  }
  func.func @transform_15(%arg0: i32) -> (i32, i32) {
    %c0_i32 = arith.constant 0 : i32
    %c0_i32_0 = arith.constant 0 : i32
    %c0_i32_1 = arith.constant 0 : i32
    return %c0_i32, %c0_i32_0 : i32, i32
  }
  func.func @transform_16(%arg0: i32) -> (i32, i32, i32) {
    %c0_i32 = arith.constant 0 : i32
    %c0_i32_0 = arith.constant 0 : i32
    %c0_i32_1 = arith.constant 0 : i32
    %c0_i32_2 = arith.constant 0 : i32
    return %c0_i32, %c0_i32_0, %c0_i32_1 : i32, i32, i32
  }
}

</mosaic_0001>

<llo_original>
// kernel: drqnet_forward.1
$region0: #{drqnet_forward.1}
  #allocation0 [shape = 'u32[]', space=smem, size = 0x4, offset = 0x4, fixed_abs, tag = 'smem constant byte address 0x4 - core index']
  #allocation1 [shape = 'u32[144,128]{1,0:T(1,128)}', space=vmem, size = 0x12000, scoped, tag = 'internal scratch']
  %s0 = inlined_call_operand.vmem [shape: bf16[2,9,9,64], index: 0, kind: input, shape index: {}]
  %s1 = inlined_call_operand.vmem [shape: bf16[2,2,64,32], index: 1, kind: input, shape index: {}]
  %s2 = inlined_call_operand.vmem [shape: bf16[4,4,32,8], index: 2, kind: input, shape index: {}]
  %s3 = inlined_call_operand.vmem [shape: bf16[3,3,8,8], index: 3, kind: input, shape index: {}]
  %s4 = inlined_call_operand.vmem [shape: bf16[3,8,16], index: 4, kind: input, shape index: {}]
  %s5 = inlined_call_operand.vmem [shape: bf16[3,16,16], index: 5, kind: input, shape index: {}]
  %s6 = inlined_call_operand.vmem [shape: f32[4,1,16], index: 6, kind: input, shape index: {}]
  %s7 = inlined_call_operand.vmem [shape: bf16[3,16,16], index: 7, kind: input, shape index: {}]
  %s8 = inlined_call_operand.vmem [shape: bf16[3,16,16], index: 8, kind: input, shape index: {}]
  %s9 = inlined_call_operand.vmem [shape: f32[4,1,16], index: 9, kind: input, shape index: {}]
  %s10 = inlined_call_operand.vmem [shape: f32[2,2,16], index: 10, kind: input, shape index: {}]
  %s11 = inlined_call_operand.vmem [shape: bf16[8,16,512], index: 11, kind: input, shape index: {}]
  %s12 = inlined_call_operand.vmem [shape: f32[1,512], index: 12, kind: input, shape index: {}]
  %s13 = inlined_call_operand.vmem [shape: bf16[512,4], index: 13, kind: input, shape index: {}]
  %s14 = inlined_call_operand.vmem [shape: f32[1,4], index: 14, kind: input, shape index: {}]
  %s15 = inlined_call_operand.hbm [shape: f32[2,4], index: 15, kind: output, shape index: {0}]
  %s16 = inlined_call_operand.hbm [shape: f32[2,2,16], index: 16, kind: output, shape index: {1}]
  %17 = xla_tuple %s15, %s16
  %s18 = sld [smem:[#allocation0]]
  $region78: #{drqnet_forward.1} parent=0
    _
  %s20 = ssub.s32 1, %s18
  %s21 = scalar_select 0, %s20, %s18
  $region1: #{drqnet_forward.1} parent=0
    #allocation2 [shape = 'u8[1024]{0}', space=vmem, size = 0x400, scoped, tag = 'output window, operand 0, single buffered']
    #allocation3 [shape = 's32[1]{0}', space=sflag, size = 0x4, scoped, tag = 'scoped memory for drqnet_forward.1']
    #allocation4 [shape = 'u8[2048]{0}', space=vmem, size = 0x800, scoped, tag = 'output window, operand 1, single buffered']
    #allocation5 [shape = 's32[1]{0}', space=sflag, size = 0x4, scoped, tag = 'scoped memory for drqnet_forward.1']
    %22 = vsyncpa [#allocation3], 0
    %23 = vsyncpa [#allocation5], 0
    // Predicated region
    $region2: #{drqnet_forward.1} parent=1 // pred_check
      _
    $region3: #{drqnet_forward.1} parent=1 // pred_check_branch
      %25 = sbr.rel (0) target = $region5
    $region4: #{drqnet_forward.1} parent=1 // pred_region
      _
    $region5: #{drqnet_forward.1} parent=1 // pred_fallthru
      _
    // Predicated region
    $region6: #{drqnet_forward.1} parent=1 // pred_check
      _
    $region7: #{drqnet_forward.1} parent=1 // pred_check_branch
      %27 = sbr.rel (0) target = $region9
    $region8: #{drqnet_forward.1} parent=1 // pred_region
      _
    $region9: #{drqnet_forward.1} parent=1 // pred_fallthru
      _
    // Predicated region
    $region10: #{drqnet_forward.1} parent=1 // pred_check
      _
    $region11: #{drqnet_forward.1} parent=1 // pred_check_branch
      %29 = sbr.rel (0) target = $region13
    $region12: #{drqnet_forward.1} parent=1 // pred_region
      _
    $region13: #{drqnet_forward.1} parent=1 // pred_fallthru
      _
    // Predicated region
    $region14: #{drqnet_forward.1} parent=1 // pred_check
      _
    $region15: #{drqnet_forward.1} parent=1 // pred_check_branch
      %31 = sbr.rel (0) target = $region17
    $region16: #{drqnet_forward.1} parent=1 // pred_region
      _
    $region17: #{drqnet_forward.1} parent=1 // pred_fallthru
      _
    // Predicated region
    $region18: #{drqnet_forward.1} parent=1 // pred_check
      _
    $region19: #{drqnet_forward.1} parent=1 // pred_check_branch
      %33 = sbr.rel (0) target = $region21
    $region20: #{drqnet_forward.1} parent=1 // pred_region
      _
    $region21: #{drqnet_forward.1} parent=1 // pred_fallthru
      _
    // Predicated region
    $region22: #{drqnet_forward.1} parent=1 // pred_check
      _
    $region23: #{drqnet_forward.1} parent=1 // pred_check_branch
      %35 = sbr.rel (0) target = $region25
    $region24: #{drqnet_forward.1} parent=1 // pred_region
      _
    $region25: #{drqnet_forward.1} parent=1 // pred_fallthru
      _
    // Predicated region
    $region26: #{drqnet_forward.1} parent=1 // pred_check
      _
    $region27: #{drqnet_forward.1} parent=1 // pred_check_branch
      %37 = sbr.rel (0) target = $region29
    $region28: #{drqnet_forward.1} parent=1 // pred_region
      _
    $region29: #{drqnet_forward.1} parent=1 // pred_fallthru
      _
    // Predicated region
    $region30: #{drqnet_forward.1} parent=1 // pred_check
      _
    $region31: #{drqnet_forward.1} parent=1 // pred_check_branch
      %39 = sbr.rel (0) target = $region33
    $region32: #{drqnet_forward.1} parent=1 // pred_region
      _
    $region33: #{drqnet_forward.1} parent=1 // pred_fallthru
      _
    // Predicated region
    $region34: #{drqnet_forward.1} parent=1 // pred_check
      _
    $region35: #{drqnet_forward.1} parent=1 // pred_check_branch
      %41 = sbr.rel (0) target = $region37
    $region36: #{drqnet_forward.1} parent=1 // pred_region
      _
    $region37: #{drqnet_forward.1} parent=1 // pred_fallthru
      _
    // Predicated region
    $region38: #{drqnet_forward.1} parent=1 // pred_check
      _
    $region39: #{drqnet_forward.1} parent=1 // pred_check_branch
      %43 = sbr.rel (0) target = $region41
    $region40: #{drqnet_forward.1} parent=1 // pred_region
      _
    $region41: #{drqnet_forward.1} parent=1 // pred_fallthru
      _
    // Predicated region
    $region42: #{drqnet_forward.1} parent=1 // pred_check
      _
    $region43: #{drqnet_forward.1} parent=1 // pred_check_branch
      %45 = sbr.rel (0) target = $region45
    $region44: #{drqnet_forward.1} parent=1 // pred_region
      _
    $region45: #{drqnet_forward.1} parent=1 // pred_fallthru
      _
    // Predicated region
    $region46: #{drqnet_forward.1} parent=1 // pred_check
      _
    $region47: #{drqnet_forward.1} parent=1 // pred_check_branch
      %47 = sbr.rel (0) target = $region49
    $region48: #{drqnet_forward.1} parent=1 // pred_region
      _
    $region49: #{drqnet_forward.1} parent=1 // pred_fallthru
      _
    // Predicated region
    $region50: #{drqnet_forward.1} parent=1 // pred_check
      _
    $region51: #{drqnet_forward.1} parent=1 // pred_check_branch
      %49 = sbr.rel (0) target = $region53
    $region52: #{drqnet_forward.1} parent=1 // pred_region
      _
    $region53: #{drqnet_forward.1} parent=1 // pred_fallthru
      _
    // Predicated region
    $region54: #{drqnet_forward.1} parent=1 // pred_check
      _
    $region55: #{drqnet_forward.1} parent=1 // pred_check_branch
      %51 = sbr.rel (0) target = $region57
    $region56: #{drqnet_forward.1} parent=1 // pred_region
      _
    $region57: #{drqnet_forward.1} parent=1 // pred_fallthru
      _
    // Predicated region
    $region58: #{drqnet_forward.1} parent=1 // pred_check
      _
    $region59: #{drqnet_forward.1} parent=1 // pred_check_branch
      %53 = sbr.rel (0) target = $region61
    $region60: #{drqnet_forward.1} parent=1 // pred_region
      _
    $region61: #{drqnet_forward.1} parent=1 // pred_fallthru
      _
    %v55 = vld [vmem:[%s0] sm:$0xf]
    %v56 = vld [vmem:[%s0 + $0x8] sm:$0xf]
    %v57 = vld [vmem:[%s0 + $0x10] sm:$0xf]
    %v58 = vld [vmem:[%s0 + $0x18] sm:$0xf]
    %v59 = vld [vmem:[%s0 + $0x20] sm:$0xf]
    %v60 = vld [vmem:[%s0 + $0x28] sm:$0xf]
    %v61 = vld [vmem:[%s0 + $0x30] sm:$0xf]
    %v62 = vld [vmem:[%s0 + $0x38] sm:$0xf]
    %v63 = vld [vmem:[%s0 + $0x48] sm:$0xf]
    %v64 = vld [vmem:[%s0 + $0x50] sm:$0xf]
    %v65 = vld [vmem:[%s0 + $0x58] sm:$0xf]
    %v66 = vld [vmem:[%s0 + $0x60] sm:$0xf]
    %v67 = vld [vmem:[%s0 + $0x68] sm:$0xf]
    %v68 = vld [vmem:[%s0 + $0x70] sm:$0xf]
    %v69 = vld [vmem:[%s0 + $0x78] sm:$0xf]
    %v70 = vld [vmem:[%s0 + $0x80] sm:$0xf]
    %v71 = vld [vmem:[%s1] sm:$0xf]
    %v72 = vld [vmem:[%s1 + $0x4] sm:$0xf]
    %v73 = vld [vmem:[%s1 + $0x8] sm:$0xf]
    %v74 = vld [vmem:[%s1 + $0xc] sm:$0xf]
    %v75 = vld [vmem:[%s1 + $0x10] sm:$0xf]
    %v76 = vld [vmem:[%s1 + $0x14] sm:$0xf]
    %v77 = vld [vmem:[%s1 + $0x18] sm:$0xf]
    %v78 = vld [vmem:[%s1 + $0x1c] sm:$0xf]
    %v79 = vld [vmem:[%s0 + $0x4] sm:$0x1]
    %v80 = vld [vmem:[%s0 + $0xc] sm:$0x1]
    %v81 = vld [vmem:[%s0 + $0x14] sm:$0x1]
    %v82 = vld [vmem:[%s0 + $0x1c] sm:$0x1]
    %v83 = vld [vmem:[%s0 + $0x24] sm:$0x1]
    %v84 = vld [vmem:[%s0 + $0x2c] sm:$0x1]
    %v85 = vld [vmem:[%s0 + $0x34] sm:$0x1]
    %v86 = vld [vmem:[%s0 + $0x3c] sm:$0x1]
    %v87 = vld [vmem:[%s0 + $0x4c] sm:$0x1]
    %v88 = vld [vmem:[%s0 + $0x54] sm:$0x1]
    %v89 = vld [vmem:[%s0 + $0x5c] sm:$0x1]
    %v90 = vld [vmem:[%s0 + $0x64] sm:$0x1]
    %v91 = vld [vmem:[%s0 + $0x6c] sm:$0x1]
    %v92 = vld [vmem:[%s0 + $0x74] sm:$0x1]
    %v93 = vld [vmem:[%s0 + $0x7c] sm:$0x1]
    %v94 = vld [vmem:[%s0 + $0x84] sm:$0x1]
    %vm95 = vsmask.f32 3328
    %vm96 = vsmask.f32 7440
    %vm97 = vmor %vm95, %vm96
    %v99 = vshrl.u32 %v55, 16
    %v101 = vrot.slane %v99, 4
    %v102 = vshll.u32 %v55, 16
    %v104 = vrot.slane %v102, 5
    %v105 = vor.u32 %v101, %v104
    %v106 = vrot.slane %v105, 4
    %v108 = vshll.u32 %v79, 16
    %v110 = vrot.slane %v108, 5
    %v111 = vsel %vm97, %v106, %v110
    %v113 = vshrl.u32 %v56, 16
    %v115 = vrot.slane %v113, 4
    %v116 = vshll.u32 %v56, 16
    %v118 = vrot.slane %v116, 5
    %v119 = vor.u32 %v115, %v118
    %v120 = vrot.slane %v119, 4
    %v122 = vshll.u32 %v80, 16
    %v124 = vrot.slane %v122, 5
    %v125 = vsel %vm97, %v120, %v124
    %v127 = vshrl.u32 %v57, 16
    %v129 = vrot.slane %v127, 4
    %v130 = vshll.u32 %v57, 16
    %v132 = vrot.slane %v130, 5
    %v133 = vor.u32 %v129, %v132
    %v134 = vrot.slane %v133, 4
    %v136 = vshll.u32 %v81, 16
    %v138 = vrot.slane %v136, 5
    %v139 = vsel %vm97, %v134, %v138
    %v141 = vshrl.u32 %v58, 16
    %v143 = vrot.slane %v141, 4
    %v144 = vshll.u32 %v58, 16
    %v146 = vrot.slane %v144, 5
    %v147 = vor.u32 %v143, %v146
    %v148 = vrot.slane %v147, 4
    %v150 = vshll.u32 %v82, 16
    %v152 = vrot.slane %v150, 5
    %v153 = vsel %vm97, %v148, %v152
    %v155 = vshrl.u32 %v59, 16
    %v157 = vrot.slane %v155, 4
    %v158 = vshll.u32 %v59, 16
    %v160 = vrot.slane %v158, 5
    %v161 = vor.u32 %v157, %v160
    %v162 = vrot.slane %v161, 4
    %v164 = vshll.u32 %v83, 16
    %v166 = vrot.slane %v164, 5
    %v167 = vsel %vm97, %v162, %v166
    %v169 = vshrl.u32 %v60, 16
    %v171 = vrot.slane %v169, 4
    %v172 = vshll.u32 %v60, 16
    %v174 = vrot.slane %v172, 5
    %v175 = vor.u32 %v171, %v174
    %v176 = vrot.slane %v175, 4
    %v178 = vshll.u32 %v84, 16
    %v180 = vrot.slane %v178, 5
    %v181 = vsel %vm97, %v176, %v180
    %v183 = vshrl.u32 %v61, 16
    %v185 = vrot.slane %v183, 4
    %v186 = vshll.u32 %v61, 16
    %v188 = vrot.slane %v186, 5
    %v189 = vor.u32 %v185, %v188
    %v190 = vrot.slane %v189, 4
    %v192 = vshll.u32 %v85, 16
    %v194 = vrot.slane %v192, 5
    %v195 = vsel %vm97, %v190, %v194
    %v197 = vshrl.u32 %v62, 16
    %v199 = vrot.slane %v197, 4
    %v200 = vshll.u32 %v62, 16
    %v202 = vrot.slane %v200, 5
    %v203 = vor.u32 %v199, %v202
    %v204 = vrot.slane %v203, 4
    %v206 = vshll.u32 %v86, 16
    %v208 = vrot.slane %v206, 5
    %v209 = vsel %vm97, %v204, %v208
    %v211 = vshrl.u32 %v63, 16
    %v213 = vrot.slane %v211, 4
    %v214 = vshll.u32 %v63, 16
    %v216 = vrot.slane %v214, 5
    %v217 = vor.u32 %v213, %v216
    %v218 = vrot.slane %v217, 4
    %v220 = vshll.u32 %v87, 16
    %v222 = vrot.slane %v220, 5
    %v223 = vsel %vm97, %v218, %v222
    %v225 = vshrl.u32 %v64, 16
    %v227 = vrot.slane %v225, 4
    %v228 = vshll.u32 %v64, 16
    %v230 = vrot.slane %v228, 5
    %v231 = vor.u32 %v227, %v230
    %v232 = vrot.slane %v231, 4
    %v234 = vshll.u32 %v88, 16
    %v236 = vrot.slane %v234, 5
    %v237 = vsel %vm97, %v232, %v236
    %v239 = vshrl.u32 %v65, 16
    %v241 = vrot.slane %v239, 4
    %v242 = vshll.u32 %v65, 16
    %v244 = vrot.slane %v242, 5
    %v245 = vor.u32 %v241, %v244
    %v246 = vrot.slane %v245, 4
    %v248 = vshll.u32 %v89, 16
    %v250 = vrot.slane %v248, 5
    %v251 = vsel %vm97, %v246, %v250
    %v253 = vshrl.u32 %v66, 16
    %v255 = vrot.slane %v253, 4
    %v256 = vshll.u32 %v66, 16
    %v258 = vrot.slane %v256, 5
    %v259 = vor.u32 %v255, %v258
    %v260 = vrot.slane %v259, 4
    %v262 = vshll.u32 %v90, 16
    %v264 = vrot.slane %v262, 5
    %v265 = vsel %vm97, %v260, %v264
    %v267 = vshrl.u32 %v67, 16
    %v269 = vrot.slane %v267, 4
    %v270 = vshll.u32 %v67, 16
    %v272 = vrot.slane %v270, 5
    %v273 = vor.u32 %v269, %v272
    %v274 = vrot.slane %v273, 4
    %v276 = vshll.u32 %v91, 16
    %v278 = vrot.slane %v276, 5
    %v279 = vsel %vm97, %v274, %v278
    %v281 = vshrl.u32 %v68, 16
    %v283 = vrot.slane %v281, 4
    %v284 = vshll.u32 %v68, 16
    %v286 = vrot.slane %v284, 5
    %v287 = vor.u32 %v283, %v286
    %v288 = vrot.slane %v287, 4
    %v290 = vshll.u32 %v92, 16
    %v292 = vrot.slane %v290, 5
    %v293 = vsel %vm97, %v288, %v292
    %v295 = vshrl.u32 %v69, 16
    %v297 = vrot.slane %v295, 4
    %v298 = vshll.u32 %v69, 16
    %v300 = vrot.slane %v298, 5
    %v301 = vor.u32 %v297, %v300
    %v302 = vrot.slane %v301, 4
    %v304 = vshll.u32 %v93, 16
    %v306 = vrot.slane %v304, 5
    %v307 = vsel %vm97, %v302, %v306
    %v309 = vshrl.u32 %v70, 16
    %v311 = vrot.slane %v309, 4
    %v312 = vshll.u32 %v70, 16
    %v314 = vrot.slane %v312, 5
    %v315 = vor.u32 %v311, %v314
    %v316 = vrot.slane %v315, 4
    %v318 = vshll.u32 %v94, 16
    %v320 = vrot.slane %v318, 5
    %v321 = vsel %vm97, %v316, %v320
    %s322 = scalar_lea.vmem %s1, 32
    %v323 = vld [vmem:[%s322] sm:$0xf]
    %v324 = vld [vmem:[%s322 + $0x4] sm:$0xf]
    %v325 = vld [vmem:[%s322 + $0x8] sm:$0xf]
    %v326 = vld [vmem:[%s322 + $0xc] sm:$0xf]
    %v327 = vld [vmem:[%s322 + $0x10] sm:$0xf]
    %v328 = vld [vmem:[%s322 + $0x14] sm:$0xf]
    %v329 = vld [vmem:[%s322 + $0x18] sm:$0xf]
    %v330 = vld [vmem:[%s322 + $0x1c] sm:$0xf]
    %v331 = vunpack.c.l.b16 %v111
    %v332 = vunpack.c.l.b16 %v125
    %v333 = vunpack.c.l.b16 %v139
    %v334 = vunpack.c.l.b16 %v153
    %v335 = vunpack.c.l.b16 %v167
    %v336 = vunpack.c.l.b16 %v181
    %v337 = vunpack.c.l.b16 %v195
    %v338 = vunpack.c.l.b16 %v209
    %v339 = vunpack.c.l.b16 %v223
    %v340 = vunpack.c.l.b16 %v237
    %v341 = vunpack.c.l.b16 %v251
    %v342 = vunpack.c.l.b16 %v265
    %v343 = vunpack.c.l.b16 %v279
    %v344 = vunpack.c.l.b16 %v293
    %v345 = vunpack.c.l.b16 %v307
    %v346 = vunpack.c.l.b16 %v321
    %v347 = vpack.c.b16 %v332, %v331
    %v348 = vpack.c.b16 %v334, %v333
    %v349 = vpack.c.b16 %v336, %v335
    %v350 = vpack.c.b16 %v338, %v337
    %v351 = vpack.c.b16 %v340, %v339
    %v352 = vpack.c.b16 %v342, %v341
    %v353 = vpack.c.b16 %v344, %v343
    %v354 = vpack.c.b16 %v346, %v345
    %v363 = vunpack.c.l.b16 %v323
    %v364 = vunpack.c.l.b16 %v324
    %v365 = vunpack.c.l.b16 %v325
    %v366 = vunpack.c.l.b16 %v326
    %v367 = vunpack.c.l.b16 %v327
    %v368 = vunpack.c.l.b16 %v328
    %v369 = vunpack.c.l.b16 %v329
    %v370 = vunpack.c.l.b16 %v330
    %v371 = vpack.c.b16 %v364, %v363
    %v372 = vpack.c.b16 %v366, %v365
    %v373 = vpack.c.b16 %v368, %v367
    %v374 = vpack.c.b16 %v370, %v369
    %vm379 = vcmask 523264
    %v381 = vsel %vm379, %v347, 0
    %v384 = vsel %vm379, %v348, 0
    %v387 = vsel %vm379, %v349, 0
    %v390 = vsel %vm379, %v350, 0
    %v393 = vsel %vm379, %v351, 0
    %v396 = vsel %vm379, %v352, 0
    %v399 = vsel %vm379, %v353, 0
    %v402 = vsel %vm379, %v354, 0
    %404 = vmatprep.subr.bf16.mxu0 0
    %405 = vmatpush1.bf16.msra.mxu0 0
    %406 = vmatprep.subr.bf16.mxu0 0
    %407 = vmatpush1.bf16.msra.mxu0 0
    %408 = vmatprep.subr.bf16.mxu0 0
    %409 = vmatpush1.bf16.msra.mxu0 0
    %410 = vmatprep.subr.bf16.mxu0 0
    %411 = vmatpush1.bf16.msra.mxu0 0
    %412 = vmatprep.subr.bf16.mxu0 0
    %413 = vmatpush1.bf16.msra.mxu0 %v374
    %414 = vmatprep.subr.bf16.mxu0 0
    %415 = vmatpush1.bf16.msra.mxu0 %v373
    %416 = vmatprep.subr.bf16.mxu0 0
    %417 = vmatpush1.bf16.msra.mxu0 %v372
    %418 = vmatprep.subr.bf16.mxu0 0
    %419 = vmatpush1.bf16.msra.mxu0 %v371
    %420 = vmatprep.subr.bf16.mxu0 0
    %421 = vmatpush2.bf16.msra.mxu0 0
    %422 = vmatprep.subr.bf16.mxu0 0
    %423 = vmatpush2.bf16.msra.mxu0 0
    %424 = vmatprep.subr.bf16.mxu0 0
    %425 = vmatpush2.bf16.msra.mxu0 0
    %426 = vmatprep.subr.bf16.mxu0 0
    %427 = vmatpush2.bf16.msra.mxu0 0
    %428 = vmatprep.subr.bf16.mxu0 0
    %429 = vmatpush2.bf16.msra.mxu0 0
    %430 = vmatprep.subr.bf16.mxu0 0
    %431 = vmatpush2.bf16.msra.mxu0 0
    %432 = vmatprep.subr.bf16.mxu0 0
    %433 = vmatpush2.bf16.msra.mxu0 0
    %434 = vmatprep.subr.bf16.mxu0 0
    %435 = vmatpush2.bf16.msra.mxu0 0
    %436 = vmatprep.mubr.bf16.mxu0 0
    %437 = vmatmul.mubr.bf16.gmra.mxu0 %v381
    %v438 = vpop.f32.mrf.mxu0
    %v439 = vadd.f32 0.0, %v438
    %v440 = vpop.f32.mrf.mxu0
    %v441 = vpop.f32.mrf.mxu0
    %v442 = vadd.f32 0.0, %v441
    %v443 = vpop.f32.mrf.mxu0
    %444 = vmatprep.mubr.bf16.mxu0 0
    %445 = vmatmul.mubr.bf16.gmra.mxu0 %v384
    %v446 = vpop.f32.mrf.mxu0
    %v447 = vadd.f32 0.0, %v446
    %v448 = vpop.f32.mrf.mxu0
    %v449 = vpop.f32.mrf.mxu0
    %v450 = vadd.f32 0.0, %v449
    %v451 = vpop.f32.mrf.mxu0
    %452 = vmatprep.mubr.bf16.mxu0 0
    %453 = vmatmul.mubr.bf16.gmra.mxu0 %v387
    %v454 = vpop.f32.mrf.mxu0
    %v455 = vadd.f32 0.0, %v454
    %v456 = vpop.f32.mrf.mxu0
    %v457 = vpop.f32.mrf.mxu0
    %v458 = vadd.f32 0.0, %v457
    %v459 = vpop.f32.mrf.mxu0
    %460 = vmatprep.mubr.bf16.mxu0 0
    %461 = vmatmul.mubr.bf16.gmra.mxu0 %v390
    %v462 = vpop.f32.mrf.mxu0
    %v463 = vadd.f32 0.0, %v462
    %v464 = vpop.f32.mrf.mxu0
    %v465 = vpop.f32.mrf.mxu0
    %v466 = vadd.f32 0.0, %v465
    %v467 = vpop.f32.mrf.mxu0
    %468 = vmatprep.mubr.bf16.mxu0 0
    %469 = vmatmul.mubr.bf16.gmra.mxu0 %v393
    %v470 = vpop.f32.mrf.mxu0
    %v471 = vadd.f32 0.0, %v470
    %v472 = vpop.f32.mrf.mxu0
    %v473 = vpop.f32.mrf.mxu0
    %v474 = vadd.f32 0.0, %v473
    %v475 = vpop.f32.mrf.mxu0
    %476 = vmatprep.mubr.bf16.mxu0 0
    %477 = vmatmul.mubr.bf16.gmra.mxu0 %v396
    %v478 = vpop.f32.mrf.mxu0
    %v479 = vadd.f32 0.0, %v478
    %v480 = vpop.f32.mrf.mxu0
    %v481 = vpop.f32.mrf.mxu0
    %v482 = vadd.f32 0.0, %v481
    %v483 = vpop.f32.mrf.mxu0
    %484 = vmatprep.mubr.bf16.mxu0 0
    %485 = vmatmul.mubr.bf16.gmra.mxu0 %v399
    %v486 = vpop.f32.mrf.mxu0
    %v487 = vadd.f32 0.0, %v486
    %v488 = vpop.f32.mrf.mxu0
    %v489 = vpop.f32.mrf.mxu0
    %v490 = vadd.f32 0.0, %v489
    %v491 = vpop.f32.mrf.mxu0
    %492 = vmatprep.mubr.bf16.mxu0 0
    %493 = vmatmul.mubr.bf16.gmra.mxu0 %v402
    %v494 = vpop.f32.mrf.mxu0
    %v495 = vadd.f32 0.0, %v494
    %v496 = vpop.f32.mrf.mxu0
    %v497 = vpop.f32.mrf.mxu0
    %v498 = vadd.f32 0.0, %v497
    %v499 = vpop.f32.mrf.mxu0
    %500 = vdwg.mxu0
    %v517 = vunpack.c.l.b16 %v55
    %v518 = vunpack.c.l.b16 %v56
    %v519 = vunpack.c.l.b16 %v57
    %v520 = vunpack.c.l.b16 %v58
    %v521 = vunpack.c.l.b16 %v59
    %v522 = vunpack.c.l.b16 %v60
    %v523 = vunpack.c.l.b16 %v61
    %v524 = vunpack.c.l.b16 %v62
    %v525 = vunpack.c.l.b16 %v63
    %v526 = vunpack.c.l.b16 %v64
    %v527 = vunpack.c.l.b16 %v65
    %v528 = vunpack.c.l.b16 %v66
    %v529 = vunpack.c.l.b16 %v67
    %v530 = vunpack.c.l.b16 %v68
    %v531 = vunpack.c.l.b16 %v69
    %v532 = vunpack.c.l.b16 %v70
    %v533 = vpack.c.b16 %v518, %v517
    %v534 = vpack.c.b16 %v520, %v519
    %v535 = vpack.c.b16 %v522, %v521
    %v536 = vpack.c.b16 %v524, %v523
    %v537 = vpack.c.b16 %v526, %v525
    %v538 = vpack.c.b16 %v528, %v527
    %v539 = vpack.c.b16 %v530, %v529
    %v540 = vpack.c.b16 %v532, %v531
    %v549 = vunpack.c.l.b16 %v71
    %v550 = vunpack.c.l.b16 %v72
    %v551 = vunpack.c.l.b16 %v73
    %v552 = vunpack.c.l.b16 %v74
    %v553 = vunpack.c.l.b16 %v75
    %v554 = vunpack.c.l.b16 %v76
    %v555 = vunpack.c.l.b16 %v77
    %v556 = vunpack.c.l.b16 %v78
    %v557 = vpack.c.b16 %v550, %v549
    %v558 = vpack.c.b16 %v552, %v551
    %v559 = vpack.c.b16 %v554, %v553
    %v560 = vpack.c.b16 %v556, %v555
    %v566 = vsel %vm379, %v533, 0
    %v569 = vsel %vm379, %v534, 0
    %v572 = vsel %vm379, %v535, 0
    %v575 = vsel %vm379, %v536, 0
    %v578 = vsel %vm379, %v537, 0
    %v581 = vsel %vm379, %v538, 0
    %v584 = vsel %vm379, %v539, 0
    %v587 = vsel %vm379, %v540, 0
    %589 = vmatprep.subr.bf16.mxu0 0
    %590 = vmatpush1.bf16.msra.mxu0 0
    %591 = vmatprep.subr.bf16.mxu0 0
    %592 = vmatpush1.bf16.msra.mxu0 0
    %593 = vmatprep.subr.bf16.mxu0 0
    %594 = vmatpush1.bf16.msra.mxu0 0
    %595 = vmatprep.subr.bf16.mxu0 0
    %596 = vmatpush1.bf16.msra.mxu0 0
    %597 = vmatprep.subr.bf16.mxu0 0
    %598 = vmatpush1.bf16.msra.mxu0 %v560
    %599 = vmatprep.subr.bf16.mxu0 0
    %600 = vmatpush1.bf16.msra.mxu0 %v559
    %601 = vmatprep.subr.bf16.mxu0 0
    %602 = vmatpush1.bf16.msra.mxu0 %v558
    %603 = vmatprep.subr.bf16.mxu0 0
    %604 = vmatpush1.bf16.msra.mxu0 %v557
    %605 = vmatprep.subr.bf16.mxu0 0
    %606 = vmatpush2.bf16.msra.mxu0 0
    %607 = vmatprep.subr.bf16.mxu0 0
    %608 = vmatpush2.bf16.msra.mxu0 0
    %609 = vmatprep.subr.bf16.mxu0 0
    %610 = vmatpush2.bf16.msra.mxu0 0
    %611 = vmatprep.subr.bf16.mxu0 0
    %612 = vmatpush2.bf16.msra.mxu0 0
    %613 = vmatprep.subr.bf16.mxu0 0
    %614 = vmatpush2.bf16.msra.mxu0 0
    %615 = vmatprep.subr.bf16.mxu0 0
    %616 = vmatpush2.bf16.msra.mxu0 0
    %617 = vmatprep.subr.bf16.mxu0 0
    %618 = vmatpush2.bf16.msra.mxu0 0
    %619 = vmatprep.subr.bf16.mxu0 0
    %620 = vmatpush2.bf16.msra.mxu0 0
    %621 = vmatprep.mubr.bf16.mxu0 0
    %622 = vmatmul.mubr.bf16.gmra.mxu0 %v566
    %v623 = vpop.f32.mrf.mxu0
    %v624 = vadd.f32 %v439, %v623
    %v625 = vpop.f32.mrf.mxu0
    %v626 = vpop.f32.mrf.mxu0
    %v627 = vadd.f32 %v442, %v626
    %v628 = vpop.f32.mrf.mxu0
    %629 = vmatprep.mubr.bf16.mxu0 0
    %630 = vmatmul.mubr.bf16.gmra.mxu0 %v569
    %v631 = vpop.f32.mrf.mxu0
    %v632 = vadd.f32 %v447, %v631
    %v633 = vpop.f32.mrf.mxu0
    %v634 = vpop.f32.mrf.mxu0
    %v635 = vadd.f32 %v450, %v634
    %v636 = vpop.f32.mrf.mxu0
    %637 = vmatprep.mubr.bf16.mxu0 0
    %638 = vmatmul.mubr.bf16.gmra.mxu0 %v572
    %v639 = vpop.f32.mrf.mxu0
    %v640 = vadd.f32 %v455, %v639
    %v641 = vpop.f32.mrf.mxu0
    %v642 = vpop.f32.mrf.mxu0
    %v643 = vadd.f32 %v458, %v642
    %v644 = vpop.f32.mrf.mxu0
    %645 = vmatprep.mubr.bf16.mxu0 0
    %646 = vmatmul.mubr.bf16.gmra.mxu0 %v575
    %v647 = vpop.f32.mrf.mxu0
    %v648 = vadd.f32 %v463, %v647
    %v649 = vpop.f32.mrf.mxu0
    %v650 = vpop.f32.mrf.mxu0
    %v651 = vadd.f32 %v466, %v650
    %v652 = vpop.f32.mrf.mxu0
    %653 = vmatprep.mubr.bf16.mxu0 0
    %654 = vmatmul.mubr.bf16.gmra.mxu0 %v578
    %v655 = vpop.f32.mrf.mxu0
    %v656 = vadd.f32 %v471, %v655
    %v657 = vpop.f32.mrf.mxu0
    %v658 = vpop.f32.mrf.mxu0
    %v659 = vadd.f32 %v474, %v658
    %v660 = vpop.f32.mrf.mxu0
    %661 = vmatprep.mubr.bf16.mxu0 0
    %662 = vmatmul.mubr.bf16.gmra.mxu0 %v581
    %v663 = vpop.f32.mrf.mxu0
    %v664 = vadd.f32 %v479, %v663
    %v665 = vpop.f32.mrf.mxu0
    %v666 = vpop.f32.mrf.mxu0
    %v667 = vadd.f32 %v482, %v666
    %v668 = vpop.f32.mrf.mxu0
    %669 = vmatprep.mubr.bf16.mxu0 0
    %670 = vmatmul.mubr.bf16.gmra.mxu0 %v584
    %v671 = vpop.f32.mrf.mxu0
    %v672 = vadd.f32 %v487, %v671
    %v673 = vpop.f32.mrf.mxu0
    %v674 = vpop.f32.mrf.mxu0
    %v675 = vadd.f32 %v490, %v674
    %v676 = vpop.f32.mrf.mxu0
    %677 = vmatprep.mubr.bf16.mxu0 0
    %678 = vmatmul.mubr.bf16.gmra.mxu0 %v587
    %v679 = vpop.f32.mrf.mxu0
    %v680 = vadd.f32 %v495, %v679
    %v681 = vpop.f32.mrf.mxu0
    %v682 = vpop.f32.mrf.mxu0
    %v683 = vadd.f32 %v498, %v682
    %v684 = vpop.f32.mrf.mxu0
    %685 = vdwg.mxu0
    %s686 = scalar_lea.vmem %s0, 8
    %v687 = vld [vmem:[%s686] sm:$0xf]
    %v688 = vld [vmem:[%s686 + $0x8] sm:$0xf]
    %v689 = vld [vmem:[%s686 + $0x10] sm:$0xf]
    %v690 = vld [vmem:[%s686 + $0x18] sm:$0xf]
    %v691 = vld [vmem:[%s686 + $0x20] sm:$0xf]
    %v692 = vld [vmem:[%s686 + $0x28] sm:$0xf]
    %v693 = vld [vmem:[%s686 + $0x30] sm:$0xf]
    %v694 = vld [vmem:[%s686 + $0x38] sm:$0xf]
    %v695 = vld [vmem:[%s686 + $0x48] sm:$0xf]
    %v696 = vld [vmem:[%s686 + $0x50] sm:$0xf]
    %v697 = vld [vmem:[%s686 + $0x58] sm:$0xf]
    %v698 = vld [vmem:[%s686 + $0x60] sm:$0xf]
    %v699 = vld [vmem:[%s686 + $0x68] sm:$0xf]
    %v700 = vld [vmem:[%s686 + $0x70] sm:$0xf]
    %v701 = vld [vmem:[%s686 + $0x78] sm:$0xf]
    %v702 = vld [vmem:[%s686 + $0x80] sm:$0xf]
    %s703 = scalar_lea.vmem %s1, 64
    %v704 = vld [vmem:[%s703] sm:$0xf]
    %v705 = vld [vmem:[%s703 + $0x4] sm:$0xf]
    %v706 = vld [vmem:[%s703 + $0x8] sm:$0xf]
    %v707 = vld [vmem:[%s703 + $0xc] sm:$0xf]
    %v708 = vld [vmem:[%s703 + $0x10] sm:$0xf]
    %v709 = vld [vmem:[%s703 + $0x14] sm:$0xf]
    %v710 = vld [vmem:[%s703 + $0x18] sm:$0xf]
    %v711 = vld [vmem:[%s703 + $0x1c] sm:$0xf]
    %v728 = vunpack.c.l.b16 %v687
    %v729 = vunpack.c.l.b16 %v688
    %v730 = vunpack.c.l.b16 %v689
    %v731 = vunpack.c.l.b16 %v690
    %v732 = vunpack.c.l.b16 %v691
    %v733 = vunpack.c.l.b16 %v692
    %v734 = vunpack.c.l.b16 %v693
    %v735 = vunpack.c.l.b16 %v694
    %v736 = vunpack.c.l.b16 %v695
    %v737 = vunpack.c.l.b16 %v696
    %v738 = vunpack.c.l.b16 %v697
    %v739 = vunpack.c.l.b16 %v698
    %v740 = vunpack.c.l.b16 %v699
    %v741 = vunpack.c.l.b16 %v700
    %v742 = vunpack.c.l.b16 %v701
    %v743 = vunpack.c.l.b16 %v702
    %v744 = vpack.c.b16 %v729, %v728
    %v745 = vpack.c.b16 %v731, %v730
    %v746 = vpack.c.b16 %v733, %v732
    %v747 = vpack.c.b16 %v735, %v734
    %v748 = vpack.c.b16 %v737, %v736
    %v749 = vpack.c.b16 %v739, %v738
    %v750 = vpack.c.b16 %v741, %v740
    %v751 = vpack.c.b16 %v743, %v742
    %v760 = vunpack.c.l.b16 %v704
    %v761 = vunpack.c.l.b16 %v705
    %v762 = vunpack.c.l.b16 %v706
    %v763 = vunpack.c.l.b16 %v707
    %v764 = vunpack.c.l.b16 %v708
    %v765 = vunpack.c.l.b16 %v709
    %v766 = vunpack.c.l.b16 %v710
    %v767 = vunpack.c.l.b16 %v711
    %v768 = vpack.c.b16 %v761, %v760
    %v769 = vpack.c.b16 %v763, %v762
    %v770 = vpack.c.b16 %v765, %v764
    %v771 = vpack.c.b16 %v767, %v766
    %v777 = vsel %vm379, %v744, 0
    %v780 = vsel %vm379, %v745, 0
    %v783 = vsel %vm379, %v746, 0
    %v786 = vsel %vm379, %v747, 0
    %v789 = vsel %vm379, %v748, 0
    %v792 = vsel %vm379, %v749, 0
    %v795 = vsel %vm379, %v750, 0
    %v798 = vsel %vm379, %v751, 0
    %800 = vmatprep.subr.bf16.mxu0 0
    %801 = vmatpush1.bf16.msra.mxu0 0
    %802 = vmatprep.subr.bf16.mxu0 0
    %803 = vmatpush1.bf16.msra.mxu0 0
    %804 = vmatprep.subr.bf16.mxu0 0
    %805 = vmatpush1.bf16.msra.mxu0 0
    %806 = vmatprep.subr.bf16.mxu0 0
    %807 = vmatpush1.bf16.msra.mxu0 0
    %808 = vmatprep.subr.bf16.mxu0 0
    %809 = vmatpush1.bf16.msra.mxu0 %v771
    %810 = vmatprep.subr.bf16.mxu0 0
    %811 = vmatpush1.bf16.msra.mxu0 %v770
    %812 = vmatprep.subr.bf16.mxu0 0
    %813 = vmatpush1.bf16.msra.mxu0 %v769
    %814 = vmatprep.subr.bf16.mxu0 0
    %815 = vmatpush1.bf16.msra.mxu0 %v768
    %816 = vmatprep.subr.bf16.mxu0 0
    %817 = vmatpush2.bf16.msra.mxu0 0
    %818 = vmatprep.subr.bf16.mxu0 0
    %819 = vmatpush2.bf16.msra.mxu0 0
    %820 = vmatprep.subr.bf16.mxu0 0
    %821 = vmatpush2.bf16.msra.mxu0 0
    %822 = vmatprep.subr.bf16.mxu0 0
    %823 = vmatpush2.bf16.msra.mxu0 0
    %824 = vmatprep.subr.bf16.mxu0 0
    %825 = vmatpush2.bf16.msra.mxu0 0
    %826 = vmatprep.subr.bf16.mxu0 0
    %827 = vmatpush2.bf16.msra.mxu0 0
    %828 = vmatprep.subr.bf16.mxu0 0
    %829 = vmatpush2.bf16.msra.mxu0 0
    %830 = vmatprep.subr.bf16.mxu0 0
    %831 = vmatpush2.bf16.msra.mxu0 0
    %832 = vmatprep.mubr.bf16.mxu0 0
    %833 = vmatmul.mubr.bf16.gmra.mxu0 %v777
    %v834 = vpop.f32.mrf.mxu0
    %v835 = vadd.f32 0.0, %v834
    %v836 = vpop.f32.mrf.mxu0
    %v837 = vpop.f32.mrf.mxu0
    %v838 = vadd.f32 0.0, %v837
    %v839 = vpop.f32.mrf.mxu0
    %840 = vmatprep.mubr.bf16.mxu0 0
    %841 = vmatmul.mubr.bf16.gmra.mxu0 %v780
    %v842 = vpop.f32.mrf.mxu0
    %v843 = vadd.f32 0.0, %v842
    %v844 = vpop.f32.mrf.mxu0
    %v845 = vpop.f32.mrf.mxu0
    %v846 = vadd.f32 0.0, %v845
    %v847 = vpop.f32.mrf.mxu0
    %848 = vmatprep.mubr.bf16.mxu0 0
    %849 = vmatmul.mubr.bf16.gmra.mxu0 %v783
    %v850 = vpop.f32.mrf.mxu0
    %v851 = vadd.f32 0.0, %v850
    %v852 = vpop.f32.mrf.mxu0
    %v853 = vpop.f32.mrf.mxu0
    %v854 = vadd.f32 0.0, %v853
    %v855 = vpop.f32.mrf.mxu0
    %856 = vmatprep.mubr.bf16.mxu0 0
    %857 = vmatmul.mubr.bf16.gmra.mxu0 %v786
    %v858 = vpop.f32.mrf.mxu0
    %v859 = vadd.f32 0.0, %v858
    %v860 = vpop.f32.mrf.mxu0
    %v861 = vpop.f32.mrf.mxu0
    %v862 = vadd.f32 0.0, %v861
    %v863 = vpop.f32.mrf.mxu0
    %864 = vmatprep.mubr.bf16.mxu0 0
    %865 = vmatmul.mubr.bf16.gmra.mxu0 %v789
    %v866 = vpop.f32.mrf.mxu0
    %v867 = vadd.f32 0.0, %v866
    %v868 = vpop.f32.mrf.mxu0
    %v869 = vpop.f32.mrf.mxu0
    %v870 = vadd.f32 0.0, %v869
    %v871 = vpop.f32.mrf.mxu0
    %872 = vmatprep.mubr.bf16.mxu0 0
    %873 = vmatmul.mubr.bf16.gmra.mxu0 %v792
    %v874 = vpop.f32.mrf.mxu0
    %v875 = vadd.f32 0.0, %v874
    %v876 = vpop.f32.mrf.mxu0
    %v877 = vpop.f32.mrf.mxu0
    %v878 = vadd.f32 0.0, %v877
    %v879 = vpop.f32.mrf.mxu0
    %880 = vmatprep.mubr.bf16.mxu0 0
    %881 = vmatmul.mubr.bf16.gmra.mxu0 %v795
    %v882 = vpop.f32.mrf.mxu0
    %v883 = vadd.f32 0.0, %v882
    %v884 = vpop.f32.mrf.mxu0
    %v885 = vpop.f32.mrf.mxu0
    %v886 = vadd.f32 0.0, %v885
    %v887 = vpop.f32.mrf.mxu0
    %888 = vmatprep.mubr.bf16.mxu0 0
    %889 = vmatmul.mubr.bf16.gmra.mxu0 %v798
    %v890 = vpop.f32.mrf.mxu0
    %v891 = vadd.f32 0.0, %v890
    %v892 = vpop.f32.mrf.mxu0
    %v893 = vpop.f32.mrf.mxu0
    %v894 = vadd.f32 0.0, %v893
    %v895 = vpop.f32.mrf.mxu0
    %896 = vdwg.mxu0
    %v897 = vadd.f32 %v624, %v835
    %v898 = vadd.f32 %v627, %v838
    %v899 = vadd.f32 %v632, %v843
    %v900 = vadd.f32 %v635, %v846
    %v901 = vadd.f32 %v640, %v851
    %v902 = vadd.f32 %v643, %v854
    %v903 = vadd.f32 %v648, %v859
    %v904 = vadd.f32 %v651, %v862
    %v905 = vadd.f32 %v656, %v867
    %v906 = vadd.f32 %v659, %v870
    %v907 = vadd.f32 %v664, %v875
    %v908 = vadd.f32 %v667, %v878
    %v909 = vadd.f32 %v672, %v883
    %v910 = vadd.f32 %v675, %v886
    %v911 = vadd.f32 %v680, %v891
    %v912 = vadd.f32 %v683, %v894
    %v913 = vld [vmem:[%s686] sm:$0xf]
    %v914 = vld [vmem:[%s686 + $0x4] sm:$0x1]
    %v915 = vld [vmem:[%s686 + $0x8] sm:$0xf]
    %v916 = vld [vmem:[%s686 + $0xc] sm:$0x1]
    %v917 = vld [vmem:[%s686 + $0x10] sm:$0xf]
    %v918 = vld [vmem:[%s686 + $0x14] sm:$0x1]
    %v919 = vld [vmem:[%s686 + $0x18] sm:$0xf]
    %v920 = vld [vmem:[%s686 + $0x1c] sm:$0x1]
    %v921 = vld [vmem:[%s686 + $0x20] sm:$0xf]
    %v922 = vld [vmem:[%s686 + $0x24] sm:$0x1]
    %v923 = vld [vmem:[%s686 + $0x28] sm:$0xf]
    %v924 = vld [vmem:[%s686 + $0x2c] sm:$0x1]
    %v925 = vld [vmem:[%s686 + $0x30] sm:$0xf]
    %v926 = vld [vmem:[%s686 + $0x34] sm:$0x1]
    %v927 = vld [vmem:[%s686 + $0x38] sm:$0xf]
    %v928 = vld [vmem:[%s686 + $0x3c] sm:$0x1]
    %v929 = vld [vmem:[%s686 + $0x48] sm:$0xf]
    %v930 = vld [vmem:[%s686 + $0x4c] sm:$0x1]
    %v931 = vld [vmem:[%s686 + $0x50] sm:$0xf]
    %v932 = vld [vmem:[%s686 + $0x54] sm:$0x1]
    %v933 = vld [vmem:[%s686 + $0x58] sm:$0xf]
    %v934 = vld [vmem:[%s686 + $0x5c] sm:$0x1]
    %v935 = vld [vmem:[%s686 + $0x60] sm:$0xf]
    %v936 = vld [vmem:[%s686 + $0x64] sm:$0x1]
    %v937 = vld [vmem:[%s686 + $0x68] sm:$0xf]
    %v938 = vld [vmem:[%s686 + $0x6c] sm:$0x1]
    %v939 = vld [vmem:[%s686 + $0x70] sm:$0xf]
    %v940 = vld [vmem:[%s686 + $0x74] sm:$0x1]
    %v941 = vld [vmem:[%s686 + $0x78] sm:$0xf]
    %v942 = vld [vmem:[%s686 + $0x7c] sm:$0x1]
    %v943 = vld [vmem:[%s686 + $0x80] sm:$0xf]
    %v944 = vld [vmem:[%s686 + $0x84] sm:$0x1]
    %v946 = vshrl.u32 %v913, 16
    %v948 = vrot.slane %v946, 4
    %v949 = vshll.u32 %v913, 16
    %v951 = vrot.slane %v949, 5
    %v952 = vor.u32 %v948, %v951
    %v953 = vrot.slane %v952, 4
    %v955 = vshll.u32 %v914, 16
    %v957 = vrot.slane %v955, 5
    %v958 = vsel %vm97, %v953, %v957
    %v960 = vshrl.u32 %v915, 16
    %v962 = vrot.slane %v960, 4
    %v963 = vshll.u32 %v915, 16
    %v965 = vrot.slane %v963, 5
    %v966 = vor.u32 %v962, %v965
    %v967 = vrot.slane %v966, 4
    %v969 = vshll.u32 %v916, 16
    %v971 = vrot.slane %v969, 5
    %v972 = vsel %vm97, %v967, %v971
    %v974 = vshrl.u32 %v917, 16
    %v976 = vrot.slane %v974, 4
    %v977 = vshll.u32 %v917, 16
    %v979 = vrot.slane %v977, 5
    %v980 = vor.u32 %v976, %v979
    %v981 = vrot.slane %v980, 4
    %v983 = vshll.u32 %v918, 16
    %v985 = vrot.slane %v983, 5
    %v986 = vsel %vm97, %v981, %v985
    %v988 = vshrl.u32 %v919, 16
    %v990 = vrot.slane %v988, 4
    %v991 = vshll.u32 %v919, 16
    %v993 = vrot.slane %v991, 5
    %v994 = vor.u32 %v990, %v993
    %v995 = vrot.slane %v994, 4
    %v997 = vshll.u32 %v920, 16
    %v999 = vrot.slane %v997, 5
    %v1000 = vsel %vm97, %v995, %v999
    %v1002 = vshrl.u32 %v921, 16
    %v1004 = vrot.slane %v1002, 4
    %v1005 = vshll.u32 %v921, 16
    %v1007 = vrot.slane %v1005, 5
    %v1008 = vor.u32 %v1004, %v1007
    %v1009 = vrot.slane %v1008, 4
    %v1011 = vshll.u32 %v922, 16
    %v1013 = vrot.slane %v1011, 5
    %v1014 = vsel %vm97, %v1009, %v1013
    %v1016 = vshrl.u32 %v923, 16
    %v1018 = vrot.slane %v1016, 4
    %v1019 = vshll.u32 %v923, 16
    %v1021 = vrot.slane %v1019, 5
    %v1022 = vor.u32 %v1018, %v1021
    %v1023 = vrot.slane %v1022, 4
    %v1025 = vshll.u32 %v924, 16
    %v1027 = vrot.slane %v1025, 5
    %v1028 = vsel %vm97, %v1023, %v1027
    %v1030 = vshrl.u32 %v925, 16
    %v1032 = vrot.slane %v1030, 4
    %v1033 = vshll.u32 %v925, 16
    %v1035 = vrot.slane %v1033, 5
    %v1036 = vor.u32 %v1032, %v1035
    %v1037 = vrot.slane %v1036, 4
    %v1039 = vshll.u32 %v926, 16
    %v1041 = vrot.slane %v1039, 5
    %v1042 = vsel %vm97, %v1037, %v1041
    %v1044 = vshrl.u32 %v927, 16
    %v1046 = vrot.slane %v1044, 4
    %v1047 = vshll.u32 %v927, 16
    %v1049 = vrot.slane %v1047, 5
    %v1050 = vor.u32 %v1046, %v1049
    %v1051 = vrot.slane %v1050, 4
    %v1053 = vshll.u32 %v928, 16
    %v1055 = vrot.slane %v1053, 5
    %v1056 = vsel %vm97, %v1051, %v1055
    %v1058 = vshrl.u32 %v929, 16
    %v1060 = vrot.slane %v1058, 4
    %v1061 = vshll.u32 %v929, 16
    %v1063 = vrot.slane %v1061, 5
    %v1064 = vor.u32 %v1060, %v1063
    %v1065 = vrot.slane %v1064, 4
    %v1067 = vshll.u32 %v930, 16
    %v1069 = vrot.slane %v1067, 5
    %v1070 = vsel %vm97, %v1065, %v1069
    %v1072 = vshrl.u32 %v931, 16
    %v1074 = vrot.slane %v1072, 4
    %v1075 = vshll.u32 %v931, 16
    %v1077 = vrot.slane %v1075, 5
    %v1078 = vor.u32 %v1074, %v1077
    %v1079 = vrot.slane %v1078, 4
    %v1081 = vshll.u32 %v932, 16
    %v1083 = vrot.slane %v1081, 5
    %v1084 = vsel %vm97, %v1079, %v1083
    %v1086 = vshrl.u32 %v933, 16
    %v1088 = vrot.slane %v1086, 4
    %v1089 = vshll.u32 %v933, 16
    %v1091 = vrot.slane %v1089, 5
    %v1092 = vor.u32 %v1088, %v1091
    %v1093 = vrot.slane %v1092, 4
    %v1095 = vshll.u32 %v934, 16
    %v1097 = vrot.slane %v1095, 5
    %v1098 = vsel %vm97, %v1093, %v1097
    %v1100 = vshrl.u32 %v935, 16
    %v1102 = vrot.slane %v1100, 4
    %v1103 = vshll.u32 %v935, 16
    %v1105 = vrot.slane %v1103, 5
    %v1106 = vor.u32 %v1102, %v1105
    %v1107 = vrot.slane %v1106, 4
    %v1109 = vshll.u32 %v936, 16
    %v1111 = vrot.slane %v1109, 5
    %v1112 = vsel %vm97, %v1107, %v1111
    %v1114 = vshrl.u32 %v937, 16
    %v1116 = vrot.slane %v1114, 4
    %v1117 = vshll.u32 %v937, 16
    %v1119 = vrot.slane %v1117, 5
    %v1120 = vor.u32 %v1116, %v1119
    %v1121 = vrot.slane %v1120, 4
    %v1123 = vshll.u32 %v938, 16
    %v1125 = vrot.slane %v1123, 5
    %v1126 = vsel %vm97, %v1121, %v1125
    %v1128 = vshrl.u32 %v939, 16
    %v1130 = vrot.slane %v1128, 4
    %v1131 = vshll.u32 %v939, 16
    %v1133 = vrot.slane %v1131, 5
    %v1134 = vor.u32 %v1130, %v1133
    %v1135 = vrot.slane %v1134, 4
    %v1137 = vshll.u32 %v940, 16
    %v1139 = vrot.slane %v1137, 5
    %v1140 = vsel %vm97, %v1135, %v1139
    %v1142 = vshrl.u32 %v941, 16
    %v1144 = vrot.slane %v1142, 4
    %v1145 = vshll.u32 %v941, 16
    %v1147 = vrot.slane %v1145, 5
    %v1148 = vor.u32 %v1144, %v1147
    %v1149 = vrot.slane %v1148, 4
    %v1151 = vshll.u32 %v942, 16
    %v1153 = vrot.slane %v1151, 5
    %v1154 = vsel %vm97, %v1149, %v1153
    %v1156 = vshrl.u32 %v943, 16
    %v1158 = vrot.slane %v1156, 4
    %v1159 = vshll.u32 %v943, 16
    %v1161 = vrot.slane %v1159, 5
    %v1162 = vor.u32 %v1158, %v1161
    %v1163 = vrot.slane %v1162, 4
    %v1165 = vshll.u32 %v944, 16
    %v1167 = vrot.slane %v1165, 5
    %v1168 = vsel %vm97, %v1163, %v1167
    %s1169 = scalar_lea.vmem %s1, 96
    %v1170 = vld [vmem:[%s1169] sm:$0xf]
    %v1171 = vld [vmem:[%s1169 + $0x4] sm:$0xf]
    %v1172 = vld [vmem:[%s1169 + $0x8] sm:$0xf]
    %v1173 = vld [vmem:[%s1169 + $0xc] sm:$0xf]
    %v1174 = vld [vmem:[%s1169 + $0x10] sm:$0xf]
    %v1175 = vld [vmem:[%s1169 + $0x14] sm:$0xf]
    %v1176 = vld [vmem:[%s1169 + $0x18] sm:$0xf]
    %v1177 = vld [vmem:[%s1169 + $0x1c] sm:$0xf]
    %v1178 = vunpack.c.l.b16 %v958
    %v1179 = vunpack.c.l.b16 %v972
    %v1180 = vunpack.c.l.b16 %v986
    %v1181 = vunpack.c.l.b16 %v1000
    %v1182 = vunpack.c.l.b16 %v1014
    %v1183 = vunpack.c.l.b16 %v1028
    %v1184 = vunpack.c.l.b16 %v1042
    %v1185 = vunpack.c.l.b16 %v1056
    %v1186 = vunpack.c.l.b16 %v1070
    %v1187 = vunpack.c.l.b16 %v1084
    %v1188 = vunpack.c.l.b16 %v1098
    %v1189 = vunpack.c.l.b16 %v1112
    %v1190 = vunpack.c.l.b16 %v1126
    %v1191 = vunpack.c.l.b16 %v1140
    %v1192 = vunpack.c.l.b16 %v1154
    %v1193 = vunpack.c.l.b16 %v1168
    %v1194 = vpack.c.b16 %v1179, %v1178
    %v1195 = vpack.c.b16 %v1181, %v1180
    %v1196 = vpack.c.b16 %v1183, %v1182
    %v1197 = vpack.c.b16 %v1185, %v1184
    %v1198 = vpack.c.b16 %v1187, %v1186
    %v1199 = vpack.c.b16 %v1189, %v1188
    %v1200 = vpack.c.b16 %v1191, %v1190
    %v1201 = vpack.c.b16 %v1193, %v1192
    %v1210 = vunpack.c.l.b16 %v1170
    %v1211 = vunpack.c.l.b16 %v1171
    %v1212 = vunpack.c.l.b16 %v1172
    %v1213 = vunpack.c.l.b16 %v1173
    %v1214 = vunpack.c.l.b16 %v1174
    %v1215 = vunpack.c.l.b16 %v1175
    %v1216 = vunpack.c.l.b16 %v1176
    %v1217 = vunpack.c.l.b16 %v1177
    %v1218 = vpack.c.b16 %v1211, %v1210
    %v1219 = vpack.c.b16 %v1213, %v1212
    %v1220 = vpack.c.b16 %v1215, %v1214
    %v1221 = vpack.c.b16 %v1217, %v1216
    %v1227 = vsel %vm379, %v1194, 0
    %v1230 = vsel %vm379, %v1195, 0
    %v1233 = vsel %vm379, %v1196, 0
    %v1236 = vsel %vm379, %v1197, 0
    %v1239 = vsel %vm379, %v1198, 0
    %v1242 = vsel %vm379, %v1199, 0
    %v1245 = vsel %vm379, %v1200, 0
    %v1248 = vsel %vm379, %v1201, 0
    %1250 = vmatprep.subr.bf16.mxu0 0
    %1251 = vmatpush1.bf16.msra.mxu0 0
    %1252 = vmatprep.subr.bf16.mxu0 0
    %1253 = vmatpush1.bf16.msra.mxu0 0
    %1254 = vmatprep.subr.bf16.mxu0 0
    %1255 = vmatpush1.bf16.msra.mxu0 0
    %1256 = vmatprep.subr.bf16.mxu0 0
    %1257 = vmatpush1.bf16.msra.mxu0 0
    %1258 = vmatprep.subr.bf16.mxu0 0
    %1259 = vmatpush1.bf16.msra.mxu0 %v1221
    %1260 = vmatprep.subr.bf16.mxu0 0
    %1261 = vmatpush1.bf16.msra.mxu0 %v1220
    %1262 = vmatprep.subr.bf16.mxu0 0
    %1263 = vmatpush1.bf16.msra.mxu0 %v1219
    %1264 = vmatprep.subr.bf16.mxu0 0
    %1265 = vmatpush1.bf16.msra.mxu0 %v1218
    %1266 = vmatprep.subr.bf16.mxu0 0
    %1267 = vmatpush2.bf16.msra.mxu0 0
    %1268 = vmatprep.subr.bf16.mxu0 0
    %1269 = vmatpush2.bf16.msra.mxu0 0
    %1270 = vmatprep.subr.bf16.mxu0 0
    %1271 = vmatpush2.bf16.msra.mxu0 0
    %1272 = vmatprep.subr.bf16.mxu0 0
    %1273 = vmatpush2.bf16.msra.mxu0 0
    %1274 = vmatprep.subr.bf16.mxu0 0
    %1275 = vmatpush2.bf16.msra.mxu0 0
    %1276 = vmatprep.subr.bf16.mxu0 0
    %1277 = vmatpush2.bf16.msra.mxu0 0
    %1278 = vmatprep.subr.bf16.mxu0 0
    %1279 = vmatpush2.bf16.msra.mxu0 0
    %1280 = vmatprep.subr.bf16.mxu0 0
    %1281 = vmatpush2.bf16.msra.mxu0 0
    %1282 = vmatprep.mubr.bf16.mxu0 0
    %1283 = vmatmul.mubr.bf16.gmra.mxu0 %v1227
    %v1284 = vpop.f32.mrf.mxu0
    %v1285 = vadd.f32 0.0, %v1284
    %v1286 = vpop.f32.mrf.mxu0
    %v1287 = vpop.f32.mrf.mxu0
    %v1288 = vadd.f32 0.0, %v1287
    %v1289 = vpop.f32.mrf.mxu0
    %1290 = vmatprep.mubr.bf16.mxu0 0
    %1291 = vmatmul.mubr.bf16.gmra.mxu0 %v1230
    %v1292 = vpop.f32.mrf.mxu0
    %v1293 = vadd.f32 0.0, %v1292
    %v1294 = vpop.f32.mrf.mxu0
    %v1295 = vpop.f32.mrf.mxu0
    %v1296 = vadd.f32 0.0, %v1295
    %v1297 = vpop.f32.mrf.mxu0
    %1298 = vmatprep.mubr.bf16.mxu0 0
    %1299 = vmatmul.mubr.bf16.gmra.mxu0 %v1233
    %v1300 = vpop.f32.mrf.mxu0
    %v1301 = vadd.f32 0.0, %v1300
    %v1302 = vpop.f32.mrf.mxu0
    %v1303 = vpop.f32.mrf.mxu0
    %v1304 = vadd.f32 0.0, %v1303
    %v1305 = vpop.f32.mrf.mxu0
    %1306 = vmatprep.mubr.bf16.mxu0 0
    %1307 = vmatmul.mubr.bf16.gmra.mxu0 %v1236
    %v1308 = vpop.f32.mrf.mxu0
    %v1309 = vadd.f32 0.0, %v1308
    %v1310 = vpop.f32.mrf.mxu0
    %v1311 = vpop.f32.mrf.mxu0
    %v1312 = vadd.f32 0.0, %v1311
    %v1313 = vpop.f32.mrf.mxu0
    %1314 = vmatprep.mubr.bf16.mxu0 0
    %1315 = vmatmul.mubr.bf16.gmra.mxu0 %v1239
    %v1316 = vpop.f32.mrf.mxu0
    %v1317 = vadd.f32 0.0, %v1316
    %v1318 = vpop.f32.mrf.mxu0
    %v1319 = vpop.f32.mrf.mxu0
    %v1320 = vadd.f32 0.0, %v1319
    %v1321 = vpop.f32.mrf.mxu0
    %1322 = vmatprep.mubr.bf16.mxu0 0
    %1323 = vmatmul.mubr.bf16.gmra.mxu0 %v1242
    %v1324 = vpop.f32.mrf.mxu0
    %v1325 = vadd.f32 0.0, %v1324
    %v1326 = vpop.f32.mrf.mxu0
    %v1327 = vpop.f32.mrf.mxu0
    %v1328 = vadd.f32 0.0, %v1327
    %v1329 = vpop.f32.mrf.mxu0
    %1330 = vmatprep.mubr.bf16.mxu0 0
    %1331 = vmatmul.mubr.bf16.gmra.mxu0 %v1245
    %v1332 = vpop.f32.mrf.mxu0
    %v1333 = vadd.f32 0.0, %v1332
    %v1334 = vpop.f32.mrf.mxu0
    %v1335 = vpop.f32.mrf.mxu0
    %v1336 = vadd.f32 0.0, %v1335
    %v1337 = vpop.f32.mrf.mxu0
    %1338 = vmatprep.mubr.bf16.mxu0 0
    %1339 = vmatmul.mubr.bf16.gmra.mxu0 %v1248
    %v1340 = vpop.f32.mrf.mxu0
    %v1341 = vadd.f32 0.0, %v1340
    %v1342 = vpop.f32.mrf.mxu0
    %v1343 = vpop.f32.mrf.mxu0
    %v1344 = vadd.f32 0.0, %v1343
    %v1345 = vpop.f32.mrf.mxu0
    %1346 = vdwg.mxu0
    %v1347 = vadd.f32 %v897, %v1285
    %v1348 = vadd.f32 %v898, %v1288
    %v1349 = vadd.f32 %v899, %v1293
    %v1350 = vadd.f32 %v900, %v1296
    %v1351 = vadd.f32 %v901, %v1301
    %v1352 = vadd.f32 %v902, %v1304
    %v1353 = vadd.f32 %v903, %v1309
    %v1354 = vadd.f32 %v904, %v1312
    %v1355 = vadd.f32 %v905, %v1317
    %v1356 = vadd.f32 %v906, %v1320
    %v1357 = vadd.f32 %v907, %v1325
    %v1358 = vadd.f32 %v908, %v1328
    %v1359 = vadd.f32 %v909, %v1333
    %v1360 = vadd.f32 %v910, %v1336
    %v1361 = vadd.f32 %v911, %v1341
    %v1362 = vadd.f32 %v912, %v1344
    %v1363 = vmax.f32 %v1347, 0.0
    %v1364 = vmax.f32 %v1348, 0.0
    %v1365 = vmax.f32 %v1349, 0.0
    %v1366 = vmax.f32 %v1350, 0.0
    %v1367 = vmax.f32 %v1351, 0.0
    %v1368 = vmax.f32 %v1352, 0.0
    %v1369 = vmax.f32 %v1353, 0.0
    %v1370 = vmax.f32 %v1354, 0.0
    %v1371 = vmax.f32 %v1355, 0.0
    %v1372 = vmax.f32 %v1356, 0.0
    %v1373 = vmax.f32 %v1357, 0.0
    %v1374 = vmax.f32 %v1358, 0.0
    %v1375 = vmax.f32 %v1359, 0.0
    %v1376 = vmax.f32 %v1360, 0.0
    %v1377 = vmax.f32 %v1361, 0.0
    %v1378 = vmax.f32 %v1362, 0.0
    %v1379 = vld [vmem:[%s2] sm:$0xf]
    %v1380 = vld [vmem:[%s2 + $0x4] sm:$0xf]
    %v1381 = vld [vmem:[%s2 + $0x8] sm:$0xf]
    %v1382 = vld [vmem:[%s2 + $0xc] sm:$0xf]
    %v1383 = vpack.c.bf16 %v1364, %v1363
    %v1384 = vpack.c.bf16 %v1366, %v1365
    %v1385 = vpack.c.bf16 %v1371, %v1367
    %v1386 = vpack.c.bf16 %v1373, %v1372
    %v1387 = vpack.c.bf16 %v1375, %v1374
    %v1392 = vunpack.c.l.b16 %v1379
    %v1393 = vunpack.c.l.b16 %v1380
    %v1394 = vunpack.c.l.b16 %v1381
    %v1395 = vunpack.c.l.b16 %v1382
    %v1396 = vpack.c.b16 %v1393, %v1392
    %v1397 = vpack.c.b16 %v1395, %v1394
    %vm1400 = vcmask 261120
    %v1402 = vsel %vm1400, %v1383, 0
    %v1405 = vsel %vm1400, %v1384, 0
    %v1408 = vsel %vm1400, %v1385, 0
    %v1411 = vsel %vm1400, %v1386, 0
    %v1414 = vsel %vm1400, %v1387, 0
    %1416 = vmatprep.subr.bf16.mxu0 0
    %1417 = vmatpush1.bf16.msra.mxu0 0
    %1418 = vmatprep.subr.bf16.mxu0 0
    %1419 = vmatpush1.bf16.msra.mxu0 0
    %1420 = vmatprep.subr.bf16.mxu0 0
    %1421 = vmatpush1.bf16.msra.mxu0 0
    %1422 = vmatprep.subr.bf16.mxu0 0
    %1423 = vmatpush1.bf16.msra.mxu0 0
    %1424 = vmatprep.subr.bf16.mxu0 0
    %1425 = vmatpush1.bf16.msra.mxu0 0
    %1426 = vmatprep.subr.bf16.mxu0 0
    %1427 = vmatpush1.bf16.msra.mxu0 0
    %1428 = vmatprep.subr.bf16.mxu0 0
    %1429 = vmatpush1.bf16.msra.mxu0 %v1397
    %1430 = vmatprep.subr.bf16.mxu0 0
    %1431 = vmatpush1.bf16.msra.mxu0 %v1396
    %1432 = vmatprep.subr.bf16.mxu0 0
    %1433 = vmatpush2.bf16.msra.mxu0 0
    %1434 = vmatprep.subr.bf16.mxu0 0
    %1435 = vmatpush2.bf16.msra.mxu0 0
    %1436 = vmatprep.subr.bf16.mxu0 0
    %1437 = vmatpush2.bf16.msra.mxu0 0
    %1438 = vmatprep.subr.bf16.mxu0 0
    %1439 = vmatpush2.bf16.msra.mxu0 0
    %1440 = vmatprep.subr.bf16.mxu0 0
    %1441 = vmatpush2.bf16.msra.mxu0 0
    %1442 = vmatprep.subr.bf16.mxu0 0
    %1443 = vmatpush2.bf16.msra.mxu0 0
    %1444 = vmatprep.subr.bf16.mxu0 0
    %1445 = vmatpush2.bf16.msra.mxu0 0
    %1446 = vmatprep.subr.bf16.mxu0 0
    %1447 = vmatpush2.bf16.msra.mxu0 0
    %1448 = vmatprep.mubr.bf16.mxu0 0
    %1449 = vmatmul.mubr.bf16.gmra.mxu0 %v1402
    %v1450 = vpop.f32.mrf.mxu0
    %v1451 = vadd.f32 0.0, %v1450
    %v1452 = vpop.f32.mrf.mxu0
    %v1453 = vpop.f32.mrf.mxu0
    %v1454 = vpop.f32.mrf.mxu0
    %1455 = vmatprep.mubr.bf16.mxu0 0
    %1456 = vmatmul.mubr.bf16.gmra.mxu0 %v1405
    %v1457 = vpop.f32.mrf.mxu0
    %v1458 = vadd.f32 0.0, %v1457
    %v1459 = vpop.f32.mrf.mxu0
    %v1460 = vpop.f32.mrf.mxu0
    %v1461 = vpop.f32.mrf.mxu0
    %1462 = vmatprep.mubr.bf16.mxu0 0
    %1463 = vmatmul.mubr.bf16.gmra.mxu0 %v1408
    %v1464 = vpop.f32.mrf.mxu0
    %v1465 = vadd.f32 0.0, %v1464
    %v1466 = vpop.f32.mrf.mxu0
    %v1467 = vpop.f32.mrf.mxu0
    %v1468 = vadd.f32 0.0, %v1467
    %v1469 = vpop.f32.mrf.mxu0
    %1470 = vmatprep.mubr.bf16.mxu0 0
    %1471 = vmatmul.mubr.bf16.gmra.mxu0 %v1411
    %v1472 = vpop.f32.mrf.mxu0
    %v1473 = vpop.f32.mrf.mxu0
    %v1474 = vpop.f32.mrf.mxu0
    %v1475 = vadd.f32 0.0, %v1474
    %v1476 = vpop.f32.mrf.mxu0
    %1477 = vmatprep.mubr.bf16.mxu0 0
    %1478 = vmatmul.mubr.bf16.gmra.mxu0 %v1414
    %v1479 = vpop.f32.mrf.mxu0
    %v1480 = vpop.f32.mrf.mxu0
    %v1481 = vpop.f32.mrf.mxu0
    %v1482 = vadd.f32 0.0, %v1481
    %v1483 = vpop.f32.mrf.mxu0
    %1484 = vdwg.mxu0
    %v1485 = vadd.f32 %v1451, 0.0
    %v1486 = vadd.f32 %v1458, 0.0
    %v1487 = vadd.f32 %v1465, 0.0
    %v1488 = vadd.f32 %v1468, 0.0
    %v1489 = vadd.f32 %v1475, 0.0
    %v1490 = vadd.f32 %v1482, 0.0
    %s1491 = scalar_lea.vmem %s2, 16
    %v1492 = vld [vmem:[%s1491] sm:$0xf]
    %v1493 = vld [vmem:[%s1491 + $0x4] sm:$0xf]
    %v1494 = vld [vmem:[%s1491 + $0x8] sm:$0xf]
    %v1495 = vld [vmem:[%s1491 + $0xc] sm:$0xf]
    %v1500 = vunpack.c.l.b16 %v1492
    %v1501 = vunpack.c.l.b16 %v1493
    %v1502 = vunpack.c.l.b16 %v1494
    %v1503 = vunpack.c.l.b16 %v1495
    %v1504 = vpack.c.b16 %v1501, %v1500
    %v1505 = vpack.c.b16 %v1503, %v1502
    %1508 = vmatprep.subr.bf16.mxu0 0
    %1509 = vmatpush1.bf16.msra.mxu0 0
    %1510 = vmatprep.subr.bf16.mxu0 0
    %1511 = vmatpush1.bf16.msra.mxu0 0
    %1512 = vmatprep.subr.bf16.mxu0 0
    %1513 = vmatpush1.bf16.msra.mxu0 0
    %1514 = vmatprep.subr.bf16.mxu0 0
    %1515 = vmatpush1.bf16.msra.mxu0 0
    %1516 = vmatprep.subr.bf16.mxu0 0
    %1517 = vmatpush1.bf16.msra.mxu0 0
    %1518 = vmatprep.subr.bf16.mxu0 0
    %1519 = vmatpush1.bf16.msra.mxu0 0
    %1520 = vmatprep.subr.bf16.mxu0 0
    %1521 = vmatpush1.bf16.msra.mxu0 %v1505
    %1522 = vmatprep.subr.bf16.mxu0 0
    %1523 = vmatpush1.bf16.msra.mxu0 %v1504
    %1524 = vmatprep.subr.bf16.mxu0 0
    %1525 = vmatpush2.bf16.msra.mxu0 0
    %1526 = vmatprep.subr.bf16.mxu0 0
    %1527 = vmatpush2.bf16.msra.mxu0 0
    %1528 = vmatprep.subr.bf16.mxu0 0
    %1529 = vmatpush2.bf16.msra.mxu0 0
    %1530 = vmatprep.subr.bf16.mxu0 0
    %1531 = vmatpush2.bf16.msra.mxu0 0
    %1532 = vmatprep.subr.bf16.mxu0 0
    %1533 = vmatpush2.bf16.msra.mxu0 0
    %1534 = vmatprep.subr.bf16.mxu0 0
    %1535 = vmatpush2.bf16.msra.mxu0 0
    %1536 = vmatprep.subr.bf16.mxu0 0
    %1537 = vmatpush2.bf16.msra.mxu0 0
    %1538 = vmatprep.subr.bf16.mxu0 0
    %1539 = vmatpush2.bf16.msra.mxu0 0
    %1540 = vmatprep.mubr.bf16.mxu0 0
    %1541 = vmatmul.mubr.bf16.gmra.mxu0 %v1402
    %v1542 = vpop.f32.mrf.mxu0
    %v1543 = vadd.f32 0.0, %v1542
    %v1544 = vpop.f32.mrf.mxu0
    %v1545 = vpop.f32.mrf.mxu0
    %v1546 = vpop.f32.mrf.mxu0
    %1547 = vmatprep.mubr.bf16.mxu0 0
    %1548 = vmatmul.mubr.bf16.gmra.mxu0 %v1405
    %v1549 = vpop.f32.mrf.mxu0
    %v1550 = vadd.f32 0.0, %v1549
    %v1551 = vpop.f32.mrf.mxu0
    %v1552 = vpop.f32.mrf.mxu0
    %v1553 = vpop.f32.mrf.mxu0
    %1554 = vmatprep.mubr.bf16.mxu0 0
    %1555 = vmatmul.mubr.bf16.gmra.mxu0 %v1408
    %v1556 = vpop.f32.mrf.mxu0
    %v1557 = vadd.f32 0.0, %v1556
    %v1558 = vpop.f32.mrf.mxu0
    %v1559 = vpop.f32.mrf.mxu0
    %v1560 = vadd.f32 0.0, %v1559
    %v1561 = vpop.f32.mrf.mxu0
    %1562 = vmatprep.mubr.bf16.mxu0 0
    %1563 = vmatmul.mubr.bf16.gmra.mxu0 %v1411
    %v1564 = vpop.f32.mrf.mxu0
    %v1565 = vpop.f32.mrf.mxu0
    %v1566 = vpop.f32.mrf.mxu0
    %v1567 = vadd.f32 0.0, %v1566
    %v1568 = vpop.f32.mrf.mxu0
    %1569 = vmatprep.mubr.bf16.mxu0 0
    %1570 = vmatmul.mubr.bf16.gmra.mxu0 %v1414
    %v1571 = vpop.f32.mrf.mxu0
    %v1572 = vpop.f32.mrf.mxu0
    %v1573 = vpop.f32.mrf.mxu0
    %v1574 = vadd.f32 0.0, %v1573
    %v1575 = vpop.f32.mrf.mxu0
    %1576 = vdwg.mxu0
    %v1583 = vrot.slane %v1543, 1
    %v1584 = vrot.slane %v1550, 1
    %v1585 = vrot.slane %v1557, 1
    %v1586 = vrot.slane %v1560, 1
    %v1587 = vrot.slane %v1567, 1
    %v1588 = vrot.slane %v1574, 1
    %v1595 = vadd.f32 %v1485, %v1583
    %v1596 = vadd.f32 %v1486, %v1584
    %v1597 = vadd.f32 %v1487, %v1585
    %v1598 = vadd.f32 %v1488, %v1586
    %v1599 = vadd.f32 %v1489, %v1587
    %v1600 = vadd.f32 %v1490, %v1588
    %s1601 = scalar_lea.vmem %s2, 32
    %v1602 = vld [vmem:[%s1601] sm:$0xf]
    %v1603 = vld [vmem:[%s1601 + $0x4] sm:$0xf]
    %v1604 = vld [vmem:[%s1601 + $0x8] sm:$0xf]
    %v1605 = vld [vmem:[%s1601 + $0xc] sm:$0xf]
    %v1610 = vunpack.c.l.b16 %v1602
    %v1611 = vunpack.c.l.b16 %v1603
    %v1612 = vunpack.c.l.b16 %v1604
    %v1613 = vunpack.c.l.b16 %v1605
    %v1614 = vpack.c.b16 %v1611, %v1610
    %v1615 = vpack.c.b16 %v1613, %v1612
    %1618 = vmatprep.subr.bf16.mxu0 0
    %1619 = vmatpush1.bf16.msra.mxu0 0
    %1620 = vmatprep.subr.bf16.mxu0 0
    %1621 = vmatpush1.bf16.msra.mxu0 0
    %1622 = vmatprep.subr.bf16.mxu0 0
    %1623 = vmatpush1.bf16.msra.mxu0 0
    %1624 = vmatprep.subr.bf16.mxu0 0
    %1625 = vmatpush1.bf16.msra.mxu0 0
    %1626 = vmatprep.subr.bf16.mxu0 0
    %1627 = vmatpush1.bf16.msra.mxu0 0
    %1628 = vmatprep.subr.bf16.mxu0 0
    %1629 = vmatpush1.bf16.msra.mxu0 0
    %1630 = vmatprep.subr.bf16.mxu0 0
    %1631 = vmatpush1.bf16.msra.mxu0 %v1615
    %1632 = vmatprep.subr.bf16.mxu0 0
    %1633 = vmatpush1.bf16.msra.mxu0 %v1614
    %1634 = vmatprep.subr.bf16.mxu0 0
    %1635 = vmatpush2.bf16.msra.mxu0 0
    %1636 = vmatprep.subr.bf16.mxu0 0
    %1637 = vmatpush2.bf16.msra.mxu0 0
    %1638 = vmatprep.subr.bf16.mxu0 0
    %1639 = vmatpush2.bf16.msra.mxu0 0
    %1640 = vmatprep.subr.bf16.mxu0 0
    %1641 = vmatpush2.bf16.msra.mxu0 0
    %1642 = vmatprep.subr.bf16.mxu0 0
    %1643 = vmatpush2.bf16.msra.mxu0 0
    %1644 = vmatprep.subr.bf16.mxu0 0
    %1645 = vmatpush2.bf16.msra.mxu0 0
    %1646 = vmatprep.subr.bf16.mxu0 0
    %1647 = vmatpush2.bf16.msra.mxu0 0
    %1648 = vmatprep.subr.bf16.mxu0 0
    %1649 = vmatpush2.bf16.msra.mxu0 0
    %1650 = vmatprep.mubr.bf16.mxu0 0
    %1651 = vmatmul.mubr.bf16.gmra.mxu0 %v1402
    %v1652 = vpop.f32.mrf.mxu0
    %v1653 = vadd.f32 0.0, %v1652
    %v1654 = vpop.f32.mrf.mxu0
    %v1655 = vpop.f32.mrf.mxu0
    %v1656 = vpop.f32.mrf.mxu0
    %1657 = vmatprep.mubr.bf16.mxu0 0
    %1658 = vmatmul.mubr.bf16.gmra.mxu0 %v1405
    %v1659 = vpop.f32.mrf.mxu0
    %v1660 = vadd.f32 0.0, %v1659
    %v1661 = vpop.f32.mrf.mxu0
    %v1662 = vpop.f32.mrf.mxu0
    %v1663 = vpop.f32.mrf.mxu0
    %1664 = vmatprep.mubr.bf16.mxu0 0
    %1665 = vmatmul.mubr.bf16.gmra.mxu0 %v1408
    %v1666 = vpop.f32.mrf.mxu0
    %v1667 = vadd.f32 0.0, %v1666
    %v1668 = vpop.f32.mrf.mxu0
    %v1669 = vpop.f32.mrf.mxu0
    %v1670 = vadd.f32 0.0, %v1669
    %v1671 = vpop.f32.mrf.mxu0
    %1672 = vmatprep.mubr.bf16.mxu0 0
    %1673 = vmatmul.mubr.bf16.gmra.mxu0 %v1411
    %v1674 = vpop.f32.mrf.mxu0
    %v1675 = vpop.f32.mrf.mxu0
    %v1676 = vpop.f32.mrf.mxu0
    %v1677 = vadd.f32 0.0, %v1676
    %v1678 = vpop.f32.mrf.mxu0
    %1679 = vmatprep.mubr.bf16.mxu0 0
    %1680 = vmatmul.mubr.bf16.gmra.mxu0 %v1414
    %v1681 = vpop.f32.mrf.mxu0
    %v1682 = vpop.f32.mrf.mxu0
    %v1683 = vpop.f32.mrf.mxu0
    %v1684 = vadd.f32 0.0, %v1683
    %v1685 = vpop.f32.mrf.mxu0
    %1686 = vdwg.mxu0
    %v1693 = vrot.slane %v1653, 2
    %v1694 = vrot.slane %v1660, 2
    %v1695 = vrot.slane %v1667, 2
    %v1696 = vrot.slane %v1670, 2
    %v1697 = vrot.slane %v1677, 2
    %v1698 = vrot.slane %v1684, 2
    %v1705 = vadd.f32 %v1595, %v1693
    %v1706 = vadd.f32 %v1596, %v1694
    %v1707 = vadd.f32 %v1597, %v1695
    %v1708 = vadd.f32 %v1598, %v1696
    %v1709 = vadd.f32 %v1599, %v1697
    %v1710 = vadd.f32 %v1600, %v1698
    %s1711 = scalar_lea.vmem %s2, 48
    %v1712 = vld [vmem:[%s1711] sm:$0xf]
    %v1713 = vld [vmem:[%s1711 + $0x4] sm:$0xf]
    %v1714 = vld [vmem:[%s1711 + $0x8] sm:$0xf]
    %v1715 = vld [vmem:[%s1711 + $0xc] sm:$0xf]
    %v1720 = vunpack.c.l.b16 %v1712
    %v1721 = vunpack.c.l.b16 %v1713
    %v1722 = vunpack.c.l.b16 %v1714
    %v1723 = vunpack.c.l.b16 %v1715
    %v1724 = vpack.c.b16 %v1721, %v1720
    %v1725 = vpack.c.b16 %v1723, %v1722
    %1728 = vmatprep.subr.bf16.mxu0 0
    %1729 = vmatpush1.bf16.msra.mxu0 0
    %1730 = vmatprep.subr.bf16.mxu0 0
    %1731 = vmatpush1.bf16.msra.mxu0 0
    %1732 = vmatprep.subr.bf16.mxu0 0
    %1733 = vmatpush1.bf16.msra.mxu0 0
    %1734 = vmatprep.subr.bf16.mxu0 0
    %1735 = vmatpush1.bf16.msra.mxu0 0
    %1736 = vmatprep.subr.bf16.mxu0 0
    %1737 = vmatpush1.bf16.msra.mxu0 0
    %1738 = vmatprep.subr.bf16.mxu0 0
    %1739 = vmatpush1.bf16.msra.mxu0 0
    %1740 = vmatprep.subr.bf16.mxu0 0
    %1741 = vmatpush1.bf16.msra.mxu0 %v1725
    %1742 = vmatprep.subr.bf16.mxu0 0
    %1743 = vmatpush1.bf16.msra.mxu0 %v1724
    %1744 = vmatprep.subr.bf16.mxu0 0
    %1745 = vmatpush2.bf16.msra.mxu0 0
    %1746 = vmatprep.subr.bf16.mxu0 0
    %1747 = vmatpush2.bf16.msra.mxu0 0
    %1748 = vmatprep.subr.bf16.mxu0 0
    %1749 = vmatpush2.bf16.msra.mxu0 0
    %1750 = vmatprep.subr.bf16.mxu0 0
    %1751 = vmatpush2.bf16.msra.mxu0 0
    %1752 = vmatprep.subr.bf16.mxu0 0
    %1753 = vmatpush2.bf16.msra.mxu0 0
    %1754 = vmatprep.subr.bf16.mxu0 0
    %1755 = vmatpush2.bf16.msra.mxu0 0
    %1756 = vmatprep.subr.bf16.mxu0 0
    %1757 = vmatpush2.bf16.msra.mxu0 0
    %1758 = vmatprep.subr.bf16.mxu0 0
    %1759 = vmatpush2.bf16.msra.mxu0 0
    %1760 = vmatprep.mubr.bf16.mxu0 0
    %1761 = vmatmul.mubr.bf16.gmra.mxu0 %v1402
    %v1762 = vpop.f32.mrf.mxu0
    %v1763 = vadd.f32 0.0, %v1762
    %v1764 = vpop.f32.mrf.mxu0
    %v1765 = vpop.f32.mrf.mxu0
    %v1766 = vpop.f32.mrf.mxu0
    %1767 = vmatprep.mubr.bf16.mxu0 0
    %1768 = vmatmul.mubr.bf16.gmra.mxu0 %v1405
    %v1769 = vpop.f32.mrf.mxu0
    %v1770 = vadd.f32 0.0, %v1769
    %v1771 = vpop.f32.mrf.mxu0
    %v1772 = vpop.f32.mrf.mxu0
    %v1773 = vpop.f32.mrf.mxu0
    %1774 = vmatprep.mubr.bf16.mxu0 0
    %1775 = vmatmul.mubr.bf16.gmra.mxu0 %v1408
    %v1776 = vpop.f32.mrf.mxu0
    %v1777 = vadd.f32 0.0, %v1776
    %v1778 = vpop.f32.mrf.mxu0
    %v1779 = vpop.f32.mrf.mxu0
    %v1780 = vadd.f32 0.0, %v1779
    %v1781 = vpop.f32.mrf.mxu0
    %1782 = vmatprep.mubr.bf16.mxu0 0
    %1783 = vmatmul.mubr.bf16.gmra.mxu0 %v1411
    %v1784 = vpop.f32.mrf.mxu0
    %v1785 = vpop.f32.mrf.mxu0
    %v1786 = vpop.f32.mrf.mxu0
    %v1787 = vadd.f32 0.0, %v1786
    %v1788 = vpop.f32.mrf.mxu0
    %1789 = vmatprep.mubr.bf16.mxu0 0
    %1790 = vmatmul.mubr.bf16.gmra.mxu0 %v1414
    %v1791 = vpop.f32.mrf.mxu0
    %v1792 = vpop.f32.mrf.mxu0
    %v1793 = vpop.f32.mrf.mxu0
    %v1794 = vadd.f32 0.0, %v1793
    %v1795 = vpop.f32.mrf.mxu0
    %1796 = vdwg.mxu0
    %v1803 = vrot.slane %v1763, 3
    %v1804 = vrot.slane %v1770, 3
    %v1805 = vrot.slane %v1777, 3
    %v1806 = vrot.slane %v1780, 3
    %v1807 = vrot.slane %v1787, 3
    %v1808 = vrot.slane %v1794, 3
    %v1815 = vadd.f32 %v1705, %v1803
    %v1816 = vadd.f32 %v1706, %v1804
    %v1817 = vadd.f32 %v1707, %v1805
    %v1818 = vadd.f32 %v1708, %v1806
    %v1819 = vadd.f32 %v1709, %v1807
    %v1820 = vadd.f32 %v1710, %v1808
    %s1821 = scalar_lea.vmem %s2, 64
    %v1822 = vld [vmem:[%s1821] sm:$0xf]
    %v1823 = vld [vmem:[%s1821 + $0x4] sm:$0xf]
    %v1824 = vld [vmem:[%s1821 + $0x8] sm:$0xf]
    %v1825 = vld [vmem:[%s1821 + $0xc] sm:$0xf]
    %v1826 = vpack.c.bf16 %v1365, %v1364
    %v1827 = vpack.c.bf16 %v1367, %v1366
    %v1828 = vpack.c.bf16 %v1372, %v1368
    %v1829 = vpack.c.bf16 %v1374, %v1373
    %v1830 = vpack.c.bf16 %v1376, %v1375
    %v1835 = vunpack.c.l.b16 %v1822
    %v1836 = vunpack.c.l.b16 %v1823
    %v1837 = vunpack.c.l.b16 %v1824
    %v1838 = vunpack.c.l.b16 %v1825
    %v1839 = vpack.c.b16 %v1836, %v1835
    %v1840 = vpack.c.b16 %v1838, %v1837
    %v1844 = vsel %vm1400, %v1826, 0
    %v1847 = vsel %vm1400, %v1827, 0
    %v1850 = vsel %vm1400, %v1828, 0
    %v1853 = vsel %vm1400, %v1829, 0
    %v1856 = vsel %vm1400, %v1830, 0
    %1858 = vmatprep.subr.bf16.mxu0 0
    %1859 = vmatpush1.bf16.msra.mxu0 0
    %1860 = vmatprep.subr.bf16.mxu0 0
    %1861 = vmatpush1.bf16.msra.mxu0 0
    %1862 = vmatprep.subr.bf16.mxu0 0
    %1863 = vmatpush1.bf16.msra.mxu0 0
    %1864 = vmatprep.subr.bf16.mxu0 0
    %1865 = vmatpush1.bf16.msra.mxu0 0
    %1866 = vmatprep.subr.bf16.mxu0 0
    %1867 = vmatpush1.bf16.msra.mxu0 0
    %1868 = vmatprep.subr.bf16.mxu0 0
    %1869 = vmatpush1.bf16.msra.mxu0 0
    %1870 = vmatprep.subr.bf16.mxu0 0
    %1871 = vmatpush1.bf16.msra.mxu0 %v1840
    %1872 = vmatprep.subr.bf16.mxu0 0
    %1873 = vmatpush1.bf16.msra.mxu0 %v1839
    %1874 = vmatprep.subr.bf16.mxu0 0
    %1875 = vmatpush2.bf16.msra.mxu0 0
    %1876 = vmatprep.subr.bf16.mxu0 0
    %1877 = vmatpush2.bf16.msra.mxu0 0
    %1878 = vmatprep.subr.bf16.mxu0 0
    %1879 = vmatpush2.bf16.msra.mxu0 0
    %1880 = vmatprep.subr.bf16.mxu0 0
    %1881 = vmatpush2.bf16.msra.mxu0 0
    %1882 = vmatprep.subr.bf16.mxu0 0
    %1883 = vmatpush2.bf16.msra.mxu0 0
    %1884 = vmatprep.subr.bf16.mxu0 0
    %1885 = vmatpush2.bf16.msra.mxu0 0
    %1886 = vmatprep.subr.bf16.mxu0 0
    %1887 = vmatpush2.bf16.msra.mxu0 0
    %1888 = vmatprep.subr.bf16.mxu0 0
    %1889 = vmatpush2.bf16.msra.mxu0 0
    %1890 = vmatprep.mubr.bf16.mxu0 0
    %1891 = vmatmul.mubr.bf16.gmra.mxu0 %v1844
    %v1892 = vpop.f32.mrf.mxu0
    %v1893 = vadd.f32 0.0, %v1892
    %v1894 = vpop.f32.mrf.mxu0
    %v1895 = vpop.f32.mrf.mxu0
    %v1896 = vpop.f32.mrf.mxu0
    %1897 = vmatprep.mubr.bf16.mxu0 0
    %1898 = vmatmul.mubr.bf16.gmra.mxu0 %v1847
    %v1899 = vpop.f32.mrf.mxu0
    %v1900 = vadd.f32 0.0, %v1899
    %v1901 = vpop.f32.mrf.mxu0
    %v1902 = vpop.f32.mrf.mxu0
    %v1903 = vpop.f32.mrf.mxu0
    %1904 = vmatprep.mubr.bf16.mxu0 0
    %1905 = vmatmul.mubr.bf16.gmra.mxu0 %v1850
    %v1906 = vpop.f32.mrf.mxu0
    %v1907 = vadd.f32 0.0, %v1906
    %v1908 = vpop.f32.mrf.mxu0
    %v1909 = vpop.f32.mrf.mxu0
    %v1910 = vadd.f32 0.0, %v1909
    %v1911 = vpop.f32.mrf.mxu0
    %1912 = vmatprep.mubr.bf16.mxu0 0
    %1913 = vmatmul.mubr.bf16.gmra.mxu0 %v1853
    %v1914 = vpop.f32.mrf.mxu0
    %v1915 = vpop.f32.mrf.mxu0
    %v1916 = vpop.f32.mrf.mxu0
    %v1917 = vadd.f32 0.0, %v1916
    %v1918 = vpop.f32.mrf.mxu0
    %1919 = vmatprep.mubr.bf16.mxu0 0
    %1920 = vmatmul.mubr.bf16.gmra.mxu0 %v1856
    %v1921 = vpop.f32.mrf.mxu0
    %v1922 = vpop.f32.mrf.mxu0
    %v1923 = vpop.f32.mrf.mxu0
    %v1924 = vadd.f32 0.0, %v1923
    %v1925 = vpop.f32.mrf.mxu0
    %1926 = vdwg.mxu0
    %v1927 = vadd.f32 %v1815, %v1893
    %v1928 = vadd.f32 %v1816, %v1900
    %v1929 = vadd.f32 %v1817, %v1907
    %v1930 = vadd.f32 %v1818, %v1910
    %v1931 = vadd.f32 %v1819, %v1917
    %v1932 = vadd.f32 %v1820, %v1924
    %s1933 = scalar_lea.vmem %s2, 80
    %v1934 = vld [vmem:[%s1933] sm:$0xf]
    %v1935 = vld [vmem:[%s1933 + $0x4] sm:$0xf]
    %v1936 = vld [vmem:[%s1933 + $0x8] sm:$0xf]
    %v1937 = vld [vmem:[%s1933 + $0xc] sm:$0xf]
    %v1942 = vunpack.c.l.b16 %v1934
    %v1943 = vunpack.c.l.b16 %v1935
    %v1944 = vunpack.c.l.b16 %v1936
    %v1945 = vunpack.c.l.b16 %v1937
    %v1946 = vpack.c.b16 %v1943, %v1942
    %v1947 = vpack.c.b16 %v1945, %v1944
    %1950 = vmatprep.subr.bf16.mxu0 0
    %1951 = vmatpush1.bf16.msra.mxu0 0
    %1952 = vmatprep.subr.bf16.mxu0 0
    %1953 = vmatpush1.bf16.msra.mxu0 0
    %1954 = vmatprep.subr.bf16.mxu0 0
    %1955 = vmatpush1.bf16.msra.mxu0 0
    %1956 = vmatprep.subr.bf16.mxu0 0
    %1957 = vmatpush1.bf16.msra.mxu0 0
    %1958 = vmatprep.subr.bf16.mxu0 0
    %1959 = vmatpush1.bf16.msra.mxu0 0
    %1960 = vmatprep.subr.bf16.mxu0 0
    %1961 = vmatpush1.bf16.msra.mxu0 0
    %1962 = vmatprep.subr.bf16.mxu0 0
    %1963 = vmatpush1.bf16.msra.mxu0 %v1947
    %1964 = vmatprep.subr.bf16.mxu0 0
    %1965 = vmatpush1.bf16.msra.mxu0 %v1946
    %1966 = vmatprep.subr.bf16.mxu0 0
    %1967 = vmatpush2.bf16.msra.mxu0 0
    %1968 = vmatprep.subr.bf16.mxu0 0
    %1969 = vmatpush2.bf16.msra.mxu0 0
    %1970 = vmatprep.subr.bf16.mxu0 0
    %1971 = vmatpush2.bf16.msra.mxu0 0
    %1972 = vmatprep.subr.bf16.mxu0 0
    %1973 = vmatpush2.bf16.msra.mxu0 0
    %1974 = vmatprep.subr.bf16.mxu0 0
    %1975 = vmatpush2.bf16.msra.mxu0 0
    %1976 = vmatprep.subr.bf16.mxu0 0
    %1977 = vmatpush2.bf16.msra.mxu0 0
    %1978 = vmatprep.subr.bf16.mxu0 0
    %1979 = vmatpush2.bf16.msra.mxu0 0
    %1980 = vmatprep.subr.bf16.mxu0 0
    %1981 = vmatpush2.bf16.msra.mxu0 0
    %1982 = vmatprep.mubr.bf16.mxu0 0
    %1983 = vmatmul.mubr.bf16.gmra.mxu0 %v1844
    %v1984 = vpop.f32.mrf.mxu0
    %v1985 = vadd.f32 0.0, %v1984
    %v1986 = vpop.f32.mrf.mxu0
    %v1987 = vpop.f32.mrf.mxu0
    %v1988 = vpop.f32.mrf.mxu0
    %1989 = vmatprep.mubr.bf16.mxu0 0
    %1990 = vmatmul.mubr.bf16.gmra.mxu0 %v1847
    %v1991 = vpop.f32.mrf.mxu0
    %v1992 = vadd.f32 0.0, %v1991
    %v1993 = vpop.f32.mrf.mxu0
    %v1994 = vpop.f32.mrf.mxu0
    %v1995 = vpop.f32.mrf.mxu0
    %1996 = vmatprep.mubr.bf16.mxu0 0
    %1997 = vmatmul.mubr.bf16.gmra.mxu0 %v1850
    %v1998 = vpop.f32.mrf.mxu0
    %v1999 = vadd.f32 0.0, %v1998
    %v2000 = vpop.f32.mrf.mxu0
    %v2001 = vpop.f32.mrf.mxu0
    %v2002 = vadd.f32 0.0, %v2001
    %v2003 = vpop.f32.mrf.mxu0
    %2004 = vmatprep.mubr.bf16.mxu0 0
    %2005 = vmatmul.mubr.bf16.gmra.mxu0 %v1853
    %v2006 = vpop.f32.mrf.mxu0
    %v2007 = vpop.f32.mrf.mxu0
    %v2008 = vpop.f32.mrf.mxu0
    %v2009 = vadd.f32 0.0, %v2008
    %v2010 = vpop.f32.mrf.mxu0
    %2011 = vmatprep.mubr.bf16.mxu0 0
    %2012 = vmatmul.mubr.bf16.gmra.mxu0 %v1856
    %v2013 = vpop.f32.mrf.mxu0
    %v2014 = vpop.f32.mrf.mxu0
    %v2015 = vpop.f32.mrf.mxu0
    %v2016 = vadd.f32 0.0, %v2015
    %v2017 = vpop.f32.mrf.mxu0
    %2018 = vdwg.mxu0
    %v2025 = vrot.slane %v1985, 1
    %v2026 = vrot.slane %v1992, 1
    %v2027 = vrot.slane %v1999, 1
    %v2028 = vrot.slane %v2002, 1
    %v2029 = vrot.slane %v2009, 1
    %v2030 = vrot.slane %v2016, 1
    %v2037 = vadd.f32 %v1927, %v2025
    %v2038 = vadd.f32 %v1928, %v2026
    %v2039 = vadd.f32 %v1929, %v2027
    %v2040 = vadd.f32 %v1930, %v2028
    %v2041 = vadd.f32 %v1931, %v2029
    %v2042 = vadd.f32 %v1932, %v2030
    %s2043 = scalar_lea.vmem %s2, 96
    %v2044 = vld [vmem:[%s2043] sm:$0xf]
    %v2045 = vld [vmem:[%s2043 + $0x4] sm:$0xf]
    %v2046 = vld [vmem:[%s2043 + $0x8] sm:$0xf]
    %v2047 = vld [vmem:[%s2043 + $0xc] sm:$0xf]
    %v2052 = vunpack.c.l.b16 %v2044
    %v2053 = vunpack.c.l.b16 %v2045
    %v2054 = vunpack.c.l.b16 %v2046
    %v2055 = vunpack.c.l.b16 %v2047
    %v2056 = vpack.c.b16 %v2053, %v2052
    %v2057 = vpack.c.b16 %v2055, %v2054
    %2060 = vmatprep.subr.bf16.mxu0 0
    %2061 = vmatpush1.bf16.msra.mxu0 0
    %2062 = vmatprep.subr.bf16.mxu0 0
    %2063 = vmatpush1.bf16.msra.mxu0 0
    %2064 = vmatprep.subr.bf16.mxu0 0
    %2065 = vmatpush1.bf16.msra.mxu0 0
    %2066 = vmatprep.subr.bf16.mxu0 0
    %2067 = vmatpush1.bf16.msra.mxu0 0
    %2068 = vmatprep.subr.bf16.mxu0 0
    %2069 = vmatpush1.bf16.msra.mxu0 0
    %2070 = vmatprep.subr.bf16.mxu0 0
    %2071 = vmatpush1.bf16.msra.mxu0 0
    %2072 = vmatprep.subr.bf16.mxu0 0
    %2073 = vmatpush1.bf16.msra.mxu0 %v2057
    %2074 = vmatprep.subr.bf16.mxu0 0
    %2075 = vmatpush1.bf16.msra.mxu0 %v2056
    %2076 = vmatprep.subr.bf16.mxu0 0
    %2077 = vmatpush2.bf16.msra.mxu0 0
    %2078 = vmatprep.subr.bf16.mxu0 0
    %2079 = vmatpush2.bf16.msra.mxu0 0
    %2080 = vmatprep.subr.bf16.mxu0 0
    %2081 = vmatpush2.bf16.msra.mxu0 0
    %2082 = vmatprep.subr.bf16.mxu0 0
    %2083 = vmatpush2.bf16.msra.mxu0 0
    %2084 = vmatprep.subr.bf16.mxu0 0
    %2085 = vmatpush2.bf16.msra.mxu0 0
    %2086 = vmatprep.subr.bf16.mxu0 0
    %2087 = vmatpush2.bf16.msra.mxu0 0
    %2088 = vmatprep.subr.bf16.mxu0 0
    %2089 = vmatpush2.bf16.msra.mxu0 0
    %2090 = vmatprep.subr.bf16.mxu0 0
    %2091 = vmatpush2.bf16.msra.mxu0 0
    %2092 = vmatprep.mubr.bf16.mxu0 0
    %2093 = vmatmul.mubr.bf16.gmra.mxu0 %v1844
    %v2094 = vpop.f32.mrf.mxu0
    %v2095 = vadd.f32 0.0, %v2094
    %v2096 = vpop.f32.mrf.mxu0
    %v2097 = vpop.f32.mrf.mxu0
    %v2098 = vpop.f32.mrf.mxu0
    %2099 = vmatprep.mubr.bf16.mxu0 0
    %2100 = vmatmul.mubr.bf16.gmra.mxu0 %v1847
    %v2101 = vpop.f32.mrf.mxu0
    %v2102 = vadd.f32 0.0, %v2101
    %v2103 = vpop.f32.mrf.mxu0
    %v2104 = vpop.f32.mrf.mxu0
    %v2105 = vpop.f32.mrf.mxu0
    %2106 = vmatprep.mubr.bf16.mxu0 0
    %2107 = vmatmul.mubr.bf16.gmra.mxu0 %v1850
    %v2108 = vpop.f32.mrf.mxu0
    %v2109 = vadd.f32 0.0, %v2108
    %v2110 = vpop.f32.mrf.mxu0
    %v2111 = vpop.f32.mrf.mxu0
    %v2112 = vadd.f32 0.0, %v2111
    %v2113 = vpop.f32.mrf.mxu0
    %2114 = vmatprep.mubr.bf16.mxu0 0
    %2115 = vmatmul.mubr.bf16.gmra.mxu0 %v1853
    %v2116 = vpop.f32.mrf.mxu0
    %v2117 = vpop.f32.mrf.mxu0
    %v2118 = vpop.f32.mrf.mxu0
    %v2119 = vadd.f32 0.0, %v2118
    %v2120 = vpop.f32.mrf.mxu0
    %2121 = vmatprep.mubr.bf16.mxu0 0
    %2122 = vmatmul.mubr.bf16.gmra.mxu0 %v1856
    %v2123 = vpop.f32.mrf.mxu0
    %v2124 = vpop.f32.mrf.mxu0
    %v2125 = vpop.f32.mrf.mxu0
    %v2126 = vadd.f32 0.0, %v2125
    %v2127 = vpop.f32.mrf.mxu0
    %2128 = vdwg.mxu0
    %v2135 = vrot.slane %v2095, 2
    %v2136 = vrot.slane %v2102, 2
    %v2137 = vrot.slane %v2109, 2
    %v2138 = vrot.slane %v2112, 2
    %v2139 = vrot.slane %v2119, 2
    %v2140 = vrot.slane %v2126, 2
    %v2147 = vadd.f32 %v2037, %v2135
    %v2148 = vadd.f32 %v2038, %v2136
    %v2149 = vadd.f32 %v2039, %v2137
    %v2150 = vadd.f32 %v2040, %v2138
    %v2151 = vadd.f32 %v2041, %v2139
    %v2152 = vadd.f32 %v2042, %v2140
    %s2153 = scalar_lea.vmem %s2, 112
    %v2154 = vld [vmem:[%s2153] sm:$0xf]
    %v2155 = vld [vmem:[%s2153 + $0x4] sm:$0xf]
    %v2156 = vld [vmem:[%s2153 + $0x8] sm:$0xf]
    %v2157 = vld [vmem:[%s2153 + $0xc] sm:$0xf]
    %v2162 = vunpack.c.l.b16 %v2154
    %v2163 = vunpack.c.l.b16 %v2155
    %v2164 = vunpack.c.l.b16 %v2156
    %v2165 = vunpack.c.l.b16 %v2157
    %v2166 = vpack.c.b16 %v2163, %v2162
    %v2167 = vpack.c.b16 %v2165, %v2164
    %2170 = vmatprep.subr.bf16.mxu0 0
    %2171 = vmatpush1.bf16.msra.mxu0 0
    %2172 = vmatprep.subr.bf16.mxu0 0
    %2173 = vmatpush1.bf16.msra.mxu0 0
    %2174 = vmatprep.subr.bf16.mxu0 0
    %2175 = vmatpush1.bf16.msra.mxu0 0
    %2176 = vmatprep.subr.bf16.mxu0 0
    %2177 = vmatpush1.bf16.msra.mxu0 0
    %2178 = vmatprep.subr.bf16.mxu0 0
    %2179 = vmatpush1.bf16.msra.mxu0 0
    %2180 = vmatprep.subr.bf16.mxu0 0
    %2181 = vmatpush1.bf16.msra.mxu0 0
    %2182 = vmatprep.subr.bf16.mxu0 0
    %2183 = vmatpush1.bf16.msra.mxu0 %v2167
    %2184 = vmatprep.subr.bf16.mxu0 0
    %2185 = vmatpush1.bf16.msra.mxu0 %v2166
    %2186 = vmatprep.subr.bf16.mxu0 0
    %2187 = vmatpush2.bf16.msra.mxu0 0
    %2188 = vmatprep.subr.bf16.mxu0 0
    %2189 = vmatpush2.bf16.msra.mxu0 0
    %2190 = vmatprep.subr.bf16.mxu0 0
    %2191 = vmatpush2.bf16.msra.mxu0 0
    %2192 = vmatprep.subr.bf16.mxu0 0
    %2193 = vmatpush2.bf16.msra.mxu0 0
    %2194 = vmatprep.subr.bf16.mxu0 0
    %2195 = vmatpush2.bf16.msra.mxu0 0
    %2196 = vmatprep.subr.bf16.mxu0 0
    %2197 = vmatpush2.bf16.msra.mxu0 0
    %2198 = vmatprep.subr.bf16.mxu0 0
    %2199 = vmatpush2.bf16.msra.mxu0 0
    %2200 = vmatprep.subr.bf16.mxu0 0
    %2201 = vmatpush2.bf16.msra.mxu0 0
    %2202 = vmatprep.mubr.bf16.mxu0 0
    %2203 = vmatmul.mubr.bf16.gmra.mxu0 %v1844
    %v2204 = vpop.f32.mrf.mxu0
    %v2205 = vadd.f32 0.0, %v2204
    %v2206 = vpop.f32.mrf.mxu0
    %v2207 = vpop.f32.mrf.mxu0
    %v2208 = vpop.f32.mrf.mxu0
    %2209 = vmatprep.mubr.bf16.mxu0 0
    %2210 = vmatmul.mubr.bf16.gmra.mxu0 %v1847
    %v2211 = vpop.f32.mrf.mxu0
    %v2212 = vadd.f32 0.0, %v2211
    %v2213 = vpop.f32.mrf.mxu0
    %v2214 = vpop.f32.mrf.mxu0
    %v2215 = vpop.f32.mrf.mxu0
    %2216 = vmatprep.mubr.bf16.mxu0 0
    %2217 = vmatmul.mubr.bf16.gmra.mxu0 %v1850
    %v2218 = vpop.f32.mrf.mxu0
    %v2219 = vadd.f32 0.0, %v2218
    %v2220 = vpop.f32.mrf.mxu0
    %v2221 = vpop.f32.mrf.mxu0
    %v2222 = vadd.f32 0.0, %v2221
    %v2223 = vpop.f32.mrf.mxu0
    %2224 = vmatprep.mubr.bf16.mxu0 0
    %2225 = vmatmul.mubr.bf16.gmra.mxu0 %v1853
    %v2226 = vpop.f32.mrf.mxu0
    %v2227 = vpop.f32.mrf.mxu0
    %v2228 = vpop.f32.mrf.mxu0
    %v2229 = vadd.f32 0.0, %v2228
    %v2230 = vpop.f32.mrf.mxu0
    %2231 = vmatprep.mubr.bf16.mxu0 0
    %2232 = vmatmul.mubr.bf16.gmra.mxu0 %v1856
    %v2233 = vpop.f32.mrf.mxu0
    %v2234 = vpop.f32.mrf.mxu0
    %v2235 = vpop.f32.mrf.mxu0
    %v2236 = vadd.f32 0.0, %v2235
    %v2237 = vpop.f32.mrf.mxu0
    %2238 = vdwg.mxu0
    %v2245 = vrot.slane %v2205, 3
    %v2246 = vrot.slane %v2212, 3
    %v2247 = vrot.slane %v2219, 3
    %v2248 = vrot.slane %v2222, 3
    %v2249 = vrot.slane %v2229, 3
    %v2250 = vrot.slane %v2236, 3
    %v2257 = vadd.f32 %v2147, %v2245
    %v2258 = vadd.f32 %v2148, %v2246
    %v2259 = vadd.f32 %v2149, %v2247
    %v2260 = vadd.f32 %v2150, %v2248
    %v2261 = vadd.f32 %v2151, %v2249
    %v2262 = vadd.f32 %v2152, %v2250
    %s2263 = scalar_lea.vmem %s2, 128
    %v2264 = vld [vmem:[%s2263] sm:$0xf]
    %v2265 = vld [vmem:[%s2263 + $0x4] sm:$0xf]
    %v2266 = vld [vmem:[%s2263 + $0x8] sm:$0xf]
    %v2267 = vld [vmem:[%s2263 + $0xc] sm:$0xf]
    %v2268 = vpack.c.bf16 %v1368, %v1367
    %v2269 = vpack.c.bf16 %v1373, %v1369
    %v2270 = vpack.c.bf16 %v1377, %v1376
    %v2275 = vunpack.c.l.b16 %v2264
    %v2276 = vunpack.c.l.b16 %v2265
    %v2277 = vunpack.c.l.b16 %v2266
    %v2278 = vunpack.c.l.b16 %v2267
    %v2279 = vpack.c.b16 %v2276, %v2275
    %v2280 = vpack.c.b16 %v2278, %v2277
    %v2284 = vsel %vm1400, %v2268, 0
    %v2287 = vsel %vm1400, %v2269, 0
    %v2290 = vsel %vm1400, %v2270, 0
    %2292 = vmatprep.subr.bf16.mxu0 0
    %2293 = vmatpush1.bf16.msra.mxu0 0
    %2294 = vmatprep.subr.bf16.mxu0 0
    %2295 = vmatpush1.bf16.msra.mxu0 0
    %2296 = vmatprep.subr.bf16.mxu0 0
    %2297 = vmatpush1.bf16.msra.mxu0 0
    %2298 = vmatprep.subr.bf16.mxu0 0
    %2299 = vmatpush1.bf16.msra.mxu0 0
    %2300 = vmatprep.subr.bf16.mxu0 0
    %2301 = vmatpush1.bf16.msra.mxu0 0
    %2302 = vmatprep.subr.bf16.mxu0 0
    %2303 = vmatpush1.bf16.msra.mxu0 0
    %2304 = vmatprep.subr.bf16.mxu0 0
    %2305 = vmatpush1.bf16.msra.mxu0 %v2280
    %2306 = vmatprep.subr.bf16.mxu0 0
    %2307 = vmatpush1.bf16.msra.mxu0 %v2279
    %2308 = vmatprep.subr.bf16.mxu0 0
    %2309 = vmatpush2.bf16.msra.mxu0 0
    %2310 = vmatprep.subr.bf16.mxu0 0
    %2311 = vmatpush2.bf16.msra.mxu0 0
    %2312 = vmatprep.subr.bf16.mxu0 0
    %2313 = vmatpush2.bf16.msra.mxu0 0
    %2314 = vmatprep.subr.bf16.mxu0 0
    %2315 = vmatpush2.bf16.msra.mxu0 0
    %2316 = vmatprep.subr.bf16.mxu0 0
    %2317 = vmatpush2.bf16.msra.mxu0 0
    %2318 = vmatprep.subr.bf16.mxu0 0
    %2319 = vmatpush2.bf16.msra.mxu0 0
    %2320 = vmatprep.subr.bf16.mxu0 0
    %2321 = vmatpush2.bf16.msra.mxu0 0
    %2322 = vmatprep.subr.bf16.mxu0 0
    %2323 = vmatpush2.bf16.msra.mxu0 0
    %2324 = vmatprep.mubr.bf16.mxu0 0
    %2325 = vmatmul.mubr.bf16.gmra.mxu0 %v1405
    %v2326 = vpop.f32.mrf.mxu0
    %v2327 = vadd.f32 0.0, %v2326
    %v2328 = vpop.f32.mrf.mxu0
    %v2329 = vpop.f32.mrf.mxu0
    %v2330 = vpop.f32.mrf.mxu0
    %2331 = vmatprep.mubr.bf16.mxu0 0
    %2332 = vmatmul.mubr.bf16.gmra.mxu0 %v2284
    %v2333 = vpop.f32.mrf.mxu0
    %v2334 = vadd.f32 0.0, %v2333
    %v2335 = vpop.f32.mrf.mxu0
    %v2336 = vpop.f32.mrf.mxu0
    %v2337 = vpop.f32.mrf.mxu0
    %2338 = vmatprep.mubr.bf16.mxu0 0
    %2339 = vmatmul.mubr.bf16.gmra.mxu0 %v2287
    %v2340 = vpop.f32.mrf.mxu0
    %v2341 = vadd.f32 0.0, %v2340
    %v2342 = vpop.f32.mrf.mxu0
    %v2343 = vpop.f32.mrf.mxu0
    %v2344 = vadd.f32 0.0, %v2343
    %v2345 = vpop.f32.mrf.mxu0
    %2346 = vmatprep.mubr.bf16.mxu0 0
    %2347 = vmatmul.mubr.bf16.gmra.mxu0 %v1414
    %v2348 = vpop.f32.mrf.mxu0
    %v2349 = vpop.f32.mrf.mxu0
    %v2350 = vpop.f32.mrf.mxu0
    %v2351 = vadd.f32 0.0, %v2350
    %v2352 = vpop.f32.mrf.mxu0
    %2353 = vmatprep.mubr.bf16.mxu0 0
    %2354 = vmatmul.mubr.bf16.gmra.mxu0 %v2290
    %v2355 = vpop.f32.mrf.mxu0
    %v2356 = vpop.f32.mrf.mxu0
    %v2357 = vpop.f32.mrf.mxu0
    %v2358 = vadd.f32 0.0, %v2357
    %v2359 = vpop.f32.mrf.mxu0
    %2360 = vdwg.mxu0
    %v2361 = vadd.f32 %v2257, %v2327
    %v2362 = vadd.f32 %v2258, %v2334
    %v2363 = vadd.f32 %v2259, %v2341
    %v2364 = vadd.f32 %v2260, %v2344
    %v2365 = vadd.f32 %v2261, %v2351
    %v2366 = vadd.f32 %v2262, %v2358
    %s2367 = scalar_lea.vmem %s2, 144
    %v2368 = vld [vmem:[%s2367] sm:$0xf]
    %v2369 = vld [vmem:[%s2367 + $0x4] sm:$0xf]
    %v2370 = vld [vmem:[%s2367 + $0x8] sm:$0xf]
    %v2371 = vld [vmem:[%s2367 + $0xc] sm:$0xf]
    %v2376 = vunpack.c.l.b16 %v2368
    %v2377 = vunpack.c.l.b16 %v2369
    %v2378 = vunpack.c.l.b16 %v2370
    %v2379 = vunpack.c.l.b16 %v2371
    %v2380 = vpack.c.b16 %v2377, %v2376
    %v2381 = vpack.c.b16 %v2379, %v2378
    %2384 = vmatprep.subr.bf16.mxu0 0
    %2385 = vmatpush1.bf16.msra.mxu0 0
    %2386 = vmatprep.subr.bf16.mxu0 0
    %2387 = vmatpush1.bf16.msra.mxu0 0
    %2388 = vmatprep.subr.bf16.mxu0 0
    %2389 = vmatpush1.bf16.msra.mxu0 0
    %2390 = vmatprep.subr.bf16.mxu0 0
    %2391 = vmatpush1.bf16.msra.mxu0 0
    %2392 = vmatprep.subr.bf16.mxu0 0
    %2393 = vmatpush1.bf16.msra.mxu0 0
    %2394 = vmatprep.subr.bf16.mxu0 0
    %2395 = vmatpush1.bf16.msra.mxu0 0
    %2396 = vmatprep.subr.bf16.mxu0 0
    %2397 = vmatpush1.bf16.msra.mxu0 %v2381
    %2398 = vmatprep.subr.bf16.mxu0 0
    %2399 = vmatpush1.bf16.msra.mxu0 %v2380
    %2400 = vmatprep.subr.bf16.mxu0 0
    %2401 = vmatpush2.bf16.msra.mxu0 0
    %2402 = vmatprep.subr.bf16.mxu0 0
    %2403 = vmatpush2.bf16.msra.mxu0 0
    %2404 = vmatprep.subr.bf16.mxu0 0
    %2405 = vmatpush2.bf16.msra.mxu0 0
    %2406 = vmatprep.subr.bf16.mxu0 0
    %2407 = vmatpush2.bf16.msra.mxu0 0
    %2408 = vmatprep.subr.bf16.mxu0 0
    %2409 = vmatpush2.bf16.msra.mxu0 0
    %2410 = vmatprep.subr.bf16.mxu0 0
    %2411 = vmatpush2.bf16.msra.mxu0 0
    %2412 = vmatprep.subr.bf16.mxu0 0
    %2413 = vmatpush2.bf16.msra.mxu0 0
    %2414 = vmatprep.subr.bf16.mxu0 0
    %2415 = vmatpush2.bf16.msra.mxu0 0
    %2416 = vmatprep.mubr.bf16.mxu0 0
    %2417 = vmatmul.mubr.bf16.gmra.mxu0 %v1405
    %v2418 = vpop.f32.mrf.mxu0
    %v2419 = vadd.f32 0.0, %v2418
    %v2420 = vpop.f32.mrf.mxu0
    %v2421 = vpop.f32.mrf.mxu0
    %v2422 = vpop.f32.mrf.mxu0
    %2423 = vmatprep.mubr.bf16.mxu0 0
    %2424 = vmatmul.mubr.bf16.gmra.mxu0 %v2284
    %v2425 = vpop.f32.mrf.mxu0
    %v2426 = vadd.f32 0.0, %v2425
    %v2427 = vpop.f32.mrf.mxu0
    %v2428 = vpop.f32.mrf.mxu0
    %v2429 = vpop.f32.mrf.mxu0
    %2430 = vmatprep.mubr.bf16.mxu0 0
    %2431 = vmatmul.mubr.bf16.gmra.mxu0 %v2287
    %v2432 = vpop.f32.mrf.mxu0
    %v2433 = vadd.f32 0.0, %v2432
    %v2434 = vpop.f32.mrf.mxu0
    %v2435 = vpop.f32.mrf.mxu0
    %v2436 = vadd.f32 0.0, %v2435
    %v2437 = vpop.f32.mrf.mxu0
    %2438 = vmatprep.mubr.bf16.mxu0 0
    %2439 = vmatmul.mubr.bf16.gmra.mxu0 %v1414
    %v2440 = vpop.f32.mrf.mxu0
    %v2441 = vpop.f32.mrf.mxu0
    %v2442 = vpop.f32.mrf.mxu0
    %v2443 = vadd.f32 0.0, %v2442
    %v2444 = vpop.f32.mrf.mxu0
    %2445 = vmatprep.mubr.bf16.mxu0 0
    %2446 = vmatmul.mubr.bf16.gmra.mxu0 %v2290
    %v2447 = vpop.f32.mrf.mxu0
    %v2448 = vpop.f32.mrf.mxu0
    %v2449 = vpop.f32.mrf.mxu0
    %v2450 = vadd.f32 0.0, %v2449
    %v2451 = vpop.f32.mrf.mxu0
    %2452 = vdwg.mxu0
    %v2459 = vrot.slane %v2419, 1
    %v2460 = vrot.slane %v2426, 1
    %v2461 = vrot.slane %v2433, 1
    %v2462 = vrot.slane %v2436, 1
    %v2463 = vrot.slane %v2443, 1
    %v2464 = vrot.slane %v2450, 1
    %v2471 = vadd.f32 %v2361, %v2459
    %v2472 = vadd.f32 %v2362, %v2460
    %v2473 = vadd.f32 %v2363, %v2461
    %v2474 = vadd.f32 %v2364, %v2462
    %v2475 = vadd.f32 %v2365, %v2463
    %v2476 = vadd.f32 %v2366, %v2464
    %s2477 = scalar_lea.vmem %s2, 160
    %v2478 = vld [vmem:[%s2477] sm:$0xf]
    %v2479 = vld [vmem:[%s2477 + $0x4] sm:$0xf]
    %v2480 = vld [vmem:[%s2477 + $0x8] sm:$0xf]
    %v2481 = vld [vmem:[%s2477 + $0xc] sm:$0xf]
    %v2486 = vunpack.c.l.b16 %v2478
    %v2487 = vunpack.c.l.b16 %v2479
    %v2488 = vunpack.c.l.b16 %v2480
    %v2489 = vunpack.c.l.b16 %v2481
    %v2490 = vpack.c.b16 %v2487, %v2486
    %v2491 = vpack.c.b16 %v2489, %v2488
    %2494 = vmatprep.subr.bf16.mxu0 0
    %2495 = vmatpush1.bf16.msra.mxu0 0
    %2496 = vmatprep.subr.bf16.mxu0 0
    %2497 = vmatpush1.bf16.msra.mxu0 0
    %2498 = vmatprep.subr.bf16.mxu0 0
    %2499 = vmatpush1.bf16.msra.mxu0 0
    %2500 = vmatprep.subr.bf16.mxu0 0
    %2501 = vmatpush1.bf16.msra.mxu0 0
    %2502 = vmatprep.subr.bf16.mxu0 0
    %2503 = vmatpush1.bf16.msra.mxu0 0
    %2504 = vmatprep.subr.bf16.mxu0 0
    %2505 = vmatpush1.bf16.msra.mxu0 0
    %2506 = vmatprep.subr.bf16.mxu0 0
    %2507 = vmatpush1.bf16.msra.mxu0 %v2491
    %2508 = vmatprep.subr.bf16.mxu0 0
    %2509 = vmatpush1.bf16.msra.mxu0 %v2490
    %2510 = vmatprep.subr.bf16.mxu0 0
    %2511 = vmatpush2.bf16.msra.mxu0 0
    %2512 = vmatprep.subr.bf16.mxu0 0
    %2513 = vmatpush2.bf16.msra.mxu0 0
    %2514 = vmatprep.subr.bf16.mxu0 0
    %2515 = vmatpush2.bf16.msra.mxu0 0
    %2516 = vmatprep.subr.bf16.mxu0 0
    %2517 = vmatpush2.bf16.msra.mxu0 0
    %2518 = vmatprep.subr.bf16.mxu0 0
    %2519 = vmatpush2.bf16.msra.mxu0 0
    %2520 = vmatprep.subr.bf16.mxu0 0
    %2521 = vmatpush2.bf16.msra.mxu0 0
    %2522 = vmatprep.subr.bf16.mxu0 0
    %2523 = vmatpush2.bf16.msra.mxu0 0
    %2524 = vmatprep.subr.bf16.mxu0 0
    %2525 = vmatpush2.bf16.msra.mxu0 0
    %2526 = vmatprep.mubr.bf16.mxu0 0
    %2527 = vmatmul.mubr.bf16.gmra.mxu0 %v1405
    %v2528 = vpop.f32.mrf.mxu0
    %v2529 = vadd.f32 0.0, %v2528
    %v2530 = vpop.f32.mrf.mxu0
    %v2531 = vpop.f32.mrf.mxu0
    %v2532 = vpop.f32.mrf.mxu0
    %2533 = vmatprep.mubr.bf16.mxu0 0
    %2534 = vmatmul.mubr.bf16.gmra.mxu0 %v2284
    %v2535 = vpop.f32.mrf.mxu0
    %v2536 = vadd.f32 0.0, %v2535
    %v2537 = vpop.f32.mrf.mxu0
    %v2538 = vpop.f32.mrf.mxu0
    %v2539 = vpop.f32.mrf.mxu0
    %2540 = vmatprep.mubr.bf16.mxu0 0
    %2541 = vmatmul.mubr.bf16.gmra.mxu0 %v2287
    %v2542 = vpop.f32.mrf.mxu0
    %v2543 = vadd.f32 0.0, %v2542
    %v2544 = vpop.f32.mrf.mxu0
    %v2545 = vpop.f32.mrf.mxu0
    %v2546 = vadd.f32 0.0, %v2545
    %v2547 = vpop.f32.mrf.mxu0
    %2548 = vmatprep.mubr.bf16.mxu0 0
    %2549 = vmatmul.mubr.bf16.gmra.mxu0 %v1414
    %v2550 = vpop.f32.mrf.mxu0
    %v2551 = vpop.f32.mrf.mxu0
    %v2552 = vpop.f32.mrf.mxu0
    %v2553 = vadd.f32 0.0, %v2552
    %v2554 = vpop.f32.mrf.mxu0
    %2555 = vmatprep.mubr.bf16.mxu0 0
    %2556 = vmatmul.mubr.bf16.gmra.mxu0 %v2290
    %v2557 = vpop.f32.mrf.mxu0
    %v2558 = vpop.f32.mrf.mxu0
    %v2559 = vpop.f32.mrf.mxu0
    %v2560 = vadd.f32 0.0, %v2559
    %v2561 = vpop.f32.mrf.mxu0
    %2562 = vdwg.mxu0
    %v2569 = vrot.slane %v2529, 2
    %v2570 = vrot.slane %v2536, 2
    %v2571 = vrot.slane %v2543, 2
    %v2572 = vrot.slane %v2546, 2
    %v2573 = vrot.slane %v2553, 2
    %v2574 = vrot.slane %v2560, 2
    %v2581 = vadd.f32 %v2471, %v2569
    %v2582 = vadd.f32 %v2472, %v2570
    %v2583 = vadd.f32 %v2473, %v2571
    %v2584 = vadd.f32 %v2474, %v2572
    %v2585 = vadd.f32 %v2475, %v2573
    %v2586 = vadd.f32 %v2476, %v2574
    %s2587 = scalar_lea.vmem %s2, 176
    %v2588 = vld [vmem:[%s2587] sm:$0xf]
    %v2589 = vld [vmem:[%s2587 + $0x4] sm:$0xf]
    %v2590 = vld [vmem:[%s2587 + $0x8] sm:$0xf]
    %v2591 = vld [vmem:[%s2587 + $0xc] sm:$0xf]
    %v2596 = vunpack.c.l.b16 %v2588
    %v2597 = vunpack.c.l.b16 %v2589
    %v2598 = vunpack.c.l.b16 %v2590
    %v2599 = vunpack.c.l.b16 %v2591
    %v2600 = vpack.c.b16 %v2597, %v2596
    %v2601 = vpack.c.b16 %v2599, %v2598
    %2604 = vmatprep.subr.bf16.mxu0 0
    %2605 = vmatpush1.bf16.msra.mxu0 0
    %2606 = vmatprep.subr.bf16.mxu0 0
    %2607 = vmatpush1.bf16.msra.mxu0 0
    %2608 = vmatprep.subr.bf16.mxu0 0
    %2609 = vmatpush1.bf16.msra.mxu0 0
    %2610 = vmatprep.subr.bf16.mxu0 0
    %2611 = vmatpush1.bf16.msra.mxu0 0
    %2612 = vmatprep.subr.bf16.mxu0 0
    %2613 = vmatpush1.bf16.msra.mxu0 0
    %2614 = vmatprep.subr.bf16.mxu0 0
    %2615 = vmatpush1.bf16.msra.mxu0 0
    %2616 = vmatprep.subr.bf16.mxu0 0
    %2617 = vmatpush1.bf16.msra.mxu0 %v2601
    %2618 = vmatprep.subr.bf16.mxu0 0
    %2619 = vmatpush1.bf16.msra.mxu0 %v2600
    %2620 = vmatprep.subr.bf16.mxu0 0
    %2621 = vmatpush2.bf16.msra.mxu0 0
    %2622 = vmatprep.subr.bf16.mxu0 0
    %2623 = vmatpush2.bf16.msra.mxu0 0
    %2624 = vmatprep.subr.bf16.mxu0 0
    %2625 = vmatpush2.bf16.msra.mxu0 0
    %2626 = vmatprep.subr.bf16.mxu0 0
    %2627 = vmatpush2.bf16.msra.mxu0 0
    %2628 = vmatprep.subr.bf16.mxu0 0
    %2629 = vmatpush2.bf16.msra.mxu0 0
    %2630 = vmatprep.subr.bf16.mxu0 0
    %2631 = vmatpush2.bf16.msra.mxu0 0
    %2632 = vmatprep.subr.bf16.mxu0 0
    %2633 = vmatpush2.bf16.msra.mxu0 0
    %2634 = vmatprep.subr.bf16.mxu0 0
    %2635 = vmatpush2.bf16.msra.mxu0 0
    %2636 = vmatprep.mubr.bf16.mxu0 0
    %2637 = vmatmul.mubr.bf16.gmra.mxu0 %v1405
    %v2638 = vpop.f32.mrf.mxu0
    %v2639 = vadd.f32 0.0, %v2638
    %v2640 = vpop.f32.mrf.mxu0
    %v2641 = vpop.f32.mrf.mxu0
    %v2642 = vpop.f32.mrf.mxu0
    %2643 = vmatprep.mubr.bf16.mxu0 0
    %2644 = vmatmul.mubr.bf16.gmra.mxu0 %v2284
    %v2645 = vpop.f32.mrf.mxu0
    %v2646 = vadd.f32 0.0, %v2645
    %v2647 = vpop.f32.mrf.mxu0
    %v2648 = vpop.f32.mrf.mxu0
    %v2649 = vpop.f32.mrf.mxu0
    %2650 = vmatprep.mubr.bf16.mxu0 0
    %2651 = vmatmul.mubr.bf16.gmra.mxu0 %v2287
    %v2652 = vpop.f32.mrf.mxu0
    %v2653 = vadd.f32 0.0, %v2652
    %v2654 = vpop.f32.mrf.mxu0
    %v2655 = vpop.f32.mrf.mxu0
    %v2656 = vadd.f32 0.0, %v2655
    %v2657 = vpop.f32.mrf.mxu0
    %2658 = vmatprep.mubr.bf16.mxu0 0
    %2659 = vmatmul.mubr.bf16.gmra.mxu0 %v1414
    %v2660 = vpop.f32.mrf.mxu0
    %v2661 = vpop.f32.mrf.mxu0
    %v2662 = vpop.f32.mrf.mxu0
    %v2663 = vadd.f32 0.0, %v2662
    %v2664 = vpop.f32.mrf.mxu0
    %2665 = vmatprep.mubr.bf16.mxu0 0
    %2666 = vmatmul.mubr.bf16.gmra.mxu0 %v2290
    %v2667 = vpop.f32.mrf.mxu0
    %v2668 = vpop.f32.mrf.mxu0
    %v2669 = vpop.f32.mrf.mxu0
    %v2670 = vadd.f32 0.0, %v2669
    %v2671 = vpop.f32.mrf.mxu0
    %2672 = vdwg.mxu0
    %v2679 = vrot.slane %v2639, 3
    %v2680 = vrot.slane %v2646, 3
    %v2681 = vrot.slane %v2653, 3
    %v2682 = vrot.slane %v2656, 3
    %v2683 = vrot.slane %v2663, 3
    %v2684 = vrot.slane %v2670, 3
    %v2691 = vadd.f32 %v2581, %v2679
    %v2692 = vadd.f32 %v2582, %v2680
    %v2693 = vadd.f32 %v2583, %v2681
    %v2694 = vadd.f32 %v2584, %v2682
    %v2695 = vadd.f32 %v2585, %v2683
    %v2696 = vadd.f32 %v2586, %v2684
    %s2697 = scalar_lea.vmem %s2, 192
    %v2698 = vld [vmem:[%s2697] sm:$0xf]
    %v2699 = vld [vmem:[%s2697 + $0x4] sm:$0xf]
    %v2700 = vld [vmem:[%s2697 + $0x8] sm:$0xf]
    %v2701 = vld [vmem:[%s2697 + $0xc] sm:$0xf]
    %v2702 = vpack.c.bf16 %v1369, %v1368
    %v2703 = vpack.c.bf16 %v1374, %v1370
    %v2704 = vpack.c.bf16 %v1378, %v1377
    %v2709 = vunpack.c.l.b16 %v2698
    %v2710 = vunpack.c.l.b16 %v2699
    %v2711 = vunpack.c.l.b16 %v2700
    %v2712 = vunpack.c.l.b16 %v2701
    %v2713 = vpack.c.b16 %v2710, %v2709
    %v2714 = vpack.c.b16 %v2712, %v2711
    %v2718 = vsel %vm1400, %v2702, 0
    %v2721 = vsel %vm1400, %v2703, 0
    %v2724 = vsel %vm1400, %v2704, 0
    %2726 = vmatprep.subr.bf16.mxu0 0
    %2727 = vmatpush1.bf16.msra.mxu0 0
    %2728 = vmatprep.subr.bf16.mxu0 0
    %2729 = vmatpush1.bf16.msra.mxu0 0
    %2730 = vmatprep.subr.bf16.mxu0 0
    %2731 = vmatpush1.bf16.msra.mxu0 0
    %2732 = vmatprep.subr.bf16.mxu0 0
    %2733 = vmatpush1.bf16.msra.mxu0 0
    %2734 = vmatprep.subr.bf16.mxu0 0
    %2735 = vmatpush1.bf16.msra.mxu0 0
    %2736 = vmatprep.subr.bf16.mxu0 0
    %2737 = vmatpush1.bf16.msra.mxu0 0
    %2738 = vmatprep.subr.bf16.mxu0 0
    %2739 = vmatpush1.bf16.msra.mxu0 %v2714
    %2740 = vmatprep.subr.bf16.mxu0 0
    %2741 = vmatpush1.bf16.msra.mxu0 %v2713
    %2742 = vmatprep.subr.bf16.mxu0 0
    %2743 = vmatpush2.bf16.msra.mxu0 0
    %2744 = vmatprep.subr.bf16.mxu0 0
    %2745 = vmatpush2.bf16.msra.mxu0 0
    %2746 = vmatprep.subr.bf16.mxu0 0
    %2747 = vmatpush2.bf16.msra.mxu0 0
    %2748 = vmatprep.subr.bf16.mxu0 0
    %2749 = vmatpush2.bf16.msra.mxu0 0
    %2750 = vmatprep.subr.bf16.mxu0 0
    %2751 = vmatpush2.bf16.msra.mxu0 0
    %2752 = vmatprep.subr.bf16.mxu0 0
    %2753 = vmatpush2.bf16.msra.mxu0 0
    %2754 = vmatprep.subr.bf16.mxu0 0
    %2755 = vmatpush2.bf16.msra.mxu0 0
    %2756 = vmatprep.subr.bf16.mxu0 0
    %2757 = vmatpush2.bf16.msra.mxu0 0
    %2758 = vmatprep.mubr.bf16.mxu0 0
    %2759 = vmatmul.mubr.bf16.gmra.mxu0 %v1847
    %v2760 = vpop.f32.mrf.mxu0
    %v2761 = vadd.f32 0.0, %v2760
    %v2762 = vpop.f32.mrf.mxu0
    %v2763 = vpop.f32.mrf.mxu0
    %v2764 = vpop.f32.mrf.mxu0
    %2765 = vmatprep.mubr.bf16.mxu0 0
    %2766 = vmatmul.mubr.bf16.gmra.mxu0 %v2718
    %v2767 = vpop.f32.mrf.mxu0
    %v2768 = vadd.f32 0.0, %v2767
    %v2769 = vpop.f32.mrf.mxu0
    %v2770 = vpop.f32.mrf.mxu0
    %v2771 = vpop.f32.mrf.mxu0
    %2772 = vmatprep.mubr.bf16.mxu0 0
    %2773 = vmatmul.mubr.bf16.gmra.mxu0 %v2721
    %v2774 = vpop.f32.mrf.mxu0
    %v2775 = vadd.f32 0.0, %v2774
    %v2776 = vpop.f32.mrf.mxu0
    %v2777 = vpop.f32.mrf.mxu0
    %v2778 = vadd.f32 0.0, %v2777
    %v2779 = vpop.f32.mrf.mxu0
    %2780 = vmatprep.mubr.bf16.mxu0 0
    %2781 = vmatmul.mubr.bf16.gmra.mxu0 %v1856
    %v2782 = vpop.f32.mrf.mxu0
    %v2783 = vpop.f32.mrf.mxu0
    %v2784 = vpop.f32.mrf.mxu0
    %v2785 = vadd.f32 0.0, %v2784
    %v2786 = vpop.f32.mrf.mxu0
    %2787 = vmatprep.mubr.bf16.mxu0 0
    %2788 = vmatmul.mubr.bf16.gmra.mxu0 %v2724
    %v2789 = vpop.f32.mrf.mxu0
    %v2790 = vpop.f32.mrf.mxu0
    %v2791 = vpop.f32.mrf.mxu0
    %v2792 = vadd.f32 0.0, %v2791
    %v2793 = vpop.f32.mrf.mxu0
    %2794 = vdwg.mxu0
    %v2795 = vadd.f32 %v2691, %v2761
    %v2796 = vadd.f32 %v2692, %v2768
    %v2797 = vadd.f32 %v2693, %v2775
    %v2798 = vadd.f32 %v2694, %v2778
    %v2799 = vadd.f32 %v2695, %v2785
    %v2800 = vadd.f32 %v2696, %v2792
    %s2801 = scalar_lea.vmem %s2, 208
    %v2802 = vld [vmem:[%s2801] sm:$0xf]
    %v2803 = vld [vmem:[%s2801 + $0x4] sm:$0xf]
    %v2804 = vld [vmem:[%s2801 + $0x8] sm:$0xf]
    %v2805 = vld [vmem:[%s2801 + $0xc] sm:$0xf]
    %v2810 = vunpack.c.l.b16 %v2802
    %v2811 = vunpack.c.l.b16 %v2803
    %v2812 = vunpack.c.l.b16 %v2804
    %v2813 = vunpack.c.l.b16 %v2805
    %v2814 = vpack.c.b16 %v2811, %v2810
    %v2815 = vpack.c.b16 %v2813, %v2812
    %2818 = vmatprep.subr.bf16.mxu0 0
    %2819 = vmatpush1.bf16.msra.mxu0 0
    %2820 = vmatprep.subr.bf16.mxu0 0
    %2821 = vmatpush1.bf16.msra.mxu0 0
    %2822 = vmatprep.subr.bf16.mxu0 0
    %2823 = vmatpush1.bf16.msra.mxu0 0
    %2824 = vmatprep.subr.bf16.mxu0 0
    %2825 = vmatpush1.bf16.msra.mxu0 0
    %2826 = vmatprep.subr.bf16.mxu0 0
    %2827 = vmatpush1.bf16.msra.mxu0 0
    %2828 = vmatprep.subr.bf16.mxu0 0
    %2829 = vmatpush1.bf16.msra.mxu0 0
    %2830 = vmatprep.subr.bf16.mxu0 0
    %2831 = vmatpush1.bf16.msra.mxu0 %v2815
    %2832 = vmatprep.subr.bf16.mxu0 0
    %2833 = vmatpush1.bf16.msra.mxu0 %v2814
    %2834 = vmatprep.subr.bf16.mxu0 0
    %2835 = vmatpush2.bf16.msra.mxu0 0
    %2836 = vmatprep.subr.bf16.mxu0 0
    %2837 = vmatpush2.bf16.msra.mxu0 0
    %2838 = vmatprep.subr.bf16.mxu0 0
    %2839 = vmatpush2.bf16.msra.mxu0 0
    %2840 = vmatprep.subr.bf16.mxu0 0
    %2841 = vmatpush2.bf16.msra.mxu0 0
    %2842 = vmatprep.subr.bf16.mxu0 0
    %2843 = vmatpush2.bf16.msra.mxu0 0
    %2844 = vmatprep.subr.bf16.mxu0 0
    %2845 = vmatpush2.bf16.msra.mxu0 0
    %2846 = vmatprep.subr.bf16.mxu0 0
    %2847 = vmatpush2.bf16.msra.mxu0 0
    %2848 = vmatprep.subr.bf16.mxu0 0
    %2849 = vmatpush2.bf16.msra.mxu0 0
    %2850 = vmatprep.mubr.bf16.mxu0 0
    %2851 = vmatmul.mubr.bf16.gmra.mxu0 %v1847
    %v2852 = vpop.f32.mrf.mxu0
    %v2853 = vadd.f32 0.0, %v2852
    %v2854 = vpop.f32.mrf.mxu0
    %v2855 = vpop.f32.mrf.mxu0
    %v2856 = vpop.f32.mrf.mxu0
    %2857 = vmatprep.mubr.bf16.mxu0 0
    %2858 = vmatmul.mubr.bf16.gmra.mxu0 %v2718
    %v2859 = vpop.f32.mrf.mxu0
    %v2860 = vadd.f32 0.0, %v2859
    %v2861 = vpop.f32.mrf.mxu0
    %v2862 = vpop.f32.mrf.mxu0
    %v2863 = vpop.f32.mrf.mxu0
    %2864 = vmatprep.mubr.bf16.mxu0 0
    %2865 = vmatmul.mubr.bf16.gmra.mxu0 %v2721
    %v2866 = vpop.f32.mrf.mxu0
    %v2867 = vadd.f32 0.0, %v2866
    %v2868 = vpop.f32.mrf.mxu0
    %v2869 = vpop.f32.mrf.mxu0
    %v2870 = vadd.f32 0.0, %v2869
    %v2871 = vpop.f32.mrf.mxu0
    %2872 = vmatprep.mubr.bf16.mxu0 0
    %2873 = vmatmul.mubr.bf16.gmra.mxu0 %v1856
    %v2874 = vpop.f32.mrf.mxu0
    %v2875 = vpop.f32.mrf.mxu0
    %v2876 = vpop.f32.mrf.mxu0
    %v2877 = vadd.f32 0.0, %v2876
    %v2878 = vpop.f32.mrf.mxu0
    %2879 = vmatprep.mubr.bf16.mxu0 0
    %2880 = vmatmul.mubr.bf16.gmra.mxu0 %v2724
    %v2881 = vpop.f32.mrf.mxu0
    %v2882 = vpop.f32.mrf.mxu0
    %v2883 = vpop.f32.mrf.mxu0
    %v2884 = vadd.f32 0.0, %v2883
    %v2885 = vpop.f32.mrf.mxu0
    %2886 = vdwg.mxu0
    %v2893 = vrot.slane %v2853, 1
    %v2894 = vrot.slane %v2860, 1
    %v2895 = vrot.slane %v2867, 1
    %v2896 = vrot.slane %v2870, 1
    %v2897 = vrot.slane %v2877, 1
    %v2898 = vrot.slane %v2884, 1
    %v2905 = vadd.f32 %v2795, %v2893
    %v2906 = vadd.f32 %v2796, %v2894
    %v2907 = vadd.f32 %v2797, %v2895
    %v2908 = vadd.f32 %v2798, %v2896
    %v2909 = vadd.f32 %v2799, %v2897
    %v2910 = vadd.f32 %v2800, %v2898
    %s2911 = scalar_lea.vmem %s2, 224
    %v2912 = vld [vmem:[%s2911] sm:$0xf]
    %v2913 = vld [vmem:[%s2911 + $0x4] sm:$0xf]
    %v2914 = vld [vmem:[%s2911 + $0x8] sm:$0xf]
    %v2915 = vld [vmem:[%s2911 + $0xc] sm:$0xf]
    %v2920 = vunpack.c.l.b16 %v2912
    %v2921 = vunpack.c.l.b16 %v2913
    %v2922 = vunpack.c.l.b16 %v2914
    %v2923 = vunpack.c.l.b16 %v2915
    %v2924 = vpack.c.b16 %v2921, %v2920
    %v2925 = vpack.c.b16 %v2923, %v2922
    %2928 = vmatprep.subr.bf16.mxu0 0
    %2929 = vmatpush1.bf16.msra.mxu0 0
    %2930 = vmatprep.subr.bf16.mxu0 0
    %2931 = vmatpush1.bf16.msra.mxu0 0
    %2932 = vmatprep.subr.bf16.mxu0 0
    %2933 = vmatpush1.bf16.msra.mxu0 0
    %2934 = vmatprep.subr.bf16.mxu0 0
    %2935 = vmatpush1.bf16.msra.mxu0 0
    %2936 = vmatprep.subr.bf16.mxu0 0
    %2937 = vmatpush1.bf16.msra.mxu0 0
    %2938 = vmatprep.subr.bf16.mxu0 0
    %2939 = vmatpush1.bf16.msra.mxu0 0
    %2940 = vmatprep.subr.bf16.mxu0 0
    %2941 = vmatpush1.bf16.msra.mxu0 %v2925
    %2942 = vmatprep.subr.bf16.mxu0 0
    %2943 = vmatpush1.bf16.msra.mxu0 %v2924
    %2944 = vmatprep.subr.bf16.mxu0 0
    %2945 = vmatpush2.bf16.msra.mxu0 0
    %2946 = vmatprep.subr.bf16.mxu0 0
    %2947 = vmatpush2.bf16.msra.mxu0 0
    %2948 = vmatprep.subr.bf16.mxu0 0
    %2949 = vmatpush2.bf16.msra.mxu0 0
    %2950 = vmatprep.subr.bf16.mxu0 0
    %2951 = vmatpush2.bf16.msra.mxu0 0
    %2952 = vmatprep.subr.bf16.mxu0 0
    %2953 = vmatpush2.bf16.msra.mxu0 0
    %2954 = vmatprep.subr.bf16.mxu0 0
    %2955 = vmatpush2.bf16.msra.mxu0 0
    %2956 = vmatprep.subr.bf16.mxu0 0
    %2957 = vmatpush2.bf16.msra.mxu0 0
    %2958 = vmatprep.subr.bf16.mxu0 0
    %2959 = vmatpush2.bf16.msra.mxu0 0
    %2960 = vmatprep.mubr.bf16.mxu0 0
    %2961 = vmatmul.mubr.bf16.gmra.mxu0 %v1847
    %v2962 = vpop.f32.mrf.mxu0
    %v2963 = vadd.f32 0.0, %v2962
    %v2964 = vpop.f32.mrf.mxu0
    %v2965 = vpop.f32.mrf.mxu0
    %v2966 = vpop.f32.mrf.mxu0
    %2967 = vmatprep.mubr.bf16.mxu0 0
    %2968 = vmatmul.mubr.bf16.gmra.mxu0 %v2718
    %v2969 = vpop.f32.mrf.mxu0
    %v2970 = vadd.f32 0.0, %v2969
    %v2971 = vpop.f32.mrf.mxu0
    %v2972 = vpop.f32.mrf.mxu0
    %v2973 = vpop.f32.mrf.mxu0
    %2974 = vmatprep.mubr.bf16.mxu0 0
    %2975 = vmatmul.mubr.bf16.gmra.mxu0 %v2721
    %v2976 = vpop.f32.mrf.mxu0
    %v2977 = vadd.f32 0.0, %v2976
    %v2978 = vpop.f32.mrf.mxu0
    %v2979 = vpop.f32.mrf.mxu0
    %v2980 = vadd.f32 0.0, %v2979
    %v2981 = vpop.f32.mrf.mxu0
    %2982 = vmatprep.mubr.bf16.mxu0 0
    %2983 = vmatmul.mubr.bf16.gmra.mxu0 %v1856
    %v2984 = vpop.f32.mrf.mxu0
    %v2985 = vpop.f32.mrf.mxu0
    %v2986 = vpop.f32.mrf.mxu0
    %v2987 = vadd.f32 0.0, %v2986
    %v2988 = vpop.f32.mrf.mxu0
    %2989 = vmatprep.mubr.bf16.mxu0 0
    %2990 = vmatmul.mubr.bf16.gmra.mxu0 %v2724
    %v2991 = vpop.f32.mrf.mxu0
    %v2992 = vpop.f32.mrf.mxu0
    %v2993 = vpop.f32.mrf.mxu0
    %v2994 = vadd.f32 0.0, %v2993
    %v2995 = vpop.f32.mrf.mxu0
    %2996 = vdwg.mxu0
    %v3003 = vrot.slane %v2963, 2
    %v3004 = vrot.slane %v2970, 2
    %v3005 = vrot.slane %v2977, 2
    %v3006 = vrot.slane %v2980, 2
    %v3007 = vrot.slane %v2987, 2
    %v3008 = vrot.slane %v2994, 2
    %v3015 = vadd.f32 %v2905, %v3003
    %v3016 = vadd.f32 %v2906, %v3004
    %v3017 = vadd.f32 %v2907, %v3005
    %v3018 = vadd.f32 %v2908, %v3006
    %v3019 = vadd.f32 %v2909, %v3007
    %v3020 = vadd.f32 %v2910, %v3008
    %s3021 = scalar_lea.vmem %s2, 240
    %v3022 = vld [vmem:[%s3021] sm:$0xf]
    %v3023 = vld [vmem:[%s3021 + $0x4] sm:$0xf]
    %v3024 = vld [vmem:[%s3021 + $0x8] sm:$0xf]
    %v3025 = vld [vmem:[%s3021 + $0xc] sm:$0xf]
    %v3030 = vunpack.c.l.b16 %v3022
    %v3031 = vunpack.c.l.b16 %v3023
    %v3032 = vunpack.c.l.b16 %v3024
    %v3033 = vunpack.c.l.b16 %v3025
    %v3034 = vpack.c.b16 %v3031, %v3030
    %v3035 = vpack.c.b16 %v3033, %v3032
    %3038 = vmatprep.subr.bf16.mxu0 0
    %3039 = vmatpush1.bf16.msra.mxu0 0
    %3040 = vmatprep.subr.bf16.mxu0 0
    %3041 = vmatpush1.bf16.msra.mxu0 0
    %3042 = vmatprep.subr.bf16.mxu0 0
    %3043 = vmatpush1.bf16.msra.mxu0 0
    %3044 = vmatprep.subr.bf16.mxu0 0
    %3045 = vmatpush1.bf16.msra.mxu0 0
    %3046 = vmatprep.subr.bf16.mxu0 0
    %3047 = vmatpush1.bf16.msra.mxu0 0
    %3048 = vmatprep.subr.bf16.mxu0 0
    %3049 = vmatpush1.bf16.msra.mxu0 0
    %3050 = vmatprep.subr.bf16.mxu0 0
    %3051 = vmatpush1.bf16.msra.mxu0 %v3035
    %3052 = vmatprep.subr.bf16.mxu0 0
    %3053 = vmatpush1.bf16.msra.mxu0 %v3034
    %3054 = vmatprep.subr.bf16.mxu0 0
    %3055 = vmatpush2.bf16.msra.mxu0 0
    %3056 = vmatprep.subr.bf16.mxu0 0
    %3057 = vmatpush2.bf16.msra.mxu0 0
    %3058 = vmatprep.subr.bf16.mxu0 0
    %3059 = vmatpush2.bf16.msra.mxu0 0
    %3060 = vmatprep.subr.bf16.mxu0 0
    %3061 = vmatpush2.bf16.msra.mxu0 0
    %3062 = vmatprep.subr.bf16.mxu0 0
    %3063 = vmatpush2.bf16.msra.mxu0 0
    %3064 = vmatprep.subr.bf16.mxu0 0
    %3065 = vmatpush2.bf16.msra.mxu0 0
    %3066 = vmatprep.subr.bf16.mxu0 0
    %3067 = vmatpush2.bf16.msra.mxu0 0
    %3068 = vmatprep.subr.bf16.mxu0 0
    %3069 = vmatpush2.bf16.msra.mxu0 0
    %3070 = vmatprep.mubr.bf16.mxu0 0
    %3071 = vmatmul.mubr.bf16.gmra.mxu0 %v1847
    %v3072 = vpop.f32.mrf.mxu0
    %v3073 = vadd.f32 0.0, %v3072
    %v3074 = vpop.f32.mrf.mxu0
    %v3075 = vpop.f32.mrf.mxu0
    %v3076 = vpop.f32.mrf.mxu0
    %3077 = vmatprep.mubr.bf16.mxu0 0
    %3078 = vmatmul.mubr.bf16.gmra.mxu0 %v2718
    %v3079 = vpop.f32.mrf.mxu0
    %v3080 = vadd.f32 0.0, %v3079
    %v3081 = vpop.f32.mrf.mxu0
    %v3082 = vpop.f32.mrf.mxu0
    %v3083 = vpop.f32.mrf.mxu0
    %3084 = vmatprep.mubr.bf16.mxu0 0
    %3085 = vmatmul.mubr.bf16.gmra.mxu0 %v2721
    %v3086 = vpop.f32.mrf.mxu0
    %v3087 = vadd.f32 0.0, %v3086
    %v3088 = vpop.f32.mrf.mxu0
    %v3089 = vpop.f32.mrf.mxu0
    %v3090 = vadd.f32 0.0, %v3089
    %v3091 = vpop.f32.mrf.mxu0
    %3092 = vmatprep.mubr.bf16.mxu0 0
    %3093 = vmatmul.mubr.bf16.gmra.mxu0 %v1856
    %v3094 = vpop.f32.mrf.mxu0
    %v3095 = vpop.f32.mrf.mxu0
    %v3096 = vpop.f32.mrf.mxu0
    %v3097 = vadd.f32 0.0, %v3096
    %v3098 = vpop.f32.mrf.mxu0
    %3099 = vmatprep.mubr.bf16.mxu0 0
    %3100 = vmatmul.mubr.bf16.gmra.mxu0 %v2724
    %v3101 = vpop.f32.mrf.mxu0
    %v3102 = vpop.f32.mrf.mxu0
    %v3103 = vpop.f32.mrf.mxu0
    %v3104 = vadd.f32 0.0, %v3103
    %v3105 = vpop.f32.mrf.mxu0
    %3106 = vdwg.mxu0
    %v3113 = vrot.slane %v3073, 3
    %v3114 = vrot.slane %v3080, 3
    %v3115 = vrot.slane %v3087, 3
    %v3116 = vrot.slane %v3090, 3
    %v3117 = vrot.slane %v3097, 3
    %v3118 = vrot.slane %v3104, 3
    %v3125 = vadd.f32 %v3015, %v3113
    %v3126 = vadd.f32 %v3016, %v3114
    %v3127 = vadd.f32 %v3017, %v3115
    %v3128 = vadd.f32 %v3018, %v3116
    %v3129 = vadd.f32 %v3019, %v3117
    %v3130 = vadd.f32 %v3020, %v3118
    %v3131 = vmax.f32 %v3125, 0.0
    %v3132 = vmax.f32 %v3126, 0.0
    %v3133 = vmax.f32 %v3127, 0.0
    %v3134 = vmax.f32 %v3128, 0.0
    %v3135 = vmax.f32 %v3129, 0.0
    %v3136 = vmax.f32 %v3130, 0.0
    %v3137 = vld [vmem:[%s3] sm:$0xf]
    %v3138 = vpack.c.bf16 %v3131, %v3131
    %v3139 = vpack.c.bf16 %v3134, %v3134
    %s3140 = scalar_lea.vmem %s3, 4
    %v3141 = vld [vmem:[%s3140] sm:$0xf]
    %v3144 = vunpack.c.l.b16 %v3138
    %v3145 = vunpack.c.l.b16 %v3139
    %v3146 = vrot.slane %v3144, 2
    %v3147 = vrot.slane %v3145, 1
    %vm3148 = vcmask 1041409
    %v3149 = vsel %vm3148, %v3147, %v3146
    %v3150 = vpack.c.b16 %v3149, %v3149
    %vm3151 = vcmask 64512
    %v3153 = vsel %vm3151, %v3150, 0
    %vm3155 = vcmask 1043456
    %v3157 = vsel %vm3155, %v3141, 0
    %3159 = vmatprep.subr.bf16.mxu0 0
    %3160 = vmatpush1.bf16.msra.mxu0 0
    %3161 = vmatprep.subr.bf16.mxu0 0
    %3162 = vmatpush1.bf16.msra.mxu0 0
    %3163 = vmatprep.subr.bf16.mxu0 0
    %3164 = vmatpush1.bf16.msra.mxu0 0
    %3165 = vmatprep.subr.bf16.mxu0 0
    %3166 = vmatpush1.bf16.msra.mxu0 0
    %3167 = vmatprep.subr.bf16.mxu0 0
    %3168 = vmatpush1.bf16.msra.mxu0 0
    %3169 = vmatprep.subr.bf16.mxu0 0
    %3170 = vmatpush1.bf16.msra.mxu0 0
    %3171 = vmatprep.subr.bf16.mxu0 0
    %3172 = vmatpush1.bf16.msra.mxu0 0
    %3173 = vmatprep.subr.bf16.mxu0 0
    %3174 = vmatpush1.bf16.msra.mxu0 %v3157
    %3175 = vmatprep.subr.bf16.mxu0 0
    %3176 = vmatpush2.bf16.msra.mxu0 0
    %3177 = vmatprep.subr.bf16.mxu0 0
    %3178 = vmatpush2.bf16.msra.mxu0 0
    %3179 = vmatprep.subr.bf16.mxu0 0
    %3180 = vmatpush2.bf16.msra.mxu0 0
    %3181 = vmatprep.subr.bf16.mxu0 0
    %3182 = vmatpush2.bf16.msra.mxu0 0
    %3183 = vmatprep.subr.bf16.mxu0 0
    %3184 = vmatpush2.bf16.msra.mxu0 0
    %3185 = vmatprep.subr.bf16.mxu0 0
    %3186 = vmatpush2.bf16.msra.mxu0 0
    %3187 = vmatprep.subr.bf16.mxu0 0
    %3188 = vmatpush2.bf16.msra.mxu0 0
    %3189 = vmatprep.subr.bf16.mxu0 0
    %3190 = vmatpush2.bf16.msra.mxu0 0
    %3191 = vmatprep.mubr.bf16.mxu0 0
    %3192 = vmatmul.mubr.bf16.gmra.mxu0 %v3153
    %v3193 = vpop.f32.mrf.mxu0
    %v3194 = vadd.f32 0.0, %v3193
    %v3195 = vpop.f32.mrf.mxu0
    %v3196 = vpop.f32.mrf.mxu0
    %v3197 = vpop.f32.mrf.mxu0
    %3198 = vdwg.mxu0
    %v3199 = vrot.slane %v3145, 7
    %v3200 = vsel %vm3148, %v3199, %v3144
    %v3201 = vpack.c.b16 %v3200, %v3200
    %v3203 = vsel %vm3151, %v3201, 0
    %v3206 = vsel %vm3155, %v3137, 0
    %3208 = vmatprep.subr.bf16.mxu0 0
    %3209 = vmatpush1.bf16.msra.mxu0 0
    %3210 = vmatprep.subr.bf16.mxu0 0
    %3211 = vmatpush1.bf16.msra.mxu0 0
    %3212 = vmatprep.subr.bf16.mxu0 0
    %3213 = vmatpush1.bf16.msra.mxu0 0
    %3214 = vmatprep.subr.bf16.mxu0 0
    %3215 = vmatpush1.bf16.msra.mxu0 0
    %3216 = vmatprep.subr.bf16.mxu0 0
    %3217 = vmatpush1.bf16.msra.mxu0 0
    %3218 = vmatprep.subr.bf16.mxu0 0
    %3219 = vmatpush1.bf16.msra.mxu0 0
    %3220 = vmatprep.subr.bf16.mxu0 0
    %3221 = vmatpush1.bf16.msra.mxu0 0
    %3222 = vmatprep.subr.bf16.mxu0 0
    %3223 = vmatpush1.bf16.msra.mxu0 %v3206
    %3224 = vmatprep.subr.bf16.mxu0 0
    %3225 = vmatpush2.bf16.msra.mxu0 0
    %3226 = vmatprep.subr.bf16.mxu0 0
    %3227 = vmatpush2.bf16.msra.mxu0 0
    %3228 = vmatprep.subr.bf16.mxu0 0
    %3229 = vmatpush2.bf16.msra.mxu0 0
    %3230 = vmatprep.subr.bf16.mxu0 0
    %3231 = vmatpush2.bf16.msra.mxu0 0
    %3232 = vmatprep.subr.bf16.mxu0 0
    %3233 = vmatpush2.bf16.msra.mxu0 0
    %3234 = vmatprep.subr.bf16.mxu0 0
    %3235 = vmatpush2.bf16.msra.mxu0 0
    %3236 = vmatprep.subr.bf16.mxu0 0
    %3237 = vmatpush2.bf16.msra.mxu0 0
    %3238 = vmatprep.subr.bf16.mxu0 0
    %3239 = vmatpush2.bf16.msra.mxu0 0
    %3240 = vmatprep.mubr.bf16.mxu0 0
    %3241 = vmatmul.mubr.bf16.gmra.mxu0 %v3203
    %v3242 = vpop.f32.mrf.mxu0
    %v3243 = vadd.f32 %v3194, %v3242
    %v3244 = vpop.f32.mrf.mxu0
    %v3245 = vpop.f32.mrf.mxu0
    %v3246 = vpop.f32.mrf.mxu0
    %3247 = vdwg.mxu0
    %s3248 = scalar_lea.vmem %s3, 8
    %v3249 = vld [vmem:[%s3248] sm:$0xf]
    %v3250 = vrot.slane %v3144, 4
    %v3251 = vrot.slane %v3145, 3
    %v3252 = vsel %vm3148, %v3251, %v3250
    %v3253 = vpack.c.b16 %v3252, %v3252
    %v3255 = vsel %vm3151, %v3253, 0
    %v3258 = vsel %vm3155, %v3249, 0
    %3260 = vmatprep.subr.bf16.mxu0 0
    %3261 = vmatpush1.bf16.msra.mxu0 0
    %3262 = vmatprep.subr.bf16.mxu0 0
    %3263 = vmatpush1.bf16.msra.mxu0 0
    %3264 = vmatprep.subr.bf16.mxu0 0
    %3265 = vmatpush1.bf16.msra.mxu0 0
    %3266 = vmatprep.subr.bf16.mxu0 0
    %3267 = vmatpush1.bf16.msra.mxu0 0
    %3268 = vmatprep.subr.bf16.mxu0 0
    %3269 = vmatpush1.bf16.msra.mxu0 0
    %3270 = vmatprep.subr.bf16.mxu0 0
    %3271 = vmatpush1.bf16.msra.mxu0 0
    %3272 = vmatprep.subr.bf16.mxu0 0
    %3273 = vmatpush1.bf16.msra.mxu0 0
    %3274 = vmatprep.subr.bf16.mxu0 0
    %3275 = vmatpush1.bf16.msra.mxu0 %v3258
    %3276 = vmatprep.subr.bf16.mxu0 0
    %3277 = vmatpush2.bf16.msra.mxu0 0
    %3278 = vmatprep.subr.bf16.mxu0 0
    %3279 = vmatpush2.bf16.msra.mxu0 0
    %3280 = vmatprep.subr.bf16.mxu0 0
    %3281 = vmatpush2.bf16.msra.mxu0 0
    %3282 = vmatprep.subr.bf16.mxu0 0
    %3283 = vmatpush2.bf16.msra.mxu0 0
    %3284 = vmatprep.subr.bf16.mxu0 0
    %3285 = vmatpush2.bf16.msra.mxu0 0
    %3286 = vmatprep.subr.bf16.mxu0 0
    %3287 = vmatpush2.bf16.msra.mxu0 0
    %3288 = vmatprep.subr.bf16.mxu0 0
    %3289 = vmatpush2.bf16.msra.mxu0 0
    %3290 = vmatprep.subr.bf16.mxu0 0
    %3291 = vmatpush2.bf16.msra.mxu0 0
    %3292 = vmatprep.mubr.bf16.mxu0 0
    %3293 = vmatmul.mubr.bf16.gmra.mxu0 %v3255
    %v3294 = vpop.f32.mrf.mxu0
    %v3295 = vadd.f32 0.0, %v3294
    %v3296 = vpop.f32.mrf.mxu0
    %v3297 = vpop.f32.mrf.mxu0
    %v3298 = vpop.f32.mrf.mxu0
    %3299 = vdwg.mxu0
    %v3300 = vadd.f32 %v3243, %v3295
    %s3301 = scalar_lea.vmem %s3, 12
    %v3302 = vld [vmem:[%s3301] sm:$0xf]
    %v3303 = vpack.c.bf16 %v3132, %v3132
    %v3304 = vpack.c.bf16 %v3135, %v3135
    %v3307 = vunpack.c.l.b16 %v3303
    %v3308 = vunpack.c.l.b16 %v3304
    %v3309 = vrot.slane %v3308, 7
    %v3310 = vsel %vm3148, %v3309, %v3307
    %v3311 = vpack.c.b16 %v3310, %v3310
    %v3313 = vsel %vm3151, %v3311, 0
    %v3316 = vsel %vm3155, %v3302, 0
    %3318 = vmatprep.subr.bf16.mxu0 0
    %3319 = vmatpush1.bf16.msra.mxu0 0
    %3320 = vmatprep.subr.bf16.mxu0 0
    %3321 = vmatpush1.bf16.msra.mxu0 0
    %3322 = vmatprep.subr.bf16.mxu0 0
    %3323 = vmatpush1.bf16.msra.mxu0 0
    %3324 = vmatprep.subr.bf16.mxu0 0
    %3325 = vmatpush1.bf16.msra.mxu0 0
    %3326 = vmatprep.subr.bf16.mxu0 0
    %3327 = vmatpush1.bf16.msra.mxu0 0
    %3328 = vmatprep.subr.bf16.mxu0 0
    %3329 = vmatpush1.bf16.msra.mxu0 0
    %3330 = vmatprep.subr.bf16.mxu0 0
    %3331 = vmatpush1.bf16.msra.mxu0 0
    %3332 = vmatprep.subr.bf16.mxu0 0
    %3333 = vmatpush1.bf16.msra.mxu0 %v3316
    %3334 = vmatprep.subr.bf16.mxu0 0
    %3335 = vmatpush2.bf16.msra.mxu0 0
    %3336 = vmatprep.subr.bf16.mxu0 0
    %3337 = vmatpush2.bf16.msra.mxu0 0
    %3338 = vmatprep.subr.bf16.mxu0 0
    %3339 = vmatpush2.bf16.msra.mxu0 0
    %3340 = vmatprep.subr.bf16.mxu0 0
    %3341 = vmatpush2.bf16.msra.mxu0 0
    %3342 = vmatprep.subr.bf16.mxu0 0
    %3343 = vmatpush2.bf16.msra.mxu0 0
    %3344 = vmatprep.subr.bf16.mxu0 0
    %3345 = vmatpush2.bf16.msra.mxu0 0
    %3346 = vmatprep.subr.bf16.mxu0 0
    %3347 = vmatpush2.bf16.msra.mxu0 0
    %3348 = vmatprep.subr.bf16.mxu0 0
    %3349 = vmatpush2.bf16.msra.mxu0 0
    %3350 = vmatprep.mubr.bf16.mxu0 0
    %3351 = vmatmul.mubr.bf16.gmra.mxu0 %v3313
    %v3352 = vpop.f32.mrf.mxu0
    %v3353 = vadd.f32 0.0, %v3352
    %v3354 = vpop.f32.mrf.mxu0
    %v3355 = vpop.f32.mrf.mxu0
    %v3356 = vpop.f32.mrf.mxu0
    %3357 = vdwg.mxu0
    %v3358 = vadd.f32 %v3300, %v3353
    %s3359 = scalar_lea.vmem %s3, 16
    %v3360 = vld [vmem:[%s3359] sm:$0xf]
    %v3361 = vrot.slane %v3307, 2
    %v3362 = vrot.slane %v3308, 1
    %v3363 = vsel %vm3148, %v3362, %v3361
    %v3364 = vpack.c.b16 %v3363, %v3363
    %v3366 = vsel %vm3151, %v3364, 0
    %v3369 = vsel %vm3155, %v3360, 0
    %3371 = vmatprep.subr.bf16.mxu0 0
    %3372 = vmatpush1.bf16.msra.mxu0 0
    %3373 = vmatprep.subr.bf16.mxu0 0
    %3374 = vmatpush1.bf16.msra.mxu0 0
    %3375 = vmatprep.subr.bf16.mxu0 0
    %3376 = vmatpush1.bf16.msra.mxu0 0
    %3377 = vmatprep.subr.bf16.mxu0 0
    %3378 = vmatpush1.bf16.msra.mxu0 0
    %3379 = vmatprep.subr.bf16.mxu0 0
    %3380 = vmatpush1.bf16.msra.mxu0 0
    %3381 = vmatprep.subr.bf16.mxu0 0
    %3382 = vmatpush1.bf16.msra.mxu0 0
    %3383 = vmatprep.subr.bf16.mxu0 0
    %3384 = vmatpush1.bf16.msra.mxu0 0
    %3385 = vmatprep.subr.bf16.mxu0 0
    %3386 = vmatpush1.bf16.msra.mxu0 %v3369
    %3387 = vmatprep.subr.bf16.mxu0 0
    %3388 = vmatpush2.bf16.msra.mxu0 0
    %3389 = vmatprep.subr.bf16.mxu0 0
    %3390 = vmatpush2.bf16.msra.mxu0 0
    %3391 = vmatprep.subr.bf16.mxu0 0
    %3392 = vmatpush2.bf16.msra.mxu0 0
    %3393 = vmatprep.subr.bf16.mxu0 0
    %3394 = vmatpush2.bf16.msra.mxu0 0
    %3395 = vmatprep.subr.bf16.mxu0 0
    %3396 = vmatpush2.bf16.msra.mxu0 0
    %3397 = vmatprep.subr.bf16.mxu0 0
    %3398 = vmatpush2.bf16.msra.mxu0 0
    %3399 = vmatprep.subr.bf16.mxu0 0
    %3400 = vmatpush2.bf16.msra.mxu0 0
    %3401 = vmatprep.subr.bf16.mxu0 0
    %3402 = vmatpush2.bf16.msra.mxu0 0
    %3403 = vmatprep.mubr.bf16.mxu0 0
    %3404 = vmatmul.mubr.bf16.gmra.mxu0 %v3366
    %v3405 = vpop.f32.mrf.mxu0
    %v3406 = vadd.f32 0.0, %v3405
    %v3407 = vpop.f32.mrf.mxu0
    %v3408 = vpop.f32.mrf.mxu0
    %v3409 = vpop.f32.mrf.mxu0
    %3410 = vdwg.mxu0
    %v3411 = vadd.f32 %v3358, %v3406
    %s3412 = scalar_lea.vmem %s3, 20
    %v3413 = vld [vmem:[%s3412] sm:$0xf]
    %v3414 = vrot.slane %v3307, 4
    %v3415 = vrot.slane %v3308, 3
    %v3416 = vsel %vm3148, %v3415, %v3414
    %v3417 = vpack.c.b16 %v3416, %v3416
    %v3419 = vsel %vm3151, %v3417, 0
    %v3422 = vsel %vm3155, %v3413, 0
    %3424 = vmatprep.subr.bf16.mxu0 0
    %3425 = vmatpush1.bf16.msra.mxu0 0
    %3426 = vmatprep.subr.bf16.mxu0 0
    %3427 = vmatpush1.bf16.msra.mxu0 0
    %3428 = vmatprep.subr.bf16.mxu0 0
    %3429 = vmatpush1.bf16.msra.mxu0 0
    %3430 = vmatprep.subr.bf16.mxu0 0
    %3431 = vmatpush1.bf16.msra.mxu0 0
    %3432 = vmatprep.subr.bf16.mxu0 0
    %3433 = vmatpush1.bf16.msra.mxu0 0
    %3434 = vmatprep.subr.bf16.mxu0 0
    %3435 = vmatpush1.bf16.msra.mxu0 0
    %3436 = vmatprep.subr.bf16.mxu0 0
    %3437 = vmatpush1.bf16.msra.mxu0 0
    %3438 = vmatprep.subr.bf16.mxu0 0
    %3439 = vmatpush1.bf16.msra.mxu0 %v3422
    %3440 = vmatprep.subr.bf16.mxu0 0
    %3441 = vmatpush2.bf16.msra.mxu0 0
    %3442 = vmatprep.subr.bf16.mxu0 0
    %3443 = vmatpush2.bf16.msra.mxu0 0
    %3444 = vmatprep.subr.bf16.mxu0 0
    %3445 = vmatpush2.bf16.msra.mxu0 0
    %3446 = vmatprep.subr.bf16.mxu0 0
    %3447 = vmatpush2.bf16.msra.mxu0 0
    %3448 = vmatprep.subr.bf16.mxu0 0
    %3449 = vmatpush2.bf16.msra.mxu0 0
    %3450 = vmatprep.subr.bf16.mxu0 0
    %3451 = vmatpush2.bf16.msra.mxu0 0
    %3452 = vmatprep.subr.bf16.mxu0 0
    %3453 = vmatpush2.bf16.msra.mxu0 0
    %3454 = vmatprep.subr.bf16.mxu0 0
    %3455 = vmatpush2.bf16.msra.mxu0 0
    %3456 = vmatprep.mubr.bf16.mxu0 0
    %3457 = vmatmul.mubr.bf16.gmra.mxu0 %v3419
    %v3458 = vpop.f32.mrf.mxu0
    %v3459 = vadd.f32 0.0, %v3458
    %v3460 = vpop.f32.mrf.mxu0
    %v3461 = vpop.f32.mrf.mxu0
    %v3462 = vpop.f32.mrf.mxu0
    %3463 = vdwg.mxu0
    %v3464 = vadd.f32 %v3411, %v3459
    %s3465 = scalar_lea.vmem %s3, 24
    %v3466 = vld [vmem:[%s3465] sm:$0xf]
    %v3467 = vpack.c.bf16 %v3133, %v3133
    %v3468 = vpack.c.bf16 %v3136, %v3136
    %v3471 = vunpack.c.l.b16 %v3467
    %v3472 = vunpack.c.l.b16 %v3468
    %v3473 = vrot.slane %v3472, 7
    %v3474 = vsel %vm3148, %v3473, %v3471
    %v3475 = vpack.c.b16 %v3474, %v3474
    %v3477 = vsel %vm3151, %v3475, 0
    %v3480 = vsel %vm3155, %v3466, 0
    %3482 = vmatprep.subr.bf16.mxu0 0
    %3483 = vmatpush1.bf16.msra.mxu0 0
    %3484 = vmatprep.subr.bf16.mxu0 0
    %3485 = vmatpush1.bf16.msra.mxu0 0
    %3486 = vmatprep.subr.bf16.mxu0 0
    %3487 = vmatpush1.bf16.msra.mxu0 0
    %3488 = vmatprep.subr.bf16.mxu0 0
    %3489 = vmatpush1.bf16.msra.mxu0 0
    %3490 = vmatprep.subr.bf16.mxu0 0
    %3491 = vmatpush1.bf16.msra.mxu0 0
    %3492 = vmatprep.subr.bf16.mxu0 0
    %3493 = vmatpush1.bf16.msra.mxu0 0
    %3494 = vmatprep.subr.bf16.mxu0 0
    %3495 = vmatpush1.bf16.msra.mxu0 0
    %3496 = vmatprep.subr.bf16.mxu0 0
    %3497 = vmatpush1.bf16.msra.mxu0 %v3480
    %3498 = vmatprep.subr.bf16.mxu0 0
    %3499 = vmatpush2.bf16.msra.mxu0 0
    %3500 = vmatprep.subr.bf16.mxu0 0
    %3501 = vmatpush2.bf16.msra.mxu0 0
    %3502 = vmatprep.subr.bf16.mxu0 0
    %3503 = vmatpush2.bf16.msra.mxu0 0
    %3504 = vmatprep.subr.bf16.mxu0 0
    %3505 = vmatpush2.bf16.msra.mxu0 0
    %3506 = vmatprep.subr.bf16.mxu0 0
    %3507 = vmatpush2.bf16.msra.mxu0 0
    %3508 = vmatprep.subr.bf16.mxu0 0
    %3509 = vmatpush2.bf16.msra.mxu0 0
    %3510 = vmatprep.subr.bf16.mxu0 0
    %3511 = vmatpush2.bf16.msra.mxu0 0
    %3512 = vmatprep.subr.bf16.mxu0 0
    %3513 = vmatpush2.bf16.msra.mxu0 0
    %3514 = vmatprep.mubr.bf16.mxu0 0
    %3515 = vmatmul.mubr.bf16.gmra.mxu0 %v3477
    %v3516 = vpop.f32.mrf.mxu0
    %v3517 = vadd.f32 0.0, %v3516
    %v3518 = vpop.f32.mrf.mxu0
    %v3519 = vpop.f32.mrf.mxu0
    %v3520 = vpop.f32.mrf.mxu0
    %3521 = vdwg.mxu0
    %v3522 = vadd.f32 %v3464, %v3517
    %s3523 = scalar_lea.vmem %s3, 28
    %v3524 = vld [vmem:[%s3523] sm:$0xf]
    %v3525 = vrot.slane %v3471, 2
    %v3526 = vrot.slane %v3472, 1
    %v3527 = vsel %vm3148, %v3526, %v3525
    %v3528 = vpack.c.b16 %v3527, %v3527
    %v3530 = vsel %vm3151, %v3528, 0
    %v3533 = vsel %vm3155, %v3524, 0
    %3535 = vmatprep.subr.bf16.mxu0 0
    %3536 = vmatpush1.bf16.msra.mxu0 0
    %3537 = vmatprep.subr.bf16.mxu0 0
    %3538 = vmatpush1.bf16.msra.mxu0 0
    %3539 = vmatprep.subr.bf16.mxu0 0
    %3540 = vmatpush1.bf16.msra.mxu0 0
    %3541 = vmatprep.subr.bf16.mxu0 0
    %3542 = vmatpush1.bf16.msra.mxu0 0
    %3543 = vmatprep.subr.bf16.mxu0 0
    %3544 = vmatpush1.bf16.msra.mxu0 0
    %3545 = vmatprep.subr.bf16.mxu0 0
    %3546 = vmatpush1.bf16.msra.mxu0 0
    %3547 = vmatprep.subr.bf16.mxu0 0
    %3548 = vmatpush1.bf16.msra.mxu0 0
    %3549 = vmatprep.subr.bf16.mxu0 0
    %3550 = vmatpush1.bf16.msra.mxu0 %v3533
    %3551 = vmatprep.subr.bf16.mxu0 0
    %3552 = vmatpush2.bf16.msra.mxu0 0
    %3553 = vmatprep.subr.bf16.mxu0 0
    %3554 = vmatpush2.bf16.msra.mxu0 0
    %3555 = vmatprep.subr.bf16.mxu0 0
    %3556 = vmatpush2.bf16.msra.mxu0 0
    %3557 = vmatprep.subr.bf16.mxu0 0
    %3558 = vmatpush2.bf16.msra.mxu0 0
    %3559 = vmatprep.subr.bf16.mxu0 0
    %3560 = vmatpush2.bf16.msra.mxu0 0
    %3561 = vmatprep.subr.bf16.mxu0 0
    %3562 = vmatpush2.bf16.msra.mxu0 0
    %3563 = vmatprep.subr.bf16.mxu0 0
    %3564 = vmatpush2.bf16.msra.mxu0 0
    %3565 = vmatprep.subr.bf16.mxu0 0
    %3566 = vmatpush2.bf16.msra.mxu0 0
    %3567 = vmatprep.mubr.bf16.mxu0 0
    %3568 = vmatmul.mubr.bf16.gmra.mxu0 %v3530
    %v3569 = vpop.f32.mrf.mxu0
    %v3570 = vadd.f32 0.0, %v3569
    %v3571 = vpop.f32.mrf.mxu0
    %v3572 = vpop.f32.mrf.mxu0
    %v3573 = vpop.f32.mrf.mxu0
    %3574 = vdwg.mxu0
    %v3575 = vadd.f32 %v3522, %v3570
    %s3576 = scalar_lea.vmem %s3, 32
    %v3577 = vld [vmem:[%s3576] sm:$0xf]
    %v3578 = vrot.slane %v3471, 4
    %v3579 = vrot.slane %v3472, 3
    %v3580 = vsel %vm3148, %v3579, %v3578
    %v3581 = vpack.c.b16 %v3580, %v3580
    %v3583 = vsel %vm3151, %v3581, 0
    %v3586 = vsel %vm3155, %v3577, 0
    %3588 = vmatprep.subr.bf16.mxu0 0
    %3589 = vmatpush1.bf16.msra.mxu0 0
    %3590 = vmatprep.subr.bf16.mxu0 0
    %3591 = vmatpush1.bf16.msra.mxu0 0
    %3592 = vmatprep.subr.bf16.mxu0 0
    %3593 = vmatpush1.bf16.msra.mxu0 0
    %3594 = vmatprep.subr.bf16.mxu0 0
    %3595 = vmatpush1.bf16.msra.mxu0 0
    %3596 = vmatprep.subr.bf16.mxu0 0
    %3597 = vmatpush1.bf16.msra.mxu0 0
    %3598 = vmatprep.subr.bf16.mxu0 0
    %3599 = vmatpush1.bf16.msra.mxu0 0
    %3600 = vmatprep.subr.bf16.mxu0 0
    %3601 = vmatpush1.bf16.msra.mxu0 0
    %3602 = vmatprep.subr.bf16.mxu0 0
    %3603 = vmatpush1.bf16.msra.mxu0 %v3586
    %3604 = vmatprep.subr.bf16.mxu0 0
    %3605 = vmatpush2.bf16.msra.mxu0 0
    %3606 = vmatprep.subr.bf16.mxu0 0
    %3607 = vmatpush2.bf16.msra.mxu0 0
    %3608 = vmatprep.subr.bf16.mxu0 0
    %3609 = vmatpush2.bf16.msra.mxu0 0
    %3610 = vmatprep.subr.bf16.mxu0 0
    %3611 = vmatpush2.bf16.msra.mxu0 0
    %3612 = vmatprep.subr.bf16.mxu0 0
    %3613 = vmatpush2.bf16.msra.mxu0 0
    %3614 = vmatprep.subr.bf16.mxu0 0
    %3615 = vmatpush2.bf16.msra.mxu0 0
    %3616 = vmatprep.subr.bf16.mxu0 0
    %3617 = vmatpush2.bf16.msra.mxu0 0
    %3618 = vmatprep.subr.bf16.mxu0 0
    %3619 = vmatpush2.bf16.msra.mxu0 0
    %3620 = vmatprep.mubr.bf16.mxu0 0
    %3621 = vmatmul.mubr.bf16.gmra.mxu0 %v3583
    %v3622 = vpop.f32.mrf.mxu0
    %v3623 = vadd.f32 0.0, %v3622
    %v3624 = vpop.f32.mrf.mxu0
    %v3625 = vpop.f32.mrf.mxu0
    %v3626 = vpop.f32.mrf.mxu0
    %3627 = vdwg.mxu0
    %v3628 = vadd.f32 %v3575, %v3623
    %v3629 = vmax.f32 %v3628, 0.0
    %3631 = vrot.lane.b32.xlu0 %v3629, 1
    %v3632 = vpop.permute.xlu0 %3631
    %3634 = vrot.lane.b32.xlu0 %v3629, 2
    %v3635 = vpop.permute.xlu0 %3634
    %3637 = vrot.lane.b32.xlu0 %v3629, 3
    %v3638 = vpop.permute.xlu0 %3637
    %3640 = vrot.lane.b32.xlu0 %v3629, 4
    %v3641 = vpop.permute.xlu0 %3640
    %3643 = vrot.lane.b32.xlu0 %v3629, 5
    %v3644 = vpop.permute.xlu0 %3643
    %3646 = vrot.lane.b32.xlu0 %v3629, 6
    %v3647 = vpop.permute.xlu0 %3646
    %3649 = vrot.lane.b32.xlu0 %v3629, 7
    %v3650 = vpop.permute.xlu0 %3649
    %vm3652 = vcmask 7168
    %v3653 = vsel %vm3652, %v3629, %v3632
    %vm3654 = vcmask 15360
    %v3655 = vsel %vm3654, %v3653, %v3635
    %vm3656 = vcmask 23552
    %v3657 = vsel %vm3656, %v3655, %v3638
    %vm3658 = vcmask 31744
    %v3659 = vsel %vm3658, %v3657, %v3641
    %vm3660 = vcmask 39936
    %v3661 = vsel %vm3660, %v3659, %v3644
    %vm3662 = vcmask 48128
    %v3663 = vsel %vm3662, %v3661, %v3647
    %vm3664 = vcmask 56320
    %v3665 = vsel %vm3664, %v3663, %v3650
    %3666 = vrot.lane.b32.xlu0 %v3629, 127
    %v3667 = vpop.permute.xlu0 %3666
    %v3669 = vsel %vm3652, %v3667, %v3629
    %v3670 = vsel %vm3654, %v3669, %v3632
    %v3671 = vsel %vm3656, %v3670, %v3635
    %v3672 = vsel %vm3658, %v3671, %v3638
    %v3673 = vsel %vm3660, %v3672, %v3641
    %v3674 = vsel %vm3662, %v3673, %v3644
    %v3675 = vsel %vm3664, %v3674, %v3647
    %3676 = vrot.lane.b32.xlu0 %v3629, 126
    %v3677 = vpop.permute.xlu0 %3676
    %v3679 = vsel %vm3652, %v3677, %v3667
    %v3680 = vsel %vm3654, %v3679, %v3629
    %v3681 = vsel %vm3656, %v3680, %v3632
    %v3682 = vsel %vm3658, %v3681, %v3635
    %v3683 = vsel %vm3660, %v3682, %v3638
    %v3684 = vsel %vm3662, %v3683, %v3641
    %v3685 = vsel %vm3664, %v3684, %v3644
    %3686 = vrot.lane.b32.xlu0 %v3629, 125
    %v3687 = vpop.permute.xlu0 %3686
    %v3689 = vsel %vm3652, %v3687, %v3677
    %v3690 = vsel %vm3654, %v3689, %v3667
    %v3691 = vsel %vm3656, %v3690, %v3629
    %v3692 = vsel %vm3658, %v3691, %v3632
    %v3693 = vsel %vm3660, %v3692, %v3635
    %v3694 = vsel %vm3662, %v3693, %v3638
    %v3695 = vsel %vm3664, %v3694, %v3641
    %3696 = vrot.lane.b32.xlu0 %v3629, 124
    %v3697 = vpop.permute.xlu0 %3696
    %v3699 = vsel %vm3652, %v3697, %v3687
    %v3700 = vsel %vm3654, %v3699, %v3677
    %v3701 = vsel %vm3656, %v3700, %v3667
    %v3702 = vsel %vm3658, %v3701, %v3629
    %v3703 = vsel %vm3660, %v3702, %v3632
    %v3704 = vsel %vm3662, %v3703, %v3635
    %v3705 = vsel %vm3664, %v3704, %v3638
    %3706 = vrot.lane.b32.xlu0 %v3629, 123
    %v3707 = vpop.permute.xlu0 %3706
    %v3709 = vsel %vm3652, %v3707, %v3697
    %v3710 = vsel %vm3654, %v3709, %v3687
    %v3711 = vsel %vm3656, %v3710, %v3677
    %v3712 = vsel %vm3658, %v3711, %v3667
    %v3713 = vsel %vm3660, %v3712, %v3629
    %v3714 = vsel %vm3662, %v3713, %v3632
    %v3715 = vsel %vm3664, %v3714, %v3635
    %3716 = vrot.lane.b32.xlu0 %v3629, 122
    %v3717 = vpop.permute.xlu0 %3716
    %v3719 = vsel %vm3652, %v3717, %v3707
    %v3720 = vsel %vm3654, %v3719, %v3697
    %v3721 = vsel %vm3656, %v3720, %v3687
    %v3722 = vsel %vm3658, %v3721, %v3677
    %v3723 = vsel %vm3660, %v3722, %v3667
    %v3724 = vsel %vm3662, %v3723, %v3629
    %v3725 = vsel %vm3664, %v3724, %v3632
    %3726 = vrot.lane.b32.xlu0 %v3629, 121
    %v3727 = vpop.permute.xlu0 %3726
    %v3729 = vsel %vm3652, %v3727, %v3717
    %v3730 = vsel %vm3654, %v3729, %v3707
    %v3731 = vsel %vm3656, %v3730, %v3697
    %v3732 = vsel %vm3658, %v3731, %v3687
    %v3733 = vsel %vm3660, %v3732, %v3677
    %v3734 = vsel %vm3662, %v3733, %v3667
    %v3735 = vsel %vm3664, %v3734, %v3629
    %v3736 = vld [vmem:[%s4] sm:$0xf]
    %s3737 = scalar_lea.vmem %s4, 4
    %v3738 = vld [vmem:[%s3737] sm:$0xf]
    %s3739 = scalar_lea.vmem %s4, 8
    %v3740 = vld [vmem:[%s3739] sm:$0xf]
    %v3741 = vld [vmem:[%s5] sm:$0xf]
    %v3742 = vld [vmem:[%s5 + $0x4] sm:$0xf]
    %s3743 = scalar_lea.vmem %s5, 8
    %v3744 = vld [vmem:[%s3743] sm:$0xf]
    %v3745 = vld [vmem:[%s3743 + $0x4] sm:$0xf]
    %s3746 = scalar_lea.vmem %s5, 16
    %v3747 = vld [vmem:[%s3746] sm:$0xf]
    %v3748 = vld [vmem:[%s3746 + $0x4] sm:$0xf]
    %v3749 = vld [vmem:[%s6] sm:$0x1]
    %s3750 = scalar_lea.vmem %s6, 1
    %v3751 = vld [vmem:[%s3750] sm:$0x1]
    %s3752 = scalar_lea.vmem %s6, 2
    %v3753 = vld [vmem:[%s3752] sm:$0x1]
    %s3754 = scalar_lea.vmem %s6, 3
    %v3755 = vld [vmem:[%s3754] sm:$0x1]
    %v3756 = vld [vmem:[%s10] sm:$0x3]
    %v3757 = vpack.c.bf16 %v3665, %v3665
    %v3758 = vpack.c.bf16 %v3756, %v3756
    %v3761 = vunpack.c.l.b16 %v3741
    %v3762 = vunpack.c.l.b16 %v3742
    %v3763 = vpack.c.b16 %v3762, %v3761
    %vm3765 = vcmask 130048
    %v3767 = vsel %vm3765, %v3758, 0
    %3769 = vmatprep.subr.bf16.mxu0 0
    %3770 = vmatpush1.bf16.msra.mxu0 0
    %3771 = vmatprep.subr.bf16.mxu0 0
    %3772 = vmatpush1.bf16.msra.mxu0 0
    %3773 = vmatprep.subr.bf16.mxu0 0
    %3774 = vmatpush1.bf16.msra.mxu0 0
    %3775 = vmatprep.subr.bf16.mxu0 0
    %3776 = vmatpush1.bf16.msra.mxu0 0
    %3777 = vmatprep.subr.bf16.mxu0 0
    %3778 = vmatpush1.bf16.msra.mxu0 0
    %3779 = vmatprep.subr.bf16.mxu0 0
    %3780 = vmatpush1.bf16.msra.mxu0 0
    %3781 = vmatprep.subr.bf16.mxu0 0
    %3782 = vmatpush1.bf16.msra.mxu0 0
    %3783 = vmatprep.subr.bf16.mxu0 0
    %3784 = vmatpush1.bf16.msra.mxu0 %v3763
    %3785 = vmatprep.subr.bf16.mxu0 0
    %3786 = vmatpush2.bf16.msra.mxu0 0
    %3787 = vmatprep.subr.bf16.mxu0 0
    %3788 = vmatpush2.bf16.msra.mxu0 0
    %3789 = vmatprep.subr.bf16.mxu0 0
    %3790 = vmatpush2.bf16.msra.mxu0 0
    %3791 = vmatprep.subr.bf16.mxu0 0
    %3792 = vmatpush2.bf16.msra.mxu0 0
    %3793 = vmatprep.subr.bf16.mxu0 0
    %3794 = vmatpush2.bf16.msra.mxu0 0
    %3795 = vmatprep.subr.bf16.mxu0 0
    %3796 = vmatpush2.bf16.msra.mxu0 0
    %3797 = vmatprep.subr.bf16.mxu0 0
    %3798 = vmatpush2.bf16.msra.mxu0 0
    %3799 = vmatprep.subr.bf16.mxu0 0
    %3800 = vmatpush2.bf16.msra.mxu0 0
    %3801 = vmatprep.mubr.bf16.mxu0 0
    %3802 = vmatmul.mubr.bf16.gmra.mxu0 %v3767
    %v3803 = vpop.f32.mrf.mxu0
    %v3804 = vadd.f32 0.0, %v3803
    %v3805 = vpop.f32.mrf.mxu0
    %v3806 = vpop.f32.mrf.mxu0
    %v3807 = vpop.f32.mrf.mxu0
    %3808 = vdwg.mxu0
    %v3810 = vsel %vm3151, %v3757, 0
    %v3813 = vsel %vm3155, %v3736, 0
    %3815 = vmatprep.subr.bf16.mxu0 0
    %3816 = vmatpush1.bf16.msra.mxu0 0
    %3817 = vmatprep.subr.bf16.mxu0 0
    %3818 = vmatpush1.bf16.msra.mxu0 0
    %3819 = vmatprep.subr.bf16.mxu0 0
    %3820 = vmatpush1.bf16.msra.mxu0 0
    %3821 = vmatprep.subr.bf16.mxu0 0
    %3822 = vmatpush1.bf16.msra.mxu0 0
    %3823 = vmatprep.subr.bf16.mxu0 0
    %3824 = vmatpush1.bf16.msra.mxu0 0
    %3825 = vmatprep.subr.bf16.mxu0 0
    %3826 = vmatpush1.bf16.msra.mxu0 0
    %3827 = vmatprep.subr.bf16.mxu0 0
    %3828 = vmatpush1.bf16.msra.mxu0 0
    %3829 = vmatprep.subr.bf16.mxu0 0
    %3830 = vmatpush1.bf16.msra.mxu0 %v3813
    %3831 = vmatprep.subr.bf16.mxu0 0
    %3832 = vmatpush2.bf16.msra.mxu0 0
    %3833 = vmatprep.subr.bf16.mxu0 0
    %3834 = vmatpush2.bf16.msra.mxu0 0
    %3835 = vmatprep.subr.bf16.mxu0 0
    %3836 = vmatpush2.bf16.msra.mxu0 0
    %3837 = vmatprep.subr.bf16.mxu0 0
    %3838 = vmatpush2.bf16.msra.mxu0 0
    %3839 = vmatprep.subr.bf16.mxu0 0
    %3840 = vmatpush2.bf16.msra.mxu0 0
    %3841 = vmatprep.subr.bf16.mxu0 0
    %3842 = vmatpush2.bf16.msra.mxu0 0
    %3843 = vmatprep.subr.bf16.mxu0 0
    %3844 = vmatpush2.bf16.msra.mxu0 0
    %3845 = vmatprep.subr.bf16.mxu0 0
    %3846 = vmatpush2.bf16.msra.mxu0 0
    %3847 = vmatprep.mubr.bf16.mxu0 0
    %3848 = vmatmul.mubr.bf16.gmra.mxu0 %v3810
    %v3849 = vpop.f32.mrf.mxu0
    %v3850 = vadd.f32 %v3804, %v3849
    %v3851 = vpop.f32.mrf.mxu0
    %v3852 = vpop.f32.mrf.mxu0
    %v3853 = vpop.f32.mrf.mxu0
    %3854 = vdwg.mxu0
    %v3856 = vlaneseq
    %v3857 = vshrl.u32 %v3856, 7
    %v3858 = vsub.s32 0, %v3857
    %v3859 = vrot.slane %v3749, %v3858
    %v3861 = vadd.f32 %v3850, %v3859
    %v3862 = vxor.u32 %v3861, 2147483648
    %v3863 = vmul.f32 %v3862, 1.442695
    %v3864 = vpow.pop %v3863
    %v3865 = vadd.f32 %v3864, 1.0
    %v3866 = vrcp.pop %v3865
    %v3867 = vmul.f32 1.0, %v3866
    %v3870 = vunpack.c.l.b16 %v3744
    %v3871 = vunpack.c.l.b16 %v3745
    %v3872 = vpack.c.b16 %v3871, %v3870
    %3874 = vmatprep.subr.bf16.mxu0 0
    %3875 = vmatpush1.bf16.msra.mxu0 0
    %3876 = vmatprep.subr.bf16.mxu0 0
    %3877 = vmatpush1.bf16.msra.mxu0 0
    %3878 = vmatprep.subr.bf16.mxu0 0
    %3879 = vmatpush1.bf16.msra.mxu0 0
    %3880 = vmatprep.subr.bf16.mxu0 0
    %3881 = vmatpush1.bf16.msra.mxu0 0
    %3882 = vmatprep.subr.bf16.mxu0 0
    %3883 = vmatpush1.bf16.msra.mxu0 0
    %3884 = vmatprep.subr.bf16.mxu0 0
    %3885 = vmatpush1.bf16.msra.mxu0 0
    %3886 = vmatprep.subr.bf16.mxu0 0
    %3887 = vmatpush1.bf16.msra.mxu0 0
    %3888 = vmatprep.subr.bf16.mxu0 0
    %3889 = vmatpush1.bf16.msra.mxu0 %v3872
    %3890 = vmatprep.subr.bf16.mxu0 0
    %3891 = vmatpush2.bf16.msra.mxu0 0
    %3892 = vmatprep.subr.bf16.mxu0 0
    %3893 = vmatpush2.bf16.msra.mxu0 0
    %3894 = vmatprep.subr.bf16.mxu0 0
    %3895 = vmatpush2.bf16.msra.mxu0 0
    %3896 = vmatprep.subr.bf16.mxu0 0
    %3897 = vmatpush2.bf16.msra.mxu0 0
    %3898 = vmatprep.subr.bf16.mxu0 0
    %3899 = vmatpush2.bf16.msra.mxu0 0
    %3900 = vmatprep.subr.bf16.mxu0 0
    %3901 = vmatpush2.bf16.msra.mxu0 0
    %3902 = vmatprep.subr.bf16.mxu0 0
    %3903 = vmatpush2.bf16.msra.mxu0 0
    %3904 = vmatprep.subr.bf16.mxu0 0
    %3905 = vmatpush2.bf16.msra.mxu0 0
    %3906 = vmatprep.mubr.bf16.mxu0 0
    %3907 = vmatmul.mubr.bf16.gmra.mxu0 %v3767
    %v3908 = vpop.f32.mrf.mxu0
    %v3909 = vadd.f32 0.0, %v3908
    %v3910 = vpop.f32.mrf.mxu0
    %v3911 = vpop.f32.mrf.mxu0
    %v3912 = vpop.f32.mrf.mxu0
    %3913 = vdwg.mxu0
    %v3915 = vsel %vm3155, %v3738, 0
    %3917 = vmatprep.subr.bf16.mxu0 0
    %3918 = vmatpush1.bf16.msra.mxu0 0
    %3919 = vmatprep.subr.bf16.mxu0 0
    %3920 = vmatpush1.bf16.msra.mxu0 0
    %3921 = vmatprep.subr.bf16.mxu0 0
    %3922 = vmatpush1.bf16.msra.mxu0 0
    %3923 = vmatprep.subr.bf16.mxu0 0
    %3924 = vmatpush1.bf16.msra.mxu0 0
    %3925 = vmatprep.subr.bf16.mxu0 0
    %3926 = vmatpush1.bf16.msra.mxu0 0
    %3927 = vmatprep.subr.bf16.mxu0 0
    %3928 = vmatpush1.bf16.msra.mxu0 0
    %3929 = vmatprep.subr.bf16.mxu0 0
    %3930 = vmatpush1.bf16.msra.mxu0 0
    %3931 = vmatprep.subr.bf16.mxu0 0
    %3932 = vmatpush1.bf16.msra.mxu0 %v3915
    %3933 = vmatprep.subr.bf16.mxu0 0
    %3934 = vmatpush2.bf16.msra.mxu0 0
    %3935 = vmatprep.subr.bf16.mxu0 0
    %3936 = vmatpush2.bf16.msra.mxu0 0
    %3937 = vmatprep.subr.bf16.mxu0 0
    %3938 = vmatpush2.bf16.msra.mxu0 0
    %3939 = vmatprep.subr.bf16.mxu0 0
    %3940 = vmatpush2.bf16.msra.mxu0 0
    %3941 = vmatprep.subr.bf16.mxu0 0
    %3942 = vmatpush2.bf16.msra.mxu0 0
    %3943 = vmatprep.subr.bf16.mxu0 0
    %3944 = vmatpush2.bf16.msra.mxu0 0
    %3945 = vmatprep.subr.bf16.mxu0 0
    %3946 = vmatpush2.bf16.msra.mxu0 0
    %3947 = vmatprep.subr.bf16.mxu0 0
    %3948 = vmatpush2.bf16.msra.mxu0 0
    %3949 = vmatprep.mubr.bf16.mxu0 0
    %3950 = vmatmul.mubr.bf16.gmra.mxu0 %v3810
    %v3951 = vpop.f32.mrf.mxu0
    %v3952 = vadd.f32 %v3909, %v3951
    %v3953 = vpop.f32.mrf.mxu0
    %v3954 = vpop.f32.mrf.mxu0
    %v3955 = vpop.f32.mrf.mxu0
    %3956 = vdwg.mxu0
    %v3958 = vlaneseq
    %v3959 = vshrl.u32 %v3958, 7
    %v3960 = vsub.s32 0, %v3959
    %v3961 = vrot.slane %v3751, %v3960
    %v3963 = vadd.f32 %v3952, %v3961
    %v3964 = vxor.u32 %v3963, 2147483648
    %v3965 = vmul.f32 %v3964, 1.442695
    %v3966 = vpow.pop %v3965
    %v3967 = vadd.f32 %v3966, 1.0
    %v3968 = vrcp.pop %v3967
    %v3969 = vmul.f32 1.0, %v3968
    %v3971 = vlaneseq
    %v3972 = vshrl.u32 %v3971, 7
    %v3973 = vsub.s32 0, %v3972
    %v3974 = vrot.slane %v3753, %v3973
    %v3977 = vsel %vm3155, %v3740, 0
    %3979 = vmatprep.subr.bf16.mxu0 0
    %3980 = vmatpush1.bf16.msra.mxu0 0
    %3981 = vmatprep.subr.bf16.mxu0 0
    %3982 = vmatpush1.bf16.msra.mxu0 0
    %3983 = vmatprep.subr.bf16.mxu0 0
    %3984 = vmatpush1.bf16.msra.mxu0 0
    %3985 = vmatprep.subr.bf16.mxu0 0
    %3986 = vmatpush1.bf16.msra.mxu0 0
    %3987 = vmatprep.subr.bf16.mxu0 0
    %3988 = vmatpush1.bf16.msra.mxu0 0
    %3989 = vmatprep.subr.bf16.mxu0 0
    %3990 = vmatpush1.bf16.msra.mxu0 0
    %3991 = vmatprep.subr.bf16.mxu0 0
    %3992 = vmatpush1.bf16.msra.mxu0 0
    %3993 = vmatprep.subr.bf16.mxu0 0
    %3994 = vmatpush1.bf16.msra.mxu0 %v3977
    %3995 = vmatprep.subr.bf16.mxu0 0
    %3996 = vmatpush2.bf16.msra.mxu0 0
    %3997 = vmatprep.subr.bf16.mxu0 0
    %3998 = vmatpush2.bf16.msra.mxu0 0
    %3999 = vmatprep.subr.bf16.mxu0 0
    %4000 = vmatpush2.bf16.msra.mxu0 0
    %4001 = vmatprep.subr.bf16.mxu0 0
    %4002 = vmatpush2.bf16.msra.mxu0 0
    %4003 = vmatprep.subr.bf16.mxu0 0
    %4004 = vmatpush2.bf16.msra.mxu0 0
    %4005 = vmatprep.subr.bf16.mxu0 0
    %4006 = vmatpush2.bf16.msra.mxu0 0
    %4007 = vmatprep.subr.bf16.mxu0 0
    %4008 = vmatpush2.bf16.msra.mxu0 0
    %4009 = vmatprep.subr.bf16.mxu0 0
    %4010 = vmatpush2.bf16.msra.mxu0 0
    %4011 = vmatprep.mubr.bf16.mxu0 0
    %4012 = vmatmul.mubr.bf16.gmra.mxu0 %v3810
    %v4013 = vpop.f32.mrf.mxu0
    %v4014 = vadd.f32 %v3974, %v4013
    %v4015 = vpop.f32.mrf.mxu0
    %v4016 = vpop.f32.mrf.mxu0
    %v4017 = vpop.f32.mrf.mxu0
    %4018 = vdwg.mxu0
    %v4020 = vlaneseq
    %v4021 = vshrl.u32 %v4020, 7
    %v4022 = vsub.s32 0, %v4021
    %v4023 = vrot.slane %v3755, %v4022
    %v4027 = vunpack.c.l.b16 %v3747
    %v4028 = vunpack.c.l.b16 %v3748
    %v4029 = vpack.c.b16 %v4028, %v4027
    %4031 = vmatprep.subr.bf16.mxu0 0
    %4032 = vmatpush1.bf16.msra.mxu0 0
    %4033 = vmatprep.subr.bf16.mxu0 0
    %4034 = vmatpush1.bf16.msra.mxu0 0
    %4035 = vmatprep.subr.bf16.mxu0 0
    %4036 = vmatpush1.bf16.msra.mxu0 0
    %4037 = vmatprep.subr.bf16.mxu0 0
    %4038 = vmatpush1.bf16.msra.mxu0 0
    %4039 = vmatprep.subr.bf16.mxu0 0
    %4040 = vmatpush1.bf16.msra.mxu0 0
    %4041 = vmatprep.subr.bf16.mxu0 0
    %4042 = vmatpush1.bf16.msra.mxu0 0
    %4043 = vmatprep.subr.bf16.mxu0 0
    %4044 = vmatpush1.bf16.msra.mxu0 0
    %4045 = vmatprep.subr.bf16.mxu0 0
    %4046 = vmatpush1.bf16.msra.mxu0 %v4029
    %4047 = vmatprep.subr.bf16.mxu0 0
    %4048 = vmatpush2.bf16.msra.mxu0 0
    %4049 = vmatprep.subr.bf16.mxu0 0
    %4050 = vmatpush2.bf16.msra.mxu0 0
    %4051 = vmatprep.subr.bf16.mxu0 0
    %4052 = vmatpush2.bf16.msra.mxu0 0
    %4053 = vmatprep.subr.bf16.mxu0 0
    %4054 = vmatpush2.bf16.msra.mxu0 0
    %4055 = vmatprep.subr.bf16.mxu0 0
    %4056 = vmatpush2.bf16.msra.mxu0 0
    %4057 = vmatprep.subr.bf16.mxu0 0
    %4058 = vmatpush2.bf16.msra.mxu0 0
    %4059 = vmatprep.subr.bf16.mxu0 0
    %4060 = vmatpush2.bf16.msra.mxu0 0
    %4061 = vmatprep.subr.bf16.mxu0 0
    %4062 = vmatpush2.bf16.msra.mxu0 0
    %4063 = vmatprep.mubr.bf16.mxu0 0
    %4064 = vmatmul.mubr.bf16.gmra.mxu0 %v3767
    %v4065 = vpop.f32.mrf.mxu0
    %v4066 = vadd.f32 %v4023, %v4065
    %v4067 = vpop.f32.mrf.mxu0
    %v4068 = vpop.f32.mrf.mxu0
    %v4069 = vpop.f32.mrf.mxu0
    %4070 = vdwg.mxu0
    %v4071 = vmul.f32 %v3867, %v4066
    %v4072 = vadd.f32 %v4014, %v4071
    %v4073 = vtanh.pop %v4072
    %v4074 = vsub.f32 1.0, %v3969
    %v4075 = vmul.f32 %v4074, %v4073
    %v4076 = vmul.f32 %v3969, %v3756
    %v4077 = vadd.f32 %v4075, %v4076
    %v4078 = vpack.c.bf16 %v3675, %v3675
    %v4079 = vpack.c.bf16 %v4077, %v4077
    %v4081 = vsel %vm3765, %v4079, 0
    %4083 = vmatprep.subr.bf16.mxu0 0
    %4084 = vmatpush1.bf16.msra.mxu0 0
    %4085 = vmatprep.subr.bf16.mxu0 0
    %4086 = vmatpush1.bf16.msra.mxu0 0
    %4087 = vmatprep.subr.bf16.mxu0 0
    %4088 = vmatpush1.bf16.msra.mxu0 0
    %4089 = vmatprep.subr.bf16.mxu0 0
    %4090 = vmatpush1.bf16.msra.mxu0 0
    %4091 = vmatprep.subr.bf16.mxu0 0
    %4092 = vmatpush1.bf16.msra.mxu0 0
    %4093 = vmatprep.subr.bf16.mxu0 0
    %4094 = vmatpush1.bf16.msra.mxu0 0
    %4095 = vmatprep.subr.bf16.mxu0 0
    %4096 = vmatpush1.bf16.msra.mxu0 0
    %4097 = vmatprep.subr.bf16.mxu0 0
    %4098 = vmatpush1.bf16.msra.mxu0 %v3763
    %4099 = vmatprep.subr.bf16.mxu0 0
    %4100 = vmatpush2.bf16.msra.mxu0 0
    %4101 = vmatprep.subr.bf16.mxu0 0
    %4102 = vmatpush2.bf16.msra.mxu0 0
    %4103 = vmatprep.subr.bf16.mxu0 0
    %4104 = vmatpush2.bf16.msra.mxu0 0
    %4105 = vmatprep.subr.bf16.mxu0 0
    %4106 = vmatpush2.bf16.msra.mxu0 0
    %4107 = vmatprep.subr.bf16.mxu0 0
    %4108 = vmatpush2.bf16.msra.mxu0 0
    %4109 = vmatprep.subr.bf16.mxu0 0
    %4110 = vmatpush2.bf16.msra.mxu0 0
    %4111 = vmatprep.subr.bf16.mxu0 0
    %4112 = vmatpush2.bf16.msra.mxu0 0
    %4113 = vmatprep.subr.bf16.mxu0 0
    %4114 = vmatpush2.bf16.msra.mxu0 0
    %4115 = vmatprep.mubr.bf16.mxu0 0
    %4116 = vmatmul.mubr.bf16.gmra.mxu0 %v4081
    %v4117 = vpop.f32.mrf.mxu0
    %v4118 = vadd.f32 0.0, %v4117
    %v4119 = vpop.f32.mrf.mxu0
    %v4120 = vpop.f32.mrf.mxu0
    %v4121 = vpop.f32.mrf.mxu0
    %4122 = vdwg.mxu0
    %v4124 = vsel %vm3151, %v4078, 0
    %4126 = vmatprep.subr.bf16.mxu0 0
    %4127 = vmatpush1.bf16.msra.mxu0 0
    %4128 = vmatprep.subr.bf16.mxu0 0
    %4129 = vmatpush1.bf16.msra.mxu0 0
    %4130 = vmatprep.subr.bf16.mxu0 0
    %4131 = vmatpush1.bf16.msra.mxu0 0
    %4132 = vmatprep.subr.bf16.mxu0 0
    %4133 = vmatpush1.bf16.msra.mxu0 0
    %4134 = vmatprep.subr.bf16.mxu0 0
    %4135 = vmatpush1.bf16.msra.mxu0 0
    %4136 = vmatprep.subr.bf16.mxu0 0
    %4137 = vmatpush1.bf16.msra.mxu0 0
    %4138 = vmatprep.subr.bf16.mxu0 0
    %4139 = vmatpush1.bf16.msra.mxu0 0
    %4140 = vmatprep.subr.bf16.mxu0 0
    %4141 = vmatpush1.bf16.msra.mxu0 %v3813
    %4142 = vmatprep.subr.bf16.mxu0 0
    %4143 = vmatpush2.bf16.msra.mxu0 0
    %4144 = vmatprep.subr.bf16.mxu0 0
    %4145 = vmatpush2.bf16.msra.mxu0 0
    %4146 = vmatprep.subr.bf16.mxu0 0
    %4147 = vmatpush2.bf16.msra.mxu0 0
    %4148 = vmatprep.subr.bf16.mxu0 0
    %4149 = vmatpush2.bf16.msra.mxu0 0
    %4150 = vmatprep.subr.bf16.mxu0 0
    %4151 = vmatpush2.bf16.msra.mxu0 0
    %4152 = vmatprep.subr.bf16.mxu0 0
    %4153 = vmatpush2.bf16.msra.mxu0 0
    %4154 = vmatprep.subr.bf16.mxu0 0
    %4155 = vmatpush2.bf16.msra.mxu0 0
    %4156 = vmatprep.subr.bf16.mxu0 0
    %4157 = vmatpush2.bf16.msra.mxu0 0
    %4158 = vmatprep.mubr.bf16.mxu0 0
    %4159 = vmatmul.mubr.bf16.gmra.mxu0 %v4124
    %v4160 = vpop.f32.mrf.mxu0
    %v4161 = vadd.f32 %v4118, %v4160
    %v4162 = vpop.f32.mrf.mxu0
    %v4163 = vpop.f32.mrf.mxu0
    %v4164 = vpop.f32.mrf.mxu0
    %4165 = vdwg.mxu0
    %v4166 = vadd.f32 %v4161, %v3859
    %v4167 = vxor.u32 %v4166, 2147483648
    %v4168 = vmul.f32 %v4167, 1.442695
    %v4169 = vpow.pop %v4168
    %v4170 = vadd.f32 %v4169, 1.0
    %v4171 = vrcp.pop %v4170
    %v4172 = vmul.f32 1.0, %v4171
    %4173 = vmatprep.subr.bf16.mxu0 0
    %4174 = vmatpush1.bf16.msra.mxu0 0
    %4175 = vmatprep.subr.bf16.mxu0 0
    %4176 = vmatpush1.bf16.msra.mxu0 0
    %4177 = vmatprep.subr.bf16.mxu0 0
    %4178 = vmatpush1.bf16.msra.mxu0 0
    %4179 = vmatprep.subr.bf16.mxu0 0
    %4180 = vmatpush1.bf16.msra.mxu0 0
    %4181 = vmatprep.subr.bf16.mxu0 0
    %4182 = vmatpush1.bf16.msra.mxu0 0
    %4183 = vmatprep.subr.bf16.mxu0 0
    %4184 = vmatpush1.bf16.msra.mxu0 0
    %4185 = vmatprep.subr.bf16.mxu0 0
    %4186 = vmatpush1.bf16.msra.mxu0 0
    %4187 = vmatprep.subr.bf16.mxu0 0
    %4188 = vmatpush1.bf16.msra.mxu0 %v3872
    %4189 = vmatprep.subr.bf16.mxu0 0
    %4190 = vmatpush2.bf16.msra.mxu0 0
    %4191 = vmatprep.subr.bf16.mxu0 0
    %4192 = vmatpush2.bf16.msra.mxu0 0
    %4193 = vmatprep.subr.bf16.mxu0 0
    %4194 = vmatpush2.bf16.msra.mxu0 0
    %4195 = vmatprep.subr.bf16.mxu0 0
    %4196 = vmatpush2.bf16.msra.mxu0 0
    %4197 = vmatprep.subr.bf16.mxu0 0
    %4198 = vmatpush2.bf16.msra.mxu0 0
    %4199 = vmatprep.subr.bf16.mxu0 0
    %4200 = vmatpush2.bf16.msra.mxu0 0
    %4201 = vmatprep.subr.bf16.mxu0 0
    %4202 = vmatpush2.bf16.msra.mxu0 0
    %4203 = vmatprep.subr.bf16.mxu0 0
    %4204 = vmatpush2.bf16.msra.mxu0 0
    %4205 = vmatprep.mubr.bf16.mxu0 0
    %4206 = vmatmul.mubr.bf16.gmra.mxu0 %v4081
    %v4207 = vpop.f32.mrf.mxu0
    %v4208 = vadd.f32 0.0, %v4207
    %v4209 = vpop.f32.mrf.mxu0
    %v4210 = vpop.f32.mrf.mxu0
    %v4211 = vpop.f32.mrf.mxu0
    %4212 = vdwg.mxu0
    %4213 = vmatprep.subr.bf16.mxu0 0
    %4214 = vmatpush1.bf16.msra.mxu0 0
    %4215 = vmatprep.subr.bf16.mxu0 0
    %4216 = vmatpush1.bf16.msra.mxu0 0
    %4217 = vmatprep.subr.bf16.mxu0 0
    %4218 = vmatpush1.bf16.msra.mxu0 0
    %4219 = vmatprep.subr.bf16.mxu0 0
    %4220 = vmatpush1.bf16.msra.mxu0 0
    %4221 = vmatprep.subr.bf16.mxu0 0
    %4222 = vmatpush1.bf16.msra.mxu0 0
    %4223 = vmatprep.subr.bf16.mxu0 0
    %4224 = vmatpush1.bf16.msra.mxu0 0
    %4225 = vmatprep.subr.bf16.mxu0 0
    %4226 = vmatpush1.bf16.msra.mxu0 0
    %4227 = vmatprep.subr.bf16.mxu0 0
    %4228 = vmatpush1.bf16.msra.mxu0 %v3915
    %4229 = vmatprep.subr.bf16.mxu0 0
    %4230 = vmatpush2.bf16.msra.mxu0 0
    %4231 = vmatprep.subr.bf16.mxu0 0
    %4232 = vmatpush2.bf16.msra.mxu0 0
    %4233 = vmatprep.subr.bf16.mxu0 0
    %4234 = vmatpush2.bf16.msra.mxu0 0
    %4235 = vmatprep.subr.bf16.mxu0 0
    %4236 = vmatpush2.bf16.msra.mxu0 0
    %4237 = vmatprep.subr.bf16.mxu0 0
    %4238 = vmatpush2.bf16.msra.mxu0 0
    %4239 = vmatprep.subr.bf16.mxu0 0
    %4240 = vmatpush2.bf16.msra.mxu0 0
    %4241 = vmatprep.subr.bf16.mxu0 0
    %4242 = vmatpush2.bf16.msra.mxu0 0
    %4243 = vmatprep.subr.bf16.mxu0 0
    %4244 = vmatpush2.bf16.msra.mxu0 0
    %4245 = vmatprep.mubr.bf16.mxu0 0
    %4246 = vmatmul.mubr.bf16.gmra.mxu0 %v4124
    %v4247 = vpop.f32.mrf.mxu0
    %v4248 = vadd.f32 %v4208, %v4247
    %v4249 = vpop.f32.mrf.mxu0
    %v4250 = vpop.f32.mrf.mxu0
    %v4251 = vpop.f32.mrf.mxu0
    %4252 = vdwg.mxu0
    %v4253 = vadd.f32 %v4248, %v3961
    %v4254 = vxor.u32 %v4253, 2147483648
    %v4255 = vmul.f32 %v4254, 1.442695
    %v4256 = vpow.pop %v4255
    %v4257 = vadd.f32 %v4256, 1.0
    %v4258 = vrcp.pop %v4257
    %v4259 = vmul.f32 1.0, %v4258
    %4260 = vmatprep.subr.bf16.mxu0 0
    %4261 = vmatpush1.bf16.msra.mxu0 0
    %4262 = vmatprep.subr.bf16.mxu0 0
    %4263 = vmatpush1.bf16.msra.mxu0 0
    %4264 = vmatprep.subr.bf16.mxu0 0
    %4265 = vmatpush1.bf16.msra.mxu0 0
    %4266 = vmatprep.subr.bf16.mxu0 0
    %4267 = vmatpush1.bf16.msra.mxu0 0
    %4268 = vmatprep.subr.bf16.mxu0 0
    %4269 = vmatpush1.bf16.msra.mxu0 0
    %4270 = vmatprep.subr.bf16.mxu0 0
    %4271 = vmatpush1.bf16.msra.mxu0 0
    %4272 = vmatprep.subr.bf16.mxu0 0
    %4273 = vmatpush1.bf16.msra.mxu0 0
    %4274 = vmatprep.subr.bf16.mxu0 0
    %4275 = vmatpush1.bf16.msra.mxu0 %v3977
    %4276 = vmatprep.subr.bf16.mxu0 0
    %4277 = vmatpush2.bf16.msra.mxu0 0
    %4278 = vmatprep.subr.bf16.mxu0 0
    %4279 = vmatpush2.bf16.msra.mxu0 0
    %4280 = vmatprep.subr.bf16.mxu0 0
    %4281 = vmatpush2.bf16.msra.mxu0 0
    %4282 = vmatprep.subr.bf16.mxu0 0
    %4283 = vmatpush2.bf16.msra.mxu0 0
    %4284 = vmatprep.subr.bf16.mxu0 0
    %4285 = vmatpush2.bf16.msra.mxu0 0
    %4286 = vmatprep.subr.bf16.mxu0 0
    %4287 = vmatpush2.bf16.msra.mxu0 0
    %4288 = vmatprep.subr.bf16.mxu0 0
    %4289 = vmatpush2.bf16.msra.mxu0 0
    %4290 = vmatprep.subr.bf16.mxu0 0
    %4291 = vmatpush2.bf16.msra.mxu0 0
    %4292 = vmatprep.mubr.bf16.mxu0 0
    %4293 = vmatmul.mubr.bf16.gmra.mxu0 %v4124
    %v4294 = vpop.f32.mrf.mxu0
    %v4295 = vadd.f32 %v3974, %v4294
    %v4296 = vpop.f32.mrf.mxu0
    %v4297 = vpop.f32.mrf.mxu0
    %v4298 = vpop.f32.mrf.mxu0
    %4299 = vdwg.mxu0
    %4300 = vmatprep.subr.bf16.mxu0 0
    %4301 = vmatpush1.bf16.msra.mxu0 0
    %4302 = vmatprep.subr.bf16.mxu0 0
    %4303 = vmatpush1.bf16.msra.mxu0 0
    %4304 = vmatprep.subr.bf16.mxu0 0
    %4305 = vmatpush1.bf16.msra.mxu0 0
    %4306 = vmatprep.subr.bf16.mxu0 0
    %4307 = vmatpush1.bf16.msra.mxu0 0
    %4308 = vmatprep.subr.bf16.mxu0 0
    %4309 = vmatpush1.bf16.msra.mxu0 0
    %4310 = vmatprep.subr.bf16.mxu0 0
    %4311 = vmatpush1.bf16.msra.mxu0 0
    %4312 = vmatprep.subr.bf16.mxu0 0
    %4313 = vmatpush1.bf16.msra.mxu0 0
    %4314 = vmatprep.subr.bf16.mxu0 0
    %4315 = vmatpush1.bf16.msra.mxu0 %v4029
    %4316 = vmatprep.subr.bf16.mxu0 0
    %4317 = vmatpush2.bf16.msra.mxu0 0
    %4318 = vmatprep.subr.bf16.mxu0 0
    %4319 = vmatpush2.bf16.msra.mxu0 0
    %4320 = vmatprep.subr.bf16.mxu0 0
    %4321 = vmatpush2.bf16.msra.mxu0 0
    %4322 = vmatprep.subr.bf16.mxu0 0
    %4323 = vmatpush2.bf16.msra.mxu0 0
    %4324 = vmatprep.subr.bf16.mxu0 0
    %4325 = vmatpush2.bf16.msra.mxu0 0
    %4326 = vmatprep.subr.bf16.mxu0 0
    %4327 = vmatpush2.bf16.msra.mxu0 0
    %4328 = vmatprep.subr.bf16.mxu0 0
    %4329 = vmatpush2.bf16.msra.mxu0 0
    %4330 = vmatprep.subr.bf16.mxu0 0
    %4331 = vmatpush2.bf16.msra.mxu0 0
    %4332 = vmatprep.mubr.bf16.mxu0 0
    %4333 = vmatmul.mubr.bf16.gmra.mxu0 %v4081
    %v4334 = vpop.f32.mrf.mxu0
    %v4335 = vadd.f32 %v4023, %v4334
    %v4336 = vpop.f32.mrf.mxu0
    %v4337 = vpop.f32.mrf.mxu0
    %v4338 = vpop.f32.mrf.mxu0
    %4339 = vdwg.mxu0
    %v4340 = vmul.f32 %v4172, %v4335
    %v4341 = vadd.f32 %v4295, %v4340
    %v4342 = vtanh.pop %v4341
    %v4343 = vsub.f32 1.0, %v4259
    %v4344 = vmul.f32 %v4343, %v4342
    %v4345 = vmul.f32 %v4259, %v4077
    %v4346 = vadd.f32 %v4344, %v4345
    %v4347 = vpack.c.bf16 %v3685, %v3685
    %v4348 = vpack.c.bf16 %v4346, %v4346
    %v4350 = vsel %vm3765, %v4348, 0
    %4352 = vmatprep.subr.bf16.mxu0 0
    %4353 = vmatpush1.bf16.msra.mxu0 0
    %4354 = vmatprep.subr.bf16.mxu0 0
    %4355 = vmatpush1.bf16.msra.mxu0 0
    %4356 = vmatprep.subr.bf16.mxu0 0
    %4357 = vmatpush1.bf16.msra.mxu0 0
    %4358 = vmatprep.subr.bf16.mxu0 0
    %4359 = vmatpush1.bf16.msra.mxu0 0
    %4360 = vmatprep.subr.bf16.mxu0 0
    %4361 = vmatpush1.bf16.msra.mxu0 0
    %4362 = vmatprep.subr.bf16.mxu0 0
    %4363 = vmatpush1.bf16.msra.mxu0 0
    %4364 = vmatprep.subr.bf16.mxu0 0
    %4365 = vmatpush1.bf16.msra.mxu0 0
    %4366 = vmatprep.subr.bf16.mxu0 0
    %4367 = vmatpush1.bf16.msra.mxu0 %v3763
    %4368 = vmatprep.subr.bf16.mxu0 0
    %4369 = vmatpush2.bf16.msra.mxu0 0
    %4370 = vmatprep.subr.bf16.mxu0 0
    %4371 = vmatpush2.bf16.msra.mxu0 0
    %4372 = vmatprep.subr.bf16.mxu0 0
    %4373 = vmatpush2.bf16.msra.mxu0 0
    %4374 = vmatprep.subr.bf16.mxu0 0
    %4375 = vmatpush2.bf16.msra.mxu0 0
    %4376 = vmatprep.subr.bf16.mxu0 0
    %4377 = vmatpush2.bf16.msra.mxu0 0
    %4378 = vmatprep.subr.bf16.mxu0 0
    %4379 = vmatpush2.bf16.msra.mxu0 0
    %4380 = vmatprep.subr.bf16.mxu0 0
    %4381 = vmatpush2.bf16.msra.mxu0 0
    %4382 = vmatprep.subr.bf16.mxu0 0
    %4383 = vmatpush2.bf16.msra.mxu0 0
    %4384 = vmatprep.mubr.bf16.mxu0 0
    %4385 = vmatmul.mubr.bf16.gmra.mxu0 %v4350
    %v4386 = vpop.f32.mrf.mxu0
    %v4387 = vadd.f32 0.0, %v4386
    %v4388 = vpop.f32.mrf.mxu0
    %v4389 = vpop.f32.mrf.mxu0
    %v4390 = vpop.f32.mrf.mxu0
    %4391 = vdwg.mxu0
    %v4393 = vsel %vm3151, %v4347, 0
    %4395 = vmatprep.subr.bf16.mxu0 0
    %4396 = vmatpush1.bf16.msra.mxu0 0
    %4397 = vmatprep.subr.bf16.mxu0 0
    %4398 = vmatpush1.bf16.msra.mxu0 0
    %4399 = vmatprep.subr.bf16.mxu0 0
    %4400 = vmatpush1.bf16.msra.mxu0 0
    %4401 = vmatprep.subr.bf16.mxu0 0
    %4402 = vmatpush1.bf16.msra.mxu0 0
    %4403 = vmatprep.subr.bf16.mxu0 0
    %4404 = vmatpush1.bf16.msra.mxu0 0
    %4405 = vmatprep.subr.bf16.mxu0 0
    %4406 = vmatpush1.bf16.msra.mxu0 0
    %4407 = vmatprep.subr.bf16.mxu0 0
    %4408 = vmatpush1.bf16.msra.mxu0 0
    %4409 = vmatprep.subr.bf16.mxu0 0
    %4410 = vmatpush1.bf16.msra.mxu0 %v3813
    %4411 = vmatprep.subr.bf16.mxu0 0
    %4412 = vmatpush2.bf16.msra.mxu0 0
    %4413 = vmatprep.subr.bf16.mxu0 0
    %4414 = vmatpush2.bf16.msra.mxu0 0
    %4415 = vmatprep.subr.bf16.mxu0 0
    %4416 = vmatpush2.bf16.msra.mxu0 0
    %4417 = vmatprep.subr.bf16.mxu0 0
    %4418 = vmatpush2.bf16.msra.mxu0 0
    %4419 = vmatprep.subr.bf16.mxu0 0
    %4420 = vmatpush2.bf16.msra.mxu0 0
    %4421 = vmatprep.subr.bf16.mxu0 0
    %4422 = vmatpush2.bf16.msra.mxu0 0
    %4423 = vmatprep.subr.bf16.mxu0 0
    %4424 = vmatpush2.bf16.msra.mxu0 0
    %4425 = vmatprep.subr.bf16.mxu0 0
    %4426 = vmatpush2.bf16.msra.mxu0 0
    %4427 = vmatprep.mubr.bf16.mxu0 0
    %4428 = vmatmul.mubr.bf16.gmra.mxu0 %v4393
    %v4429 = vpop.f32.mrf.mxu0
    %v4430 = vadd.f32 %v4387, %v4429
    %v4431 = vpop.f32.mrf.mxu0
    %v4432 = vpop.f32.mrf.mxu0
    %v4433 = vpop.f32.mrf.mxu0
    %4434 = vdwg.mxu0
    %v4435 = vadd.f32 %v4430, %v3859
    %v4436 = vxor.u32 %v4435, 2147483648
    %v4437 = vmul.f32 %v4436, 1.442695
    %v4438 = vpow.pop %v4437
    %v4439 = vadd.f32 %v4438, 1.0
    %v4440 = vrcp.pop %v4439
    %v4441 = vmul.f32 1.0, %v4440
    %4442 = vmatprep.subr.bf16.mxu0 0
    %4443 = vmatpush1.bf16.msra.mxu0 0
    %4444 = vmatprep.subr.bf16.mxu0 0
    %4445 = vmatpush1.bf16.msra.mxu0 0
    %4446 = vmatprep.subr.bf16.mxu0 0
    %4447 = vmatpush1.bf16.msra.mxu0 0
    %4448 = vmatprep.subr.bf16.mxu0 0
    %4449 = vmatpush1.bf16.msra.mxu0 0
    %4450 = vmatprep.subr.bf16.mxu0 0
    %4451 = vmatpush1.bf16.msra.mxu0 0
    %4452 = vmatprep.subr.bf16.mxu0 0
    %4453 = vmatpush1.bf16.msra.mxu0 0
    %4454 = vmatprep.subr.bf16.mxu0 0
    %4455 = vmatpush1.bf16.msra.mxu0 0
    %4456 = vmatprep.subr.bf16.mxu0 0
    %4457 = vmatpush1.bf16.msra.mxu0 %v3872
    %4458 = vmatprep.subr.bf16.mxu0 0
    %4459 = vmatpush2.bf16.msra.mxu0 0
    %4460 = vmatprep.subr.bf16.mxu0 0
    %4461 = vmatpush2.bf16.msra.mxu0 0
    %4462 = vmatprep.subr.bf16.mxu0 0
    %4463 = vmatpush2.bf16.msra.mxu0 0
    %4464 = vmatprep.subr.bf16.mxu0 0
    %4465 = vmatpush2.bf16.msra.mxu0 0
    %4466 = vmatprep.subr.bf16.mxu0 0
    %4467 = vmatpush2.bf16.msra.mxu0 0
    %4468 = vmatprep.subr.bf16.mxu0 0
    %4469 = vmatpush2.bf16.msra.mxu0 0
    %4470 = vmatprep.subr.bf16.mxu0 0
    %4471 = vmatpush2.bf16.msra.mxu0 0
    %4472 = vmatprep.subr.bf16.mxu0 0
    %4473 = vmatpush2.bf16.msra.mxu0 0
    %4474 = vmatprep.mubr.bf16.mxu0 0
    %4475 = vmatmul.mubr.bf16.gmra.mxu0 %v4350
    %v4476 = vpop.f32.mrf.mxu0
    %v4477 = vadd.f32 0.0, %v4476
    %v4478 = vpop.f32.mrf.mxu0
    %v4479 = vpop.f32.mrf.mxu0
    %v4480 = vpop.f32.mrf.mxu0
    %4481 = vdwg.mxu0
    %4482 = vmatprep.subr.bf16.mxu0 0
    %4483 = vmatpush1.bf16.msra.mxu0 0
    %4484 = vmatprep.subr.bf16.mxu0 0
    %4485 = vmatpush1.bf16.msra.mxu0 0
    %4486 = vmatprep.subr.bf16.mxu0 0
    %4487 = vmatpush1.bf16.msra.mxu0 0
    %4488 = vmatprep.subr.bf16.mxu0 0
    %4489 = vmatpush1.bf16.msra.mxu0 0
    %4490 = vmatprep.subr.bf16.mxu0 0
    %4491 = vmatpush1.bf16.msra.mxu0 0
    %4492 = vmatprep.subr.bf16.mxu0 0
    %4493 = vmatpush1.bf16.msra.mxu0 0
    %4494 = vmatprep.subr.bf16.mxu0 0
    %4495 = vmatpush1.bf16.msra.mxu0 0
    %4496 = vmatprep.subr.bf16.mxu0 0
    %4497 = vmatpush1.bf16.msra.mxu0 %v3915
    %4498 = vmatprep.subr.bf16.mxu0 0
    %4499 = vmatpush2.bf16.msra.mxu0 0
    %4500 = vmatprep.subr.bf16.mxu0 0
    %4501 = vmatpush2.bf16.msra.mxu0 0
    %4502 = vmatprep.subr.bf16.mxu0 0
    %4503 = vmatpush2.bf16.msra.mxu0 0
    %4504 = vmatprep.subr.bf16.mxu0 0
    %4505 = vmatpush2.bf16.msra.mxu0 0
    %4506 = vmatprep.subr.bf16.mxu0 0
    %4507 = vmatpush2.bf16.msra.mxu0 0
    %4508 = vmatprep.subr.bf16.mxu0 0
    %4509 = vmatpush2.bf16.msra.mxu0 0
    %4510 = vmatprep.subr.bf16.mxu0 0
    %4511 = vmatpush2.bf16.msra.mxu0 0
    %4512 = vmatprep.subr.bf16.mxu0 0
    %4513 = vmatpush2.bf16.msra.mxu0 0
    %4514 = vmatprep.mubr.bf16.mxu0 0
    %4515 = vmatmul.mubr.bf16.gmra.mxu0 %v4393
    %v4516 = vpop.f32.mrf.mxu0
    %v4517 = vadd.f32 %v4477, %v4516
    %v4518 = vpop.f32.mrf.mxu0
    %v4519 = vpop.f32.mrf.mxu0
    %v4520 = vpop.f32.mrf.mxu0
    %4521 = vdwg.mxu0
    %v4522 = vadd.f32 %v4517, %v3961
    %v4523 = vxor.u32 %v4522, 2147483648
    %v4524 = vmul.f32 %v4523, 1.442695
    %v4525 = vpow.pop %v4524
    %v4526 = vadd.f32 %v4525, 1.0
    %v4527 = vrcp.pop %v4526
    %v4528 = vmul.f32 1.0, %v4527
    %4529 = vmatprep.subr.bf16.mxu0 0
    %4530 = vmatpush1.bf16.msra.mxu0 0
    %4531 = vmatprep.subr.bf16.mxu0 0
    %4532 = vmatpush1.bf16.msra.mxu0 0
    %4533 = vmatprep.subr.bf16.mxu0 0
    %4534 = vmatpush1.bf16.msra.mxu0 0
    %4535 = vmatprep.subr.bf16.mxu0 0
    %4536 = vmatpush1.bf16.msra.mxu0 0
    %4537 = vmatprep.subr.bf16.mxu0 0
    %4538 = vmatpush1.bf16.msra.mxu0 0
    %4539 = vmatprep.subr.bf16.mxu0 0
    %4540 = vmatpush1.bf16.msra.mxu0 0
    %4541 = vmatprep.subr.bf16.mxu0 0
    %4542 = vmatpush1.bf16.msra.mxu0 0
    %4543 = vmatprep.subr.bf16.mxu0 0
    %4544 = vmatpush1.bf16.msra.mxu0 %v3977
    %4545 = vmatprep.subr.bf16.mxu0 0
    %4546 = vmatpush2.bf16.msra.mxu0 0
    %4547 = vmatprep.subr.bf16.mxu0 0
    %4548 = vmatpush2.bf16.msra.mxu0 0
    %4549 = vmatprep.subr.bf16.mxu0 0
    %4550 = vmatpush2.bf16.msra.mxu0 0
    %4551 = vmatprep.subr.bf16.mxu0 0
    %4552 = vmatpush2.bf16.msra.mxu0 0
    %4553 = vmatprep.subr.bf16.mxu0 0
    %4554 = vmatpush2.bf16.msra.mxu0 0
    %4555 = vmatprep.subr.bf16.mxu0 0
    %4556 = vmatpush2.bf16.msra.mxu0 0
    %4557 = vmatprep.subr.bf16.mxu0 0
    %4558 = vmatpush2.bf16.msra.mxu0 0
    %4559 = vmatprep.subr.bf16.mxu0 0
    %4560 = vmatpush2.bf16.msra.mxu0 0
    %4561 = vmatprep.mubr.bf16.mxu0 0
    %4562 = vmatmul.mubr.bf16.gmra.mxu0 %v4393
    %v4563 = vpop.f32.mrf.mxu0
    %v4564 = vadd.f32 %v3974, %v4563
    %v4565 = vpop.f32.mrf.mxu0
    %v4566 = vpop.f32.mrf.mxu0
    %v4567 = vpop.f32.mrf.mxu0
    %4568 = vdwg.mxu0
    %4569 = vmatprep.subr.bf16.mxu0 0
    %4570 = vmatpush1.bf16.msra.mxu0 0
    %4571 = vmatprep.subr.bf16.mxu0 0
    %4572 = vmatpush1.bf16.msra.mxu0 0
    %4573 = vmatprep.subr.bf16.mxu0 0
    %4574 = vmatpush1.bf16.msra.mxu0 0
    %4575 = vmatprep.subr.bf16.mxu0 0
    %4576 = vmatpush1.bf16.msra.mxu0 0
    %4577 = vmatprep.subr.bf16.mxu0 0
    %4578 = vmatpush1.bf16.msra.mxu0 0
    %4579 = vmatprep.subr.bf16.mxu0 0
    %4580 = vmatpush1.bf16.msra.mxu0 0
    %4581 = vmatprep.subr.bf16.mxu0 0
    %4582 = vmatpush1.bf16.msra.mxu0 0
    %4583 = vmatprep.subr.bf16.mxu0 0
    %4584 = vmatpush1.bf16.msra.mxu0 %v4029
    %4585 = vmatprep.subr.bf16.mxu0 0
    %4586 = vmatpush2.bf16.msra.mxu0 0
    %4587 = vmatprep.subr.bf16.mxu0 0
    %4588 = vmatpush2.bf16.msra.mxu0 0
    %4589 = vmatprep.subr.bf16.mxu0 0
    %4590 = vmatpush2.bf16.msra.mxu0 0
    %4591 = vmatprep.subr.bf16.mxu0 0
    %4592 = vmatpush2.bf16.msra.mxu0 0
    %4593 = vmatprep.subr.bf16.mxu0 0
    %4594 = vmatpush2.bf16.msra.mxu0 0
    %4595 = vmatprep.subr.bf16.mxu0 0
    %4596 = vmatpush2.bf16.msra.mxu0 0
    %4597 = vmatprep.subr.bf16.mxu0 0
    %4598 = vmatpush2.bf16.msra.mxu0 0
    %4599 = vmatprep.subr.bf16.mxu0 0
    %4600 = vmatpush2.bf16.msra.mxu0 0
    %4601 = vmatprep.mubr.bf16.mxu0 0
    %4602 = vmatmul.mubr.bf16.gmra.mxu0 %v4350
    %v4603 = vpop.f32.mrf.mxu0
    %v4604 = vadd.f32 %v4023, %v4603
    %v4605 = vpop.f32.mrf.mxu0
    %v4606 = vpop.f32.mrf.mxu0
    %v4607 = vpop.f32.mrf.mxu0
    %4608 = vdwg.mxu0
    %v4609 = vmul.f32 %v4441, %v4604
    %v4610 = vadd.f32 %v4564, %v4609
    %v4611 = vtanh.pop %v4610
    %v4612 = vsub.f32 1.0, %v4528
    %v4613 = vmul.f32 %v4612, %v4611
    %v4614 = vmul.f32 %v4528, %v4346
    %v4615 = vadd.f32 %v4613, %v4614
    %v4616 = vpack.c.bf16 %v3695, %v3695
    %v4617 = vpack.c.bf16 %v4615, %v4615
    %v4619 = vsel %vm3765, %v4617, 0
    %4621 = vmatprep.subr.bf16.mxu0 0
    %4622 = vmatpush1.bf16.msra.mxu0 0
    %4623 = vmatprep.subr.bf16.mxu0 0
    %4624 = vmatpush1.bf16.msra.mxu0 0
    %4625 = vmatprep.subr.bf16.mxu0 0
    %4626 = vmatpush1.bf16.msra.mxu0 0
    %4627 = vmatprep.subr.bf16.mxu0 0
    %4628 = vmatpush1.bf16.msra.mxu0 0
    %4629 = vmatprep.subr.bf16.mxu0 0
    %4630 = vmatpush1.bf16.msra.mxu0 0
    %4631 = vmatprep.subr.bf16.mxu0 0
    %4632 = vmatpush1.bf16.msra.mxu0 0
    %4633 = vmatprep.subr.bf16.mxu0 0
    %4634 = vmatpush1.bf16.msra.mxu0 0
    %4635 = vmatprep.subr.bf16.mxu0 0
    %4636 = vmatpush1.bf16.msra.mxu0 %v3763
    %4637 = vmatprep.subr.bf16.mxu0 0
    %4638 = vmatpush2.bf16.msra.mxu0 0
    %4639 = vmatprep.subr.bf16.mxu0 0
    %4640 = vmatpush2.bf16.msra.mxu0 0
    %4641 = vmatprep.subr.bf16.mxu0 0
    %4642 = vmatpush2.bf16.msra.mxu0 0
    %4643 = vmatprep.subr.bf16.mxu0 0
    %4644 = vmatpush2.bf16.msra.mxu0 0
    %4645 = vmatprep.subr.bf16.mxu0 0
    %4646 = vmatpush2.bf16.msra.mxu0 0
    %4647 = vmatprep.subr.bf16.mxu0 0
    %4648 = vmatpush2.bf16.msra.mxu0 0
    %4649 = vmatprep.subr.bf16.mxu0 0
    %4650 = vmatpush2.bf16.msra.mxu0 0
    %4651 = vmatprep.subr.bf16.mxu0 0
    %4652 = vmatpush2.bf16.msra.mxu0 0
    %4653 = vmatprep.mubr.bf16.mxu0 0
    %4654 = vmatmul.mubr.bf16.gmra.mxu0 %v4619
    %v4655 = vpop.f32.mrf.mxu0
    %v4656 = vadd.f32 0.0, %v4655
    %v4657 = vpop.f32.mrf.mxu0
    %v4658 = vpop.f32.mrf.mxu0
    %v4659 = vpop.f32.mrf.mxu0
    %4660 = vdwg.mxu0
    %v4662 = vsel %vm3151, %v4616, 0
    %4664 = vmatprep.subr.bf16.mxu0 0
    %4665 = vmatpush1.bf16.msra.mxu0 0
    %4666 = vmatprep.subr.bf16.mxu0 0
    %4667 = vmatpush1.bf16.msra.mxu0 0
    %4668 = vmatprep.subr.bf16.mxu0 0
    %4669 = vmatpush1.bf16.msra.mxu0 0
    %4670 = vmatprep.subr.bf16.mxu0 0
    %4671 = vmatpush1.bf16.msra.mxu0 0
    %4672 = vmatprep.subr.bf16.mxu0 0
    %4673 = vmatpush1.bf16.msra.mxu0 0
    %4674 = vmatprep.subr.bf16.mxu0 0
    %4675 = vmatpush1.bf16.msra.mxu0 0
    %4676 = vmatprep.subr.bf16.mxu0 0
    %4677 = vmatpush1.bf16.msra.mxu0 0
    %4678 = vmatprep.subr.bf16.mxu0 0
    %4679 = vmatpush1.bf16.msra.mxu0 %v3813
    %4680 = vmatprep.subr.bf16.mxu0 0
    %4681 = vmatpush2.bf16.msra.mxu0 0
    %4682 = vmatprep.subr.bf16.mxu0 0
    %4683 = vmatpush2.bf16.msra.mxu0 0
    %4684 = vmatprep.subr.bf16.mxu0 0
    %4685 = vmatpush2.bf16.msra.mxu0 0
    %4686 = vmatprep.subr.bf16.mxu0 0
    %4687 = vmatpush2.bf16.msra.mxu0 0
    %4688 = vmatprep.subr.bf16.mxu0 0
    %4689 = vmatpush2.bf16.msra.mxu0 0
    %4690 = vmatprep.subr.bf16.mxu0 0
    %4691 = vmatpush2.bf16.msra.mxu0 0
    %4692 = vmatprep.subr.bf16.mxu0 0
    %4693 = vmatpush2.bf16.msra.mxu0 0
    %4694 = vmatprep.subr.bf16.mxu0 0
    %4695 = vmatpush2.bf16.msra.mxu0 0
    %4696 = vmatprep.mubr.bf16.mxu0 0
    %4697 = vmatmul.mubr.bf16.gmra.mxu0 %v4662
    %v4698 = vpop.f32.mrf.mxu0
    %v4699 = vadd.f32 %v4656, %v4698
    %v4700 = vpop.f32.mrf.mxu0
    %v4701 = vpop.f32.mrf.mxu0
    %v4702 = vpop.f32.mrf.mxu0
    %4703 = vdwg.mxu0
    %v4704 = vadd.f32 %v4699, %v3859
    %v4705 = vxor.u32 %v4704, 2147483648
    %v4706 = vmul.f32 %v4705, 1.442695
    %v4707 = vpow.pop %v4706
    %v4708 = vadd.f32 %v4707, 1.0
    %v4709 = vrcp.pop %v4708
    %v4710 = vmul.f32 1.0, %v4709
    %4711 = vmatprep.subr.bf16.mxu0 0
    %4712 = vmatpush1.bf16.msra.mxu0 0
    %4713 = vmatprep.subr.bf16.mxu0 0
    %4714 = vmatpush1.bf16.msra.mxu0 0
    %4715 = vmatprep.subr.bf16.mxu0 0
    %4716 = vmatpush1.bf16.msra.mxu0 0
    %4717 = vmatprep.subr.bf16.mxu0 0
    %4718 = vmatpush1.bf16.msra.mxu0 0
    %4719 = vmatprep.subr.bf16.mxu0 0
    %4720 = vmatpush1.bf16.msra.mxu0 0
    %4721 = vmatprep.subr.bf16.mxu0 0
    %4722 = vmatpush1.bf16.msra.mxu0 0
    %4723 = vmatprep.subr.bf16.mxu0 0
    %4724 = vmatpush1.bf16.msra.mxu0 0
    %4725 = vmatprep.subr.bf16.mxu0 0
    %4726 = vmatpush1.bf16.msra.mxu0 %v3872
    %4727 = vmatprep.subr.bf16.mxu0 0
    %4728 = vmatpush2.bf16.msra.mxu0 0
    %4729 = vmatprep.subr.bf16.mxu0 0
    %4730 = vmatpush2.bf16.msra.mxu0 0
    %4731 = vmatprep.subr.bf16.mxu0 0
    %4732 = vmatpush2.bf16.msra.mxu0 0
    %4733 = vmatprep.subr.bf16.mxu0 0
    %4734 = vmatpush2.bf16.msra.mxu0 0
    %4735 = vmatprep.subr.bf16.mxu0 0
    %4736 = vmatpush2.bf16.msra.mxu0 0
    %4737 = vmatprep.subr.bf16.mxu0 0
    %4738 = vmatpush2.bf16.msra.mxu0 0
    %4739 = vmatprep.subr.bf16.mxu0 0
    %4740 = vmatpush2.bf16.msra.mxu0 0
    %4741 = vmatprep.subr.bf16.mxu0 0
    %4742 = vmatpush2.bf16.msra.mxu0 0
    %4743 = vmatprep.mubr.bf16.mxu0 0
    %4744 = vmatmul.mubr.bf16.gmra.mxu0 %v4619
    %v4745 = vpop.f32.mrf.mxu0
    %v4746 = vadd.f32 0.0, %v4745
    %v4747 = vpop.f32.mrf.mxu0
    %v4748 = vpop.f32.mrf.mxu0
    %v4749 = vpop.f32.mrf.mxu0
    %4750 = vdwg.mxu0
    %4751 = vmatprep.subr.bf16.mxu0 0
    %4752 = vmatpush1.bf16.msra.mxu0 0
    %4753 = vmatprep.subr.bf16.mxu0 0
    %4754 = vmatpush1.bf16.msra.mxu0 0
    %4755 = vmatprep.subr.bf16.mxu0 0
    %4756 = vmatpush1.bf16.msra.mxu0 0
    %4757 = vmatprep.subr.bf16.mxu0 0
    %4758 = vmatpush1.bf16.msra.mxu0 0
    %4759 = vmatprep.subr.bf16.mxu0 0
    %4760 = vmatpush1.bf16.msra.mxu0 0
    %4761 = vmatprep.subr.bf16.mxu0 0
    %4762 = vmatpush1.bf16.msra.mxu0 0
    %4763 = vmatprep.subr.bf16.mxu0 0
    %4764 = vmatpush1.bf16.msra.mxu0 0
    %4765 = vmatprep.subr.bf16.mxu0 0
    %4766 = vmatpush1.bf16.msra.mxu0 %v3915
    %4767 = vmatprep.subr.bf16.mxu0 0
    %4768 = vmatpush2.bf16.msra.mxu0 0
    %4769 = vmatprep.subr.bf16.mxu0 0
    %4770 = vmatpush2.bf16.msra.mxu0 0
    %4771 = vmatprep.subr.bf16.mxu0 0
    %4772 = vmatpush2.bf16.msra.mxu0 0
    %4773 = vmatprep.subr.bf16.mxu0 0
    %4774 = vmatpush2.bf16.msra.mxu0 0
    %4775 = vmatprep.subr.bf16.mxu0 0
    %4776 = vmatpush2.bf16.msra.mxu0 0
    %4777 = vmatprep.subr.bf16.mxu0 0
    %4778 = vmatpush2.bf16.msra.mxu0 0
    %4779 = vmatprep.subr.bf16.mxu0 0
    %4780 = vmatpush2.bf16.msra.mxu0 0
    %4781 = vmatprep.subr.bf16.mxu0 0
    %4782 = vmatpush2.bf16.msra.mxu0 0
    %4783 = vmatprep.mubr.bf16.mxu0 0
    %4784 = vmatmul.mubr.bf16.gmra.mxu0 %v4662
    %v4785 = vpop.f32.mrf.mxu0
    %v4786 = vadd.f32 %v4746, %v4785
    %v4787 = vpop.f32.mrf.mxu0
    %v4788 = vpop.f32.mrf.mxu0
    %v4789 = vpop.f32.mrf.mxu0
    %4790 = vdwg.mxu0
    %v4791 = vadd.f32 %v4786, %v3961
    %v4792 = vxor.u32 %v4791, 2147483648
    %v4793 = vmul.f32 %v4792, 1.442695
    %v4794 = vpow.pop %v4793
    %v4795 = vadd.f32 %v4794, 1.0
    %v4796 = vrcp.pop %v4795
    %v4797 = vmul.f32 1.0, %v4796
    %4798 = vmatprep.subr.bf16.mxu0 0
    %4799 = vmatpush1.bf16.msra.mxu0 0
    %4800 = vmatprep.subr.bf16.mxu0 0
    %4801 = vmatpush1.bf16.msra.mxu0 0
    %4802 = vmatprep.subr.bf16.mxu0 0
    %4803 = vmatpush1.bf16.msra.mxu0 0
    %4804 = vmatprep.subr.bf16.mxu0 0
    %4805 = vmatpush1.bf16.msra.mxu0 0
    %4806 = vmatprep.subr.bf16.mxu0 0
    %4807 = vmatpush1.bf16.msra.mxu0 0
    %4808 = vmatprep.subr.bf16.mxu0 0
    %4809 = vmatpush1.bf16.msra.mxu0 0
    %4810 = vmatprep.subr.bf16.mxu0 0
    %4811 = vmatpush1.bf16.msra.mxu0 0
    %4812 = vmatprep.subr.bf16.mxu0 0
    %4813 = vmatpush1.bf16.msra.mxu0 %v3977
    %4814 = vmatprep.subr.bf16.mxu0 0
    %4815 = vmatpush2.bf16.msra.mxu0 0
    %4816 = vmatprep.subr.bf16.mxu0 0
    %4817 = vmatpush2.bf16.msra.mxu0 0
    %4818 = vmatprep.subr.bf16.mxu0 0
    %4819 = vmatpush2.bf16.msra.mxu0 0
    %4820 = vmatprep.subr.bf16.mxu0 0
    %4821 = vmatpush2.bf16.msra.mxu0 0
    %4822 = vmatprep.subr.bf16.mxu0 0
    %4823 = vmatpush2.bf16.msra.mxu0 0
    %4824 = vmatprep.subr.bf16.mxu0 0
    %4825 = vmatpush2.bf16.msra.mxu0 0
    %4826 = vmatprep.subr.bf16.mxu0 0
    %4827 = vmatpush2.bf16.msra.mxu0 0
    %4828 = vmatprep.subr.bf16.mxu0 0
    %4829 = vmatpush2.bf16.msra.mxu0 0
    %4830 = vmatprep.mubr.bf16.mxu0 0
    %4831 = vmatmul.mubr.bf16.gmra.mxu0 %v4662
    %v4832 = vpop.f32.mrf.mxu0
    %v4833 = vadd.f32 %v3974, %v4832
    %v4834 = vpop.f32.mrf.mxu0
    %v4835 = vpop.f32.mrf.mxu0
    %v4836 = vpop.f32.mrf.mxu0
    %4837 = vdwg.mxu0
    %4838 = vmatprep.subr.bf16.mxu0 0
    %4839 = vmatpush1.bf16.msra.mxu0 0
    %4840 = vmatprep.subr.bf16.mxu0 0
    %4841 = vmatpush1.bf16.msra.mxu0 0
    %4842 = vmatprep.subr.bf16.mxu0 0
    %4843 = vmatpush1.bf16.msra.mxu0 0
    %4844 = vmatprep.subr.bf16.mxu0 0
    %4845 = vmatpush1.bf16.msra.mxu0 0
    %4846 = vmatprep.subr.bf16.mxu0 0
    %4847 = vmatpush1.bf16.msra.mxu0 0
    %4848 = vmatprep.subr.bf16.mxu0 0
    %4849 = vmatpush1.bf16.msra.mxu0 0
    %4850 = vmatprep.subr.bf16.mxu0 0
    %4851 = vmatpush1.bf16.msra.mxu0 0
    %4852 = vmatprep.subr.bf16.mxu0 0
    %4853 = vmatpush1.bf16.msra.mxu0 %v4029
    %4854 = vmatprep.subr.bf16.mxu0 0
    %4855 = vmatpush2.bf16.msra.mxu0 0
    %4856 = vmatprep.subr.bf16.mxu0 0
    %4857 = vmatpush2.bf16.msra.mxu0 0
    %4858 = vmatprep.subr.bf16.mxu0 0
    %4859 = vmatpush2.bf16.msra.mxu0 0
    %4860 = vmatprep.subr.bf16.mxu0 0
    %4861 = vmatpush2.bf16.msra.mxu0 0
    %4862 = vmatprep.subr.bf16.mxu0 0
    %4863 = vmatpush2.bf16.msra.mxu0 0
    %4864 = vmatprep.subr.bf16.mxu0 0
    %4865 = vmatpush2.bf16.msra.mxu0 0
    %4866 = vmatprep.subr.bf16.mxu0 0
    %4867 = vmatpush2.bf16.msra.mxu0 0
    %4868 = vmatprep.subr.bf16.mxu0 0
    %4869 = vmatpush2.bf16.msra.mxu0 0
    %4870 = vmatprep.mubr.bf16.mxu0 0
    %4871 = vmatmul.mubr.bf16.gmra.mxu0 %v4619
    %v4872 = vpop.f32.mrf.mxu0
    %v4873 = vadd.f32 %v4023, %v4872
    %v4874 = vpop.f32.mrf.mxu0
    %v4875 = vpop.f32.mrf.mxu0
    %v4876 = vpop.f32.mrf.mxu0
    %4877 = vdwg.mxu0
    %v4878 = vmul.f32 %v4710, %v4873
    %v4879 = vadd.f32 %v4833, %v4878
    %v4880 = vtanh.pop %v4879
    %v4881 = vsub.f32 1.0, %v4797
    %v4882 = vmul.f32 %v4881, %v4880
    %v4883 = vmul.f32 %v4797, %v4615
    %v4884 = vadd.f32 %v4882, %v4883
    %v4885 = vpack.c.bf16 %v3705, %v3705
    %v4886 = vpack.c.bf16 %v4884, %v4884
    %v4888 = vsel %vm3765, %v4886, 0
    %4890 = vmatprep.subr.bf16.mxu0 0
    %4891 = vmatpush1.bf16.msra.mxu0 0
    %4892 = vmatprep.subr.bf16.mxu0 0
    %4893 = vmatpush1.bf16.msra.mxu0 0
    %4894 = vmatprep.subr.bf16.mxu0 0
    %4895 = vmatpush1.bf16.msra.mxu0 0
    %4896 = vmatprep.subr.bf16.mxu0 0
    %4897 = vmatpush1.bf16.msra.mxu0 0
    %4898 = vmatprep.subr.bf16.mxu0 0
    %4899 = vmatpush1.bf16.msra.mxu0 0
    %4900 = vmatprep.subr.bf16.mxu0 0
    %4901 = vmatpush1.bf16.msra.mxu0 0
    %4902 = vmatprep.subr.bf16.mxu0 0
    %4903 = vmatpush1.bf16.msra.mxu0 0
    %4904 = vmatprep.subr.bf16.mxu0 0
    %4905 = vmatpush1.bf16.msra.mxu0 %v3763
    %4906 = vmatprep.subr.bf16.mxu0 0
    %4907 = vmatpush2.bf16.msra.mxu0 0
    %4908 = vmatprep.subr.bf16.mxu0 0
    %4909 = vmatpush2.bf16.msra.mxu0 0
    %4910 = vmatprep.subr.bf16.mxu0 0
    %4911 = vmatpush2.bf16.msra.mxu0 0
    %4912 = vmatprep.subr.bf16.mxu0 0
    %4913 = vmatpush2.bf16.msra.mxu0 0
    %4914 = vmatprep.subr.bf16.mxu0 0
    %4915 = vmatpush2.bf16.msra.mxu0 0
    %4916 = vmatprep.subr.bf16.mxu0 0
    %4917 = vmatpush2.bf16.msra.mxu0 0
    %4918 = vmatprep.subr.bf16.mxu0 0
    %4919 = vmatpush2.bf16.msra.mxu0 0
    %4920 = vmatprep.subr.bf16.mxu0 0
    %4921 = vmatpush2.bf16.msra.mxu0 0
    %4922 = vmatprep.mubr.bf16.mxu0 0
    %4923 = vmatmul.mubr.bf16.gmra.mxu0 %v4888
    %v4924 = vpop.f32.mrf.mxu0
    %v4925 = vadd.f32 0.0, %v4924
    %v4926 = vpop.f32.mrf.mxu0
    %v4927 = vpop.f32.mrf.mxu0
    %v4928 = vpop.f32.mrf.mxu0
    %4929 = vdwg.mxu0
    %v4931 = vsel %vm3151, %v4885, 0
    %4933 = vmatprep.subr.bf16.mxu0 0
    %4934 = vmatpush1.bf16.msra.mxu0 0
    %4935 = vmatprep.subr.bf16.mxu0 0
    %4936 = vmatpush1.bf16.msra.mxu0 0
    %4937 = vmatprep.subr.bf16.mxu0 0
    %4938 = vmatpush1.bf16.msra.mxu0 0
    %4939 = vmatprep.subr.bf16.mxu0 0
    %4940 = vmatpush1.bf16.msra.mxu0 0
    %4941 = vmatprep.subr.bf16.mxu0 0
    %4942 = vmatpush1.bf16.msra.mxu0 0
    %4943 = vmatprep.subr.bf16.mxu0 0
    %4944 = vmatpush1.bf16.msra.mxu0 0
    %4945 = vmatprep.subr.bf16.mxu0 0
    %4946 = vmatpush1.bf16.msra.mxu0 0
    %4947 = vmatprep.subr.bf16.mxu0 0
    %4948 = vmatpush1.bf16.msra.mxu0 %v3813
    %4949 = vmatprep.subr.bf16.mxu0 0
    %4950 = vmatpush2.bf16.msra.mxu0 0
    %4951 = vmatprep.subr.bf16.mxu0 0
    %4952 = vmatpush2.bf16.msra.mxu0 0
    %4953 = vmatprep.subr.bf16.mxu0 0
    %4954 = vmatpush2.bf16.msra.mxu0 0
    %4955 = vmatprep.subr.bf16.mxu0 0
    %4956 = vmatpush2.bf16.msra.mxu0 0
    %4957 = vmatprep.subr.bf16.mxu0 0
    %4958 = vmatpush2.bf16.msra.mxu0 0
    %4959 = vmatprep.subr.bf16.mxu0 0
    %4960 = vmatpush2.bf16.msra.mxu0 0
    %4961 = vmatprep.subr.bf16.mxu0 0
    %4962 = vmatpush2.bf16.msra.mxu0 0
    %4963 = vmatprep.subr.bf16.mxu0 0
    %4964 = vmatpush2.bf16.msra.mxu0 0
    %4965 = vmatprep.mubr.bf16.mxu0 0
    %4966 = vmatmul.mubr.bf16.gmra.mxu0 %v4931
    %v4967 = vpop.f32.mrf.mxu0
    %v4968 = vadd.f32 %v4925, %v4967
    %v4969 = vpop.f32.mrf.mxu0
    %v4970 = vpop.f32.mrf.mxu0
    %v4971 = vpop.f32.mrf.mxu0
    %4972 = vdwg.mxu0
    %v4973 = vadd.f32 %v4968, %v3859
    %v4974 = vxor.u32 %v4973, 2147483648
    %v4975 = vmul.f32 %v4974, 1.442695
    %v4976 = vpow.pop %v4975
    %v4977 = vadd.f32 %v4976, 1.0
    %v4978 = vrcp.pop %v4977
    %v4979 = vmul.f32 1.0, %v4978
    %4980 = vmatprep.subr.bf16.mxu0 0
    %4981 = vmatpush1.bf16.msra.mxu0 0
    %4982 = vmatprep.subr.bf16.mxu0 0
    %4983 = vmatpush1.bf16.msra.mxu0 0
    %4984 = vmatprep.subr.bf16.mxu0 0
    %4985 = vmatpush1.bf16.msra.mxu0 0
    %4986 = vmatprep.subr.bf16.mxu0 0
    %4987 = vmatpush1.bf16.msra.mxu0 0
    %4988 = vmatprep.subr.bf16.mxu0 0
    %4989 = vmatpush1.bf16.msra.mxu0 0
    %4990 = vmatprep.subr.bf16.mxu0 0
    %4991 = vmatpush1.bf16.msra.mxu0 0
    %4992 = vmatprep.subr.bf16.mxu0 0
    %4993 = vmatpush1.bf16.msra.mxu0 0
    %4994 = vmatprep.subr.bf16.mxu0 0
    %4995 = vmatpush1.bf16.msra.mxu0 %v3872
    %4996 = vmatprep.subr.bf16.mxu0 0
    %4997 = vmatpush2.bf16.msra.mxu0 0
    %4998 = vmatprep.subr.bf16.mxu0 0
    %4999 = vmatpush2.bf16.msra.mxu0 0
    %5000 = vmatprep.subr.bf16.mxu0 0
    %5001 = vmatpush2.bf16.msra.mxu0 0
    %5002 = vmatprep.subr.bf16.mxu0 0
    %5003 = vmatpush2.bf16.msra.mxu0 0
    %5004 = vmatprep.subr.bf16.mxu0 0
    %5005 = vmatpush2.bf16.msra.mxu0 0
    %5006 = vmatprep.subr.bf16.mxu0 0
    %5007 = vmatpush2.bf16.msra.mxu0 0
    %5008 = vmatprep.subr.bf16.mxu0 0
    %5009 = vmatpush2.bf16.msra.mxu0 0
    %5010 = vmatprep.subr.bf16.mxu0 0
    %5011 = vmatpush2.bf16.msra.mxu0 0
    %5012 = vmatprep.mubr.bf16.mxu0 0
    %5013 = vmatmul.mubr.bf16.gmra.mxu0 %v4888
    %v5014 = vpop.f32.mrf.mxu0
    %v5015 = vadd.f32 0.0, %v5014
    %v5016 = vpop.f32.mrf.mxu0
    %v5017 = vpop.f32.mrf.mxu0
    %v5018 = vpop.f32.mrf.mxu0
    %5019 = vdwg.mxu0
    %5020 = vmatprep.subr.bf16.mxu0 0
    %5021 = vmatpush1.bf16.msra.mxu0 0
    %5022 = vmatprep.subr.bf16.mxu0 0
    %5023 = vmatpush1.bf16.msra.mxu0 0
    %5024 = vmatprep.subr.bf16.mxu0 0
    %5025 = vmatpush1.bf16.msra.mxu0 0
    %5026 = vmatprep.subr.bf16.mxu0 0
    %5027 = vmatpush1.bf16.msra.mxu0 0
    %5028 = vmatprep.subr.bf16.mxu0 0
    %5029 = vmatpush1.bf16.msra.mxu0 0
    %5030 = vmatprep.subr.bf16.mxu0 0
    %5031 = vmatpush1.bf16.msra.mxu0 0
    %5032 = vmatprep.subr.bf16.mxu0 0
    %5033 = vmatpush1.bf16.msra.mxu0 0
    %5034 = vmatprep.subr.bf16.mxu0 0
    %5035 = vmatpush1.bf16.msra.mxu0 %v3915
    %5036 = vmatprep.subr.bf16.mxu0 0
    %5037 = vmatpush2.bf16.msra.mxu0 0
    %5038 = vmatprep.subr.bf16.mxu0 0
    %5039 = vmatpush2.bf16.msra.mxu0 0
    %5040 = vmatprep.subr.bf16.mxu0 0
    %5041 = vmatpush2.bf16.msra.mxu0 0
    %5042 = vmatprep.subr.bf16.mxu0 0
    %5043 = vmatpush2.bf16.msra.mxu0 0
    %5044 = vmatprep.subr.bf16.mxu0 0
    %5045 = vmatpush2.bf16.msra.mxu0 0
    %5046 = vmatprep.subr.bf16.mxu0 0
    %5047 = vmatpush2.bf16.msra.mxu0 0
    %5048 = vmatprep.subr.bf16.mxu0 0
    %5049 = vmatpush2.bf16.msra.mxu0 0
    %5050 = vmatprep.subr.bf16.mxu0 0
    %5051 = vmatpush2.bf16.msra.mxu0 0
    %5052 = vmatprep.mubr.bf16.mxu0 0
    %5053 = vmatmul.mubr.bf16.gmra.mxu0 %v4931
    %v5054 = vpop.f32.mrf.mxu0
    %v5055 = vadd.f32 %v5015, %v5054
    %v5056 = vpop.f32.mrf.mxu0
    %v5057 = vpop.f32.mrf.mxu0
    %v5058 = vpop.f32.mrf.mxu0
    %5059 = vdwg.mxu0
    %v5060 = vadd.f32 %v5055, %v3961
    %v5061 = vxor.u32 %v5060, 2147483648
    %v5062 = vmul.f32 %v5061, 1.442695
    %v5063 = vpow.pop %v5062
    %v5064 = vadd.f32 %v5063, 1.0
    %v5065 = vrcp.pop %v5064
    %v5066 = vmul.f32 1.0, %v5065
    %5067 = vmatprep.subr.bf16.mxu0 0
    %5068 = vmatpush1.bf16.msra.mxu0 0
    %5069 = vmatprep.subr.bf16.mxu0 0
    %5070 = vmatpush1.bf16.msra.mxu0 0
    %5071 = vmatprep.subr.bf16.mxu0 0
    %5072 = vmatpush1.bf16.msra.mxu0 0
    %5073 = vmatprep.subr.bf16.mxu0 0
    %5074 = vmatpush1.bf16.msra.mxu0 0
    %5075 = vmatprep.subr.bf16.mxu0 0
    %5076 = vmatpush1.bf16.msra.mxu0 0
    %5077 = vmatprep.subr.bf16.mxu0 0
    %5078 = vmatpush1.bf16.msra.mxu0 0
    %5079 = vmatprep.subr.bf16.mxu0 0
    %5080 = vmatpush1.bf16.msra.mxu0 0
    %5081 = vmatprep.subr.bf16.mxu0 0
    %5082 = vmatpush1.bf16.msra.mxu0 %v3977
    %5083 = vmatprep.subr.bf16.mxu0 0
    %5084 = vmatpush2.bf16.msra.mxu0 0
    %5085 = vmatprep.subr.bf16.mxu0 0
    %5086 = vmatpush2.bf16.msra.mxu0 0
    %5087 = vmatprep.subr.bf16.mxu0 0
    %5088 = vmatpush2.bf16.msra.mxu0 0
    %5089 = vmatprep.subr.bf16.mxu0 0
    %5090 = vmatpush2.bf16.msra.mxu0 0
    %5091 = vmatprep.subr.bf16.mxu0 0
    %5092 = vmatpush2.bf16.msra.mxu0 0
    %5093 = vmatprep.subr.bf16.mxu0 0
    %5094 = vmatpush2.bf16.msra.mxu0 0
    %5095 = vmatprep.subr.bf16.mxu0 0
    %5096 = vmatpush2.bf16.msra.mxu0 0
    %5097 = vmatprep.subr.bf16.mxu0 0
    %5098 = vmatpush2.bf16.msra.mxu0 0
    %5099 = vmatprep.mubr.bf16.mxu0 0
    %5100 = vmatmul.mubr.bf16.gmra.mxu0 %v4931
    %v5101 = vpop.f32.mrf.mxu0
    %v5102 = vadd.f32 %v3974, %v5101
    %v5103 = vpop.f32.mrf.mxu0
    %v5104 = vpop.f32.mrf.mxu0
    %v5105 = vpop.f32.mrf.mxu0
    %5106 = vdwg.mxu0
    %5107 = vmatprep.subr.bf16.mxu0 0
    %5108 = vmatpush1.bf16.msra.mxu0 0
    %5109 = vmatprep.subr.bf16.mxu0 0
    %5110 = vmatpush1.bf16.msra.mxu0 0
    %5111 = vmatprep.subr.bf16.mxu0 0
    %5112 = vmatpush1.bf16.msra.mxu0 0
    %5113 = vmatprep.subr.bf16.mxu0 0
    %5114 = vmatpush1.bf16.msra.mxu0 0
    %5115 = vmatprep.subr.bf16.mxu0 0
    %5116 = vmatpush1.bf16.msra.mxu0 0
    %5117 = vmatprep.subr.bf16.mxu0 0
    %5118 = vmatpush1.bf16.msra.mxu0 0
    %5119 = vmatprep.subr.bf16.mxu0 0
    %5120 = vmatpush1.bf16.msra.mxu0 0
    %5121 = vmatprep.subr.bf16.mxu0 0
    %5122 = vmatpush1.bf16.msra.mxu0 %v4029
    %5123 = vmatprep.subr.bf16.mxu0 0
    %5124 = vmatpush2.bf16.msra.mxu0 0
    %5125 = vmatprep.subr.bf16.mxu0 0
    %5126 = vmatpush2.bf16.msra.mxu0 0
    %5127 = vmatprep.subr.bf16.mxu0 0
    %5128 = vmatpush2.bf16.msra.mxu0 0
    %5129 = vmatprep.subr.bf16.mxu0 0
    %5130 = vmatpush2.bf16.msra.mxu0 0
    %5131 = vmatprep.subr.bf16.mxu0 0
    %5132 = vmatpush2.bf16.msra.mxu0 0
    %5133 = vmatprep.subr.bf16.mxu0 0
    %5134 = vmatpush2.bf16.msra.mxu0 0
    %5135 = vmatprep.subr.bf16.mxu0 0
    %5136 = vmatpush2.bf16.msra.mxu0 0
    %5137 = vmatprep.subr.bf16.mxu0 0
    %5138 = vmatpush2.bf16.msra.mxu0 0
    %5139 = vmatprep.mubr.bf16.mxu0 0
    %5140 = vmatmul.mubr.bf16.gmra.mxu0 %v4888
    %v5141 = vpop.f32.mrf.mxu0
    %v5142 = vadd.f32 %v4023, %v5141
    %v5143 = vpop.f32.mrf.mxu0
    %v5144 = vpop.f32.mrf.mxu0
    %v5145 = vpop.f32.mrf.mxu0
    %5146 = vdwg.mxu0
    %v5147 = vmul.f32 %v4979, %v5142
    %v5148 = vadd.f32 %v5102, %v5147
    %v5149 = vtanh.pop %v5148
    %v5150 = vsub.f32 1.0, %v5066
    %v5151 = vmul.f32 %v5150, %v5149
    %v5152 = vmul.f32 %v5066, %v4884
    %v5153 = vadd.f32 %v5151, %v5152
    %v5154 = vpack.c.bf16 %v3715, %v3715
    %v5155 = vpack.c.bf16 %v5153, %v5153
    %v5157 = vsel %vm3765, %v5155, 0
    %5159 = vmatprep.subr.bf16.mxu0 0
    %5160 = vmatpush1.bf16.msra.mxu0 0
    %5161 = vmatprep.subr.bf16.mxu0 0
    %5162 = vmatpush1.bf16.msra.mxu0 0
    %5163 = vmatprep.subr.bf16.mxu0 0
    %5164 = vmatpush1.bf16.msra.mxu0 0
    %5165 = vmatprep.subr.bf16.mxu0 0
    %5166 = vmatpush1.bf16.msra.mxu0 0
    %5167 = vmatprep.subr.bf16.mxu0 0
    %5168 = vmatpush1.bf16.msra.mxu0 0
    %5169 = vmatprep.subr.bf16.mxu0 0
    %5170 = vmatpush1.bf16.msra.mxu0 0
    %5171 = vmatprep.subr.bf16.mxu0 0
    %5172 = vmatpush1.bf16.msra.mxu0 0
    %5173 = vmatprep.subr.bf16.mxu0 0
    %5174 = vmatpush1.bf16.msra.mxu0 %v3763
    %5175 = vmatprep.subr.bf16.mxu0 0
    %5176 = vmatpush2.bf16.msra.mxu0 0
    %5177 = vmatprep.subr.bf16.mxu0 0
    %5178 = vmatpush2.bf16.msra.mxu0 0
    %5179 = vmatprep.subr.bf16.mxu0 0
    %5180 = vmatpush2.bf16.msra.mxu0 0
    %5181 = vmatprep.subr.bf16.mxu0 0
    %5182 = vmatpush2.bf16.msra.mxu0 0
    %5183 = vmatprep.subr.bf16.mxu0 0
    %5184 = vmatpush2.bf16.msra.mxu0 0
    %5185 = vmatprep.subr.bf16.mxu0 0
    %5186 = vmatpush2.bf16.msra.mxu0 0
    %5187 = vmatprep.subr.bf16.mxu0 0
    %5188 = vmatpush2.bf16.msra.mxu0 0
    %5189 = vmatprep.subr.bf16.mxu0 0
    %5190 = vmatpush2.bf16.msra.mxu0 0
    %5191 = vmatprep.mubr.bf16.mxu0 0
    %5192 = vmatmul.mubr.bf16.gmra.mxu0 %v5157
    %v5193 = vpop.f32.mrf.mxu0
    %v5194 = vadd.f32 0.0, %v5193
    %v5195 = vpop.f32.mrf.mxu0
    %v5196 = vpop.f32.mrf.mxu0
    %v5197 = vpop.f32.mrf.mxu0
    %5198 = vdwg.mxu0
    %v5200 = vsel %vm3151, %v5154, 0
    %5202 = vmatprep.subr.bf16.mxu0 0
    %5203 = vmatpush1.bf16.msra.mxu0 0
    %5204 = vmatprep.subr.bf16.mxu0 0
    %5205 = vmatpush1.bf16.msra.mxu0 0
    %5206 = vmatprep.subr.bf16.mxu0 0
    %5207 = vmatpush1.bf16.msra.mxu0 0
    %5208 = vmatprep.subr.bf16.mxu0 0
    %5209 = vmatpush1.bf16.msra.mxu0 0
    %5210 = vmatprep.subr.bf16.mxu0 0
    %5211 = vmatpush1.bf16.msra.mxu0 0
    %5212 = vmatprep.subr.bf16.mxu0 0
    %5213 = vmatpush1.bf16.msra.mxu0 0
    %5214 = vmatprep.subr.bf16.mxu0 0
    %5215 = vmatpush1.bf16.msra.mxu0 0
    %5216 = vmatprep.subr.bf16.mxu0 0
    %5217 = vmatpush1.bf16.msra.mxu0 %v3813
    %5218 = vmatprep.subr.bf16.mxu0 0
    %5219 = vmatpush2.bf16.msra.mxu0 0
    %5220 = vmatprep.subr.bf16.mxu0 0
    %5221 = vmatpush2.bf16.msra.mxu0 0
    %5222 = vmatprep.subr.bf16.mxu0 0
    %5223 = vmatpush2.bf16.msra.mxu0 0
    %5224 = vmatprep.subr.bf16.mxu0 0
    %5225 = vmatpush2.bf16.msra.mxu0 0
    %5226 = vmatprep.subr.bf16.mxu0 0
    %5227 = vmatpush2.bf16.msra.mxu0 0
    %5228 = vmatprep.subr.bf16.mxu0 0
    %5229 = vmatpush2.bf16.msra.mxu0 0
    %5230 = vmatprep.subr.bf16.mxu0 0
    %5231 = vmatpush2.bf16.msra.mxu0 0
    %5232 = vmatprep.subr.bf16.mxu0 0
    %5233 = vmatpush2.bf16.msra.mxu0 0
    %5234 = vmatprep.mubr.bf16.mxu0 0
    %5235 = vmatmul.mubr.bf16.gmra.mxu0 %v5200
    %v5236 = vpop.f32.mrf.mxu0
    %v5237 = vadd.f32 %v5194, %v5236
    %v5238 = vpop.f32.mrf.mxu0
    %v5239 = vpop.f32.mrf.mxu0
    %v5240 = vpop.f32.mrf.mxu0
    %5241 = vdwg.mxu0
    %v5242 = vadd.f32 %v5237, %v3859
    %v5243 = vxor.u32 %v5242, 2147483648
    %v5244 = vmul.f32 %v5243, 1.442695
    %v5245 = vpow.pop %v5244
    %v5246 = vadd.f32 %v5245, 1.0
    %v5247 = vrcp.pop %v5246
    %v5248 = vmul.f32 1.0, %v5247
    %5249 = vmatprep.subr.bf16.mxu0 0
    %5250 = vmatpush1.bf16.msra.mxu0 0
    %5251 = vmatprep.subr.bf16.mxu0 0
    %5252 = vmatpush1.bf16.msra.mxu0 0
    %5253 = vmatprep.subr.bf16.mxu0 0
    %5254 = vmatpush1.bf16.msra.mxu0 0
    %5255 = vmatprep.subr.bf16.mxu0 0
    %5256 = vmatpush1.bf16.msra.mxu0 0
    %5257 = vmatprep.subr.bf16.mxu0 0
    %5258 = vmatpush1.bf16.msra.mxu0 0
    %5259 = vmatprep.subr.bf16.mxu0 0
    %5260 = vmatpush1.bf16.msra.mxu0 0
    %5261 = vmatprep.subr.bf16.mxu0 0
    %5262 = vmatpush1.bf16.msra.mxu0 0
    %5263 = vmatprep.subr.bf16.mxu0 0
    %5264 = vmatpush1.bf16.msra.mxu0 %v3872
    %5265 = vmatprep.subr.bf16.mxu0 0
    %5266 = vmatpush2.bf16.msra.mxu0 0
    %5267 = vmatprep.subr.bf16.mxu0 0
    %5268 = vmatpush2.bf16.msra.mxu0 0
    %5269 = vmatprep.subr.bf16.mxu0 0
    %5270 = vmatpush2.bf16.msra.mxu0 0
    %5271 = vmatprep.subr.bf16.mxu0 0
    %5272 = vmatpush2.bf16.msra.mxu0 0
    %5273 = vmatprep.subr.bf16.mxu0 0
    %5274 = vmatpush2.bf16.msra.mxu0 0
    %5275 = vmatprep.subr.bf16.mxu0 0
    %5276 = vmatpush2.bf16.msra.mxu0 0
    %5277 = vmatprep.subr.bf16.mxu0 0
    %5278 = vmatpush2.bf16.msra.mxu0 0
    %5279 = vmatprep.subr.bf16.mxu0 0
    %5280 = vmatpush2.bf16.msra.mxu0 0
    %5281 = vmatprep.mubr.bf16.mxu0 0
    %5282 = vmatmul.mubr.bf16.gmra.mxu0 %v5157
    %v5283 = vpop.f32.mrf.mxu0
    %v5284 = vadd.f32 0.0, %v5283
    %v5285 = vpop.f32.mrf.mxu0
    %v5286 = vpop.f32.mrf.mxu0
    %v5287 = vpop.f32.mrf.mxu0
    %5288 = vdwg.mxu0
    %5289 = vmatprep.subr.bf16.mxu0 0
    %5290 = vmatpush1.bf16.msra.mxu0 0
    %5291 = vmatprep.subr.bf16.mxu0 0
    %5292 = vmatpush1.bf16.msra.mxu0 0
    %5293 = vmatprep.subr.bf16.mxu0 0
    %5294 = vmatpush1.bf16.msra.mxu0 0
    %5295 = vmatprep.subr.bf16.mxu0 0
    %5296 = vmatpush1.bf16.msra.mxu0 0
    %5297 = vmatprep.subr.bf16.mxu0 0
    %5298 = vmatpush1.bf16.msra.mxu0 0
    %5299 = vmatprep.subr.bf16.mxu0 0
    %5300 = vmatpush1.bf16.msra.mxu0 0
    %5301 = vmatprep.subr.bf16.mxu0 0
    %5302 = vmatpush1.bf16.msra.mxu0 0
    %5303 = vmatprep.subr.bf16.mxu0 0
    %5304 = vmatpush1.bf16.msra.mxu0 %v3915
    %5305 = vmatprep.subr.bf16.mxu0 0
    %5306 = vmatpush2.bf16.msra.mxu0 0
    %5307 = vmatprep.subr.bf16.mxu0 0
    %5308 = vmatpush2.bf16.msra.mxu0 0
    %5309 = vmatprep.subr.bf16.mxu0 0
    %5310 = vmatpush2.bf16.msra.mxu0 0
    %5311 = vmatprep.subr.bf16.mxu0 0
    %5312 = vmatpush2.bf16.msra.mxu0 0
    %5313 = vmatprep.subr.bf16.mxu0 0
    %5314 = vmatpush2.bf16.msra.mxu0 0
    %5315 = vmatprep.subr.bf16.mxu0 0
    %5316 = vmatpush2.bf16.msra.mxu0 0
    %5317 = vmatprep.subr.bf16.mxu0 0
    %5318 = vmatpush2.bf16.msra.mxu0 0
    %5319 = vmatprep.subr.bf16.mxu0 0
    %5320 = vmatpush2.bf16.msra.mxu0 0
    %5321 = vmatprep.mubr.bf16.mxu0 0
    %5322 = vmatmul.mubr.bf16.gmra.mxu0 %v5200
    %v5323 = vpop.f32.mrf.mxu0
    %v5324 = vadd.f32 %v5284, %v5323
    %v5325 = vpop.f32.mrf.mxu0
    %v5326 = vpop.f32.mrf.mxu0
    %v5327 = vpop.f32.mrf.mxu0
    %5328 = vdwg.mxu0
    %v5329 = vadd.f32 %v5324, %v3961
    %v5330 = vxor.u32 %v5329, 2147483648
    %v5331 = vmul.f32 %v5330, 1.442695
    %v5332 = vpow.pop %v5331
    %v5333 = vadd.f32 %v5332, 1.0
    %v5334 = vrcp.pop %v5333
    %v5335 = vmul.f32 1.0, %v5334
    %5336 = vmatprep.subr.bf16.mxu0 0
    %5337 = vmatpush1.bf16.msra.mxu0 0
    %5338 = vmatprep.subr.bf16.mxu0 0
    %5339 = vmatpush1.bf16.msra.mxu0 0
    %5340 = vmatprep.subr.bf16.mxu0 0
    %5341 = vmatpush1.bf16.msra.mxu0 0
    %5342 = vmatprep.subr.bf16.mxu0 0
    %5343 = vmatpush1.bf16.msra.mxu0 0
    %5344 = vmatprep.subr.bf16.mxu0 0
    %5345 = vmatpush1.bf16.msra.mxu0 0
    %5346 = vmatprep.subr.bf16.mxu0 0
    %5347 = vmatpush1.bf16.msra.mxu0 0
    %5348 = vmatprep.subr.bf16.mxu0 0
    %5349 = vmatpush1.bf16.msra.mxu0 0
    %5350 = vmatprep.subr.bf16.mxu0 0
    %5351 = vmatpush1.bf16.msra.mxu0 %v3977
    %5352 = vmatprep.subr.bf16.mxu0 0
    %5353 = vmatpush2.bf16.msra.mxu0 0
    %5354 = vmatprep.subr.bf16.mxu0 0
    %5355 = vmatpush2.bf16.msra.mxu0 0
    %5356 = vmatprep.subr.bf16.mxu0 0
    %5357 = vmatpush2.bf16.msra.mxu0 0
    %5358 = vmatprep.subr.bf16.mxu0 0
    %5359 = vmatpush2.bf16.msra.mxu0 0
    %5360 = vmatprep.subr.bf16.mxu0 0
    %5361 = vmatpush2.bf16.msra.mxu0 0
    %5362 = vmatprep.subr.bf16.mxu0 0
    %5363 = vmatpush2.bf16.msra.mxu0 0
    %5364 = vmatprep.subr.bf16.mxu0 0
    %5365 = vmatpush2.bf16.msra.mxu0 0
    %5366 = vmatprep.subr.bf16.mxu0 0
    %5367 = vmatpush2.bf16.msra.mxu0 0
    %5368 = vmatprep.mubr.bf16.mxu0 0
    %5369 = vmatmul.mubr.bf16.gmra.mxu0 %v5200
    %v5370 = vpop.f32.mrf.mxu0
    %v5371 = vadd.f32 %v3974, %v5370
    %v5372 = vpop.f32.mrf.mxu0
    %v5373 = vpop.f32.mrf.mxu0
    %v5374 = vpop.f32.mrf.mxu0
    %5375 = vdwg.mxu0
    %5376 = vmatprep.subr.bf16.mxu0 0
    %5377 = vmatpush1.bf16.msra.mxu0 0
    %5378 = vmatprep.subr.bf16.mxu0 0
    %5379 = vmatpush1.bf16.msra.mxu0 0
    %5380 = vmatprep.subr.bf16.mxu0 0
    %5381 = vmatpush1.bf16.msra.mxu0 0
    %5382 = vmatprep.subr.bf16.mxu0 0
    %5383 = vmatpush1.bf16.msra.mxu0 0
    %5384 = vmatprep.subr.bf16.mxu0 0
    %5385 = vmatpush1.bf16.msra.mxu0 0
    %5386 = vmatprep.subr.bf16.mxu0 0
    %5387 = vmatpush1.bf16.msra.mxu0 0
    %5388 = vmatprep.subr.bf16.mxu0 0
    %5389 = vmatpush1.bf16.msra.mxu0 0
    %5390 = vmatprep.subr.bf16.mxu0 0
    %5391 = vmatpush1.bf16.msra.mxu0 %v4029
    %5392 = vmatprep.subr.bf16.mxu0 0
    %5393 = vmatpush2.bf16.msra.mxu0 0
    %5394 = vmatprep.subr.bf16.mxu0 0
    %5395 = vmatpush2.bf16.msra.mxu0 0
    %5396 = vmatprep.subr.bf16.mxu0 0
    %5397 = vmatpush2.bf16.msra.mxu0 0
    %5398 = vmatprep.subr.bf16.mxu0 0
    %5399 = vmatpush2.bf16.msra.mxu0 0
    %5400 = vmatprep.subr.bf16.mxu0 0
    %5401 = vmatpush2.bf16.msra.mxu0 0
    %5402 = vmatprep.subr.bf16.mxu0 0
    %5403 = vmatpush2.bf16.msra.mxu0 0
    %5404 = vmatprep.subr.bf16.mxu0 0
    %5405 = vmatpush2.bf16.msra.mxu0 0
    %5406 = vmatprep.subr.bf16.mxu0 0
    %5407 = vmatpush2.bf16.msra.mxu0 0
    %5408 = vmatprep.mubr.bf16.mxu0 0
    %5409 = vmatmul.mubr.bf16.gmra.mxu0 %v5157
    %v5410 = vpop.f32.mrf.mxu0
    %v5411 = vadd.f32 %v4023, %v5410
    %v5412 = vpop.f32.mrf.mxu0
    %v5413 = vpop.f32.mrf.mxu0
    %v5414 = vpop.f32.mrf.mxu0
    %5415 = vdwg.mxu0
    %v5416 = vmul.f32 %v5248, %v5411
    %v5417 = vadd.f32 %v5371, %v5416
    %v5418 = vtanh.pop %v5417
    %v5419 = vsub.f32 1.0, %v5335
    %v5420 = vmul.f32 %v5419, %v5418
    %v5421 = vmul.f32 %v5335, %v5153
    %v5422 = vadd.f32 %v5420, %v5421
    %v5423 = vpack.c.bf16 %v3725, %v3725
    %v5424 = vpack.c.bf16 %v5422, %v5422
    %v5426 = vsel %vm3765, %v5424, 0
    %5428 = vmatprep.subr.bf16.mxu0 0
    %5429 = vmatpush1.bf16.msra.mxu0 0
    %5430 = vmatprep.subr.bf16.mxu0 0
    %5431 = vmatpush1.bf16.msra.mxu0 0
    %5432 = vmatprep.subr.bf16.mxu0 0
    %5433 = vmatpush1.bf16.msra.mxu0 0
    %5434 = vmatprep.subr.bf16.mxu0 0
    %5435 = vmatpush1.bf16.msra.mxu0 0
    %5436 = vmatprep.subr.bf16.mxu0 0
    %5437 = vmatpush1.bf16.msra.mxu0 0
    %5438 = vmatprep.subr.bf16.mxu0 0
    %5439 = vmatpush1.bf16.msra.mxu0 0
    %5440 = vmatprep.subr.bf16.mxu0 0
    %5441 = vmatpush1.bf16.msra.mxu0 0
    %5442 = vmatprep.subr.bf16.mxu0 0
    %5443 = vmatpush1.bf16.msra.mxu0 %v3763
    %5444 = vmatprep.subr.bf16.mxu0 0
    %5445 = vmatpush2.bf16.msra.mxu0 0
    %5446 = vmatprep.subr.bf16.mxu0 0
    %5447 = vmatpush2.bf16.msra.mxu0 0
    %5448 = vmatprep.subr.bf16.mxu0 0
    %5449 = vmatpush2.bf16.msra.mxu0 0
    %5450 = vmatprep.subr.bf16.mxu0 0
    %5451 = vmatpush2.bf16.msra.mxu0 0
    %5452 = vmatprep.subr.bf16.mxu0 0
    %5453 = vmatpush2.bf16.msra.mxu0 0
    %5454 = vmatprep.subr.bf16.mxu0 0
    %5455 = vmatpush2.bf16.msra.mxu0 0
    %5456 = vmatprep.subr.bf16.mxu0 0
    %5457 = vmatpush2.bf16.msra.mxu0 0
    %5458 = vmatprep.subr.bf16.mxu0 0
    %5459 = vmatpush2.bf16.msra.mxu0 0
    %5460 = vmatprep.mubr.bf16.mxu0 0
    %5461 = vmatmul.mubr.bf16.gmra.mxu0 %v5426
    %v5462 = vpop.f32.mrf.mxu0
    %v5463 = vadd.f32 0.0, %v5462
    %v5464 = vpop.f32.mrf.mxu0
    %v5465 = vpop.f32.mrf.mxu0
    %v5466 = vpop.f32.mrf.mxu0
    %5467 = vdwg.mxu0
    %v5469 = vsel %vm3151, %v5423, 0
    %5471 = vmatprep.subr.bf16.mxu0 0
    %5472 = vmatpush1.bf16.msra.mxu0 0
    %5473 = vmatprep.subr.bf16.mxu0 0
    %5474 = vmatpush1.bf16.msra.mxu0 0
    %5475 = vmatprep.subr.bf16.mxu0 0
    %5476 = vmatpush1.bf16.msra.mxu0 0
    %5477 = vmatprep.subr.bf16.mxu0 0
    %5478 = vmatpush1.bf16.msra.mxu0 0
    %5479 = vmatprep.subr.bf16.mxu0 0
    %5480 = vmatpush1.bf16.msra.mxu0 0
    %5481 = vmatprep.subr.bf16.mxu0 0
    %5482 = vmatpush1.bf16.msra.mxu0 0
    %5483 = vmatprep.subr.bf16.mxu0 0
    %5484 = vmatpush1.bf16.msra.mxu0 0
    %5485 = vmatprep.subr.bf16.mxu0 0
    %5486 = vmatpush1.bf16.msra.mxu0 %v3813
    %5487 = vmatprep.subr.bf16.mxu0 0
    %5488 = vmatpush2.bf16.msra.mxu0 0
    %5489 = vmatprep.subr.bf16.mxu0 0
    %5490 = vmatpush2.bf16.msra.mxu0 0
    %5491 = vmatprep.subr.bf16.mxu0 0
    %5492 = vmatpush2.bf16.msra.mxu0 0
    %5493 = vmatprep.subr.bf16.mxu0 0
    %5494 = vmatpush2.bf16.msra.mxu0 0
    %5495 = vmatprep.subr.bf16.mxu0 0
    %5496 = vmatpush2.bf16.msra.mxu0 0
    %5497 = vmatprep.subr.bf16.mxu0 0
    %5498 = vmatpush2.bf16.msra.mxu0 0
    %5499 = vmatprep.subr.bf16.mxu0 0
    %5500 = vmatpush2.bf16.msra.mxu0 0
    %5501 = vmatprep.subr.bf16.mxu0 0
    %5502 = vmatpush2.bf16.msra.mxu0 0
    %5503 = vmatprep.mubr.bf16.mxu0 0
    %5504 = vmatmul.mubr.bf16.gmra.mxu0 %v5469
    %v5505 = vpop.f32.mrf.mxu0
    %v5506 = vadd.f32 %v5463, %v5505
    %v5507 = vpop.f32.mrf.mxu0
    %v5508 = vpop.f32.mrf.mxu0
    %v5509 = vpop.f32.mrf.mxu0
    %5510 = vdwg.mxu0
    %v5511 = vadd.f32 %v5506, %v3859
    %v5512 = vxor.u32 %v5511, 2147483648
    %v5513 = vmul.f32 %v5512, 1.442695
    %v5514 = vpow.pop %v5513
    %v5515 = vadd.f32 %v5514, 1.0
    %v5516 = vrcp.pop %v5515
    %v5517 = vmul.f32 1.0, %v5516
    %5518 = vmatprep.subr.bf16.mxu0 0
    %5519 = vmatpush1.bf16.msra.mxu0 0
    %5520 = vmatprep.subr.bf16.mxu0 0
    %5521 = vmatpush1.bf16.msra.mxu0 0
    %5522 = vmatprep.subr.bf16.mxu0 0
    %5523 = vmatpush1.bf16.msra.mxu0 0
    %5524 = vmatprep.subr.bf16.mxu0 0
    %5525 = vmatpush1.bf16.msra.mxu0 0
    %5526 = vmatprep.subr.bf16.mxu0 0
    %5527 = vmatpush1.bf16.msra.mxu0 0
    %5528 = vmatprep.subr.bf16.mxu0 0
    %5529 = vmatpush1.bf16.msra.mxu0 0
    %5530 = vmatprep.subr.bf16.mxu0 0
    %5531 = vmatpush1.bf16.msra.mxu0 0
    %5532 = vmatprep.subr.bf16.mxu0 0
    %5533 = vmatpush1.bf16.msra.mxu0 %v3872
    %5534 = vmatprep.subr.bf16.mxu0 0
    %5535 = vmatpush2.bf16.msra.mxu0 0
    %5536 = vmatprep.subr.bf16.mxu0 0
    %5537 = vmatpush2.bf16.msra.mxu0 0
    %5538 = vmatprep.subr.bf16.mxu0 0
    %5539 = vmatpush2.bf16.msra.mxu0 0
    %5540 = vmatprep.subr.bf16.mxu0 0
    %5541 = vmatpush2.bf16.msra.mxu0 0
    %5542 = vmatprep.subr.bf16.mxu0 0
    %5543 = vmatpush2.bf16.msra.mxu0 0
    %5544 = vmatprep.subr.bf16.mxu0 0
    %5545 = vmatpush2.bf16.msra.mxu0 0
    %5546 = vmatprep.subr.bf16.mxu0 0
    %5547 = vmatpush2.bf16.msra.mxu0 0
    %5548 = vmatprep.subr.bf16.mxu0 0
    %5549 = vmatpush2.bf16.msra.mxu0 0
    %5550 = vmatprep.mubr.bf16.mxu0 0
    %5551 = vmatmul.mubr.bf16.gmra.mxu0 %v5426
    %v5552 = vpop.f32.mrf.mxu0
    %v5553 = vadd.f32 0.0, %v5552
    %v5554 = vpop.f32.mrf.mxu0
    %v5555 = vpop.f32.mrf.mxu0
    %v5556 = vpop.f32.mrf.mxu0
    %5557 = vdwg.mxu0
    %5558 = vmatprep.subr.bf16.mxu0 0
    %5559 = vmatpush1.bf16.msra.mxu0 0
    %5560 = vmatprep.subr.bf16.mxu0 0
    %5561 = vmatpush1.bf16.msra.mxu0 0
    %5562 = vmatprep.subr.bf16.mxu0 0
    %5563 = vmatpush1.bf16.msra.mxu0 0
    %5564 = vmatprep.subr.bf16.mxu0 0
    %5565 = vmatpush1.bf16.msra.mxu0 0
    %5566 = vmatprep.subr.bf16.mxu0 0
    %5567 = vmatpush1.bf16.msra.mxu0 0
    %5568 = vmatprep.subr.bf16.mxu0 0
    %5569 = vmatpush1.bf16.msra.mxu0 0
    %5570 = vmatprep.subr.bf16.mxu0 0
    %5571 = vmatpush1.bf16.msra.mxu0 0
    %5572 = vmatprep.subr.bf16.mxu0 0
    %5573 = vmatpush1.bf16.msra.mxu0 %v3915
    %5574 = vmatprep.subr.bf16.mxu0 0
    %5575 = vmatpush2.bf16.msra.mxu0 0
    %5576 = vmatprep.subr.bf16.mxu0 0
    %5577 = vmatpush2.bf16.msra.mxu0 0
    %5578 = vmatprep.subr.bf16.mxu0 0
    %5579 = vmatpush2.bf16.msra.mxu0 0
    %5580 = vmatprep.subr.bf16.mxu0 0
    %5581 = vmatpush2.bf16.msra.mxu0 0
    %5582 = vmatprep.subr.bf16.mxu0 0
    %5583 = vmatpush2.bf16.msra.mxu0 0
    %5584 = vmatprep.subr.bf16.mxu0 0
    %5585 = vmatpush2.bf16.msra.mxu0 0
    %5586 = vmatprep.subr.bf16.mxu0 0
    %5587 = vmatpush2.bf16.msra.mxu0 0
    %5588 = vmatprep.subr.bf16.mxu0 0
    %5589 = vmatpush2.bf16.msra.mxu0 0
    %5590 = vmatprep.mubr.bf16.mxu0 0
    %5591 = vmatmul.mubr.bf16.gmra.mxu0 %v5469
    %v5592 = vpop.f32.mrf.mxu0
    %v5593 = vadd.f32 %v5553, %v5592
    %v5594 = vpop.f32.mrf.mxu0
    %v5595 = vpop.f32.mrf.mxu0
    %v5596 = vpop.f32.mrf.mxu0
    %5597 = vdwg.mxu0
    %v5598 = vadd.f32 %v5593, %v3961
    %v5599 = vxor.u32 %v5598, 2147483648
    %v5600 = vmul.f32 %v5599, 1.442695
    %v5601 = vpow.pop %v5600
    %v5602 = vadd.f32 %v5601, 1.0
    %v5603 = vrcp.pop %v5602
    %v5604 = vmul.f32 1.0, %v5603
    %5605 = vmatprep.subr.bf16.mxu0 0
    %5606 = vmatpush1.bf16.msra.mxu0 0
    %5607 = vmatprep.subr.bf16.mxu0 0
    %5608 = vmatpush1.bf16.msra.mxu0 0
    %5609 = vmatprep.subr.bf16.mxu0 0
    %5610 = vmatpush1.bf16.msra.mxu0 0
    %5611 = vmatprep.subr.bf16.mxu0 0
    %5612 = vmatpush1.bf16.msra.mxu0 0
    %5613 = vmatprep.subr.bf16.mxu0 0
    %5614 = vmatpush1.bf16.msra.mxu0 0
    %5615 = vmatprep.subr.bf16.mxu0 0
    %5616 = vmatpush1.bf16.msra.mxu0 0
    %5617 = vmatprep.subr.bf16.mxu0 0
    %5618 = vmatpush1.bf16.msra.mxu0 0
    %5619 = vmatprep.subr.bf16.mxu0 0
    %5620 = vmatpush1.bf16.msra.mxu0 %v3977
    %5621 = vmatprep.subr.bf16.mxu0 0
    %5622 = vmatpush2.bf16.msra.mxu0 0
    %5623 = vmatprep.subr.bf16.mxu0 0
    %5624 = vmatpush2.bf16.msra.mxu0 0
    %5625 = vmatprep.subr.bf16.mxu0 0
    %5626 = vmatpush2.bf16.msra.mxu0 0
    %5627 = vmatprep.subr.bf16.mxu0 0
    %5628 = vmatpush2.bf16.msra.mxu0 0
    %5629 = vmatprep.subr.bf16.mxu0 0
    %5630 = vmatpush2.bf16.msra.mxu0 0
    %5631 = vmatprep.subr.bf16.mxu0 0
    %5632 = vmatpush2.bf16.msra.mxu0 0
    %5633 = vmatprep.subr.bf16.mxu0 0
    %5634 = vmatpush2.bf16.msra.mxu0 0
    %5635 = vmatprep.subr.bf16.mxu0 0
    %5636 = vmatpush2.bf16.msra.mxu0 0
    %5637 = vmatprep.mubr.bf16.mxu0 0
    %5638 = vmatmul.mubr.bf16.gmra.mxu0 %v5469
    %v5639 = vpop.f32.mrf.mxu0
    %v5640 = vadd.f32 %v3974, %v5639
    %v5641 = vpop.f32.mrf.mxu0
    %v5642 = vpop.f32.mrf.mxu0
    %v5643 = vpop.f32.mrf.mxu0
    %5644 = vdwg.mxu0
    %5645 = vmatprep.subr.bf16.mxu0 0
    %5646 = vmatpush1.bf16.msra.mxu0 0
    %5647 = vmatprep.subr.bf16.mxu0 0
    %5648 = vmatpush1.bf16.msra.mxu0 0
    %5649 = vmatprep.subr.bf16.mxu0 0
    %5650 = vmatpush1.bf16.msra.mxu0 0
    %5651 = vmatprep.subr.bf16.mxu0 0
    %5652 = vmatpush1.bf16.msra.mxu0 0
    %5653 = vmatprep.subr.bf16.mxu0 0
    %5654 = vmatpush1.bf16.msra.mxu0 0
    %5655 = vmatprep.subr.bf16.mxu0 0
    %5656 = vmatpush1.bf16.msra.mxu0 0
    %5657 = vmatprep.subr.bf16.mxu0 0
    %5658 = vmatpush1.bf16.msra.mxu0 0
    %5659 = vmatprep.subr.bf16.mxu0 0
    %5660 = vmatpush1.bf16.msra.mxu0 %v4029
    %5661 = vmatprep.subr.bf16.mxu0 0
    %5662 = vmatpush2.bf16.msra.mxu0 0
    %5663 = vmatprep.subr.bf16.mxu0 0
    %5664 = vmatpush2.bf16.msra.mxu0 0
    %5665 = vmatprep.subr.bf16.mxu0 0
    %5666 = vmatpush2.bf16.msra.mxu0 0
    %5667 = vmatprep.subr.bf16.mxu0 0
    %5668 = vmatpush2.bf16.msra.mxu0 0
    %5669 = vmatprep.subr.bf16.mxu0 0
    %5670 = vmatpush2.bf16.msra.mxu0 0
    %5671 = vmatprep.subr.bf16.mxu0 0
    %5672 = vmatpush2.bf16.msra.mxu0 0
    %5673 = vmatprep.subr.bf16.mxu0 0
    %5674 = vmatpush2.bf16.msra.mxu0 0
    %5675 = vmatprep.subr.bf16.mxu0 0
    %5676 = vmatpush2.bf16.msra.mxu0 0
    %5677 = vmatprep.mubr.bf16.mxu0 0
    %5678 = vmatmul.mubr.bf16.gmra.mxu0 %v5426
    %v5679 = vpop.f32.mrf.mxu0
    %v5680 = vadd.f32 %v4023, %v5679
    %v5681 = vpop.f32.mrf.mxu0
    %v5682 = vpop.f32.mrf.mxu0
    %v5683 = vpop.f32.mrf.mxu0
    %5684 = vdwg.mxu0
    %v5685 = vmul.f32 %v5517, %v5680
    %v5686 = vadd.f32 %v5640, %v5685
    %v5687 = vtanh.pop %v5686
    %v5688 = vsub.f32 1.0, %v5604
    %v5689 = vmul.f32 %v5688, %v5687
    %v5690 = vmul.f32 %v5604, %v5422
    %v5691 = vadd.f32 %v5689, %v5690
    %v5692 = vpack.c.bf16 %v3735, %v3735
    %v5693 = vpack.c.bf16 %v5691, %v5691
    %v5695 = vsel %vm3765, %v5693, 0
    %5697 = vmatprep.subr.bf16.mxu0 0
    %5698 = vmatpush1.bf16.msra.mxu0 0
    %5699 = vmatprep.subr.bf16.mxu0 0
    %5700 = vmatpush1.bf16.msra.mxu0 0
    %5701 = vmatprep.subr.bf16.mxu0 0
    %5702 = vmatpush1.bf16.msra.mxu0 0
    %5703 = vmatprep.subr.bf16.mxu0 0
    %5704 = vmatpush1.bf16.msra.mxu0 0
    %5705 = vmatprep.subr.bf16.mxu0 0
    %5706 = vmatpush1.bf16.msra.mxu0 0
    %5707 = vmatprep.subr.bf16.mxu0 0
    %5708 = vmatpush1.bf16.msra.mxu0 0
    %5709 = vmatprep.subr.bf16.mxu0 0
    %5710 = vmatpush1.bf16.msra.mxu0 0
    %5711 = vmatprep.subr.bf16.mxu0 0
    %5712 = vmatpush1.bf16.msra.mxu0 %v3763
    %5713 = vmatprep.subr.bf16.mxu0 0
    %5714 = vmatpush2.bf16.msra.mxu0 0
    %5715 = vmatprep.subr.bf16.mxu0 0
    %5716 = vmatpush2.bf16.msra.mxu0 0
    %5717 = vmatprep.subr.bf16.mxu0 0
    %5718 = vmatpush2.bf16.msra.mxu0 0
    %5719 = vmatprep.subr.bf16.mxu0 0
    %5720 = vmatpush2.bf16.msra.mxu0 0
    %5721 = vmatprep.subr.bf16.mxu0 0
    %5722 = vmatpush2.bf16.msra.mxu0 0
    %5723 = vmatprep.subr.bf16.mxu0 0
    %5724 = vmatpush2.bf16.msra.mxu0 0
    %5725 = vmatprep.subr.bf16.mxu0 0
    %5726 = vmatpush2.bf16.msra.mxu0 0
    %5727 = vmatprep.subr.bf16.mxu0 0
    %5728 = vmatpush2.bf16.msra.mxu0 0
    %5729 = vmatprep.mubr.bf16.mxu0 0
    %5730 = vmatmul.mubr.bf16.gmra.mxu0 %v5695
    %v5731 = vpop.f32.mrf.mxu0
    %v5732 = vadd.f32 0.0, %v5731
    %v5733 = vpop.f32.mrf.mxu0
    %v5734 = vpop.f32.mrf.mxu0
    %v5735 = vpop.f32.mrf.mxu0
    %5736 = vdwg.mxu0
    %v5738 = vsel %vm3151, %v5692, 0
    %5740 = vmatprep.subr.bf16.mxu0 0
    %5741 = vmatpush1.bf16.msra.mxu0 0
    %5742 = vmatprep.subr.bf16.mxu0 0
    %5743 = vmatpush1.bf16.msra.mxu0 0
    %5744 = vmatprep.subr.bf16.mxu0 0
    %5745 = vmatpush1.bf16.msra.mxu0 0
    %5746 = vmatprep.subr.bf16.mxu0 0
    %5747 = vmatpush1.bf16.msra.mxu0 0
    %5748 = vmatprep.subr.bf16.mxu0 0
    %5749 = vmatpush1.bf16.msra.mxu0 0
    %5750 = vmatprep.subr.bf16.mxu0 0
    %5751 = vmatpush1.bf16.msra.mxu0 0
    %5752 = vmatprep.subr.bf16.mxu0 0
    %5753 = vmatpush1.bf16.msra.mxu0 0
    %5754 = vmatprep.subr.bf16.mxu0 0
    %5755 = vmatpush1.bf16.msra.mxu0 %v3813
    %5756 = vmatprep.subr.bf16.mxu0 0
    %5757 = vmatpush2.bf16.msra.mxu0 0
    %5758 = vmatprep.subr.bf16.mxu0 0
    %5759 = vmatpush2.bf16.msra.mxu0 0
    %5760 = vmatprep.subr.bf16.mxu0 0
    %5761 = vmatpush2.bf16.msra.mxu0 0
    %5762 = vmatprep.subr.bf16.mxu0 0
    %5763 = vmatpush2.bf16.msra.mxu0 0
    %5764 = vmatprep.subr.bf16.mxu0 0
    %5765 = vmatpush2.bf16.msra.mxu0 0
    %5766 = vmatprep.subr.bf16.mxu0 0
    %5767 = vmatpush2.bf16.msra.mxu0 0
    %5768 = vmatprep.subr.bf16.mxu0 0
    %5769 = vmatpush2.bf16.msra.mxu0 0
    %5770 = vmatprep.subr.bf16.mxu0 0
    %5771 = vmatpush2.bf16.msra.mxu0 0
    %5772 = vmatprep.mubr.bf16.mxu0 0
    %5773 = vmatmul.mubr.bf16.gmra.mxu0 %v5738
    %v5774 = vpop.f32.mrf.mxu0
    %v5775 = vadd.f32 %v5732, %v5774
    %v5776 = vpop.f32.mrf.mxu0
    %v5777 = vpop.f32.mrf.mxu0
    %v5778 = vpop.f32.mrf.mxu0
    %5779 = vdwg.mxu0
    %v5780 = vadd.f32 %v5775, %v3859
    %v5781 = vxor.u32 %v5780, 2147483648
    %v5782 = vmul.f32 %v5781, 1.442695
    %v5783 = vpow.pop %v5782
    %v5784 = vadd.f32 %v5783, 1.0
    %v5785 = vrcp.pop %v5784
    %v5786 = vmul.f32 1.0, %v5785
    %5787 = vmatprep.subr.bf16.mxu0 0
    %5788 = vmatpush1.bf16.msra.mxu0 0
    %5789 = vmatprep.subr.bf16.mxu0 0
    %5790 = vmatpush1.bf16.msra.mxu0 0
    %5791 = vmatprep.subr.bf16.mxu0 0
    %5792 = vmatpush1.bf16.msra.mxu0 0
    %5793 = vmatprep.subr.bf16.mxu0 0
    %5794 = vmatpush1.bf16.msra.mxu0 0
    %5795 = vmatprep.subr.bf16.mxu0 0
    %5796 = vmatpush1.bf16.msra.mxu0 0
    %5797 = vmatprep.subr.bf16.mxu0 0
    %5798 = vmatpush1.bf16.msra.mxu0 0
    %5799 = vmatprep.subr.bf16.mxu0 0
    %5800 = vmatpush1.bf16.msra.mxu0 0
    %5801 = vmatprep.subr.bf16.mxu0 0
    %5802 = vmatpush1.bf16.msra.mxu0 %v3872
    %5803 = vmatprep.subr.bf16.mxu0 0
    %5804 = vmatpush2.bf16.msra.mxu0 0
    %5805 = vmatprep.subr.bf16.mxu0 0
    %5806 = vmatpush2.bf16.msra.mxu0 0
    %5807 = vmatprep.subr.bf16.mxu0 0
    %5808 = vmatpush2.bf16.msra.mxu0 0
    %5809 = vmatprep.subr.bf16.mxu0 0
    %5810 = vmatpush2.bf16.msra.mxu0 0
    %5811 = vmatprep.subr.bf16.mxu0 0
    %5812 = vmatpush2.bf16.msra.mxu0 0
    %5813 = vmatprep.subr.bf16.mxu0 0
    %5814 = vmatpush2.bf16.msra.mxu0 0
    %5815 = vmatprep.subr.bf16.mxu0 0
    %5816 = vmatpush2.bf16.msra.mxu0 0
    %5817 = vmatprep.subr.bf16.mxu0 0
    %5818 = vmatpush2.bf16.msra.mxu0 0
    %5819 = vmatprep.mubr.bf16.mxu0 0
    %5820 = vmatmul.mubr.bf16.gmra.mxu0 %v5695
    %v5821 = vpop.f32.mrf.mxu0
    %v5822 = vadd.f32 0.0, %v5821
    %v5823 = vpop.f32.mrf.mxu0
    %v5824 = vpop.f32.mrf.mxu0
    %v5825 = vpop.f32.mrf.mxu0
    %5826 = vdwg.mxu0
    %5827 = vmatprep.subr.bf16.mxu0 0
    %5828 = vmatpush1.bf16.msra.mxu0 0
    %5829 = vmatprep.subr.bf16.mxu0 0
    %5830 = vmatpush1.bf16.msra.mxu0 0
    %5831 = vmatprep.subr.bf16.mxu0 0
    %5832 = vmatpush1.bf16.msra.mxu0 0
    %5833 = vmatprep.subr.bf16.mxu0 0
    %5834 = vmatpush1.bf16.msra.mxu0 0
    %5835 = vmatprep.subr.bf16.mxu0 0
    %5836 = vmatpush1.bf16.msra.mxu0 0
    %5837 = vmatprep.subr.bf16.mxu0 0
    %5838 = vmatpush1.bf16.msra.mxu0 0
    %5839 = vmatprep.subr.bf16.mxu0 0
    %5840 = vmatpush1.bf16.msra.mxu0 0
    %5841 = vmatprep.subr.bf16.mxu0 0
    %5842 = vmatpush1.bf16.msra.mxu0 %v3915
    %5843 = vmatprep.subr.bf16.mxu0 0
    %5844 = vmatpush2.bf16.msra.mxu0 0
    %5845 = vmatprep.subr.bf16.mxu0 0
    %5846 = vmatpush2.bf16.msra.mxu0 0
    %5847 = vmatprep.subr.bf16.mxu0 0
    %5848 = vmatpush2.bf16.msra.mxu0 0
    %5849 = vmatprep.subr.bf16.mxu0 0
    %5850 = vmatpush2.bf16.msra.mxu0 0
    %5851 = vmatprep.subr.bf16.mxu0 0
    %5852 = vmatpush2.bf16.msra.mxu0 0
    %5853 = vmatprep.subr.bf16.mxu0 0
    %5854 = vmatpush2.bf16.msra.mxu0 0
    %5855 = vmatprep.subr.bf16.mxu0 0
    %5856 = vmatpush2.bf16.msra.mxu0 0
    %5857 = vmatprep.subr.bf16.mxu0 0
    %5858 = vmatpush2.bf16.msra.mxu0 0
    %5859 = vmatprep.mubr.bf16.mxu0 0
    %5860 = vmatmul.mubr.bf16.gmra.mxu0 %v5738
    %v5861 = vpop.f32.mrf.mxu0
    %v5862 = vadd.f32 %v5822, %v5861
    %v5863 = vpop.f32.mrf.mxu0
    %v5864 = vpop.f32.mrf.mxu0
    %v5865 = vpop.f32.mrf.mxu0
    %5866 = vdwg.mxu0
    %v5867 = vadd.f32 %v5862, %v3961
    %v5868 = vxor.u32 %v5867, 2147483648
    %v5869 = vmul.f32 %v5868, 1.442695
    %v5870 = vpow.pop %v5869
    %v5871 = vadd.f32 %v5870, 1.0
    %v5872 = vrcp.pop %v5871
    %v5873 = vmul.f32 1.0, %v5872
    %5874 = vmatprep.subr.bf16.mxu0 0
    %5875 = vmatpush1.bf16.msra.mxu0 0
    %5876 = vmatprep.subr.bf16.mxu0 0
    %5877 = vmatpush1.bf16.msra.mxu0 0
    %5878 = vmatprep.subr.bf16.mxu0 0
    %5879 = vmatpush1.bf16.msra.mxu0 0
    %5880 = vmatprep.subr.bf16.mxu0 0
    %5881 = vmatpush1.bf16.msra.mxu0 0
    %5882 = vmatprep.subr.bf16.mxu0 0
    %5883 = vmatpush1.bf16.msra.mxu0 0
    %5884 = vmatprep.subr.bf16.mxu0 0
    %5885 = vmatpush1.bf16.msra.mxu0 0
    %5886 = vmatprep.subr.bf16.mxu0 0
    %5887 = vmatpush1.bf16.msra.mxu0 0
    %5888 = vmatprep.subr.bf16.mxu0 0
    %5889 = vmatpush1.bf16.msra.mxu0 %v3977
    %5890 = vmatprep.subr.bf16.mxu0 0
    %5891 = vmatpush2.bf16.msra.mxu0 0
    %5892 = vmatprep.subr.bf16.mxu0 0
    %5893 = vmatpush2.bf16.msra.mxu0 0
    %5894 = vmatprep.subr.bf16.mxu0 0
    %5895 = vmatpush2.bf16.msra.mxu0 0
    %5896 = vmatprep.subr.bf16.mxu0 0
    %5897 = vmatpush2.bf16.msra.mxu0 0
    %5898 = vmatprep.subr.bf16.mxu0 0
    %5899 = vmatpush2.bf16.msra.mxu0 0
    %5900 = vmatprep.subr.bf16.mxu0 0
    %5901 = vmatpush2.bf16.msra.mxu0 0
    %5902 = vmatprep.subr.bf16.mxu0 0
    %5903 = vmatpush2.bf16.msra.mxu0 0
    %5904 = vmatprep.subr.bf16.mxu0 0
    %5905 = vmatpush2.bf16.msra.mxu0 0
    %5906 = vmatprep.mubr.bf16.mxu0 0
    %5907 = vmatmul.mubr.bf16.gmra.mxu0 %v5738
    %v5908 = vpop.f32.mrf.mxu0
    %v5909 = vadd.f32 %v3974, %v5908
    %v5910 = vpop.f32.mrf.mxu0
    %v5911 = vpop.f32.mrf.mxu0
    %v5912 = vpop.f32.mrf.mxu0
    %5913 = vdwg.mxu0
    %5914 = vmatprep.subr.bf16.mxu0 0
    %5915 = vmatpush1.bf16.msra.mxu0 0
    %5916 = vmatprep.subr.bf16.mxu0 0
    %5917 = vmatpush1.bf16.msra.mxu0 0
    %5918 = vmatprep.subr.bf16.mxu0 0
    %5919 = vmatpush1.bf16.msra.mxu0 0
    %5920 = vmatprep.subr.bf16.mxu0 0
    %5921 = vmatpush1.bf16.msra.mxu0 0
    %5922 = vmatprep.subr.bf16.mxu0 0
    %5923 = vmatpush1.bf16.msra.mxu0 0
    %5924 = vmatprep.subr.bf16.mxu0 0
    %5925 = vmatpush1.bf16.msra.mxu0 0
    %5926 = vmatprep.subr.bf16.mxu0 0
    %5927 = vmatpush1.bf16.msra.mxu0 0
    %5928 = vmatprep.subr.bf16.mxu0 0
    %5929 = vmatpush1.bf16.msra.mxu0 %v4029
    %5930 = vmatprep.subr.bf16.mxu0 0
    %5931 = vmatpush2.bf16.msra.mxu0 0
    %5932 = vmatprep.subr.bf16.mxu0 0
    %5933 = vmatpush2.bf16.msra.mxu0 0
    %5934 = vmatprep.subr.bf16.mxu0 0
    %5935 = vmatpush2.bf16.msra.mxu0 0
    %5936 = vmatprep.subr.bf16.mxu0 0
    %5937 = vmatpush2.bf16.msra.mxu0 0
    %5938 = vmatprep.subr.bf16.mxu0 0
    %5939 = vmatpush2.bf16.msra.mxu0 0
    %5940 = vmatprep.subr.bf16.mxu0 0
    %5941 = vmatpush2.bf16.msra.mxu0 0
    %5942 = vmatprep.subr.bf16.mxu0 0
    %5943 = vmatpush2.bf16.msra.mxu0 0
    %5944 = vmatprep.subr.bf16.mxu0 0
    %5945 = vmatpush2.bf16.msra.mxu0 0
    %5946 = vmatprep.mubr.bf16.mxu0 0
    %5947 = vmatmul.mubr.bf16.gmra.mxu0 %v5695
    %v5948 = vpop.f32.mrf.mxu0
    %v5949 = vadd.f32 %v4023, %v5948
    %v5950 = vpop.f32.mrf.mxu0
    %v5951 = vpop.f32.mrf.mxu0
    %v5952 = vpop.f32.mrf.mxu0
    %5953 = vdwg.mxu0
    %v5954 = vmul.f32 %v5786, %v5949
    %v5955 = vadd.f32 %v5909, %v5954
    %v5956 = vtanh.pop %v5955
    %v5957 = vsub.f32 1.0, %v5873
    %v5958 = vmul.f32 %v5957, %v5956
    %v5959 = vmul.f32 %v5873, %v5691
    %v5960 = vadd.f32 %v5958, %v5959
    %vm5961 = vcmask 123904
    %5962 = vst.msk [vmem:[#allocation4] sm:$0x3] %vm5961, %v5960
    %v5963 = vld [vmem:[%s7] sm:$0xf]
    %v5964 = vld [vmem:[%s7 + $0x4] sm:$0xf]
    %s5965 = scalar_lea.vmem %s7, 8
    %v5966 = vld [vmem:[%s5965] sm:$0xf]
    %v5967 = vld [vmem:[%s5965 + $0x4] sm:$0xf]
    %s5968 = scalar_lea.vmem %s7, 16
    %v5969 = vld [vmem:[%s5968] sm:$0xf]
    %v5970 = vld [vmem:[%s5968 + $0x4] sm:$0xf]
    %v5971 = vld [vmem:[%s8] sm:$0xf]
    %v5972 = vld [vmem:[%s8 + $0x4] sm:$0xf]
    %s5973 = scalar_lea.vmem %s8, 8
    %v5974 = vld [vmem:[%s5973] sm:$0xf]
    %v5975 = vld [vmem:[%s5973 + $0x4] sm:$0xf]
    %s5976 = scalar_lea.vmem %s8, 16
    %v5977 = vld [vmem:[%s5976] sm:$0xf]
    %v5978 = vld [vmem:[%s5976 + $0x4] sm:$0xf]
    %v5979 = vld [vmem:[%s9] sm:$0x1]
    %s5980 = scalar_lea.vmem %s9, 1
    %v5981 = vld [vmem:[%s5980] sm:$0x1]
    %s5982 = scalar_lea.vmem %s9, 2
    %v5983 = vld [vmem:[%s5982] sm:$0x1]
    %s5984 = scalar_lea.vmem %s9, 3
    %v5985 = vld [vmem:[%s5984] sm:$0x1]
    %s5986 = scalar_lea.vmem %s10, 2
    %v5987 = vld [vmem:[%s5986] sm:$0x3]
    %v5988 = vpack.c.bf16 %v5987, %v5987
    %v5991 = vunpack.c.l.b16 %v5971
    %v5992 = vunpack.c.l.b16 %v5972
    %v5993 = vpack.c.b16 %v5992, %v5991
    %v5996 = vsel %vm3765, %v5988, 0
    %5998 = vmatprep.subr.bf16.mxu0 0
    %5999 = vmatpush1.bf16.msra.mxu0 0
    %6000 = vmatprep.subr.bf16.mxu0 0
    %6001 = vmatpush1.bf16.msra.mxu0 0
    %6002 = vmatprep.subr.bf16.mxu0 0
    %6003 = vmatpush1.bf16.msra.mxu0 0
    %6004 = vmatprep.subr.bf16.mxu0 0
    %6005 = vmatpush1.bf16.msra.mxu0 0
    %6006 = vmatprep.subr.bf16.mxu0 0
    %6007 = vmatpush1.bf16.msra.mxu0 0
    %6008 = vmatprep.subr.bf16.mxu0 0
    %6009 = vmatpush1.bf16.msra.mxu0 0
    %6010 = vmatprep.subr.bf16.mxu0 0
    %6011 = vmatpush1.bf16.msra.mxu0 0
    %6012 = vmatprep.subr.bf16.mxu0 0
    %6013 = vmatpush1.bf16.msra.mxu0 %v5993
    %6014 = vmatprep.subr.bf16.mxu0 0
    %6015 = vmatpush2.bf16.msra.mxu0 0
    %6016 = vmatprep.subr.bf16.mxu0 0
    %6017 = vmatpush2.bf16.msra.mxu0 0
    %6018 = vmatprep.subr.bf16.mxu0 0
    %6019 = vmatpush2.bf16.msra.mxu0 0
    %6020 = vmatprep.subr.bf16.mxu0 0
    %6021 = vmatpush2.bf16.msra.mxu0 0
    %6022 = vmatprep.subr.bf16.mxu0 0
    %6023 = vmatpush2.bf16.msra.mxu0 0
    %6024 = vmatprep.subr.bf16.mxu0 0
    %6025 = vmatpush2.bf16.msra.mxu0 0
    %6026 = vmatprep.subr.bf16.mxu0 0
    %6027 = vmatpush2.bf16.msra.mxu0 0
    %6028 = vmatprep.subr.bf16.mxu0 0
    %6029 = vmatpush2.bf16.msra.mxu0 0
    %6030 = vmatprep.mubr.bf16.mxu0 0
    %6031 = vmatmul.mubr.bf16.gmra.mxu0 %v5996
    %v6032 = vpop.f32.mrf.mxu0
    %v6033 = vadd.f32 0.0, %v6032
    %v6034 = vpop.f32.mrf.mxu0
    %v6035 = vpop.f32.mrf.mxu0
    %v6036 = vpop.f32.mrf.mxu0
    %6037 = vdwg.mxu0
    %v6040 = vunpack.c.l.b16 %v5963
    %v6041 = vunpack.c.l.b16 %v5964
    %v6042 = vpack.c.b16 %v6041, %v6040
    %6044 = vmatprep.subr.bf16.mxu0 0
    %6045 = vmatpush1.bf16.msra.mxu0 0
    %6046 = vmatprep.subr.bf16.mxu0 0
    %6047 = vmatpush1.bf16.msra.mxu0 0
    %6048 = vmatprep.subr.bf16.mxu0 0
    %6049 = vmatpush1.bf16.msra.mxu0 0
    %6050 = vmatprep.subr.bf16.mxu0 0
    %6051 = vmatpush1.bf16.msra.mxu0 0
    %6052 = vmatprep.subr.bf16.mxu0 0
    %6053 = vmatpush1.bf16.msra.mxu0 0
    %6054 = vmatprep.subr.bf16.mxu0 0
    %6055 = vmatpush1.bf16.msra.mxu0 0
    %6056 = vmatprep.subr.bf16.mxu0 0
    %6057 = vmatpush1.bf16.msra.mxu0 0
    %6058 = vmatprep.subr.bf16.mxu0 0
    %6059 = vmatpush1.bf16.msra.mxu0 %v6042
    %6060 = vmatprep.subr.bf16.mxu0 0
    %6061 = vmatpush2.bf16.msra.mxu0 0
    %6062 = vmatprep.subr.bf16.mxu0 0
    %6063 = vmatpush2.bf16.msra.mxu0 0
    %6064 = vmatprep.subr.bf16.mxu0 0
    %6065 = vmatpush2.bf16.msra.mxu0 0
    %6066 = vmatprep.subr.bf16.mxu0 0
    %6067 = vmatpush2.bf16.msra.mxu0 0
    %6068 = vmatprep.subr.bf16.mxu0 0
    %6069 = vmatpush2.bf16.msra.mxu0 0
    %6070 = vmatprep.subr.bf16.mxu0 0
    %6071 = vmatpush2.bf16.msra.mxu0 0
    %6072 = vmatprep.subr.bf16.mxu0 0
    %6073 = vmatpush2.bf16.msra.mxu0 0
    %6074 = vmatprep.subr.bf16.mxu0 0
    %6075 = vmatpush2.bf16.msra.mxu0 0
    %6076 = vmatprep.mubr.bf16.mxu0 0
    %6077 = vmatmul.mubr.bf16.gmra.mxu0 %v4081
    %v6078 = vpop.f32.mrf.mxu0
    %v6079 = vadd.f32 %v6033, %v6078
    %v6080 = vpop.f32.mrf.mxu0
    %v6081 = vpop.f32.mrf.mxu0
    %v6082 = vpop.f32.mrf.mxu0
    %6083 = vdwg.mxu0
    %v6085 = vlaneseq
    %v6086 = vshrl.u32 %v6085, 7
    %v6087 = vsub.s32 0, %v6086
    %v6088 = vrot.slane %v5979, %v6087
    %v6090 = vadd.f32 %v6079, %v6088
    %v6091 = vxor.u32 %v6090, 2147483648
    %v6092 = vmul.f32 %v6091, 1.442695
    %v6093 = vpow.pop %v6092
    %v6094 = vadd.f32 %v6093, 1.0
    %v6095 = vrcp.pop %v6094
    %v6096 = vmul.f32 1.0, %v6095
    %v6099 = vunpack.c.l.b16 %v5974
    %v6100 = vunpack.c.l.b16 %v5975
    %v6101 = vpack.c.b16 %v6100, %v6099
    %6103 = vmatprep.subr.bf16.mxu0 0
    %6104 = vmatpush1.bf16.msra.mxu0 0
    %6105 = vmatprep.subr.bf16.mxu0 0
    %6106 = vmatpush1.bf16.msra.mxu0 0
    %6107 = vmatprep.subr.bf16.mxu0 0
    %6108 = vmatpush1.bf16.msra.mxu0 0
    %6109 = vmatprep.subr.bf16.mxu0 0
    %6110 = vmatpush1.bf16.msra.mxu0 0
    %6111 = vmatprep.subr.bf16.mxu0 0
    %6112 = vmatpush1.bf16.msra.mxu0 0
    %6113 = vmatprep.subr.bf16.mxu0 0
    %6114 = vmatpush1.bf16.msra.mxu0 0
    %6115 = vmatprep.subr.bf16.mxu0 0
    %6116 = vmatpush1.bf16.msra.mxu0 0
    %6117 = vmatprep.subr.bf16.mxu0 0
    %6118 = vmatpush1.bf16.msra.mxu0 %v6101
    %6119 = vmatprep.subr.bf16.mxu0 0
    %6120 = vmatpush2.bf16.msra.mxu0 0
    %6121 = vmatprep.subr.bf16.mxu0 0
    %6122 = vmatpush2.bf16.msra.mxu0 0
    %6123 = vmatprep.subr.bf16.mxu0 0
    %6124 = vmatpush2.bf16.msra.mxu0 0
    %6125 = vmatprep.subr.bf16.mxu0 0
    %6126 = vmatpush2.bf16.msra.mxu0 0
    %6127 = vmatprep.subr.bf16.mxu0 0
    %6128 = vmatpush2.bf16.msra.mxu0 0
    %6129 = vmatprep.subr.bf16.mxu0 0
    %6130 = vmatpush2.bf16.msra.mxu0 0
    %6131 = vmatprep.subr.bf16.mxu0 0
    %6132 = vmatpush2.bf16.msra.mxu0 0
    %6133 = vmatprep.subr.bf16.mxu0 0
    %6134 = vmatpush2.bf16.msra.mxu0 0
    %6135 = vmatprep.mubr.bf16.mxu0 0
    %6136 = vmatmul.mubr.bf16.gmra.mxu0 %v5996
    %v6137 = vpop.f32.mrf.mxu0
    %v6138 = vadd.f32 0.0, %v6137
    %v6139 = vpop.f32.mrf.mxu0
    %v6140 = vpop.f32.mrf.mxu0
    %v6141 = vpop.f32.mrf.mxu0
    %6142 = vdwg.mxu0
    %v6145 = vunpack.c.l.b16 %v5966
    %v6146 = vunpack.c.l.b16 %v5967
    %v6147 = vpack.c.b16 %v6146, %v6145
    %6149 = vmatprep.subr.bf16.mxu0 0
    %6150 = vmatpush1.bf16.msra.mxu0 0
    %6151 = vmatprep.subr.bf16.mxu0 0
    %6152 = vmatpush1.bf16.msra.mxu0 0
    %6153 = vmatprep.subr.bf16.mxu0 0
    %6154 = vmatpush1.bf16.msra.mxu0 0
    %6155 = vmatprep.subr.bf16.mxu0 0
    %6156 = vmatpush1.bf16.msra.mxu0 0
    %6157 = vmatprep.subr.bf16.mxu0 0
    %6158 = vmatpush1.bf16.msra.mxu0 0
    %6159 = vmatprep.subr.bf16.mxu0 0
    %6160 = vmatpush1.bf16.msra.mxu0 0
    %6161 = vmatprep.subr.bf16.mxu0 0
    %6162 = vmatpush1.bf16.msra.mxu0 0
    %6163 = vmatprep.subr.bf16.mxu0 0
    %6164 = vmatpush1.bf16.msra.mxu0 %v6147
    %6165 = vmatprep.subr.bf16.mxu0 0
    %6166 = vmatpush2.bf16.msra.mxu0 0
    %6167 = vmatprep.subr.bf16.mxu0 0
    %6168 = vmatpush2.bf16.msra.mxu0 0
    %6169 = vmatprep.subr.bf16.mxu0 0
    %6170 = vmatpush2.bf16.msra.mxu0 0
    %6171 = vmatprep.subr.bf16.mxu0 0
    %6172 = vmatpush2.bf16.msra.mxu0 0
    %6173 = vmatprep.subr.bf16.mxu0 0
    %6174 = vmatpush2.bf16.msra.mxu0 0
    %6175 = vmatprep.subr.bf16.mxu0 0
    %6176 = vmatpush2.bf16.msra.mxu0 0
    %6177 = vmatprep.subr.bf16.mxu0 0
    %6178 = vmatpush2.bf16.msra.mxu0 0
    %6179 = vmatprep.subr.bf16.mxu0 0
    %6180 = vmatpush2.bf16.msra.mxu0 0
    %6181 = vmatprep.mubr.bf16.mxu0 0
    %6182 = vmatmul.mubr.bf16.gmra.mxu0 %v4081
    %v6183 = vpop.f32.mrf.mxu0
    %v6184 = vadd.f32 %v6138, %v6183
    %v6185 = vpop.f32.mrf.mxu0
    %v6186 = vpop.f32.mrf.mxu0
    %v6187 = vpop.f32.mrf.mxu0
    %6188 = vdwg.mxu0
    %v6190 = vlaneseq
    %v6191 = vshrl.u32 %v6190, 7
    %v6192 = vsub.s32 0, %v6191
    %v6193 = vrot.slane %v5981, %v6192
    %v6195 = vadd.f32 %v6184, %v6193
    %v6196 = vxor.u32 %v6195, 2147483648
    %v6197 = vmul.f32 %v6196, 1.442695
    %v6198 = vpow.pop %v6197
    %v6199 = vadd.f32 %v6198, 1.0
    %v6200 = vrcp.pop %v6199
    %v6201 = vmul.f32 1.0, %v6200
    %v6203 = vlaneseq
    %v6204 = vshrl.u32 %v6203, 7
    %v6205 = vsub.s32 0, %v6204
    %v6206 = vrot.slane %v5983, %v6205
    %v6210 = vunpack.c.l.b16 %v5969
    %v6211 = vunpack.c.l.b16 %v5970
    %v6212 = vpack.c.b16 %v6211, %v6210
    %6214 = vmatprep.subr.bf16.mxu0 0
    %6215 = vmatpush1.bf16.msra.mxu0 0
    %6216 = vmatprep.subr.bf16.mxu0 0
    %6217 = vmatpush1.bf16.msra.mxu0 0
    %6218 = vmatprep.subr.bf16.mxu0 0
    %6219 = vmatpush1.bf16.msra.mxu0 0
    %6220 = vmatprep.subr.bf16.mxu0 0
    %6221 = vmatpush1.bf16.msra.mxu0 0
    %6222 = vmatprep.subr.bf16.mxu0 0
    %6223 = vmatpush1.bf16.msra.mxu0 0
    %6224 = vmatprep.subr.bf16.mxu0 0
    %6225 = vmatpush1.bf16.msra.mxu0 0
    %6226 = vmatprep.subr.bf16.mxu0 0
    %6227 = vmatpush1.bf16.msra.mxu0 0
    %6228 = vmatprep.subr.bf16.mxu0 0
    %6229 = vmatpush1.bf16.msra.mxu0 %v6212
    %6230 = vmatprep.subr.bf16.mxu0 0
    %6231 = vmatpush2.bf16.msra.mxu0 0
    %6232 = vmatprep.subr.bf16.mxu0 0
    %6233 = vmatpush2.bf16.msra.mxu0 0
    %6234 = vmatprep.subr.bf16.mxu0 0
    %6235 = vmatpush2.bf16.msra.mxu0 0
    %6236 = vmatprep.subr.bf16.mxu0 0
    %6237 = vmatpush2.bf16.msra.mxu0 0
    %6238 = vmatprep.subr.bf16.mxu0 0
    %6239 = vmatpush2.bf16.msra.mxu0 0
    %6240 = vmatprep.subr.bf16.mxu0 0
    %6241 = vmatpush2.bf16.msra.mxu0 0
    %6242 = vmatprep.subr.bf16.mxu0 0
    %6243 = vmatpush2.bf16.msra.mxu0 0
    %6244 = vmatprep.subr.bf16.mxu0 0
    %6245 = vmatpush2.bf16.msra.mxu0 0
    %6246 = vmatprep.mubr.bf16.mxu0 0
    %6247 = vmatmul.mubr.bf16.gmra.mxu0 %v4081
    %v6248 = vpop.f32.mrf.mxu0
    %v6249 = vadd.f32 %v6206, %v6248
    %v6250 = vpop.f32.mrf.mxu0
    %v6251 = vpop.f32.mrf.mxu0
    %v6252 = vpop.f32.mrf.mxu0
    %6253 = vdwg.mxu0
    %v6255 = vlaneseq
    %v6256 = vshrl.u32 %v6255, 7
    %v6257 = vsub.s32 0, %v6256
    %v6258 = vrot.slane %v5985, %v6257
    %v6262 = vunpack.c.l.b16 %v5977
    %v6263 = vunpack.c.l.b16 %v5978
    %v6264 = vpack.c.b16 %v6263, %v6262
    %6266 = vmatprep.subr.bf16.mxu0 0
    %6267 = vmatpush1.bf16.msra.mxu0 0
    %6268 = vmatprep.subr.bf16.mxu0 0
    %6269 = vmatpush1.bf16.msra.mxu0 0
    %6270 = vmatprep.subr.bf16.mxu0 0
    %6271 = vmatpush1.bf16.msra.mxu0 0
    %6272 = vmatprep.subr.bf16.mxu0 0
    %6273 = vmatpush1.bf16.msra.mxu0 0
    %6274 = vmatprep.subr.bf16.mxu0 0
    %6275 = vmatpush1.bf16.msra.mxu0 0
    %6276 = vmatprep.subr.bf16.mxu0 0
    %6277 = vmatpush1.bf16.msra.mxu0 0
    %6278 = vmatprep.subr.bf16.mxu0 0
    %6279 = vmatpush1.bf16.msra.mxu0 0
    %6280 = vmatprep.subr.bf16.mxu0 0
    %6281 = vmatpush1.bf16.msra.mxu0 %v6264
    %6282 = vmatprep.subr.bf16.mxu0 0
    %6283 = vmatpush2.bf16.msra.mxu0 0
    %6284 = vmatprep.subr.bf16.mxu0 0
    %6285 = vmatpush2.bf16.msra.mxu0 0
    %6286 = vmatprep.subr.bf16.mxu0 0
    %6287 = vmatpush2.bf16.msra.mxu0 0
    %6288 = vmatprep.subr.bf16.mxu0 0
    %6289 = vmatpush2.bf16.msra.mxu0 0
    %6290 = vmatprep.subr.bf16.mxu0 0
    %6291 = vmatpush2.bf16.msra.mxu0 0
    %6292 = vmatprep.subr.bf16.mxu0 0
    %6293 = vmatpush2.bf16.msra.mxu0 0
    %6294 = vmatprep.subr.bf16.mxu0 0
    %6295 = vmatpush2.bf16.msra.mxu0 0
    %6296 = vmatprep.subr.bf16.mxu0 0
    %6297 = vmatpush2.bf16.msra.mxu0 0
    %6298 = vmatprep.mubr.bf16.mxu0 0
    %6299 = vmatmul.mubr.bf16.gmra.mxu0 %v5996
    %v6300 = vpop.f32.mrf.mxu0
    %v6301 = vadd.f32 %v6258, %v6300
    %v6302 = vpop.f32.mrf.mxu0
    %v6303 = vpop.f32.mrf.mxu0
    %v6304 = vpop.f32.mrf.mxu0
    %6305 = vdwg.mxu0
    %v6306 = vmul.f32 %v6096, %v6301
    %v6307 = vadd.f32 %v6249, %v6306
    %v6308 = vtanh.pop %v6307
    %v6309 = vsub.f32 1.0, %v6201
    %v6310 = vmul.f32 %v6309, %v6308
    %v6311 = vmul.f32 %v6201, %v5987
    %v6312 = vadd.f32 %v6310, %v6311
    %v6313 = vpack.c.bf16 %v6312, %v6312
    %v6315 = vsel %vm3765, %v6313, 0
    %6317 = vmatprep.subr.bf16.mxu0 0
    %6318 = vmatpush1.bf16.msra.mxu0 0
    %6319 = vmatprep.subr.bf16.mxu0 0
    %6320 = vmatpush1.bf16.msra.mxu0 0
    %6321 = vmatprep.subr.bf16.mxu0 0
    %6322 = vmatpush1.bf16.msra.mxu0 0
    %6323 = vmatprep.subr.bf16.mxu0 0
    %6324 = vmatpush1.bf16.msra.mxu0 0
    %6325 = vmatprep.subr.bf16.mxu0 0
    %6326 = vmatpush1.bf16.msra.mxu0 0
    %6327 = vmatprep.subr.bf16.mxu0 0
    %6328 = vmatpush1.bf16.msra.mxu0 0
    %6329 = vmatprep.subr.bf16.mxu0 0
    %6330 = vmatpush1.bf16.msra.mxu0 0
    %6331 = vmatprep.subr.bf16.mxu0 0
    %6332 = vmatpush1.bf16.msra.mxu0 %v5993
    %6333 = vmatprep.subr.bf16.mxu0 0
    %6334 = vmatpush2.bf16.msra.mxu0 0
    %6335 = vmatprep.subr.bf16.mxu0 0
    %6336 = vmatpush2.bf16.msra.mxu0 0
    %6337 = vmatprep.subr.bf16.mxu0 0
    %6338 = vmatpush2.bf16.msra.mxu0 0
    %6339 = vmatprep.subr.bf16.mxu0 0
    %6340 = vmatpush2.bf16.msra.mxu0 0
    %6341 = vmatprep.subr.bf16.mxu0 0
    %6342 = vmatpush2.bf16.msra.mxu0 0
    %6343 = vmatprep.subr.bf16.mxu0 0
    %6344 = vmatpush2.bf16.msra.mxu0 0
    %6345 = vmatprep.subr.bf16.mxu0 0
    %6346 = vmatpush2.bf16.msra.mxu0 0
    %6347 = vmatprep.subr.bf16.mxu0 0
    %6348 = vmatpush2.bf16.msra.mxu0 0
    %6349 = vmatprep.mubr.bf16.mxu0 0
    %6350 = vmatmul.mubr.bf16.gmra.mxu0 %v6315
    %v6351 = vpop.f32.mrf.mxu0
    %v6352 = vadd.f32 0.0, %v6351
    %v6353 = vpop.f32.mrf.mxu0
    %v6354 = vpop.f32.mrf.mxu0
    %v6355 = vpop.f32.mrf.mxu0
    %6356 = vdwg.mxu0
    %6357 = vmatprep.subr.bf16.mxu0 0
    %6358 = vmatpush1.bf16.msra.mxu0 0
    %6359 = vmatprep.subr.bf16.mxu0 0
    %6360 = vmatpush1.bf16.msra.mxu0 0
    %6361 = vmatprep.subr.bf16.mxu0 0
    %6362 = vmatpush1.bf16.msra.mxu0 0
    %6363 = vmatprep.subr.bf16.mxu0 0
    %6364 = vmatpush1.bf16.msra.mxu0 0
    %6365 = vmatprep.subr.bf16.mxu0 0
    %6366 = vmatpush1.bf16.msra.mxu0 0
    %6367 = vmatprep.subr.bf16.mxu0 0
    %6368 = vmatpush1.bf16.msra.mxu0 0
    %6369 = vmatprep.subr.bf16.mxu0 0
    %6370 = vmatpush1.bf16.msra.mxu0 0
    %6371 = vmatprep.subr.bf16.mxu0 0
    %6372 = vmatpush1.bf16.msra.mxu0 %v6042
    %6373 = vmatprep.subr.bf16.mxu0 0
    %6374 = vmatpush2.bf16.msra.mxu0 0
    %6375 = vmatprep.subr.bf16.mxu0 0
    %6376 = vmatpush2.bf16.msra.mxu0 0
    %6377 = vmatprep.subr.bf16.mxu0 0
    %6378 = vmatpush2.bf16.msra.mxu0 0
    %6379 = vmatprep.subr.bf16.mxu0 0
    %6380 = vmatpush2.bf16.msra.mxu0 0
    %6381 = vmatprep.subr.bf16.mxu0 0
    %6382 = vmatpush2.bf16.msra.mxu0 0
    %6383 = vmatprep.subr.bf16.mxu0 0
    %6384 = vmatpush2.bf16.msra.mxu0 0
    %6385 = vmatprep.subr.bf16.mxu0 0
    %6386 = vmatpush2.bf16.msra.mxu0 0
    %6387 = vmatprep.subr.bf16.mxu0 0
    %6388 = vmatpush2.bf16.msra.mxu0 0
    %6389 = vmatprep.mubr.bf16.mxu0 0
    %6390 = vmatmul.mubr.bf16.gmra.mxu0 %v4350
    %v6391 = vpop.f32.mrf.mxu0
    %v6392 = vadd.f32 %v6352, %v6391
    %v6393 = vpop.f32.mrf.mxu0
    %v6394 = vpop.f32.mrf.mxu0
    %v6395 = vpop.f32.mrf.mxu0
    %6396 = vdwg.mxu0
    %v6397 = vadd.f32 %v6392, %v6088
    %v6398 = vxor.u32 %v6397, 2147483648
    %v6399 = vmul.f32 %v6398, 1.442695
    %v6400 = vpow.pop %v6399
    %v6401 = vadd.f32 %v6400, 1.0
    %v6402 = vrcp.pop %v6401
    %v6403 = vmul.f32 1.0, %v6402
    %6404 = vmatprep.subr.bf16.mxu0 0
    %6405 = vmatpush1.bf16.msra.mxu0 0
    %6406 = vmatprep.subr.bf16.mxu0 0
    %6407 = vmatpush1.bf16.msra.mxu0 0
    %6408 = vmatprep.subr.bf16.mxu0 0
    %6409 = vmatpush1.bf16.msra.mxu0 0
    %6410 = vmatprep.subr.bf16.mxu0 0
    %6411 = vmatpush1.bf16.msra.mxu0 0
    %6412 = vmatprep.subr.bf16.mxu0 0
    %6413 = vmatpush1.bf16.msra.mxu0 0
    %6414 = vmatprep.subr.bf16.mxu0 0
    %6415 = vmatpush1.bf16.msra.mxu0 0
    %6416 = vmatprep.subr.bf16.mxu0 0
    %6417 = vmatpush1.bf16.msra.mxu0 0
    %6418 = vmatprep.subr.bf16.mxu0 0
    %6419 = vmatpush1.bf16.msra.mxu0 %v6101
    %6420 = vmatprep.subr.bf16.mxu0 0
    %6421 = vmatpush2.bf16.msra.mxu0 0
    %6422 = vmatprep.subr.bf16.mxu0 0
    %6423 = vmatpush2.bf16.msra.mxu0 0
    %6424 = vmatprep.subr.bf16.mxu0 0
    %6425 = vmatpush2.bf16.msra.mxu0 0
    %6426 = vmatprep.subr.bf16.mxu0 0
    %6427 = vmatpush2.bf16.msra.mxu0 0
    %6428 = vmatprep.subr.bf16.mxu0 0
    %6429 = vmatpush2.bf16.msra.mxu0 0
    %6430 = vmatprep.subr.bf16.mxu0 0
    %6431 = vmatpush2.bf16.msra.mxu0 0
    %6432 = vmatprep.subr.bf16.mxu0 0
    %6433 = vmatpush2.bf16.msra.mxu0 0
    %6434 = vmatprep.subr.bf16.mxu0 0
    %6435 = vmatpush2.bf16.msra.mxu0 0
    %6436 = vmatprep.mubr.bf16.mxu0 0
    %6437 = vmatmul.mubr.bf16.gmra.mxu0 %v6315
    %v6438 = vpop.f32.mrf.mxu0
    %v6439 = vadd.f32 0.0, %v6438
    %v6440 = vpop.f32.mrf.mxu0
    %v6441 = vpop.f32.mrf.mxu0
    %v6442 = vpop.f32.mrf.mxu0
    %6443 = vdwg.mxu0
    %6444 = vmatprep.subr.bf16.mxu0 0
    %6445 = vmatpush1.bf16.msra.mxu0 0
    %6446 = vmatprep.subr.bf16.mxu0 0
    %6447 = vmatpush1.bf16.msra.mxu0 0
    %6448 = vmatprep.subr.bf16.mxu0 0
    %6449 = vmatpush1.bf16.msra.mxu0 0
    %6450 = vmatprep.subr.bf16.mxu0 0
    %6451 = vmatpush1.bf16.msra.mxu0 0
    %6452 = vmatprep.subr.bf16.mxu0 0
    %6453 = vmatpush1.bf16.msra.mxu0 0
    %6454 = vmatprep.subr.bf16.mxu0 0
    %6455 = vmatpush1.bf16.msra.mxu0 0
    %6456 = vmatprep.subr.bf16.mxu0 0
    %6457 = vmatpush1.bf16.msra.mxu0 0
    %6458 = vmatprep.subr.bf16.mxu0 0
    %6459 = vmatpush1.bf16.msra.mxu0 %v6147
    %6460 = vmatprep.subr.bf16.mxu0 0
    %6461 = vmatpush2.bf16.msra.mxu0 0
    %6462 = vmatprep.subr.bf16.mxu0 0
    %6463 = vmatpush2.bf16.msra.mxu0 0
    %6464 = vmatprep.subr.bf16.mxu0 0
    %6465 = vmatpush2.bf16.msra.mxu0 0
    %6466 = vmatprep.subr.bf16.mxu0 0
    %6467 = vmatpush2.bf16.msra.mxu0 0
    %6468 = vmatprep.subr.bf16.mxu0 0
    %6469 = vmatpush2.bf16.msra.mxu0 0
    %6470 = vmatprep.subr.bf16.mxu0 0
    %6471 = vmatpush2.bf16.msra.mxu0 0
    %6472 = vmatprep.subr.bf16.mxu0 0
    %6473 = vmatpush2.bf16.msra.mxu0 0
    %6474 = vmatprep.subr.bf16.mxu0 0
    %6475 = vmatpush2.bf16.msra.mxu0 0
    %6476 = vmatprep.mubr.bf16.mxu0 0
    %6477 = vmatmul.mubr.bf16.gmra.mxu0 %v4350
    %v6478 = vpop.f32.mrf.mxu0
    %v6479 = vadd.f32 %v6439, %v6478
    %v6480 = vpop.f32.mrf.mxu0
    %v6481 = vpop.f32.mrf.mxu0
    %v6482 = vpop.f32.mrf.mxu0
    %6483 = vdwg.mxu0
    %v6484 = vadd.f32 %v6479, %v6193
    %v6485 = vxor.u32 %v6484, 2147483648
    %v6486 = vmul.f32 %v6485, 1.442695
    %v6487 = vpow.pop %v6486
    %v6488 = vadd.f32 %v6487, 1.0
    %v6489 = vrcp.pop %v6488
    %v6490 = vmul.f32 1.0, %v6489
    %6491 = vmatprep.subr.bf16.mxu0 0
    %6492 = vmatpush1.bf16.msra.mxu0 0
    %6493 = vmatprep.subr.bf16.mxu0 0
    %6494 = vmatpush1.bf16.msra.mxu0 0
    %6495 = vmatprep.subr.bf16.mxu0 0
    %6496 = vmatpush1.bf16.msra.mxu0 0
    %6497 = vmatprep.subr.bf16.mxu0 0
    %6498 = vmatpush1.bf16.msra.mxu0 0
    %6499 = vmatprep.subr.bf16.mxu0 0
    %6500 = vmatpush1.bf16.msra.mxu0 0
    %6501 = vmatprep.subr.bf16.mxu0 0
    %6502 = vmatpush1.bf16.msra.mxu0 0
    %6503 = vmatprep.subr.bf16.mxu0 0
    %6504 = vmatpush1.bf16.msra.mxu0 0
    %6505 = vmatprep.subr.bf16.mxu0 0
    %6506 = vmatpush1.bf16.msra.mxu0 %v6212
    %6507 = vmatprep.subr.bf16.mxu0 0
    %6508 = vmatpush2.bf16.msra.mxu0 0
    %6509 = vmatprep.subr.bf16.mxu0 0
    %6510 = vmatpush2.bf16.msra.mxu0 0
    %6511 = vmatprep.subr.bf16.mxu0 0
    %6512 = vmatpush2.bf16.msra.mxu0 0
    %6513 = vmatprep.subr.bf16.mxu0 0
    %6514 = vmatpush2.bf16.msra.mxu0 0
    %6515 = vmatprep.subr.bf16.mxu0 0
    %6516 = vmatpush2.bf16.msra.mxu0 0
    %6517 = vmatprep.subr.bf16.mxu0 0
    %6518 = vmatpush2.bf16.msra.mxu0 0
    %6519 = vmatprep.subr.bf16.mxu0 0
    %6520 = vmatpush2.bf16.msra.mxu0 0
    %6521 = vmatprep.subr.bf16.mxu0 0
    %6522 = vmatpush2.bf16.msra.mxu0 0
    %6523 = vmatprep.mubr.bf16.mxu0 0
    %6524 = vmatmul.mubr.bf16.gmra.mxu0 %v4350
    %v6525 = vpop.f32.mrf.mxu0
    %v6526 = vadd.f32 %v6206, %v6525
    %v6527 = vpop.f32.mrf.mxu0
    %v6528 = vpop.f32.mrf.mxu0
    %v6529 = vpop.f32.mrf.mxu0
    %6530 = vdwg.mxu0
    %6531 = vmatprep.subr.bf16.mxu0 0
    %6532 = vmatpush1.bf16.msra.mxu0 0
    %6533 = vmatprep.subr.bf16.mxu0 0
    %6534 = vmatpush1.bf16.msra.mxu0 0
    %6535 = vmatprep.subr.bf16.mxu0 0
    %6536 = vmatpush1.bf16.msra.mxu0 0
    %6537 = vmatprep.subr.bf16.mxu0 0
    %6538 = vmatpush1.bf16.msra.mxu0 0
    %6539 = vmatprep.subr.bf16.mxu0 0
    %6540 = vmatpush1.bf16.msra.mxu0 0
    %6541 = vmatprep.subr.bf16.mxu0 0
    %6542 = vmatpush1.bf16.msra.mxu0 0
    %6543 = vmatprep.subr.bf16.mxu0 0
    %6544 = vmatpush1.bf16.msra.mxu0 0
    %6545 = vmatprep.subr.bf16.mxu0 0
    %6546 = vmatpush1.bf16.msra.mxu0 %v6264
    %6547 = vmatprep.subr.bf16.mxu0 0
    %6548 = vmatpush2.bf16.msra.mxu0 0
    %6549 = vmatprep.subr.bf16.mxu0 0
    %6550 = vmatpush2.bf16.msra.mxu0 0
    %6551 = vmatprep.subr.bf16.mxu0 0
    %6552 = vmatpush2.bf16.msra.mxu0 0
    %6553 = vmatprep.subr.bf16.mxu0 0
    %6554 = vmatpush2.bf16.msra.mxu0 0
    %6555 = vmatprep.subr.bf16.mxu0 0
    %6556 = vmatpush2.bf16.msra.mxu0 0
    %6557 = vmatprep.subr.bf16.mxu0 0
    %6558 = vmatpush2.bf16.msra.mxu0 0
    %6559 = vmatprep.subr.bf16.mxu0 0
    %6560 = vmatpush2.bf16.msra.mxu0 0
    %6561 = vmatprep.subr.bf16.mxu0 0
    %6562 = vmatpush2.bf16.msra.mxu0 0
    %6563 = vmatprep.mubr.bf16.mxu0 0
    %6564 = vmatmul.mubr.bf16.gmra.mxu0 %v6315
    %v6565 = vpop.f32.mrf.mxu0
    %v6566 = vadd.f32 %v6258, %v6565
    %v6567 = vpop.f32.mrf.mxu0
    %v6568 = vpop.f32.mrf.mxu0
    %v6569 = vpop.f32.mrf.mxu0
    %6570 = vdwg.mxu0
    %v6571 = vmul.f32 %v6403, %v6566
    %v6572 = vadd.f32 %v6526, %v6571
    %v6573 = vtanh.pop %v6572
    %v6574 = vsub.f32 1.0, %v6490
    %v6575 = vmul.f32 %v6574, %v6573
    %v6576 = vmul.f32 %v6490, %v6312
    %v6577 = vadd.f32 %v6575, %v6576
    %v6578 = vpack.c.bf16 %v6577, %v6577
    %v6580 = vsel %vm3765, %v6578, 0
    %6582 = vmatprep.subr.bf16.mxu0 0
    %6583 = vmatpush1.bf16.msra.mxu0 0
    %6584 = vmatprep.subr.bf16.mxu0 0
    %6585 = vmatpush1.bf16.msra.mxu0 0
    %6586 = vmatprep.subr.bf16.mxu0 0
    %6587 = vmatpush1.bf16.msra.mxu0 0
    %6588 = vmatprep.subr.bf16.mxu0 0
    %6589 = vmatpush1.bf16.msra.mxu0 0
    %6590 = vmatprep.subr.bf16.mxu0 0
    %6591 = vmatpush1.bf16.msra.mxu0 0
    %6592 = vmatprep.subr.bf16.mxu0 0
    %6593 = vmatpush1.bf16.msra.mxu0 0
    %6594 = vmatprep.subr.bf16.mxu0 0
    %6595 = vmatpush1.bf16.msra.mxu0 0
    %6596 = vmatprep.subr.bf16.mxu0 0
    %6597 = vmatpush1.bf16.msra.mxu0 %v5993
    %6598 = vmatprep.subr.bf16.mxu0 0
    %6599 = vmatpush2.bf16.msra.mxu0 0
    %6600 = vmatprep.subr.bf16.mxu0 0
    %6601 = vmatpush2.bf16.msra.mxu0 0
    %6602 = vmatprep.subr.bf16.mxu0 0
    %6603 = vmatpush2.bf16.msra.mxu0 0
    %6604 = vmatprep.subr.bf16.mxu0 0
    %6605 = vmatpush2.bf16.msra.mxu0 0
    %6606 = vmatprep.subr.bf16.mxu0 0
    %6607 = vmatpush2.bf16.msra.mxu0 0
    %6608 = vmatprep.subr.bf16.mxu0 0
    %6609 = vmatpush2.bf16.msra.mxu0 0
    %6610 = vmatprep.subr.bf16.mxu0 0
    %6611 = vmatpush2.bf16.msra.mxu0 0
    %6612 = vmatprep.subr.bf16.mxu0 0
    %6613 = vmatpush2.bf16.msra.mxu0 0
    %6614 = vmatprep.mubr.bf16.mxu0 0
    %6615 = vmatmul.mubr.bf16.gmra.mxu0 %v6580
    %v6616 = vpop.f32.mrf.mxu0
    %v6617 = vadd.f32 0.0, %v6616
    %v6618 = vpop.f32.mrf.mxu0
    %v6619 = vpop.f32.mrf.mxu0
    %v6620 = vpop.f32.mrf.mxu0
    %6621 = vdwg.mxu0
    %6622 = vmatprep.subr.bf16.mxu0 0
    %6623 = vmatpush1.bf16.msra.mxu0 0
    %6624 = vmatprep.subr.bf16.mxu0 0
    %6625 = vmatpush1.bf16.msra.mxu0 0
    %6626 = vmatprep.subr.bf16.mxu0 0
    %6627 = vmatpush1.bf16.msra.mxu0 0
    %6628 = vmatprep.subr.bf16.mxu0 0
    %6629 = vmatpush1.bf16.msra.mxu0 0
    %6630 = vmatprep.subr.bf16.mxu0 0
    %6631 = vmatpush1.bf16.msra.mxu0 0
    %6632 = vmatprep.subr.bf16.mxu0 0
    %6633 = vmatpush1.bf16.msra.mxu0 0
    %6634 = vmatprep.subr.bf16.mxu0 0
    %6635 = vmatpush1.bf16.msra.mxu0 0
    %6636 = vmatprep.subr.bf16.mxu0 0
    %6637 = vmatpush1.bf16.msra.mxu0 %v6042
    %6638 = vmatprep.subr.bf16.mxu0 0
    %6639 = vmatpush2.bf16.msra.mxu0 0
    %6640 = vmatprep.subr.bf16.mxu0 0
    %6641 = vmatpush2.bf16.msra.mxu0 0
    %6642 = vmatprep.subr.bf16.mxu0 0
    %6643 = vmatpush2.bf16.msra.mxu0 0
    %6644 = vmatprep.subr.bf16.mxu0 0
    %6645 = vmatpush2.bf16.msra.mxu0 0
    %6646 = vmatprep.subr.bf16.mxu0 0
    %6647 = vmatpush2.bf16.msra.mxu0 0
    %6648 = vmatprep.subr.bf16.mxu0 0
    %6649 = vmatpush2.bf16.msra.mxu0 0
    %6650 = vmatprep.subr.bf16.mxu0 0
    %6651 = vmatpush2.bf16.msra.mxu0 0
    %6652 = vmatprep.subr.bf16.mxu0 0
    %6653 = vmatpush2.bf16.msra.mxu0 0
    %6654 = vmatprep.mubr.bf16.mxu0 0
    %6655 = vmatmul.mubr.bf16.gmra.mxu0 %v4619
    %v6656 = vpop.f32.mrf.mxu0
    %v6657 = vadd.f32 %v6617, %v6656
    %v6658 = vpop.f32.mrf.mxu0
    %v6659 = vpop.f32.mrf.mxu0
    %v6660 = vpop.f32.mrf.mxu0
    %6661 = vdwg.mxu0
    %v6662 = vadd.f32 %v6657, %v6088
    %v6663 = vxor.u32 %v6662, 2147483648
    %v6664 = vmul.f32 %v6663, 1.442695
    %v6665 = vpow.pop %v6664
    %v6666 = vadd.f32 %v6665, 1.0
    %v6667 = vrcp.pop %v6666
    %v6668 = vmul.f32 1.0, %v6667
    %6669 = vmatprep.subr.bf16.mxu0 0
    %6670 = vmatpush1.bf16.msra.mxu0 0
    %6671 = vmatprep.subr.bf16.mxu0 0
    %6672 = vmatpush1.bf16.msra.mxu0 0
    %6673 = vmatprep.subr.bf16.mxu0 0
    %6674 = vmatpush1.bf16.msra.mxu0 0
    %6675 = vmatprep.subr.bf16.mxu0 0
    %6676 = vmatpush1.bf16.msra.mxu0 0
    %6677 = vmatprep.subr.bf16.mxu0 0
    %6678 = vmatpush1.bf16.msra.mxu0 0
    %6679 = vmatprep.subr.bf16.mxu0 0
    %6680 = vmatpush1.bf16.msra.mxu0 0
    %6681 = vmatprep.subr.bf16.mxu0 0
    %6682 = vmatpush1.bf16.msra.mxu0 0
    %6683 = vmatprep.subr.bf16.mxu0 0
    %6684 = vmatpush1.bf16.msra.mxu0 %v6101
    %6685 = vmatprep.subr.bf16.mxu0 0
    %6686 = vmatpush2.bf16.msra.mxu0 0
    %6687 = vmatprep.subr.bf16.mxu0 0
    %6688 = vmatpush2.bf16.msra.mxu0 0
    %6689 = vmatprep.subr.bf16.mxu0 0
    %6690 = vmatpush2.bf16.msra.mxu0 0
    %6691 = vmatprep.subr.bf16.mxu0 0
    %6692 = vmatpush2.bf16.msra.mxu0 0
    %6693 = vmatprep.subr.bf16.mxu0 0
    %6694 = vmatpush2.bf16.msra.mxu0 0
    %6695 = vmatprep.subr.bf16.mxu0 0
    %6696 = vmatpush2.bf16.msra.mxu0 0
    %6697 = vmatprep.subr.bf16.mxu0 0
    %6698 = vmatpush2.bf16.msra.mxu0 0
    %6699 = vmatprep.subr.bf16.mxu0 0
    %6700 = vmatpush2.bf16.msra.mxu0 0
    %6701 = vmatprep.mubr.bf16.mxu0 0
    %6702 = vmatmul.mubr.bf16.gmra.mxu0 %v6580
    %v6703 = vpop.f32.mrf.mxu0
    %v6704 = vadd.f32 0.0, %v6703
    %v6705 = vpop.f32.mrf.mxu0
    %v6706 = vpop.f32.mrf.mxu0
    %v6707 = vpop.f32.mrf.mxu0
    %6708 = vdwg.mxu0
    %6709 = vmatprep.subr.bf16.mxu0 0
    %6710 = vmatpush1.bf16.msra.mxu0 0
    %6711 = vmatprep.subr.bf16.mxu0 0
    %6712 = vmatpush1.bf16.msra.mxu0 0
    %6713 = vmatprep.subr.bf16.mxu0 0
    %6714 = vmatpush1.bf16.msra.mxu0 0
    %6715 = vmatprep.subr.bf16.mxu0 0
    %6716 = vmatpush1.bf16.msra.mxu0 0
    %6717 = vmatprep.subr.bf16.mxu0 0
    %6718 = vmatpush1.bf16.msra.mxu0 0
    %6719 = vmatprep.subr.bf16.mxu0 0
    %6720 = vmatpush1.bf16.msra.mxu0 0
    %6721 = vmatprep.subr.bf16.mxu0 0
    %6722 = vmatpush1.bf16.msra.mxu0 0
    %6723 = vmatprep.subr.bf16.mxu0 0
    %6724 = vmatpush1.bf16.msra.mxu0 %v6147
    %6725 = vmatprep.subr.bf16.mxu0 0
    %6726 = vmatpush2.bf16.msra.mxu0 0
    %6727 = vmatprep.subr.bf16.mxu0 0
    %6728 = vmatpush2.bf16.msra.mxu0 0
    %6729 = vmatprep.subr.bf16.mxu0 0
    %6730 = vmatpush2.bf16.msra.mxu0 0
    %6731 = vmatprep.subr.bf16.mxu0 0
    %6732 = vmatpush2.bf16.msra.mxu0 0
    %6733 = vmatprep.subr.bf16.mxu0 0
    %6734 = vmatpush2.bf16.msra.mxu0 0
    %6735 = vmatprep.subr.bf16.mxu0 0
    %6736 = vmatpush2.bf16.msra.mxu0 0
    %6737 = vmatprep.subr.bf16.mxu0 0
    %6738 = vmatpush2.bf16.msra.mxu0 0
    %6739 = vmatprep.subr.bf16.mxu0 0
    %6740 = vmatpush2.bf16.msra.mxu0 0
    %6741 = vmatprep.mubr.bf16.mxu0 0
    %6742 = vmatmul.mubr.bf16.gmra.mxu0 %v4619
    %v6743 = vpop.f32.mrf.mxu0
    %v6744 = vadd.f32 %v6704, %v6743
    %v6745 = vpop.f32.mrf.mxu0
    %v6746 = vpop.f32.mrf.mxu0
    %v6747 = vpop.f32.mrf.mxu0
    %6748 = vdwg.mxu0
    %v6749 = vadd.f32 %v6744, %v6193
    %v6750 = vxor.u32 %v6749, 2147483648
    %v6751 = vmul.f32 %v6750, 1.442695
    %v6752 = vpow.pop %v6751
    %v6753 = vadd.f32 %v6752, 1.0
    %v6754 = vrcp.pop %v6753
    %v6755 = vmul.f32 1.0, %v6754
    %6756 = vmatprep.subr.bf16.mxu0 0
    %6757 = vmatpush1.bf16.msra.mxu0 0
    %6758 = vmatprep.subr.bf16.mxu0 0
    %6759 = vmatpush1.bf16.msra.mxu0 0
    %6760 = vmatprep.subr.bf16.mxu0 0
    %6761 = vmatpush1.bf16.msra.mxu0 0
    %6762 = vmatprep.subr.bf16.mxu0 0
    %6763 = vmatpush1.bf16.msra.mxu0 0
    %6764 = vmatprep.subr.bf16.mxu0 0
    %6765 = vmatpush1.bf16.msra.mxu0 0
    %6766 = vmatprep.subr.bf16.mxu0 0
    %6767 = vmatpush1.bf16.msra.mxu0 0
    %6768 = vmatprep.subr.bf16.mxu0 0
    %6769 = vmatpush1.bf16.msra.mxu0 0
    %6770 = vmatprep.subr.bf16.mxu0 0
    %6771 = vmatpush1.bf16.msra.mxu0 %v6212
    %6772 = vmatprep.subr.bf16.mxu0 0
    %6773 = vmatpush2.bf16.msra.mxu0 0
    %6774 = vmatprep.subr.bf16.mxu0 0
    %6775 = vmatpush2.bf16.msra.mxu0 0
    %6776 = vmatprep.subr.bf16.mxu0 0
    %6777 = vmatpush2.bf16.msra.mxu0 0
    %6778 = vmatprep.subr.bf16.mxu0 0
    %6779 = vmatpush2.bf16.msra.mxu0 0
    %6780 = vmatprep.subr.bf16.mxu0 0
    %6781 = vmatpush2.bf16.msra.mxu0 0
    %6782 = vmatprep.subr.bf16.mxu0 0
    %6783 = vmatpush2.bf16.msra.mxu0 0
    %6784 = vmatprep.subr.bf16.mxu0 0
    %6785 = vmatpush2.bf16.msra.mxu0 0
    %6786 = vmatprep.subr.bf16.mxu0 0
    %6787 = vmatpush2.bf16.msra.mxu0 0
    %6788 = vmatprep.mubr.bf16.mxu0 0
    %6789 = vmatmul.mubr.bf16.gmra.mxu0 %v4619
    %v6790 = vpop.f32.mrf.mxu0
    %v6791 = vadd.f32 %v6206, %v6790
    %v6792 = vpop.f32.mrf.mxu0
    %v6793 = vpop.f32.mrf.mxu0
    %v6794 = vpop.f32.mrf.mxu0
    %6795 = vdwg.mxu0
    %6796 = vmatprep.subr.bf16.mxu0 0
    %6797 = vmatpush1.bf16.msra.mxu0 0
    %6798 = vmatprep.subr.bf16.mxu0 0
    %6799 = vmatpush1.bf16.msra.mxu0 0
    %6800 = vmatprep.subr.bf16.mxu0 0
    %6801 = vmatpush1.bf16.msra.mxu0 0
    %6802 = vmatprep.subr.bf16.mxu0 0
    %6803 = vmatpush1.bf16.msra.mxu0 0
    %6804 = vmatprep.subr.bf16.mxu0 0
    %6805 = vmatpush1.bf16.msra.mxu0 0
    %6806 = vmatprep.subr.bf16.mxu0 0
    %6807 = vmatpush1.bf16.msra.mxu0 0
    %6808 = vmatprep.subr.bf16.mxu0 0
    %6809 = vmatpush1.bf16.msra.mxu0 0
    %6810 = vmatprep.subr.bf16.mxu0 0
    %6811 = vmatpush1.bf16.msra.mxu0 %v6264
    %6812 = vmatprep.subr.bf16.mxu0 0
    %6813 = vmatpush2.bf16.msra.mxu0 0
    %6814 = vmatprep.subr.bf16.mxu0 0
    %6815 = vmatpush2.bf16.msra.mxu0 0
    %6816 = vmatprep.subr.bf16.mxu0 0
    %6817 = vmatpush2.bf16.msra.mxu0 0
    %6818 = vmatprep.subr.bf16.mxu0 0
    %6819 = vmatpush2.bf16.msra.mxu0 0
    %6820 = vmatprep.subr.bf16.mxu0 0
    %6821 = vmatpush2.bf16.msra.mxu0 0
    %6822 = vmatprep.subr.bf16.mxu0 0
    %6823 = vmatpush2.bf16.msra.mxu0 0
    %6824 = vmatprep.subr.bf16.mxu0 0
    %6825 = vmatpush2.bf16.msra.mxu0 0
    %6826 = vmatprep.subr.bf16.mxu0 0
    %6827 = vmatpush2.bf16.msra.mxu0 0
    %6828 = vmatprep.mubr.bf16.mxu0 0
    %6829 = vmatmul.mubr.bf16.gmra.mxu0 %v6580
    %v6830 = vpop.f32.mrf.mxu0
    %v6831 = vadd.f32 %v6258, %v6830
    %v6832 = vpop.f32.mrf.mxu0
    %v6833 = vpop.f32.mrf.mxu0
    %v6834 = vpop.f32.mrf.mxu0
    %6835 = vdwg.mxu0
    %v6836 = vmul.f32 %v6668, %v6831
    %v6837 = vadd.f32 %v6791, %v6836
    %v6838 = vtanh.pop %v6837
    %v6839 = vsub.f32 1.0, %v6755
    %v6840 = vmul.f32 %v6839, %v6838
    %v6841 = vmul.f32 %v6755, %v6577
    %v6842 = vadd.f32 %v6840, %v6841
    %v6843 = vpack.c.bf16 %v6842, %v6842
    %v6845 = vsel %vm3765, %v6843, 0
    %6847 = vmatprep.subr.bf16.mxu0 0
    %6848 = vmatpush1.bf16.msra.mxu0 0
    %6849 = vmatprep.subr.bf16.mxu0 0
    %6850 = vmatpush1.bf16.msra.mxu0 0
    %6851 = vmatprep.subr.bf16.mxu0 0
    %6852 = vmatpush1.bf16.msra.mxu0 0
    %6853 = vmatprep.subr.bf16.mxu0 0
    %6854 = vmatpush1.bf16.msra.mxu0 0
    %6855 = vmatprep.subr.bf16.mxu0 0
    %6856 = vmatpush1.bf16.msra.mxu0 0
    %6857 = vmatprep.subr.bf16.mxu0 0
    %6858 = vmatpush1.bf16.msra.mxu0 0
    %6859 = vmatprep.subr.bf16.mxu0 0
    %6860 = vmatpush1.bf16.msra.mxu0 0
    %6861 = vmatprep.subr.bf16.mxu0 0
    %6862 = vmatpush1.bf16.msra.mxu0 %v5993
    %6863 = vmatprep.subr.bf16.mxu0 0
    %6864 = vmatpush2.bf16.msra.mxu0 0
    %6865 = vmatprep.subr.bf16.mxu0 0
    %6866 = vmatpush2.bf16.msra.mxu0 0
    %6867 = vmatprep.subr.bf16.mxu0 0
    %6868 = vmatpush2.bf16.msra.mxu0 0
    %6869 = vmatprep.subr.bf16.mxu0 0
    %6870 = vmatpush2.bf16.msra.mxu0 0
    %6871 = vmatprep.subr.bf16.mxu0 0
    %6872 = vmatpush2.bf16.msra.mxu0 0
    %6873 = vmatprep.subr.bf16.mxu0 0
    %6874 = vmatpush2.bf16.msra.mxu0 0
    %6875 = vmatprep.subr.bf16.mxu0 0
    %6876 = vmatpush2.bf16.msra.mxu0 0
    %6877 = vmatprep.subr.bf16.mxu0 0
    %6878 = vmatpush2.bf16.msra.mxu0 0
    %6879 = vmatprep.mubr.bf16.mxu0 0
    %6880 = vmatmul.mubr.bf16.gmra.mxu0 %v6845
    %v6881 = vpop.f32.mrf.mxu0
    %v6882 = vadd.f32 0.0, %v6881
    %v6883 = vpop.f32.mrf.mxu0
    %v6884 = vpop.f32.mrf.mxu0
    %v6885 = vpop.f32.mrf.mxu0
    %6886 = vdwg.mxu0
    %6887 = vmatprep.subr.bf16.mxu0 0
    %6888 = vmatpush1.bf16.msra.mxu0 0
    %6889 = vmatprep.subr.bf16.mxu0 0
    %6890 = vmatpush1.bf16.msra.mxu0 0
    %6891 = vmatprep.subr.bf16.mxu0 0
    %6892 = vmatpush1.bf16.msra.mxu0 0
    %6893 = vmatprep.subr.bf16.mxu0 0
    %6894 = vmatpush1.bf16.msra.mxu0 0
    %6895 = vmatprep.subr.bf16.mxu0 0
    %6896 = vmatpush1.bf16.msra.mxu0 0
    %6897 = vmatprep.subr.bf16.mxu0 0
    %6898 = vmatpush1.bf16.msra.mxu0 0
    %6899 = vmatprep.subr.bf16.mxu0 0
    %6900 = vmatpush1.bf16.msra.mxu0 0
    %6901 = vmatprep.subr.bf16.mxu0 0
    %6902 = vmatpush1.bf16.msra.mxu0 %v6042
    %6903 = vmatprep.subr.bf16.mxu0 0
    %6904 = vmatpush2.bf16.msra.mxu0 0
    %6905 = vmatprep.subr.bf16.mxu0 0
    %6906 = vmatpush2.bf16.msra.mxu0 0
    %6907 = vmatprep.subr.bf16.mxu0 0
    %6908 = vmatpush2.bf16.msra.mxu0 0
    %6909 = vmatprep.subr.bf16.mxu0 0
    %6910 = vmatpush2.bf16.msra.mxu0 0
    %6911 = vmatprep.subr.bf16.mxu0 0
    %6912 = vmatpush2.bf16.msra.mxu0 0
    %6913 = vmatprep.subr.bf16.mxu0 0
    %6914 = vmatpush2.bf16.msra.mxu0 0
    %6915 = vmatprep.subr.bf16.mxu0 0
    %6916 = vmatpush2.bf16.msra.mxu0 0
    %6917 = vmatprep.subr.bf16.mxu0 0
    %6918 = vmatpush2.bf16.msra.mxu0 0
    %6919 = vmatprep.mubr.bf16.mxu0 0
    %6920 = vmatmul.mubr.bf16.gmra.mxu0 %v4888
    %v6921 = vpop.f32.mrf.mxu0
    %v6922 = vadd.f32 %v6882, %v6921
    %v6923 = vpop.f32.mrf.mxu0
    %v6924 = vpop.f32.mrf.mxu0
    %v6925 = vpop.f32.mrf.mxu0
    %6926 = vdwg.mxu0
    %v6927 = vadd.f32 %v6922, %v6088
    %v6928 = vxor.u32 %v6927, 2147483648
    %v6929 = vmul.f32 %v6928, 1.442695
    %v6930 = vpow.pop %v6929
    %v6931 = vadd.f32 %v6930, 1.0
    %v6932 = vrcp.pop %v6931
    %v6933 = vmul.f32 1.0, %v6932
    %6934 = vmatprep.subr.bf16.mxu0 0
    %6935 = vmatpush1.bf16.msra.mxu0 0
    %6936 = vmatprep.subr.bf16.mxu0 0
    %6937 = vmatpush1.bf16.msra.mxu0 0
    %6938 = vmatprep.subr.bf16.mxu0 0
    %6939 = vmatpush1.bf16.msra.mxu0 0
    %6940 = vmatprep.subr.bf16.mxu0 0
    %6941 = vmatpush1.bf16.msra.mxu0 0
    %6942 = vmatprep.subr.bf16.mxu0 0
    %6943 = vmatpush1.bf16.msra.mxu0 0
    %6944 = vmatprep.subr.bf16.mxu0 0
    %6945 = vmatpush1.bf16.msra.mxu0 0
    %6946 = vmatprep.subr.bf16.mxu0 0
    %6947 = vmatpush1.bf16.msra.mxu0 0
    %6948 = vmatprep.subr.bf16.mxu0 0
    %6949 = vmatpush1.bf16.msra.mxu0 %v6101
    %6950 = vmatprep.subr.bf16.mxu0 0
    %6951 = vmatpush2.bf16.msra.mxu0 0
    %6952 = vmatprep.subr.bf16.mxu0 0
    %6953 = vmatpush2.bf16.msra.mxu0 0
    %6954 = vmatprep.subr.bf16.mxu0 0
    %6955 = vmatpush2.bf16.msra.mxu0 0
    %6956 = vmatprep.subr.bf16.mxu0 0
    %6957 = vmatpush2.bf16.msra.mxu0 0
    %6958 = vmatprep.subr.bf16.mxu0 0
    %6959 = vmatpush2.bf16.msra.mxu0 0
    %6960 = vmatprep.subr.bf16.mxu0 0
    %6961 = vmatpush2.bf16.msra.mxu0 0
    %6962 = vmatprep.subr.bf16.mxu0 0
    %6963 = vmatpush2.bf16.msra.mxu0 0
    %6964 = vmatprep.subr.bf16.mxu0 0
    %6965 = vmatpush2.bf16.msra.mxu0 0
    %6966 = vmatprep.mubr.bf16.mxu0 0
    %6967 = vmatmul.mubr.bf16.gmra.mxu0 %v6845
    %v6968 = vpop.f32.mrf.mxu0
    %v6969 = vadd.f32 0.0, %v6968
    %v6970 = vpop.f32.mrf.mxu0
    %v6971 = vpop.f32.mrf.mxu0
    %v6972 = vpop.f32.mrf.mxu0
    %6973 = vdwg.mxu0
    %6974 = vmatprep.subr.bf16.mxu0 0
    %6975 = vmatpush1.bf16.msra.mxu0 0
    %6976 = vmatprep.subr.bf16.mxu0 0
    %6977 = vmatpush1.bf16.msra.mxu0 0
    %6978 = vmatprep.subr.bf16.mxu0 0
    %6979 = vmatpush1.bf16.msra.mxu0 0
    %6980 = vmatprep.subr.bf16.mxu0 0
    %6981 = vmatpush1.bf16.msra.mxu0 0
    %6982 = vmatprep.subr.bf16.mxu0 0
    %6983 = vmatpush1.bf16.msra.mxu0 0
    %6984 = vmatprep.subr.bf16.mxu0 0
    %6985 = vmatpush1.bf16.msra.mxu0 0
    %6986 = vmatprep.subr.bf16.mxu0 0
    %6987 = vmatpush1.bf16.msra.mxu0 0
    %6988 = vmatprep.subr.bf16.mxu0 0
    %6989 = vmatpush1.bf16.msra.mxu0 %v6147
    %6990 = vmatprep.subr.bf16.mxu0 0
    %6991 = vmatpush2.bf16.msra.mxu0 0
    %6992 = vmatprep.subr.bf16.mxu0 0
    %6993 = vmatpush2.bf16.msra.mxu0 0
    %6994 = vmatprep.subr.bf16.mxu0 0
    %6995 = vmatpush2.bf16.msra.mxu0 0
    %6996 = vmatprep.subr.bf16.mxu0 0
    %6997 = vmatpush2.bf16.msra.mxu0 0
    %6998 = vmatprep.subr.bf16.mxu0 0
    %6999 = vmatpush2.bf16.msra.mxu0 0
    %7000 = vmatprep.subr.bf16.mxu0 0
    %7001 = vmatpush2.bf16.msra.mxu0 0
    %7002 = vmatprep.subr.bf16.mxu0 0
    %7003 = vmatpush2.bf16.msra.mxu0 0
    %7004 = vmatprep.subr.bf16.mxu0 0
    %7005 = vmatpush2.bf16.msra.mxu0 0
    %7006 = vmatprep.mubr.bf16.mxu0 0
    %7007 = vmatmul.mubr.bf16.gmra.mxu0 %v4888
    %v7008 = vpop.f32.mrf.mxu0
    %v7009 = vadd.f32 %v6969, %v7008
    %v7010 = vpop.f32.mrf.mxu0
    %v7011 = vpop.f32.mrf.mxu0
    %v7012 = vpop.f32.mrf.mxu0
    %7013 = vdwg.mxu0
    %v7014 = vadd.f32 %v7009, %v6193
    %v7015 = vxor.u32 %v7014, 2147483648
    %v7016 = vmul.f32 %v7015, 1.442695
    %v7017 = vpow.pop %v7016
    %v7018 = vadd.f32 %v7017, 1.0
    %v7019 = vrcp.pop %v7018
    %v7020 = vmul.f32 1.0, %v7019
    %7021 = vmatprep.subr.bf16.mxu0 0
    %7022 = vmatpush1.bf16.msra.mxu0 0
    %7023 = vmatprep.subr.bf16.mxu0 0
    %7024 = vmatpush1.bf16.msra.mxu0 0
    %7025 = vmatprep.subr.bf16.mxu0 0
    %7026 = vmatpush1.bf16.msra.mxu0 0
    %7027 = vmatprep.subr.bf16.mxu0 0
    %7028 = vmatpush1.bf16.msra.mxu0 0
    %7029 = vmatprep.subr.bf16.mxu0 0
    %7030 = vmatpush1.bf16.msra.mxu0 0
    %7031 = vmatprep.subr.bf16.mxu0 0
    %7032 = vmatpush1.bf16.msra.mxu0 0
    %7033 = vmatprep.subr.bf16.mxu0 0
    %7034 = vmatpush1.bf16.msra.mxu0 0
    %7035 = vmatprep.subr.bf16.mxu0 0
    %7036 = vmatpush1.bf16.msra.mxu0 %v6212
    %7037 = vmatprep.subr.bf16.mxu0 0
    %7038 = vmatpush2.bf16.msra.mxu0 0
    %7039 = vmatprep.subr.bf16.mxu0 0
    %7040 = vmatpush2.bf16.msra.mxu0 0
    %7041 = vmatprep.subr.bf16.mxu0 0
    %7042 = vmatpush2.bf16.msra.mxu0 0
    %7043 = vmatprep.subr.bf16.mxu0 0
    %7044 = vmatpush2.bf16.msra.mxu0 0
    %7045 = vmatprep.subr.bf16.mxu0 0
    %7046 = vmatpush2.bf16.msra.mxu0 0
    %7047 = vmatprep.subr.bf16.mxu0 0
    %7048 = vmatpush2.bf16.msra.mxu0 0
    %7049 = vmatprep.subr.bf16.mxu0 0
    %7050 = vmatpush2.bf16.msra.mxu0 0
    %7051 = vmatprep.subr.bf16.mxu0 0
    %7052 = vmatpush2.bf16.msra.mxu0 0
    %7053 = vmatprep.mubr.bf16.mxu0 0
    %7054 = vmatmul.mubr.bf16.gmra.mxu0 %v4888
    %v7055 = vpop.f32.mrf.mxu0
    %v7056 = vadd.f32 %v6206, %v7055
    %v7057 = vpop.f32.mrf.mxu0
    %v7058 = vpop.f32.mrf.mxu0
    %v7059 = vpop.f32.mrf.mxu0
    %7060 = vdwg.mxu0
    %7061 = vmatprep.subr.bf16.mxu0 0
    %7062 = vmatpush1.bf16.msra.mxu0 0
    %7063 = vmatprep.subr.bf16.mxu0 0
    %7064 = vmatpush1.bf16.msra.mxu0 0
    %7065 = vmatprep.subr.bf16.mxu0 0
    %7066 = vmatpush1.bf16.msra.mxu0 0
    %7067 = vmatprep.subr.bf16.mxu0 0
    %7068 = vmatpush1.bf16.msra.mxu0 0
    %7069 = vmatprep.subr.bf16.mxu0 0
    %7070 = vmatpush1.bf16.msra.mxu0 0
    %7071 = vmatprep.subr.bf16.mxu0 0
    %7072 = vmatpush1.bf16.msra.mxu0 0
    %7073 = vmatprep.subr.bf16.mxu0 0
    %7074 = vmatpush1.bf16.msra.mxu0 0
    %7075 = vmatprep.subr.bf16.mxu0 0
    %7076 = vmatpush1.bf16.msra.mxu0 %v6264
    %7077 = vmatprep.subr.bf16.mxu0 0
    %7078 = vmatpush2.bf16.msra.mxu0 0
    %7079 = vmatprep.subr.bf16.mxu0 0
    %7080 = vmatpush2.bf16.msra.mxu0 0
    %7081 = vmatprep.subr.bf16.mxu0 0
    %7082 = vmatpush2.bf16.msra.mxu0 0
    %7083 = vmatprep.subr.bf16.mxu0 0
    %7084 = vmatpush2.bf16.msra.mxu0 0
    %7085 = vmatprep.subr.bf16.mxu0 0
    %7086 = vmatpush2.bf16.msra.mxu0 0
    %7087 = vmatprep.subr.bf16.mxu0 0
    %7088 = vmatpush2.bf16.msra.mxu0 0
    %7089 = vmatprep.subr.bf16.mxu0 0
    %7090 = vmatpush2.bf16.msra.mxu0 0
    %7091 = vmatprep.subr.bf16.mxu0 0
    %7092 = vmatpush2.bf16.msra.mxu0 0
    %7093 = vmatprep.mubr.bf16.mxu0 0
    %7094 = vmatmul.mubr.bf16.gmra.mxu0 %v6845
    %v7095 = vpop.f32.mrf.mxu0
    %v7096 = vadd.f32 %v6258, %v7095
    %v7097 = vpop.f32.mrf.mxu0
    %v7098 = vpop.f32.mrf.mxu0
    %v7099 = vpop.f32.mrf.mxu0
    %7100 = vdwg.mxu0
    %v7101 = vmul.f32 %v6933, %v7096
    %v7102 = vadd.f32 %v7056, %v7101
    %v7103 = vtanh.pop %v7102
    %v7104 = vsub.f32 1.0, %v7020
    %v7105 = vmul.f32 %v7104, %v7103
    %v7106 = vmul.f32 %v7020, %v6842
    %v7107 = vadd.f32 %v7105, %v7106
    %v7108 = vpack.c.bf16 %v7107, %v7107
    %v7110 = vsel %vm3765, %v7108, 0
    %7112 = vmatprep.subr.bf16.mxu0 0
    %7113 = vmatpush1.bf16.msra.mxu0 0
    %7114 = vmatprep.subr.bf16.mxu0 0
    %7115 = vmatpush1.bf16.msra.mxu0 0
    %7116 = vmatprep.subr.bf16.mxu0 0
    %7117 = vmatpush1.bf16.msra.mxu0 0
    %7118 = vmatprep.subr.bf16.mxu0 0
    %7119 = vmatpush1.bf16.msra.mxu0 0
    %7120 = vmatprep.subr.bf16.mxu0 0
    %7121 = vmatpush1.bf16.msra.mxu0 0
    %7122 = vmatprep.subr.bf16.mxu0 0
    %7123 = vmatpush1.bf16.msra.mxu0 0
    %7124 = vmatprep.subr.bf16.mxu0 0
    %7125 = vmatpush1.bf16.msra.mxu0 0
    %7126 = vmatprep.subr.bf16.mxu0 0
    %7127 = vmatpush1.bf16.msra.mxu0 %v5993
    %7128 = vmatprep.subr.bf16.mxu0 0
    %7129 = vmatpush2.bf16.msra.mxu0 0
    %7130 = vmatprep.subr.bf16.mxu0 0
    %7131 = vmatpush2.bf16.msra.mxu0 0
    %7132 = vmatprep.subr.bf16.mxu0 0
    %7133 = vmatpush2.bf16.msra.mxu0 0
    %7134 = vmatprep.subr.bf16.mxu0 0
    %7135 = vmatpush2.bf16.msra.mxu0 0
    %7136 = vmatprep.subr.bf16.mxu0 0
    %7137 = vmatpush2.bf16.msra.mxu0 0
    %7138 = vmatprep.subr.bf16.mxu0 0
    %7139 = vmatpush2.bf16.msra.mxu0 0
    %7140 = vmatprep.subr.bf16.mxu0 0
    %7141 = vmatpush2.bf16.msra.mxu0 0
    %7142 = vmatprep.subr.bf16.mxu0 0
    %7143 = vmatpush2.bf16.msra.mxu0 0
    %7144 = vmatprep.mubr.bf16.mxu0 0
    %7145 = vmatmul.mubr.bf16.gmra.mxu0 %v7110
    %v7146 = vpop.f32.mrf.mxu0
    %v7147 = vadd.f32 0.0, %v7146
    %v7148 = vpop.f32.mrf.mxu0
    %v7149 = vpop.f32.mrf.mxu0
    %v7150 = vpop.f32.mrf.mxu0
    %7151 = vdwg.mxu0
    %7152 = vmatprep.subr.bf16.mxu0 0
    %7153 = vmatpush1.bf16.msra.mxu0 0
    %7154 = vmatprep.subr.bf16.mxu0 0
    %7155 = vmatpush1.bf16.msra.mxu0 0
    %7156 = vmatprep.subr.bf16.mxu0 0
    %7157 = vmatpush1.bf16.msra.mxu0 0
    %7158 = vmatprep.subr.bf16.mxu0 0
    %7159 = vmatpush1.bf16.msra.mxu0 0
    %7160 = vmatprep.subr.bf16.mxu0 0
    %7161 = vmatpush1.bf16.msra.mxu0 0
    %7162 = vmatprep.subr.bf16.mxu0 0
    %7163 = vmatpush1.bf16.msra.mxu0 0
    %7164 = vmatprep.subr.bf16.mxu0 0
    %7165 = vmatpush1.bf16.msra.mxu0 0
    %7166 = vmatprep.subr.bf16.mxu0 0
    %7167 = vmatpush1.bf16.msra.mxu0 %v6042
    %7168 = vmatprep.subr.bf16.mxu0 0
    %7169 = vmatpush2.bf16.msra.mxu0 0
    %7170 = vmatprep.subr.bf16.mxu0 0
    %7171 = vmatpush2.bf16.msra.mxu0 0
    %7172 = vmatprep.subr.bf16.mxu0 0
    %7173 = vmatpush2.bf16.msra.mxu0 0
    %7174 = vmatprep.subr.bf16.mxu0 0
    %7175 = vmatpush2.bf16.msra.mxu0 0
    %7176 = vmatprep.subr.bf16.mxu0 0
    %7177 = vmatpush2.bf16.msra.mxu0 0
    %7178 = vmatprep.subr.bf16.mxu0 0
    %7179 = vmatpush2.bf16.msra.mxu0 0
    %7180 = vmatprep.subr.bf16.mxu0 0
    %7181 = vmatpush2.bf16.msra.mxu0 0
    %7182 = vmatprep.subr.bf16.mxu0 0
    %7183 = vmatpush2.bf16.msra.mxu0 0
    %7184 = vmatprep.mubr.bf16.mxu0 0
    %7185 = vmatmul.mubr.bf16.gmra.mxu0 %v5157
    %v7186 = vpop.f32.mrf.mxu0
    %v7187 = vadd.f32 %v7147, %v7186
    %v7188 = vpop.f32.mrf.mxu0
    %v7189 = vpop.f32.mrf.mxu0
    %v7190 = vpop.f32.mrf.mxu0
    %7191 = vdwg.mxu0
    %v7192 = vadd.f32 %v7187, %v6088
    %v7193 = vxor.u32 %v7192, 2147483648
    %v7194 = vmul.f32 %v7193, 1.442695
    %v7195 = vpow.pop %v7194
    %v7196 = vadd.f32 %v7195, 1.0
    %v7197 = vrcp.pop %v7196
    %v7198 = vmul.f32 1.0, %v7197
    %7199 = vmatprep.subr.bf16.mxu0 0
    %7200 = vmatpush1.bf16.msra.mxu0 0
    %7201 = vmatprep.subr.bf16.mxu0 0
    %7202 = vmatpush1.bf16.msra.mxu0 0
    %7203 = vmatprep.subr.bf16.mxu0 0
    %7204 = vmatpush1.bf16.msra.mxu0 0
    %7205 = vmatprep.subr.bf16.mxu0 0
    %7206 = vmatpush1.bf16.msra.mxu0 0
    %7207 = vmatprep.subr.bf16.mxu0 0
    %7208 = vmatpush1.bf16.msra.mxu0 0
    %7209 = vmatprep.subr.bf16.mxu0 0
    %7210 = vmatpush1.bf16.msra.mxu0 0
    %7211 = vmatprep.subr.bf16.mxu0 0
    %7212 = vmatpush1.bf16.msra.mxu0 0
    %7213 = vmatprep.subr.bf16.mxu0 0
    %7214 = vmatpush1.bf16.msra.mxu0 %v6101
    %7215 = vmatprep.subr.bf16.mxu0 0
    %7216 = vmatpush2.bf16.msra.mxu0 0
    %7217 = vmatprep.subr.bf16.mxu0 0
    %7218 = vmatpush2.bf16.msra.mxu0 0
    %7219 = vmatprep.subr.bf16.mxu0 0
    %7220 = vmatpush2.bf16.msra.mxu0 0
    %7221 = vmatprep.subr.bf16.mxu0 0
    %7222 = vmatpush2.bf16.msra.mxu0 0
    %7223 = vmatprep.subr.bf16.mxu0 0
    %7224 = vmatpush2.bf16.msra.mxu0 0
    %7225 = vmatprep.subr.bf16.mxu0 0
    %7226 = vmatpush2.bf16.msra.mxu0 0
    %7227 = vmatprep.subr.bf16.mxu0 0
    %7228 = vmatpush2.bf16.msra.mxu0 0
    %7229 = vmatprep.subr.bf16.mxu0 0
    %7230 = vmatpush2.bf16.msra.mxu0 0
    %7231 = vmatprep.mubr.bf16.mxu0 0
    %7232 = vmatmul.mubr.bf16.gmra.mxu0 %v7110
    %v7233 = vpop.f32.mrf.mxu0
    %v7234 = vadd.f32 0.0, %v7233
    %v7235 = vpop.f32.mrf.mxu0
    %v7236 = vpop.f32.mrf.mxu0
    %v7237 = vpop.f32.mrf.mxu0
    %7238 = vdwg.mxu0
    %7239 = vmatprep.subr.bf16.mxu0 0
    %7240 = vmatpush1.bf16.msra.mxu0 0
    %7241 = vmatprep.subr.bf16.mxu0 0
    %7242 = vmatpush1.bf16.msra.mxu0 0
    %7243 = vmatprep.subr.bf16.mxu0 0
    %7244 = vmatpush1.bf16.msra.mxu0 0
    %7245 = vmatprep.subr.bf16.mxu0 0
    %7246 = vmatpush1.bf16.msra.mxu0 0
    %7247 = vmatprep.subr.bf16.mxu0 0
    %7248 = vmatpush1.bf16.msra.mxu0 0
    %7249 = vmatprep.subr.bf16.mxu0 0
    %7250 = vmatpush1.bf16.msra.mxu0 0
    %7251 = vmatprep.subr.bf16.mxu0 0
    %7252 = vmatpush1.bf16.msra.mxu0 0
    %7253 = vmatprep.subr.bf16.mxu0 0
    %7254 = vmatpush1.bf16.msra.mxu0 %v6147
    %7255 = vmatprep.subr.bf16.mxu0 0
    %7256 = vmatpush2.bf16.msra.mxu0 0
    %7257 = vmatprep.subr.bf16.mxu0 0
    %7258 = vmatpush2.bf16.msra.mxu0 0
    %7259 = vmatprep.subr.bf16.mxu0 0
    %7260 = vmatpush2.bf16.msra.mxu0 0
    %7261 = vmatprep.subr.bf16.mxu0 0
    %7262 = vmatpush2.bf16.msra.mxu0 0
    %7263 = vmatprep.subr.bf16.mxu0 0
    %7264 = vmatpush2.bf16.msra.mxu0 0
    %7265 = vmatprep.subr.bf16.mxu0 0
    %7266 = vmatpush2.bf16.msra.mxu0 0
    %7267 = vmatprep.subr.bf16.mxu0 0
    %7268 = vmatpush2.bf16.msra.mxu0 0
    %7269 = vmatprep.subr.bf16.mxu0 0
    %7270 = vmatpush2.bf16.msra.mxu0 0
    %7271 = vmatprep.mubr.bf16.mxu0 0
    %7272 = vmatmul.mubr.bf16.gmra.mxu0 %v5157
    %v7273 = vpop.f32.mrf.mxu0
    %v7274 = vadd.f32 %v7234, %v7273
    %v7275 = vpop.f32.mrf.mxu0
    %v7276 = vpop.f32.mrf.mxu0
    %v7277 = vpop.f32.mrf.mxu0
    %7278 = vdwg.mxu0
    %v7279 = vadd.f32 %v7274, %v6193
    %v7280 = vxor.u32 %v7279, 2147483648
    %v7281 = vmul.f32 %v7280, 1.442695
    %v7282 = vpow.pop %v7281
    %v7283 = vadd.f32 %v7282, 1.0
    %v7284 = vrcp.pop %v7283
    %v7285 = vmul.f32 1.0, %v7284
    %7286 = vmatprep.subr.bf16.mxu0 0
    %7287 = vmatpush1.bf16.msra.mxu0 0
    %7288 = vmatprep.subr.bf16.mxu0 0
    %7289 = vmatpush1.bf16.msra.mxu0 0
    %7290 = vmatprep.subr.bf16.mxu0 0
    %7291 = vmatpush1.bf16.msra.mxu0 0
    %7292 = vmatprep.subr.bf16.mxu0 0
    %7293 = vmatpush1.bf16.msra.mxu0 0
    %7294 = vmatprep.subr.bf16.mxu0 0
    %7295 = vmatpush1.bf16.msra.mxu0 0
    %7296 = vmatprep.subr.bf16.mxu0 0
    %7297 = vmatpush1.bf16.msra.mxu0 0
    %7298 = vmatprep.subr.bf16.mxu0 0
    %7299 = vmatpush1.bf16.msra.mxu0 0
    %7300 = vmatprep.subr.bf16.mxu0 0
    %7301 = vmatpush1.bf16.msra.mxu0 %v6212
    %7302 = vmatprep.subr.bf16.mxu0 0
    %7303 = vmatpush2.bf16.msra.mxu0 0
    %7304 = vmatprep.subr.bf16.mxu0 0
    %7305 = vmatpush2.bf16.msra.mxu0 0
    %7306 = vmatprep.subr.bf16.mxu0 0
    %7307 = vmatpush2.bf16.msra.mxu0 0
    %7308 = vmatprep.subr.bf16.mxu0 0
    %7309 = vmatpush2.bf16.msra.mxu0 0
    %7310 = vmatprep.subr.bf16.mxu0 0
    %7311 = vmatpush2.bf16.msra.mxu0 0
    %7312 = vmatprep.subr.bf16.mxu0 0
    %7313 = vmatpush2.bf16.msra.mxu0 0
    %7314 = vmatprep.subr.bf16.mxu0 0
    %7315 = vmatpush2.bf16.msra.mxu0 0
    %7316 = vmatprep.subr.bf16.mxu0 0
    %7317 = vmatpush2.bf16.msra.mxu0 0
    %7318 = vmatprep.mubr.bf16.mxu0 0
    %7319 = vmatmul.mubr.bf16.gmra.mxu0 %v5157
    %v7320 = vpop.f32.mrf.mxu0
    %v7321 = vadd.f32 %v6206, %v7320
    %v7322 = vpop.f32.mrf.mxu0
    %v7323 = vpop.f32.mrf.mxu0
    %v7324 = vpop.f32.mrf.mxu0
    %7325 = vdwg.mxu0
    %7326 = vmatprep.subr.bf16.mxu0 0
    %7327 = vmatpush1.bf16.msra.mxu0 0
    %7328 = vmatprep.subr.bf16.mxu0 0
    %7329 = vmatpush1.bf16.msra.mxu0 0
    %7330 = vmatprep.subr.bf16.mxu0 0
    %7331 = vmatpush1.bf16.msra.mxu0 0
    %7332 = vmatprep.subr.bf16.mxu0 0
    %7333 = vmatpush1.bf16.msra.mxu0 0
    %7334 = vmatprep.subr.bf16.mxu0 0
    %7335 = vmatpush1.bf16.msra.mxu0 0
    %7336 = vmatprep.subr.bf16.mxu0 0
    %7337 = vmatpush1.bf16.msra.mxu0 0
    %7338 = vmatprep.subr.bf16.mxu0 0
    %7339 = vmatpush1.bf16.msra.mxu0 0
    %7340 = vmatprep.subr.bf16.mxu0 0
    %7341 = vmatpush1.bf16.msra.mxu0 %v6264
    %7342 = vmatprep.subr.bf16.mxu0 0
    %7343 = vmatpush2.bf16.msra.mxu0 0
    %7344 = vmatprep.subr.bf16.mxu0 0
    %7345 = vmatpush2.bf16.msra.mxu0 0
    %7346 = vmatprep.subr.bf16.mxu0 0
    %7347 = vmatpush2.bf16.msra.mxu0 0
    %7348 = vmatprep.subr.bf16.mxu0 0
    %7349 = vmatpush2.bf16.msra.mxu0 0
    %7350 = vmatprep.subr.bf16.mxu0 0
    %7351 = vmatpush2.bf16.msra.mxu0 0
    %7352 = vmatprep.subr.bf16.mxu0 0
    %7353 = vmatpush2.bf16.msra.mxu0 0
    %7354 = vmatprep.subr.bf16.mxu0 0
    %7355 = vmatpush2.bf16.msra.mxu0 0
    %7356 = vmatprep.subr.bf16.mxu0 0
    %7357 = vmatpush2.bf16.msra.mxu0 0
    %7358 = vmatprep.mubr.bf16.mxu0 0
    %7359 = vmatmul.mubr.bf16.gmra.mxu0 %v7110
    %v7360 = vpop.f32.mrf.mxu0
    %v7361 = vadd.f32 %v6258, %v7360
    %v7362 = vpop.f32.mrf.mxu0
    %v7363 = vpop.f32.mrf.mxu0
    %v7364 = vpop.f32.mrf.mxu0
    %7365 = vdwg.mxu0
    %v7366 = vmul.f32 %v7198, %v7361
    %v7367 = vadd.f32 %v7321, %v7366
    %v7368 = vtanh.pop %v7367
    %v7369 = vsub.f32 1.0, %v7285
    %v7370 = vmul.f32 %v7369, %v7368
    %v7371 = vmul.f32 %v7285, %v7107
    %v7372 = vadd.f32 %v7370, %v7371
    %v7373 = vpack.c.bf16 %v7372, %v7372
    %v7375 = vsel %vm3765, %v7373, 0
    %7377 = vmatprep.subr.bf16.mxu0 0
    %7378 = vmatpush1.bf16.msra.mxu0 0
    %7379 = vmatprep.subr.bf16.mxu0 0
    %7380 = vmatpush1.bf16.msra.mxu0 0
    %7381 = vmatprep.subr.bf16.mxu0 0
    %7382 = vmatpush1.bf16.msra.mxu0 0
    %7383 = vmatprep.subr.bf16.mxu0 0
    %7384 = vmatpush1.bf16.msra.mxu0 0
    %7385 = vmatprep.subr.bf16.mxu0 0
    %7386 = vmatpush1.bf16.msra.mxu0 0
    %7387 = vmatprep.subr.bf16.mxu0 0
    %7388 = vmatpush1.bf16.msra.mxu0 0
    %7389 = vmatprep.subr.bf16.mxu0 0
    %7390 = vmatpush1.bf16.msra.mxu0 0
    %7391 = vmatprep.subr.bf16.mxu0 0
    %7392 = vmatpush1.bf16.msra.mxu0 %v5993
    %7393 = vmatprep.subr.bf16.mxu0 0
    %7394 = vmatpush2.bf16.msra.mxu0 0
    %7395 = vmatprep.subr.bf16.mxu0 0
    %7396 = vmatpush2.bf16.msra.mxu0 0
    %7397 = vmatprep.subr.bf16.mxu0 0
    %7398 = vmatpush2.bf16.msra.mxu0 0
    %7399 = vmatprep.subr.bf16.mxu0 0
    %7400 = vmatpush2.bf16.msra.mxu0 0
    %7401 = vmatprep.subr.bf16.mxu0 0
    %7402 = vmatpush2.bf16.msra.mxu0 0
    %7403 = vmatprep.subr.bf16.mxu0 0
    %7404 = vmatpush2.bf16.msra.mxu0 0
    %7405 = vmatprep.subr.bf16.mxu0 0
    %7406 = vmatpush2.bf16.msra.mxu0 0
    %7407 = vmatprep.subr.bf16.mxu0 0
    %7408 = vmatpush2.bf16.msra.mxu0 0
    %7409 = vmatprep.mubr.bf16.mxu0 0
    %7410 = vmatmul.mubr.bf16.gmra.mxu0 %v7375
    %v7411 = vpop.f32.mrf.mxu0
    %v7412 = vadd.f32 0.0, %v7411
    %v7413 = vpop.f32.mrf.mxu0
    %v7414 = vpop.f32.mrf.mxu0
    %v7415 = vpop.f32.mrf.mxu0
    %7416 = vdwg.mxu0
    %7417 = vmatprep.subr.bf16.mxu0 0
    %7418 = vmatpush1.bf16.msra.mxu0 0
    %7419 = vmatprep.subr.bf16.mxu0 0
    %7420 = vmatpush1.bf16.msra.mxu0 0
    %7421 = vmatprep.subr.bf16.mxu0 0
    %7422 = vmatpush1.bf16.msra.mxu0 0
    %7423 = vmatprep.subr.bf16.mxu0 0
    %7424 = vmatpush1.bf16.msra.mxu0 0
    %7425 = vmatprep.subr.bf16.mxu0 0
    %7426 = vmatpush1.bf16.msra.mxu0 0
    %7427 = vmatprep.subr.bf16.mxu0 0
    %7428 = vmatpush1.bf16.msra.mxu0 0
    %7429 = vmatprep.subr.bf16.mxu0 0
    %7430 = vmatpush1.bf16.msra.mxu0 0
    %7431 = vmatprep.subr.bf16.mxu0 0
    %7432 = vmatpush1.bf16.msra.mxu0 %v6042
    %7433 = vmatprep.subr.bf16.mxu0 0
    %7434 = vmatpush2.bf16.msra.mxu0 0
    %7435 = vmatprep.subr.bf16.mxu0 0
    %7436 = vmatpush2.bf16.msra.mxu0 0
    %7437 = vmatprep.subr.bf16.mxu0 0
    %7438 = vmatpush2.bf16.msra.mxu0 0
    %7439 = vmatprep.subr.bf16.mxu0 0
    %7440 = vmatpush2.bf16.msra.mxu0 0
    %7441 = vmatprep.subr.bf16.mxu0 0
    %7442 = vmatpush2.bf16.msra.mxu0 0
    %7443 = vmatprep.subr.bf16.mxu0 0
    %7444 = vmatpush2.bf16.msra.mxu0 0
    %7445 = vmatprep.subr.bf16.mxu0 0
    %7446 = vmatpush2.bf16.msra.mxu0 0
    %7447 = vmatprep.subr.bf16.mxu0 0
    %7448 = vmatpush2.bf16.msra.mxu0 0
    %7449 = vmatprep.mubr.bf16.mxu0 0
    %7450 = vmatmul.mubr.bf16.gmra.mxu0 %v5426
    %v7451 = vpop.f32.mrf.mxu0
    %v7452 = vadd.f32 %v7412, %v7451
    %v7453 = vpop.f32.mrf.mxu0
    %v7454 = vpop.f32.mrf.mxu0
    %v7455 = vpop.f32.mrf.mxu0
    %7456 = vdwg.mxu0
    %v7457 = vadd.f32 %v7452, %v6088
    %v7458 = vxor.u32 %v7457, 2147483648
    %v7459 = vmul.f32 %v7458, 1.442695
    %v7460 = vpow.pop %v7459
    %v7461 = vadd.f32 %v7460, 1.0
    %v7462 = vrcp.pop %v7461
    %v7463 = vmul.f32 1.0, %v7462
    %7464 = vmatprep.subr.bf16.mxu0 0
    %7465 = vmatpush1.bf16.msra.mxu0 0
    %7466 = vmatprep.subr.bf16.mxu0 0
    %7467 = vmatpush1.bf16.msra.mxu0 0
    %7468 = vmatprep.subr.bf16.mxu0 0
    %7469 = vmatpush1.bf16.msra.mxu0 0
    %7470 = vmatprep.subr.bf16.mxu0 0
    %7471 = vmatpush1.bf16.msra.mxu0 0
    %7472 = vmatprep.subr.bf16.mxu0 0
    %7473 = vmatpush1.bf16.msra.mxu0 0
    %7474 = vmatprep.subr.bf16.mxu0 0
    %7475 = vmatpush1.bf16.msra.mxu0 0
    %7476 = vmatprep.subr.bf16.mxu0 0
    %7477 = vmatpush1.bf16.msra.mxu0 0
    %7478 = vmatprep.subr.bf16.mxu0 0
    %7479 = vmatpush1.bf16.msra.mxu0 %v6101
    %7480 = vmatprep.subr.bf16.mxu0 0
    %7481 = vmatpush2.bf16.msra.mxu0 0
    %7482 = vmatprep.subr.bf16.mxu0 0
    %7483 = vmatpush2.bf16.msra.mxu0 0
    %7484 = vmatprep.subr.bf16.mxu0 0
    %7485 = vmatpush2.bf16.msra.mxu0 0
    %7486 = vmatprep.subr.bf16.mxu0 0
    %7487 = vmatpush2.bf16.msra.mxu0 0
    %7488 = vmatprep.subr.bf16.mxu0 0
    %7489 = vmatpush2.bf16.msra.mxu0 0
    %7490 = vmatprep.subr.bf16.mxu0 0
    %7491 = vmatpush2.bf16.msra.mxu0 0
    %7492 = vmatprep.subr.bf16.mxu0 0
    %7493 = vmatpush2.bf16.msra.mxu0 0
    %7494 = vmatprep.subr.bf16.mxu0 0
    %7495 = vmatpush2.bf16.msra.mxu0 0
    %7496 = vmatprep.mubr.bf16.mxu0 0
    %7497 = vmatmul.mubr.bf16.gmra.mxu0 %v7375
    %v7498 = vpop.f32.mrf.mxu0
    %v7499 = vadd.f32 0.0, %v7498
    %v7500 = vpop.f32.mrf.mxu0
    %v7501 = vpop.f32.mrf.mxu0
    %v7502 = vpop.f32.mrf.mxu0
    %7503 = vdwg.mxu0
    %7504 = vmatprep.subr.bf16.mxu0 0
    %7505 = vmatpush1.bf16.msra.mxu0 0
    %7506 = vmatprep.subr.bf16.mxu0 0
    %7507 = vmatpush1.bf16.msra.mxu0 0
    %7508 = vmatprep.subr.bf16.mxu0 0
    %7509 = vmatpush1.bf16.msra.mxu0 0
    %7510 = vmatprep.subr.bf16.mxu0 0
    %7511 = vmatpush1.bf16.msra.mxu0 0
    %7512 = vmatprep.subr.bf16.mxu0 0
    %7513 = vmatpush1.bf16.msra.mxu0 0
    %7514 = vmatprep.subr.bf16.mxu0 0
    %7515 = vmatpush1.bf16.msra.mxu0 0
    %7516 = vmatprep.subr.bf16.mxu0 0
    %7517 = vmatpush1.bf16.msra.mxu0 0
    %7518 = vmatprep.subr.bf16.mxu0 0
    %7519 = vmatpush1.bf16.msra.mxu0 %v6147
    %7520 = vmatprep.subr.bf16.mxu0 0
    %7521 = vmatpush2.bf16.msra.mxu0 0
    %7522 = vmatprep.subr.bf16.mxu0 0
    %7523 = vmatpush2.bf16.msra.mxu0 0
    %7524 = vmatprep.subr.bf16.mxu0 0
    %7525 = vmatpush2.bf16.msra.mxu0 0
    %7526 = vmatprep.subr.bf16.mxu0 0
    %7527 = vmatpush2.bf16.msra.mxu0 0
    %7528 = vmatprep.subr.bf16.mxu0 0
    %7529 = vmatpush2.bf16.msra.mxu0 0
    %7530 = vmatprep.subr.bf16.mxu0 0
    %7531 = vmatpush2.bf16.msra.mxu0 0
    %7532 = vmatprep.subr.bf16.mxu0 0
    %7533 = vmatpush2.bf16.msra.mxu0 0
    %7534 = vmatprep.subr.bf16.mxu0 0
    %7535 = vmatpush2.bf16.msra.mxu0 0
    %7536 = vmatprep.mubr.bf16.mxu0 0
    %7537 = vmatmul.mubr.bf16.gmra.mxu0 %v5426
    %v7538 = vpop.f32.mrf.mxu0
    %v7539 = vadd.f32 %v7499, %v7538
    %v7540 = vpop.f32.mrf.mxu0
    %v7541 = vpop.f32.mrf.mxu0
    %v7542 = vpop.f32.mrf.mxu0
    %7543 = vdwg.mxu0
    %v7544 = vadd.f32 %v7539, %v6193
    %v7545 = vxor.u32 %v7544, 2147483648
    %v7546 = vmul.f32 %v7545, 1.442695
    %v7547 = vpow.pop %v7546
    %v7548 = vadd.f32 %v7547, 1.0
    %v7549 = vrcp.pop %v7548
    %v7550 = vmul.f32 1.0, %v7549
    %7551 = vmatprep.subr.bf16.mxu0 0
    %7552 = vmatpush1.bf16.msra.mxu0 0
    %7553 = vmatprep.subr.bf16.mxu0 0
    %7554 = vmatpush1.bf16.msra.mxu0 0
    %7555 = vmatprep.subr.bf16.mxu0 0
    %7556 = vmatpush1.bf16.msra.mxu0 0
    %7557 = vmatprep.subr.bf16.mxu0 0
    %7558 = vmatpush1.bf16.msra.mxu0 0
    %7559 = vmatprep.subr.bf16.mxu0 0
    %7560 = vmatpush1.bf16.msra.mxu0 0
    %7561 = vmatprep.subr.bf16.mxu0 0
    %7562 = vmatpush1.bf16.msra.mxu0 0
    %7563 = vmatprep.subr.bf16.mxu0 0
    %7564 = vmatpush1.bf16.msra.mxu0 0
    %7565 = vmatprep.subr.bf16.mxu0 0
    %7566 = vmatpush1.bf16.msra.mxu0 %v6212
    %7567 = vmatprep.subr.bf16.mxu0 0
    %7568 = vmatpush2.bf16.msra.mxu0 0
    %7569 = vmatprep.subr.bf16.mxu0 0
    %7570 = vmatpush2.bf16.msra.mxu0 0
    %7571 = vmatprep.subr.bf16.mxu0 0
    %7572 = vmatpush2.bf16.msra.mxu0 0
    %7573 = vmatprep.subr.bf16.mxu0 0
    %7574 = vmatpush2.bf16.msra.mxu0 0
    %7575 = vmatprep.subr.bf16.mxu0 0
    %7576 = vmatpush2.bf16.msra.mxu0 0
    %7577 = vmatprep.subr.bf16.mxu0 0
    %7578 = vmatpush2.bf16.msra.mxu0 0
    %7579 = vmatprep.subr.bf16.mxu0 0
    %7580 = vmatpush2.bf16.msra.mxu0 0
    %7581 = vmatprep.subr.bf16.mxu0 0
    %7582 = vmatpush2.bf16.msra.mxu0 0
    %7583 = vmatprep.mubr.bf16.mxu0 0
    %7584 = vmatmul.mubr.bf16.gmra.mxu0 %v5426
    %v7585 = vpop.f32.mrf.mxu0
    %v7586 = vadd.f32 %v6206, %v7585
    %v7587 = vpop.f32.mrf.mxu0
    %v7588 = vpop.f32.mrf.mxu0
    %v7589 = vpop.f32.mrf.mxu0
    %7590 = vdwg.mxu0
    %7591 = vmatprep.subr.bf16.mxu0 0
    %7592 = vmatpush1.bf16.msra.mxu0 0
    %7593 = vmatprep.subr.bf16.mxu0 0
    %7594 = vmatpush1.bf16.msra.mxu0 0
    %7595 = vmatprep.subr.bf16.mxu0 0
    %7596 = vmatpush1.bf16.msra.mxu0 0
    %7597 = vmatprep.subr.bf16.mxu0 0
    %7598 = vmatpush1.bf16.msra.mxu0 0
    %7599 = vmatprep.subr.bf16.mxu0 0
    %7600 = vmatpush1.bf16.msra.mxu0 0
    %7601 = vmatprep.subr.bf16.mxu0 0
    %7602 = vmatpush1.bf16.msra.mxu0 0
    %7603 = vmatprep.subr.bf16.mxu0 0
    %7604 = vmatpush1.bf16.msra.mxu0 0
    %7605 = vmatprep.subr.bf16.mxu0 0
    %7606 = vmatpush1.bf16.msra.mxu0 %v6264
    %7607 = vmatprep.subr.bf16.mxu0 0
    %7608 = vmatpush2.bf16.msra.mxu0 0
    %7609 = vmatprep.subr.bf16.mxu0 0
    %7610 = vmatpush2.bf16.msra.mxu0 0
    %7611 = vmatprep.subr.bf16.mxu0 0
    %7612 = vmatpush2.bf16.msra.mxu0 0
    %7613 = vmatprep.subr.bf16.mxu0 0
    %7614 = vmatpush2.bf16.msra.mxu0 0
    %7615 = vmatprep.subr.bf16.mxu0 0
    %7616 = vmatpush2.bf16.msra.mxu0 0
    %7617 = vmatprep.subr.bf16.mxu0 0
    %7618 = vmatpush2.bf16.msra.mxu0 0
    %7619 = vmatprep.subr.bf16.mxu0 0
    %7620 = vmatpush2.bf16.msra.mxu0 0
    %7621 = vmatprep.subr.bf16.mxu0 0
    %7622 = vmatpush2.bf16.msra.mxu0 0
    %7623 = vmatprep.mubr.bf16.mxu0 0
    %7624 = vmatmul.mubr.bf16.gmra.mxu0 %v7375
    %v7625 = vpop.f32.mrf.mxu0
    %v7626 = vadd.f32 %v6258, %v7625
    %v7627 = vpop.f32.mrf.mxu0
    %v7628 = vpop.f32.mrf.mxu0
    %v7629 = vpop.f32.mrf.mxu0
    %7630 = vdwg.mxu0
    %v7631 = vmul.f32 %v7463, %v7626
    %v7632 = vadd.f32 %v7586, %v7631
    %v7633 = vtanh.pop %v7632
    %v7634 = vsub.f32 1.0, %v7550
    %v7635 = vmul.f32 %v7634, %v7633
    %v7636 = vmul.f32 %v7550, %v7372
    %v7637 = vadd.f32 %v7635, %v7636
    %v7638 = vpack.c.bf16 %v7637, %v7637
    %v7640 = vsel %vm3765, %v7638, 0
    %7642 = vmatprep.subr.bf16.mxu0 0
    %7643 = vmatpush1.bf16.msra.mxu0 0
    %7644 = vmatprep.subr.bf16.mxu0 0
    %7645 = vmatpush1.bf16.msra.mxu0 0
    %7646 = vmatprep.subr.bf16.mxu0 0
    %7647 = vmatpush1.bf16.msra.mxu0 0
    %7648 = vmatprep.subr.bf16.mxu0 0
    %7649 = vmatpush1.bf16.msra.mxu0 0
    %7650 = vmatprep.subr.bf16.mxu0 0
    %7651 = vmatpush1.bf16.msra.mxu0 0
    %7652 = vmatprep.subr.bf16.mxu0 0
    %7653 = vmatpush1.bf16.msra.mxu0 0
    %7654 = vmatprep.subr.bf16.mxu0 0
    %7655 = vmatpush1.bf16.msra.mxu0 0
    %7656 = vmatprep.subr.bf16.mxu0 0
    %7657 = vmatpush1.bf16.msra.mxu0 %v5993
    %7658 = vmatprep.subr.bf16.mxu0 0
    %7659 = vmatpush2.bf16.msra.mxu0 0
    %7660 = vmatprep.subr.bf16.mxu0 0
    %7661 = vmatpush2.bf16.msra.mxu0 0
    %7662 = vmatprep.subr.bf16.mxu0 0
    %7663 = vmatpush2.bf16.msra.mxu0 0
    %7664 = vmatprep.subr.bf16.mxu0 0
    %7665 = vmatpush2.bf16.msra.mxu0 0
    %7666 = vmatprep.subr.bf16.mxu0 0
    %7667 = vmatpush2.bf16.msra.mxu0 0
    %7668 = vmatprep.subr.bf16.mxu0 0
    %7669 = vmatpush2.bf16.msra.mxu0 0
    %7670 = vmatprep.subr.bf16.mxu0 0
    %7671 = vmatpush2.bf16.msra.mxu0 0
    %7672 = vmatprep.subr.bf16.mxu0 0
    %7673 = vmatpush2.bf16.msra.mxu0 0
    %7674 = vmatprep.mubr.bf16.mxu0 0
    %7675 = vmatmul.mubr.bf16.gmra.mxu0 %v7640
    %v7676 = vpop.f32.mrf.mxu0
    %v7677 = vadd.f32 0.0, %v7676
    %v7678 = vpop.f32.mrf.mxu0
    %v7679 = vpop.f32.mrf.mxu0
    %v7680 = vpop.f32.mrf.mxu0
    %7681 = vdwg.mxu0
    %7682 = vmatprep.subr.bf16.mxu0 0
    %7683 = vmatpush1.bf16.msra.mxu0 0
    %7684 = vmatprep.subr.bf16.mxu0 0
    %7685 = vmatpush1.bf16.msra.mxu0 0
    %7686 = vmatprep.subr.bf16.mxu0 0
    %7687 = vmatpush1.bf16.msra.mxu0 0
    %7688 = vmatprep.subr.bf16.mxu0 0
    %7689 = vmatpush1.bf16.msra.mxu0 0
    %7690 = vmatprep.subr.bf16.mxu0 0
    %7691 = vmatpush1.bf16.msra.mxu0 0
    %7692 = vmatprep.subr.bf16.mxu0 0
    %7693 = vmatpush1.bf16.msra.mxu0 0
    %7694 = vmatprep.subr.bf16.mxu0 0
    %7695 = vmatpush1.bf16.msra.mxu0 0
    %7696 = vmatprep.subr.bf16.mxu0 0
    %7697 = vmatpush1.bf16.msra.mxu0 %v6042
    %7698 = vmatprep.subr.bf16.mxu0 0
    %7699 = vmatpush2.bf16.msra.mxu0 0
    %7700 = vmatprep.subr.bf16.mxu0 0
    %7701 = vmatpush2.bf16.msra.mxu0 0
    %7702 = vmatprep.subr.bf16.mxu0 0
    %7703 = vmatpush2.bf16.msra.mxu0 0
    %7704 = vmatprep.subr.bf16.mxu0 0
    %7705 = vmatpush2.bf16.msra.mxu0 0
    %7706 = vmatprep.subr.bf16.mxu0 0
    %7707 = vmatpush2.bf16.msra.mxu0 0
    %7708 = vmatprep.subr.bf16.mxu0 0
    %7709 = vmatpush2.bf16.msra.mxu0 0
    %7710 = vmatprep.subr.bf16.mxu0 0
    %7711 = vmatpush2.bf16.msra.mxu0 0
    %7712 = vmatprep.subr.bf16.mxu0 0
    %7713 = vmatpush2.bf16.msra.mxu0 0
    %7714 = vmatprep.mubr.bf16.mxu0 0
    %7715 = vmatmul.mubr.bf16.gmra.mxu0 %v5695
    %v7716 = vpop.f32.mrf.mxu0
    %v7717 = vadd.f32 %v7677, %v7716
    %v7718 = vpop.f32.mrf.mxu0
    %v7719 = vpop.f32.mrf.mxu0
    %v7720 = vpop.f32.mrf.mxu0
    %7721 = vdwg.mxu0
    %v7722 = vadd.f32 %v7717, %v6088
    %v7723 = vxor.u32 %v7722, 2147483648
    %v7724 = vmul.f32 %v7723, 1.442695
    %v7725 = vpow.pop %v7724
    %v7726 = vadd.f32 %v7725, 1.0
    %v7727 = vrcp.pop %v7726
    %v7728 = vmul.f32 1.0, %v7727
    %7729 = vmatprep.subr.bf16.mxu0 0
    %7730 = vmatpush1.bf16.msra.mxu0 0
    %7731 = vmatprep.subr.bf16.mxu0 0
    %7732 = vmatpush1.bf16.msra.mxu0 0
    %7733 = vmatprep.subr.bf16.mxu0 0
    %7734 = vmatpush1.bf16.msra.mxu0 0
    %7735 = vmatprep.subr.bf16.mxu0 0
    %7736 = vmatpush1.bf16.msra.mxu0 0
    %7737 = vmatprep.subr.bf16.mxu0 0
    %7738 = vmatpush1.bf16.msra.mxu0 0
    %7739 = vmatprep.subr.bf16.mxu0 0
    %7740 = vmatpush1.bf16.msra.mxu0 0
    %7741 = vmatprep.subr.bf16.mxu0 0
    %7742 = vmatpush1.bf16.msra.mxu0 0
    %7743 = vmatprep.subr.bf16.mxu0 0
    %7744 = vmatpush1.bf16.msra.mxu0 %v6101
    %7745 = vmatprep.subr.bf16.mxu0 0
    %7746 = vmatpush2.bf16.msra.mxu0 0
    %7747 = vmatprep.subr.bf16.mxu0 0
    %7748 = vmatpush2.bf16.msra.mxu0 0
    %7749 = vmatprep.subr.bf16.mxu0 0
    %7750 = vmatpush2.bf16.msra.mxu0 0
    %7751 = vmatprep.subr.bf16.mxu0 0
    %7752 = vmatpush2.bf16.msra.mxu0 0
    %7753 = vmatprep.subr.bf16.mxu0 0
    %7754 = vmatpush2.bf16.msra.mxu0 0
    %7755 = vmatprep.subr.bf16.mxu0 0
    %7756 = vmatpush2.bf16.msra.mxu0 0
    %7757 = vmatprep.subr.bf16.mxu0 0
    %7758 = vmatpush2.bf16.msra.mxu0 0
    %7759 = vmatprep.subr.bf16.mxu0 0
    %7760 = vmatpush2.bf16.msra.mxu0 0
    %7761 = vmatprep.mubr.bf16.mxu0 0
    %7762 = vmatmul.mubr.bf16.gmra.mxu0 %v7640
    %v7763 = vpop.f32.mrf.mxu0
    %v7764 = vadd.f32 0.0, %v7763
    %v7765 = vpop.f32.mrf.mxu0
    %v7766 = vpop.f32.mrf.mxu0
    %v7767 = vpop.f32.mrf.mxu0
    %7768 = vdwg.mxu0
    %7769 = vmatprep.subr.bf16.mxu0 0
    %7770 = vmatpush1.bf16.msra.mxu0 0
    %7771 = vmatprep.subr.bf16.mxu0 0
    %7772 = vmatpush1.bf16.msra.mxu0 0
    %7773 = vmatprep.subr.bf16.mxu0 0
    %7774 = vmatpush1.bf16.msra.mxu0 0
    %7775 = vmatprep.subr.bf16.mxu0 0
    %7776 = vmatpush1.bf16.msra.mxu0 0
    %7777 = vmatprep.subr.bf16.mxu0 0
    %7778 = vmatpush1.bf16.msra.mxu0 0
    %7779 = vmatprep.subr.bf16.mxu0 0
    %7780 = vmatpush1.bf16.msra.mxu0 0
    %7781 = vmatprep.subr.bf16.mxu0 0
    %7782 = vmatpush1.bf16.msra.mxu0 0
    %7783 = vmatprep.subr.bf16.mxu0 0
    %7784 = vmatpush1.bf16.msra.mxu0 %v6147
    %7785 = vmatprep.subr.bf16.mxu0 0
    %7786 = vmatpush2.bf16.msra.mxu0 0
    %7787 = vmatprep.subr.bf16.mxu0 0
    %7788 = vmatpush2.bf16.msra.mxu0 0
    %7789 = vmatprep.subr.bf16.mxu0 0
    %7790 = vmatpush2.bf16.msra.mxu0 0
    %7791 = vmatprep.subr.bf16.mxu0 0
    %7792 = vmatpush2.bf16.msra.mxu0 0
    %7793 = vmatprep.subr.bf16.mxu0 0
    %7794 = vmatpush2.bf16.msra.mxu0 0
    %7795 = vmatprep.subr.bf16.mxu0 0
    %7796 = vmatpush2.bf16.msra.mxu0 0
    %7797 = vmatprep.subr.bf16.mxu0 0
    %7798 = vmatpush2.bf16.msra.mxu0 0
    %7799 = vmatprep.subr.bf16.mxu0 0
    %7800 = vmatpush2.bf16.msra.mxu0 0
    %7801 = vmatprep.mubr.bf16.mxu0 0
    %7802 = vmatmul.mubr.bf16.gmra.mxu0 %v5695
    %v7803 = vpop.f32.mrf.mxu0
    %v7804 = vadd.f32 %v7764, %v7803
    %v7805 = vpop.f32.mrf.mxu0
    %v7806 = vpop.f32.mrf.mxu0
    %v7807 = vpop.f32.mrf.mxu0
    %7808 = vdwg.mxu0
    %v7809 = vadd.f32 %v7804, %v6193
    %v7810 = vxor.u32 %v7809, 2147483648
    %v7811 = vmul.f32 %v7810, 1.442695
    %v7812 = vpow.pop %v7811
    %v7813 = vadd.f32 %v7812, 1.0
    %v7814 = vrcp.pop %v7813
    %v7815 = vmul.f32 1.0, %v7814
    %7816 = vmatprep.subr.bf16.mxu0 0
    %7817 = vmatpush1.bf16.msra.mxu0 0
    %7818 = vmatprep.subr.bf16.mxu0 0
    %7819 = vmatpush1.bf16.msra.mxu0 0
    %7820 = vmatprep.subr.bf16.mxu0 0
    %7821 = vmatpush1.bf16.msra.mxu0 0
    %7822 = vmatprep.subr.bf16.mxu0 0
    %7823 = vmatpush1.bf16.msra.mxu0 0
    %7824 = vmatprep.subr.bf16.mxu0 0
    %7825 = vmatpush1.bf16.msra.mxu0 0
    %7826 = vmatprep.subr.bf16.mxu0 0
    %7827 = vmatpush1.bf16.msra.mxu0 0
    %7828 = vmatprep.subr.bf16.mxu0 0
    %7829 = vmatpush1.bf16.msra.mxu0 0
    %7830 = vmatprep.subr.bf16.mxu0 0
    %7831 = vmatpush1.bf16.msra.mxu0 %v6212
    %7832 = vmatprep.subr.bf16.mxu0 0
    %7833 = vmatpush2.bf16.msra.mxu0 0
    %7834 = vmatprep.subr.bf16.mxu0 0
    %7835 = vmatpush2.bf16.msra.mxu0 0
    %7836 = vmatprep.subr.bf16.mxu0 0
    %7837 = vmatpush2.bf16.msra.mxu0 0
    %7838 = vmatprep.subr.bf16.mxu0 0
    %7839 = vmatpush2.bf16.msra.mxu0 0
    %7840 = vmatprep.subr.bf16.mxu0 0
    %7841 = vmatpush2.bf16.msra.mxu0 0
    %7842 = vmatprep.subr.bf16.mxu0 0
    %7843 = vmatpush2.bf16.msra.mxu0 0
    %7844 = vmatprep.subr.bf16.mxu0 0
    %7845 = vmatpush2.bf16.msra.mxu0 0
    %7846 = vmatprep.subr.bf16.mxu0 0
    %7847 = vmatpush2.bf16.msra.mxu0 0
    %7848 = vmatprep.mubr.bf16.mxu0 0
    %7849 = vmatmul.mubr.bf16.gmra.mxu0 %v5695
    %v7850 = vpop.f32.mrf.mxu0
    %v7851 = vadd.f32 %v6206, %v7850
    %v7852 = vpop.f32.mrf.mxu0
    %v7853 = vpop.f32.mrf.mxu0
    %v7854 = vpop.f32.mrf.mxu0
    %7855 = vdwg.mxu0
    %7856 = vmatprep.subr.bf16.mxu0 0
    %7857 = vmatpush1.bf16.msra.mxu0 0
    %7858 = vmatprep.subr.bf16.mxu0 0
    %7859 = vmatpush1.bf16.msra.mxu0 0
    %7860 = vmatprep.subr.bf16.mxu0 0
    %7861 = vmatpush1.bf16.msra.mxu0 0
    %7862 = vmatprep.subr.bf16.mxu0 0
    %7863 = vmatpush1.bf16.msra.mxu0 0
    %7864 = vmatprep.subr.bf16.mxu0 0
    %7865 = vmatpush1.bf16.msra.mxu0 0
    %7866 = vmatprep.subr.bf16.mxu0 0
    %7867 = vmatpush1.bf16.msra.mxu0 0
    %7868 = vmatprep.subr.bf16.mxu0 0
    %7869 = vmatpush1.bf16.msra.mxu0 0
    %7870 = vmatprep.subr.bf16.mxu0 0
    %7871 = vmatpush1.bf16.msra.mxu0 %v6264
    %7872 = vmatprep.subr.bf16.mxu0 0
    %7873 = vmatpush2.bf16.msra.mxu0 0
    %7874 = vmatprep.subr.bf16.mxu0 0
    %7875 = vmatpush2.bf16.msra.mxu0 0
    %7876 = vmatprep.subr.bf16.mxu0 0
    %7877 = vmatpush2.bf16.msra.mxu0 0
    %7878 = vmatprep.subr.bf16.mxu0 0
    %7879 = vmatpush2.bf16.msra.mxu0 0
    %7880 = vmatprep.subr.bf16.mxu0 0
    %7881 = vmatpush2.bf16.msra.mxu0 0
    %7882 = vmatprep.subr.bf16.mxu0 0
    %7883 = vmatpush2.bf16.msra.mxu0 0
    %7884 = vmatprep.subr.bf16.mxu0 0
    %7885 = vmatpush2.bf16.msra.mxu0 0
    %7886 = vmatprep.subr.bf16.mxu0 0
    %7887 = vmatpush2.bf16.msra.mxu0 0
    %7888 = vmatprep.mubr.bf16.mxu0 0
    %7889 = vmatmul.mubr.bf16.gmra.mxu0 %v7640
    %v7890 = vpop.f32.mrf.mxu0
    %v7891 = vadd.f32 %v6258, %v7890
    %v7892 = vpop.f32.mrf.mxu0
    %v7893 = vpop.f32.mrf.mxu0
    %v7894 = vpop.f32.mrf.mxu0
    %7895 = vdwg.mxu0
    %v7896 = vmul.f32 %v7728, %v7891
    %v7897 = vadd.f32 %v7851, %v7896
    %v7898 = vtanh.pop %v7897
    %v7899 = vsub.f32 1.0, %v7815
    %v7900 = vmul.f32 %v7899, %v7898
    %v7901 = vmul.f32 %v7815, %v7637
    %v7902 = vadd.f32 %v7900, %v7901
    %v7903 = vpack.c.bf16 %v5960, %v5960
    %v7904 = vpack.c.bf16 %v7902, %v7902
    %v7906 = vsel %vm3765, %v7904, 0
    %7908 = vmatprep.subr.bf16.mxu0 0
    %7909 = vmatpush1.bf16.msra.mxu0 0
    %7910 = vmatprep.subr.bf16.mxu0 0
    %7911 = vmatpush1.bf16.msra.mxu0 0
    %7912 = vmatprep.subr.bf16.mxu0 0
    %7913 = vmatpush1.bf16.msra.mxu0 0
    %7914 = vmatprep.subr.bf16.mxu0 0
    %7915 = vmatpush1.bf16.msra.mxu0 0
    %7916 = vmatprep.subr.bf16.mxu0 0
    %7917 = vmatpush1.bf16.msra.mxu0 0
    %7918 = vmatprep.subr.bf16.mxu0 0
    %7919 = vmatpush1.bf16.msra.mxu0 0
    %7920 = vmatprep.subr.bf16.mxu0 0
    %7921 = vmatpush1.bf16.msra.mxu0 0
    %7922 = vmatprep.subr.bf16.mxu0 0
    %7923 = vmatpush1.bf16.msra.mxu0 %v5993
    %7924 = vmatprep.subr.bf16.mxu0 0
    %7925 = vmatpush2.bf16.msra.mxu0 0
    %7926 = vmatprep.subr.bf16.mxu0 0
    %7927 = vmatpush2.bf16.msra.mxu0 0
    %7928 = vmatprep.subr.bf16.mxu0 0
    %7929 = vmatpush2.bf16.msra.mxu0 0
    %7930 = vmatprep.subr.bf16.mxu0 0
    %7931 = vmatpush2.bf16.msra.mxu0 0
    %7932 = vmatprep.subr.bf16.mxu0 0
    %7933 = vmatpush2.bf16.msra.mxu0 0
    %7934 = vmatprep.subr.bf16.mxu0 0
    %7935 = vmatpush2.bf16.msra.mxu0 0
    %7936 = vmatprep.subr.bf16.mxu0 0
    %7937 = vmatpush2.bf16.msra.mxu0 0
    %7938 = vmatprep.subr.bf16.mxu0 0
    %7939 = vmatpush2.bf16.msra.mxu0 0
    %7940 = vmatprep.mubr.bf16.mxu0 0
    %7941 = vmatmul.mubr.bf16.gmra.mxu0 %v7906
    %v7942 = vpop.f32.mrf.mxu0
    %v7943 = vadd.f32 0.0, %v7942
    %v7944 = vpop.f32.mrf.mxu0
    %v7945 = vpop.f32.mrf.mxu0
    %v7946 = vpop.f32.mrf.mxu0
    %7947 = vdwg.mxu0
    %v7949 = vsel %vm3765, %v7903, 0
    %7951 = vmatprep.subr.bf16.mxu0 0
    %7952 = vmatpush1.bf16.msra.mxu0 0
    %7953 = vmatprep.subr.bf16.mxu0 0
    %7954 = vmatpush1.bf16.msra.mxu0 0
    %7955 = vmatprep.subr.bf16.mxu0 0
    %7956 = vmatpush1.bf16.msra.mxu0 0
    %7957 = vmatprep.subr.bf16.mxu0 0
    %7958 = vmatpush1.bf16.msra.mxu0 0
    %7959 = vmatprep.subr.bf16.mxu0 0
    %7960 = vmatpush1.bf16.msra.mxu0 0
    %7961 = vmatprep.subr.bf16.mxu0 0
    %7962 = vmatpush1.bf16.msra.mxu0 0
    %7963 = vmatprep.subr.bf16.mxu0 0
    %7964 = vmatpush1.bf16.msra.mxu0 0
    %7965 = vmatprep.subr.bf16.mxu0 0
    %7966 = vmatpush1.bf16.msra.mxu0 %v6042
    %7967 = vmatprep.subr.bf16.mxu0 0
    %7968 = vmatpush2.bf16.msra.mxu0 0
    %7969 = vmatprep.subr.bf16.mxu0 0
    %7970 = vmatpush2.bf16.msra.mxu0 0
    %7971 = vmatprep.subr.bf16.mxu0 0
    %7972 = vmatpush2.bf16.msra.mxu0 0
    %7973 = vmatprep.subr.bf16.mxu0 0
    %7974 = vmatpush2.bf16.msra.mxu0 0
    %7975 = vmatprep.subr.bf16.mxu0 0
    %7976 = vmatpush2.bf16.msra.mxu0 0
    %7977 = vmatprep.subr.bf16.mxu0 0
    %7978 = vmatpush2.bf16.msra.mxu0 0
    %7979 = vmatprep.subr.bf16.mxu0 0
    %7980 = vmatpush2.bf16.msra.mxu0 0
    %7981 = vmatprep.subr.bf16.mxu0 0
    %7982 = vmatpush2.bf16.msra.mxu0 0
    %7983 = vmatprep.mubr.bf16.mxu0 0
    %7984 = vmatmul.mubr.bf16.gmra.mxu0 %v7949
    %v7985 = vpop.f32.mrf.mxu0
    %v7986 = vadd.f32 %v7943, %v7985
    %v7987 = vpop.f32.mrf.mxu0
    %v7988 = vpop.f32.mrf.mxu0
    %v7989 = vpop.f32.mrf.mxu0
    %7990 = vdwg.mxu0
    %v7991 = vadd.f32 %v7986, %v6088
    %v7992 = vxor.u32 %v7991, 2147483648
    %v7993 = vmul.f32 %v7992, 1.442695
    %v7994 = vpow.pop %v7993
    %v7995 = vadd.f32 %v7994, 1.0
    %v7996 = vrcp.pop %v7995
    %v7997 = vmul.f32 1.0, %v7996
    %7998 = vmatprep.subr.bf16.mxu0 0
    %7999 = vmatpush1.bf16.msra.mxu0 0
    %8000 = vmatprep.subr.bf16.mxu0 0
    %8001 = vmatpush1.bf16.msra.mxu0 0
    %8002 = vmatprep.subr.bf16.mxu0 0
    %8003 = vmatpush1.bf16.msra.mxu0 0
    %8004 = vmatprep.subr.bf16.mxu0 0
    %8005 = vmatpush1.bf16.msra.mxu0 0
    %8006 = vmatprep.subr.bf16.mxu0 0
    %8007 = vmatpush1.bf16.msra.mxu0 0
    %8008 = vmatprep.subr.bf16.mxu0 0
    %8009 = vmatpush1.bf16.msra.mxu0 0
    %8010 = vmatprep.subr.bf16.mxu0 0
    %8011 = vmatpush1.bf16.msra.mxu0 0
    %8012 = vmatprep.subr.bf16.mxu0 0
    %8013 = vmatpush1.bf16.msra.mxu0 %v6101
    %8014 = vmatprep.subr.bf16.mxu0 0
    %8015 = vmatpush2.bf16.msra.mxu0 0
    %8016 = vmatprep.subr.bf16.mxu0 0
    %8017 = vmatpush2.bf16.msra.mxu0 0
    %8018 = vmatprep.subr.bf16.mxu0 0
    %8019 = vmatpush2.bf16.msra.mxu0 0
    %8020 = vmatprep.subr.bf16.mxu0 0
    %8021 = vmatpush2.bf16.msra.mxu0 0
    %8022 = vmatprep.subr.bf16.mxu0 0
    %8023 = vmatpush2.bf16.msra.mxu0 0
    %8024 = vmatprep.subr.bf16.mxu0 0
    %8025 = vmatpush2.bf16.msra.mxu0 0
    %8026 = vmatprep.subr.bf16.mxu0 0
    %8027 = vmatpush2.bf16.msra.mxu0 0
    %8028 = vmatprep.subr.bf16.mxu0 0
    %8029 = vmatpush2.bf16.msra.mxu0 0
    %8030 = vmatprep.mubr.bf16.mxu0 0
    %8031 = vmatmul.mubr.bf16.gmra.mxu0 %v7906
    %v8032 = vpop.f32.mrf.mxu0
    %v8033 = vadd.f32 0.0, %v8032
    %v8034 = vpop.f32.mrf.mxu0
    %v8035 = vpop.f32.mrf.mxu0
    %v8036 = vpop.f32.mrf.mxu0
    %8037 = vdwg.mxu0
    %8038 = vmatprep.subr.bf16.mxu0 0
    %8039 = vmatpush1.bf16.msra.mxu0 0
    %8040 = vmatprep.subr.bf16.mxu0 0
    %8041 = vmatpush1.bf16.msra.mxu0 0
    %8042 = vmatprep.subr.bf16.mxu0 0
    %8043 = vmatpush1.bf16.msra.mxu0 0
    %8044 = vmatprep.subr.bf16.mxu0 0
    %8045 = vmatpush1.bf16.msra.mxu0 0
    %8046 = vmatprep.subr.bf16.mxu0 0
    %8047 = vmatpush1.bf16.msra.mxu0 0
    %8048 = vmatprep.subr.bf16.mxu0 0
    %8049 = vmatpush1.bf16.msra.mxu0 0
    %8050 = vmatprep.subr.bf16.mxu0 0
    %8051 = vmatpush1.bf16.msra.mxu0 0
    %8052 = vmatprep.subr.bf16.mxu0 0
    %8053 = vmatpush1.bf16.msra.mxu0 %v6147
    %8054 = vmatprep.subr.bf16.mxu0 0
    %8055 = vmatpush2.bf16.msra.mxu0 0
    %8056 = vmatprep.subr.bf16.mxu0 0
    %8057 = vmatpush2.bf16.msra.mxu0 0
    %8058 = vmatprep.subr.bf16.mxu0 0
    %8059 = vmatpush2.bf16.msra.mxu0 0
    %8060 = vmatprep.subr.bf16.mxu0 0
    %8061 = vmatpush2.bf16.msra.mxu0 0
    %8062 = vmatprep.subr.bf16.mxu0 0
    %8063 = vmatpush2.bf16.msra.mxu0 0
    %8064 = vmatprep.subr.bf16.mxu0 0
    %8065 = vmatpush2.bf16.msra.mxu0 0
    %8066 = vmatprep.subr.bf16.mxu0 0
    %8067 = vmatpush2.bf16.msra.mxu0 0
    %8068 = vmatprep.subr.bf16.mxu0 0
    %8069 = vmatpush2.bf16.msra.mxu0 0
    %8070 = vmatprep.mubr.bf16.mxu0 0
    %8071 = vmatmul.mubr.bf16.gmra.mxu0 %v7949
    %v8072 = vpop.f32.mrf.mxu0
    %v8073 = vadd.f32 %v8033, %v8072
    %v8074 = vpop.f32.mrf.mxu0
    %v8075 = vpop.f32.mrf.mxu0
    %v8076 = vpop.f32.mrf.mxu0
    %8077 = vdwg.mxu0
    %v8078 = vadd.f32 %v8073, %v6193
    %v8079 = vxor.u32 %v8078, 2147483648
    %v8080 = vmul.f32 %v8079, 1.442695
    %v8081 = vpow.pop %v8080
    %v8082 = vadd.f32 %v8081, 1.0
    %v8083 = vrcp.pop %v8082
    %v8084 = vmul.f32 1.0, %v8083
    %8085 = vmatprep.subr.bf16.mxu0 0
    %8086 = vmatpush1.bf16.msra.mxu0 0
    %8087 = vmatprep.subr.bf16.mxu0 0
    %8088 = vmatpush1.bf16.msra.mxu0 0
    %8089 = vmatprep.subr.bf16.mxu0 0
    %8090 = vmatpush1.bf16.msra.mxu0 0
    %8091 = vmatprep.subr.bf16.mxu0 0
    %8092 = vmatpush1.bf16.msra.mxu0 0
    %8093 = vmatprep.subr.bf16.mxu0 0
    %8094 = vmatpush1.bf16.msra.mxu0 0
    %8095 = vmatprep.subr.bf16.mxu0 0
    %8096 = vmatpush1.bf16.msra.mxu0 0
    %8097 = vmatprep.subr.bf16.mxu0 0
    %8098 = vmatpush1.bf16.msra.mxu0 0
    %8099 = vmatprep.subr.bf16.mxu0 0
    %8100 = vmatpush1.bf16.msra.mxu0 %v6212
    %8101 = vmatprep.subr.bf16.mxu0 0
    %8102 = vmatpush2.bf16.msra.mxu0 0
    %8103 = vmatprep.subr.bf16.mxu0 0
    %8104 = vmatpush2.bf16.msra.mxu0 0
    %8105 = vmatprep.subr.bf16.mxu0 0
    %8106 = vmatpush2.bf16.msra.mxu0 0
    %8107 = vmatprep.subr.bf16.mxu0 0
    %8108 = vmatpush2.bf16.msra.mxu0 0
    %8109 = vmatprep.subr.bf16.mxu0 0
    %8110 = vmatpush2.bf16.msra.mxu0 0
    %8111 = vmatprep.subr.bf16.mxu0 0
    %8112 = vmatpush2.bf16.msra.mxu0 0
    %8113 = vmatprep.subr.bf16.mxu0 0
    %8114 = vmatpush2.bf16.msra.mxu0 0
    %8115 = vmatprep.subr.bf16.mxu0 0
    %8116 = vmatpush2.bf16.msra.mxu0 0
    %8117 = vmatprep.mubr.bf16.mxu0 0
    %8118 = vmatmul.mubr.bf16.gmra.mxu0 %v7949
    %v8119 = vpop.f32.mrf.mxu0
    %v8120 = vadd.f32 %v6206, %v8119
    %v8121 = vpop.f32.mrf.mxu0
    %v8122 = vpop.f32.mrf.mxu0
    %v8123 = vpop.f32.mrf.mxu0
    %8124 = vdwg.mxu0
    %8125 = vmatprep.subr.bf16.mxu0 0
    %8126 = vmatpush1.bf16.msra.mxu0 0
    %8127 = vmatprep.subr.bf16.mxu0 0
    %8128 = vmatpush1.bf16.msra.mxu0 0
    %8129 = vmatprep.subr.bf16.mxu0 0
    %8130 = vmatpush1.bf16.msra.mxu0 0
    %8131 = vmatprep.subr.bf16.mxu0 0
    %8132 = vmatpush1.bf16.msra.mxu0 0
    %8133 = vmatprep.subr.bf16.mxu0 0
    %8134 = vmatpush1.bf16.msra.mxu0 0
    %8135 = vmatprep.subr.bf16.mxu0 0
    %8136 = vmatpush1.bf16.msra.mxu0 0
    %8137 = vmatprep.subr.bf16.mxu0 0
    %8138 = vmatpush1.bf16.msra.mxu0 0
    %8139 = vmatprep.subr.bf16.mxu0 0
    %8140 = vmatpush1.bf16.msra.mxu0 %v6264
    %8141 = vmatprep.subr.bf16.mxu0 0
    %8142 = vmatpush2.bf16.msra.mxu0 0
    %8143 = vmatprep.subr.bf16.mxu0 0
    %8144 = vmatpush2.bf16.msra.mxu0 0
    %8145 = vmatprep.subr.bf16.mxu0 0
    %8146 = vmatpush2.bf16.msra.mxu0 0
    %8147 = vmatprep.subr.bf16.mxu0 0
    %8148 = vmatpush2.bf16.msra.mxu0 0
    %8149 = vmatprep.subr.bf16.mxu0 0
    %8150 = vmatpush2.bf16.msra.mxu0 0
    %8151 = vmatprep.subr.bf16.mxu0 0
    %8152 = vmatpush2.bf16.msra.mxu0 0
    %8153 = vmatprep.subr.bf16.mxu0 0
    %8154 = vmatpush2.bf16.msra.mxu0 0
    %8155 = vmatprep.subr.bf16.mxu0 0
    %8156 = vmatpush2.bf16.msra.mxu0 0
    %8157 = vmatprep.mubr.bf16.mxu0 0
    %8158 = vmatmul.mubr.bf16.gmra.mxu0 %v7906
    %v8159 = vpop.f32.mrf.mxu0
    %v8160 = vadd.f32 %v6258, %v8159
    %v8161 = vpop.f32.mrf.mxu0
    %v8162 = vpop.f32.mrf.mxu0
    %v8163 = vpop.f32.mrf.mxu0
    %8164 = vdwg.mxu0
    %v8165 = vmul.f32 %v7997, %v8160
    %v8166 = vadd.f32 %v8120, %v8165
    %v8167 = vtanh.pop %v8166
    %v8168 = vsub.f32 1.0, %v8084
    %v8169 = vmul.f32 %v8168, %v8167
    %v8170 = vmul.f32 %v8084, %v7902
    %v8171 = vadd.f32 %v8169, %v8170
    %s8172 = scalar_lea.vmem [#allocation4], 2
    %8173 = vst.msk [vmem:[%s8172] sm:$0x3] %vm5961, %v8171
    %v8174 = vmax.f32 %v6312, 0.0
    %v8175 = vld [vmem:[%s11] sm:$0xff]
    %v8176 = vld [vmem:[%s11 + $0x8] sm:$0xff]
    %v8177 = vld [vmem:[%s11 + $0x10] sm:$0xff]
    %v8178 = vld [vmem:[%s11 + $0x18] sm:$0xff]
    %v8179 = vpack.c.bf16 %v8174, %v8174
    %v8180 = vmax.f32 %v6577, 0.0
    %s8181 = scalar_lea.vmem %s11, 32
    %v8182 = vld [vmem:[%s8181] sm:$0xff]
    %v8183 = vld [vmem:[%s8181 + $0x8] sm:$0xff]
    %v8184 = vld [vmem:[%s8181 + $0x10] sm:$0xff]
    %v8185 = vld [vmem:[%s8181 + $0x18] sm:$0xff]
    %v8186 = vpack.c.bf16 %v8180, %v8180
    %v8191 = vunpack.c.l.b16 %v8182
    %v8192 = vunpack.c.h.b16 %v8182
    %v8193 = vunpack.c.l.b16 %v8183
    %v8194 = vunpack.c.h.b16 %v8183
    %v8195 = vunpack.c.l.b16 %v8184
    %v8196 = vunpack.c.h.b16 %v8184
    %v8197 = vunpack.c.l.b16 %v8185
    %v8198 = vunpack.c.h.b16 %v8185
    %v8199 = vpack.c.b16 %v8195, %v8191
    %v8200 = vpack.c.b16 %v8196, %v8192
    %v8201 = vpack.c.b16 %v8197, %v8193
    %v8202 = vpack.c.b16 %v8198, %v8194
    %v8208 = vsel %vm3765, %v8186, 0
    %8210 = vmatprep.subr.bf16.mxu0 0
    %8211 = vmatpush1.bf16.msra.mxu0 0
    %8212 = vmatprep.subr.bf16.mxu0 0
    %8213 = vmatpush1.bf16.msra.mxu0 0
    %8214 = vmatprep.subr.bf16.mxu0 0
    %8215 = vmatpush1.bf16.msra.mxu0 0
    %8216 = vmatprep.subr.bf16.mxu0 0
    %8217 = vmatpush1.bf16.msra.mxu0 0
    %8218 = vmatprep.subr.bf16.mxu0 0
    %8219 = vmatpush1.bf16.msra.mxu0 0
    %8220 = vmatprep.subr.bf16.mxu0 0
    %8221 = vmatpush1.bf16.msra.mxu0 0
    %8222 = vmatprep.subr.bf16.mxu0 0
    %8223 = vmatpush1.bf16.msra.mxu0 0
    %8224 = vmatprep.subr.bf16.mxu0 %v8200
    %8225 = vmatpush1.bf16.msra.mxu0 %v8199
    %8226 = vmatprep.subr.bf16.mxu0 0
    %8227 = vmatpush2.bf16.msra.mxu0 0
    %8228 = vmatprep.subr.bf16.mxu0 0
    %8229 = vmatpush2.bf16.msra.mxu0 0
    %8230 = vmatprep.subr.bf16.mxu0 0
    %8231 = vmatpush2.bf16.msra.mxu0 0
    %8232 = vmatprep.subr.bf16.mxu0 0
    %8233 = vmatpush2.bf16.msra.mxu0 0
    %8234 = vmatprep.subr.bf16.mxu0 0
    %8235 = vmatpush2.bf16.msra.mxu0 0
    %8236 = vmatprep.subr.bf16.mxu0 0
    %8237 = vmatpush2.bf16.msra.mxu0 0
    %8238 = vmatprep.subr.bf16.mxu0 0
    %8239 = vmatpush2.bf16.msra.mxu0 0
    %8240 = vmatprep.subr.bf16.mxu0 0
    %8241 = vmatpush2.bf16.msra.mxu0 0
    %8242 = vmatprep.mubr.bf16.mxu0 0
    %8243 = vmatmul.mubr.bf16.gmra.mxu0 %v8208
    %v8244 = vpop.f32.mrf.mxu0
    %v8245 = vadd.f32 0.0, %v8244
    %v8246 = vpop.f32.mrf.mxu0
    %v8247 = vadd.f32 0.0, %v8246
    %v8248 = vpop.f32.mrf.mxu0
    %v8249 = vpop.f32.mrf.mxu0
    %8250 = vdwg.mxu0
    %8251 = vmatprep.subr.bf16.mxu0 0
    %8252 = vmatpush1.bf16.msra.mxu0 0
    %8253 = vmatprep.subr.bf16.mxu0 0
    %8254 = vmatpush1.bf16.msra.mxu0 0
    %8255 = vmatprep.subr.bf16.mxu0 0
    %8256 = vmatpush1.bf16.msra.mxu0 0
    %8257 = vmatprep.subr.bf16.mxu0 0
    %8258 = vmatpush1.bf16.msra.mxu0 0
    %8259 = vmatprep.subr.bf16.mxu0 0
    %8260 = vmatpush1.bf16.msra.mxu0 0
    %8261 = vmatprep.subr.bf16.mxu0 0
    %8262 = vmatpush1.bf16.msra.mxu0 0
    %8263 = vmatprep.subr.bf16.mxu0 0
    %8264 = vmatpush1.bf16.msra.mxu0 0
    %8265 = vmatprep.subr.bf16.mxu0 %v8202
    %8266 = vmatpush1.bf16.msra.mxu0 %v8201
    %8267 = vmatprep.subr.bf16.mxu0 0
    %8268 = vmatpush2.bf16.msra.mxu0 0
    %8269 = vmatprep.subr.bf16.mxu0 0
    %8270 = vmatpush2.bf16.msra.mxu0 0
    %8271 = vmatprep.subr.bf16.mxu0 0
    %8272 = vmatpush2.bf16.msra.mxu0 0
    %8273 = vmatprep.subr.bf16.mxu0 0
    %8274 = vmatpush2.bf16.msra.mxu0 0
    %8275 = vmatprep.subr.bf16.mxu0 0
    %8276 = vmatpush2.bf16.msra.mxu0 0
    %8277 = vmatprep.subr.bf16.mxu0 0
    %8278 = vmatpush2.bf16.msra.mxu0 0
    %8279 = vmatprep.subr.bf16.mxu0 0
    %8280 = vmatpush2.bf16.msra.mxu0 0
    %8281 = vmatprep.subr.bf16.mxu0 0
    %8282 = vmatpush2.bf16.msra.mxu0 0
    %8283 = vmatprep.mubr.bf16.mxu0 0
    %8284 = vmatmul.mubr.bf16.gmra.mxu0 %v8208
    %v8285 = vpop.f32.mrf.mxu0
    %v8286 = vadd.f32 0.0, %v8285
    %v8287 = vpop.f32.mrf.mxu0
    %v8288 = vadd.f32 0.0, %v8287
    %v8289 = vpop.f32.mrf.mxu0
    %v8290 = vpop.f32.mrf.mxu0
    %8291 = vdwg.mxu0
    %v8296 = vunpack.c.l.b16 %v8175
    %v8297 = vunpack.c.h.b16 %v8175
    %v8298 = vunpack.c.l.b16 %v8176
    %v8299 = vunpack.c.h.b16 %v8176
    %v8300 = vunpack.c.l.b16 %v8177
    %v8301 = vunpack.c.h.b16 %v8177
    %v8302 = vunpack.c.l.b16 %v8178
    %v8303 = vunpack.c.h.b16 %v8178
    %v8304 = vpack.c.b16 %v8300, %v8296
    %v8305 = vpack.c.b16 %v8301, %v8297
    %v8306 = vpack.c.b16 %v8302, %v8298
    %v8307 = vpack.c.b16 %v8303, %v8299
    %v8313 = vsel %vm3765, %v8179, 0
    %8315 = vmatprep.subr.bf16.mxu0 0
    %8316 = vmatpush1.bf16.msra.mxu0 0
    %8317 = vmatprep.subr.bf16.mxu0 0
    %8318 = vmatpush1.bf16.msra.mxu0 0
    %8319 = vmatprep.subr.bf16.mxu0 0
    %8320 = vmatpush1.bf16.msra.mxu0 0
    %8321 = vmatprep.subr.bf16.mxu0 0
    %8322 = vmatpush1.bf16.msra.mxu0 0
    %8323 = vmatprep.subr.bf16.mxu0 0
    %8324 = vmatpush1.bf16.msra.mxu0 0
    %8325 = vmatprep.subr.bf16.mxu0 0
    %8326 = vmatpush1.bf16.msra.mxu0 0
    %8327 = vmatprep.subr.bf16.mxu0 0
    %8328 = vmatpush1.bf16.msra.mxu0 0
    %8329 = vmatprep.subr.bf16.mxu0 %v8305
    %8330 = vmatpush1.bf16.msra.mxu0 %v8304
    %8331 = vmatprep.subr.bf16.mxu0 0
    %8332 = vmatpush2.bf16.msra.mxu0 0
    %8333 = vmatprep.subr.bf16.mxu0 0
    %8334 = vmatpush2.bf16.msra.mxu0 0
    %8335 = vmatprep.subr.bf16.mxu0 0
    %8336 = vmatpush2.bf16.msra.mxu0 0
    %8337 = vmatprep.subr.bf16.mxu0 0
    %8338 = vmatpush2.bf16.msra.mxu0 0
    %8339 = vmatprep.subr.bf16.mxu0 0
    %8340 = vmatpush2.bf16.msra.mxu0 0
    %8341 = vmatprep.subr.bf16.mxu0 0
    %8342 = vmatpush2.bf16.msra.mxu0 0
    %8343 = vmatprep.subr.bf16.mxu0 0
    %8344 = vmatpush2.bf16.msra.mxu0 0
    %8345 = vmatprep.subr.bf16.mxu0 0
    %8346 = vmatpush2.bf16.msra.mxu0 0
    %8347 = vmatprep.mubr.bf16.mxu0 0
    %8348 = vmatmul.mubr.bf16.gmra.mxu0 %v8313
    %v8349 = vpop.f32.mrf.mxu0
    %v8350 = vadd.f32 %v8245, %v8349
    %v8351 = vpop.f32.mrf.mxu0
    %v8352 = vadd.f32 %v8247, %v8351
    %v8353 = vpop.f32.mrf.mxu0
    %v8354 = vpop.f32.mrf.mxu0
    %8355 = vdwg.mxu0
    %8356 = vmatprep.subr.bf16.mxu0 0
    %8357 = vmatpush1.bf16.msra.mxu0 0
    %8358 = vmatprep.subr.bf16.mxu0 0
    %8359 = vmatpush1.bf16.msra.mxu0 0
    %8360 = vmatprep.subr.bf16.mxu0 0
    %8361 = vmatpush1.bf16.msra.mxu0 0
    %8362 = vmatprep.subr.bf16.mxu0 0
    %8363 = vmatpush1.bf16.msra.mxu0 0
    %8364 = vmatprep.subr.bf16.mxu0 0
    %8365 = vmatpush1.bf16.msra.mxu0 0
    %8366 = vmatprep.subr.bf16.mxu0 0
    %8367 = vmatpush1.bf16.msra.mxu0 0
    %8368 = vmatprep.subr.bf16.mxu0 0
    %8369 = vmatpush1.bf16.msra.mxu0 0
    %8370 = vmatprep.subr.bf16.mxu0 %v8307
    %8371 = vmatpush1.bf16.msra.mxu0 %v8306
    %8372 = vmatprep.subr.bf16.mxu0 0
    %8373 = vmatpush2.bf16.msra.mxu0 0
    %8374 = vmatprep.subr.bf16.mxu0 0
    %8375 = vmatpush2.bf16.msra.mxu0 0
    %8376 = vmatprep.subr.bf16.mxu0 0
    %8377 = vmatpush2.bf16.msra.mxu0 0
    %8378 = vmatprep.subr.bf16.mxu0 0
    %8379 = vmatpush2.bf16.msra.mxu0 0
    %8380 = vmatprep.subr.bf16.mxu0 0
    %8381 = vmatpush2.bf16.msra.mxu0 0
    %8382 = vmatprep.subr.bf16.mxu0 0
    %8383 = vmatpush2.bf16.msra.mxu0 0
    %8384 = vmatprep.subr.bf16.mxu0 0
    %8385 = vmatpush2.bf16.msra.mxu0 0
    %8386 = vmatprep.subr.bf16.mxu0 0
    %8387 = vmatpush2.bf16.msra.mxu0 0
    %8388 = vmatprep.mubr.bf16.mxu0 0
    %8389 = vmatmul.mubr.bf16.gmra.mxu0 %v8313
    %v8390 = vpop.f32.mrf.mxu0
    %v8391 = vadd.f32 %v8286, %v8390
    %v8392 = vpop.f32.mrf.mxu0
    %v8393 = vadd.f32 %v8288, %v8392
    %v8394 = vpop.f32.mrf.mxu0
    %v8395 = vpop.f32.mrf.mxu0
    %8396 = vdwg.mxu0
    %v8397 = vmax.f32 %v6842, 0.0
    %s8398 = scalar_lea.vmem %s11, 64
    %v8399 = vld [vmem:[%s8398] sm:$0xff]
    %v8400 = vld [vmem:[%s8398 + $0x8] sm:$0xff]
    %v8401 = vld [vmem:[%s8398 + $0x10] sm:$0xff]
    %v8402 = vld [vmem:[%s8398 + $0x18] sm:$0xff]
    %v8403 = vpack.c.bf16 %v8397, %v8397
    %v8408 = vunpack.c.l.b16 %v8399
    %v8409 = vunpack.c.h.b16 %v8399
    %v8410 = vunpack.c.l.b16 %v8400
    %v8411 = vunpack.c.h.b16 %v8400
    %v8412 = vunpack.c.l.b16 %v8401
    %v8413 = vunpack.c.h.b16 %v8401
    %v8414 = vunpack.c.l.b16 %v8402
    %v8415 = vunpack.c.h.b16 %v8402
    %v8416 = vpack.c.b16 %v8412, %v8408
    %v8417 = vpack.c.b16 %v8413, %v8409
    %v8418 = vpack.c.b16 %v8414, %v8410
    %v8419 = vpack.c.b16 %v8415, %v8411
    %v8425 = vsel %vm3765, %v8403, 0
    %8427 = vmatprep.subr.bf16.mxu0 0
    %8428 = vmatpush1.bf16.msra.mxu0 0
    %8429 = vmatprep.subr.bf16.mxu0 0
    %8430 = vmatpush1.bf16.msra.mxu0 0
    %8431 = vmatprep.subr.bf16.mxu0 0
    %8432 = vmatpush1.bf16.msra.mxu0 0
    %8433 = vmatprep.subr.bf16.mxu0 0
    %8434 = vmatpush1.bf16.msra.mxu0 0
    %8435 = vmatprep.subr.bf16.mxu0 0
    %8436 = vmatpush1.bf16.msra.mxu0 0
    %8437 = vmatprep.subr.bf16.mxu0 0
    %8438 = vmatpush1.bf16.msra.mxu0 0
    %8439 = vmatprep.subr.bf16.mxu0 0
    %8440 = vmatpush1.bf16.msra.mxu0 0
    %8441 = vmatprep.subr.bf16.mxu0 %v8417
    %8442 = vmatpush1.bf16.msra.mxu0 %v8416
    %8443 = vmatprep.subr.bf16.mxu0 0
    %8444 = vmatpush2.bf16.msra.mxu0 0
    %8445 = vmatprep.subr.bf16.mxu0 0
    %8446 = vmatpush2.bf16.msra.mxu0 0
    %8447 = vmatprep.subr.bf16.mxu0 0
    %8448 = vmatpush2.bf16.msra.mxu0 0
    %8449 = vmatprep.subr.bf16.mxu0 0
    %8450 = vmatpush2.bf16.msra.mxu0 0
    %8451 = vmatprep.subr.bf16.mxu0 0
    %8452 = vmatpush2.bf16.msra.mxu0 0
    %8453 = vmatprep.subr.bf16.mxu0 0
    %8454 = vmatpush2.bf16.msra.mxu0 0
    %8455 = vmatprep.subr.bf16.mxu0 0
    %8456 = vmatpush2.bf16.msra.mxu0 0
    %8457 = vmatprep.subr.bf16.mxu0 0
    %8458 = vmatpush2.bf16.msra.mxu0 0
    %8459 = vmatprep.mubr.bf16.mxu0 0
    %8460 = vmatmul.mubr.bf16.gmra.mxu0 %v8425
    %v8461 = vpop.f32.mrf.mxu0
    %v8462 = vadd.f32 0.0, %v8461
    %v8463 = vpop.f32.mrf.mxu0
    %v8464 = vadd.f32 0.0, %v8463
    %v8465 = vpop.f32.mrf.mxu0
    %v8466 = vpop.f32.mrf.mxu0
    %8467 = vdwg.mxu0
    %8468 = vmatprep.subr.bf16.mxu0 0
    %8469 = vmatpush1.bf16.msra.mxu0 0
    %8470 = vmatprep.subr.bf16.mxu0 0
    %8471 = vmatpush1.bf16.msra.mxu0 0
    %8472 = vmatprep.subr.bf16.mxu0 0
    %8473 = vmatpush1.bf16.msra.mxu0 0
    %8474 = vmatprep.subr.bf16.mxu0 0
    %8475 = vmatpush1.bf16.msra.mxu0 0
    %8476 = vmatprep.subr.bf16.mxu0 0
    %8477 = vmatpush1.bf16.msra.mxu0 0
    %8478 = vmatprep.subr.bf16.mxu0 0
    %8479 = vmatpush1.bf16.msra.mxu0 0
    %8480 = vmatprep.subr.bf16.mxu0 0
    %8481 = vmatpush1.bf16.msra.mxu0 0
    %8482 = vmatprep.subr.bf16.mxu0 %v8419
    %8483 = vmatpush1.bf16.msra.mxu0 %v8418
    %8484 = vmatprep.subr.bf16.mxu0 0
    %8485 = vmatpush2.bf16.msra.mxu0 0
    %8486 = vmatprep.subr.bf16.mxu0 0
    %8487 = vmatpush2.bf16.msra.mxu0 0
    %8488 = vmatprep.subr.bf16.mxu0 0
    %8489 = vmatpush2.bf16.msra.mxu0 0
    %8490 = vmatprep.subr.bf16.mxu0 0
    %8491 = vmatpush2.bf16.msra.mxu0 0
    %8492 = vmatprep.subr.bf16.mxu0 0
    %8493 = vmatpush2.bf16.msra.mxu0 0
    %8494 = vmatprep.subr.bf16.mxu0 0
    %8495 = vmatpush2.bf16.msra.mxu0 0
    %8496 = vmatprep.subr.bf16.mxu0 0
    %8497 = vmatpush2.bf16.msra.mxu0 0
    %8498 = vmatprep.subr.bf16.mxu0 0
    %8499 = vmatpush2.bf16.msra.mxu0 0
    %8500 = vmatprep.mubr.bf16.mxu0 0
    %8501 = vmatmul.mubr.bf16.gmra.mxu0 %v8425
    %v8502 = vpop.f32.mrf.mxu0
    %v8503 = vadd.f32 0.0, %v8502
    %v8504 = vpop.f32.mrf.mxu0
    %v8505 = vadd.f32 0.0, %v8504
    %v8506 = vpop.f32.mrf.mxu0
    %v8507 = vpop.f32.mrf.mxu0
    %8508 = vdwg.mxu0
    %v8509 = vadd.f32 %v8350, %v8462
    %v8510 = vadd.f32 %v8352, %v8464
    %v8511 = vadd.f32 %v8391, %v8503
    %v8512 = vadd.f32 %v8393, %v8505
    %v8513 = vmax.f32 %v7107, 0.0
    %s8514 = scalar_lea.vmem %s11, 96
    %v8515 = vld [vmem:[%s8514] sm:$0xff]
    %v8516 = vld [vmem:[%s8514 + $0x8] sm:$0xff]
    %v8517 = vld [vmem:[%s8514 + $0x10] sm:$0xff]
    %v8518 = vld [vmem:[%s8514 + $0x18] sm:$0xff]
    %v8519 = vpack.c.bf16 %v8513, %v8513
    %v8524 = vunpack.c.l.b16 %v8515
    %v8525 = vunpack.c.h.b16 %v8515
    %v8526 = vunpack.c.l.b16 %v8516
    %v8527 = vunpack.c.h.b16 %v8516
    %v8528 = vunpack.c.l.b16 %v8517
    %v8529 = vunpack.c.h.b16 %v8517
    %v8530 = vunpack.c.l.b16 %v8518
    %v8531 = vunpack.c.h.b16 %v8518
    %v8532 = vpack.c.b16 %v8528, %v8524
    %v8533 = vpack.c.b16 %v8529, %v8525
    %v8534 = vpack.c.b16 %v8530, %v8526
    %v8535 = vpack.c.b16 %v8531, %v8527
    %v8541 = vsel %vm3765, %v8519, 0
    %8543 = vmatprep.subr.bf16.mxu0 0
    %8544 = vmatpush1.bf16.msra.mxu0 0
    %8545 = vmatprep.subr.bf16.mxu0 0
    %8546 = vmatpush1.bf16.msra.mxu0 0
    %8547 = vmatprep.subr.bf16.mxu0 0
    %8548 = vmatpush1.bf16.msra.mxu0 0
    %8549 = vmatprep.subr.bf16.mxu0 0
    %8550 = vmatpush1.bf16.msra.mxu0 0
    %8551 = vmatprep.subr.bf16.mxu0 0
    %8552 = vmatpush1.bf16.msra.mxu0 0
    %8553 = vmatprep.subr.bf16.mxu0 0
    %8554 = vmatpush1.bf16.msra.mxu0 0
    %8555 = vmatprep.subr.bf16.mxu0 0
    %8556 = vmatpush1.bf16.msra.mxu0 0
    %8557 = vmatprep.subr.bf16.mxu0 %v8533
    %8558 = vmatpush1.bf16.msra.mxu0 %v8532
    %8559 = vmatprep.subr.bf16.mxu0 0
    %8560 = vmatpush2.bf16.msra.mxu0 0
    %8561 = vmatprep.subr.bf16.mxu0 0
    %8562 = vmatpush2.bf16.msra.mxu0 0
    %8563 = vmatprep.subr.bf16.mxu0 0
    %8564 = vmatpush2.bf16.msra.mxu0 0
    %8565 = vmatprep.subr.bf16.mxu0 0
    %8566 = vmatpush2.bf16.msra.mxu0 0
    %8567 = vmatprep.subr.bf16.mxu0 0
    %8568 = vmatpush2.bf16.msra.mxu0 0
    %8569 = vmatprep.subr.bf16.mxu0 0
    %8570 = vmatpush2.bf16.msra.mxu0 0
    %8571 = vmatprep.subr.bf16.mxu0 0
    %8572 = vmatpush2.bf16.msra.mxu0 0
    %8573 = vmatprep.subr.bf16.mxu0 0
    %8574 = vmatpush2.bf16.msra.mxu0 0
    %8575 = vmatprep.mubr.bf16.mxu0 0
    %8576 = vmatmul.mubr.bf16.gmra.mxu0 %v8541
    %v8577 = vpop.f32.mrf.mxu0
    %v8578 = vadd.f32 0.0, %v8577
    %v8579 = vpop.f32.mrf.mxu0
    %v8580 = vadd.f32 0.0, %v8579
    %v8581 = vpop.f32.mrf.mxu0
    %v8582 = vpop.f32.mrf.mxu0
    %8583 = vdwg.mxu0
    %8584 = vmatprep.subr.bf16.mxu0 0
    %8585 = vmatpush1.bf16.msra.mxu0 0
    %8586 = vmatprep.subr.bf16.mxu0 0
    %8587 = vmatpush1.bf16.msra.mxu0 0
    %8588 = vmatprep.subr.bf16.mxu0 0
    %8589 = vmatpush1.bf16.msra.mxu0 0
    %8590 = vmatprep.subr.bf16.mxu0 0
    %8591 = vmatpush1.bf16.msra.mxu0 0
    %8592 = vmatprep.subr.bf16.mxu0 0
    %8593 = vmatpush1.bf16.msra.mxu0 0
    %8594 = vmatprep.subr.bf16.mxu0 0
    %8595 = vmatpush1.bf16.msra.mxu0 0
    %8596 = vmatprep.subr.bf16.mxu0 0
    %8597 = vmatpush1.bf16.msra.mxu0 0
    %8598 = vmatprep.subr.bf16.mxu0 %v8535
    %8599 = vmatpush1.bf16.msra.mxu0 %v8534
    %8600 = vmatprep.subr.bf16.mxu0 0
    %8601 = vmatpush2.bf16.msra.mxu0 0
    %8602 = vmatprep.subr.bf16.mxu0 0
    %8603 = vmatpush2.bf16.msra.mxu0 0
    %8604 = vmatprep.subr.bf16.mxu0 0
    %8605 = vmatpush2.bf16.msra.mxu0 0
    %8606 = vmatprep.subr.bf16.mxu0 0
    %8607 = vmatpush2.bf16.msra.mxu0 0
    %8608 = vmatprep.subr.bf16.mxu0 0
    %8609 = vmatpush2.bf16.msra.mxu0 0
    %8610 = vmatprep.subr.bf16.mxu0 0
    %8611 = vmatpush2.bf16.msra.mxu0 0
    %8612 = vmatprep.subr.bf16.mxu0 0
    %8613 = vmatpush2.bf16.msra.mxu0 0
    %8614 = vmatprep.subr.bf16.mxu0 0
    %8615 = vmatpush2.bf16.msra.mxu0 0
    %8616 = vmatprep.mubr.bf16.mxu0 0
    %8617 = vmatmul.mubr.bf16.gmra.mxu0 %v8541
    %v8618 = vpop.f32.mrf.mxu0
    %v8619 = vadd.f32 0.0, %v8618
    %v8620 = vpop.f32.mrf.mxu0
    %v8621 = vadd.f32 0.0, %v8620
    %v8622 = vpop.f32.mrf.mxu0
    %v8623 = vpop.f32.mrf.mxu0
    %8624 = vdwg.mxu0
    %v8625 = vadd.f32 %v8509, %v8578
    %v8626 = vadd.f32 %v8510, %v8580
    %v8627 = vadd.f32 %v8511, %v8619
    %v8628 = vadd.f32 %v8512, %v8621
    %v8629 = vmax.f32 %v7372, 0.0
    %s8630 = scalar_lea.vmem %s11, 128
    %v8631 = vld [vmem:[%s8630] sm:$0xff]
    %v8632 = vld [vmem:[%s8630 + $0x8] sm:$0xff]
    %v8633 = vld [vmem:[%s8630 + $0x10] sm:$0xff]
    %v8634 = vld [vmem:[%s8630 + $0x18] sm:$0xff]
    %v8635 = vpack.c.bf16 %v8629, %v8629
    %v8640 = vunpack.c.l.b16 %v8631
    %v8641 = vunpack.c.h.b16 %v8631
    %v8642 = vunpack.c.l.b16 %v8632
    %v8643 = vunpack.c.h.b16 %v8632
    %v8644 = vunpack.c.l.b16 %v8633
    %v8645 = vunpack.c.h.b16 %v8633
    %v8646 = vunpack.c.l.b16 %v8634
    %v8647 = vunpack.c.h.b16 %v8634
    %v8648 = vpack.c.b16 %v8644, %v8640
    %v8649 = vpack.c.b16 %v8645, %v8641
    %v8650 = vpack.c.b16 %v8646, %v8642
    %v8651 = vpack.c.b16 %v8647, %v8643
    %v8657 = vsel %vm3765, %v8635, 0
    %8659 = vmatprep.subr.bf16.mxu0 0
    %8660 = vmatpush1.bf16.msra.mxu0 0
    %8661 = vmatprep.subr.bf16.mxu0 0
    %8662 = vmatpush1.bf16.msra.mxu0 0
    %8663 = vmatprep.subr.bf16.mxu0 0
    %8664 = vmatpush1.bf16.msra.mxu0 0
    %8665 = vmatprep.subr.bf16.mxu0 0
    %8666 = vmatpush1.bf16.msra.mxu0 0
    %8667 = vmatprep.subr.bf16.mxu0 0
    %8668 = vmatpush1.bf16.msra.mxu0 0
    %8669 = vmatprep.subr.bf16.mxu0 0
    %8670 = vmatpush1.bf16.msra.mxu0 0
    %8671 = vmatprep.subr.bf16.mxu0 0
    %8672 = vmatpush1.bf16.msra.mxu0 0
    %8673 = vmatprep.subr.bf16.mxu0 %v8649
    %8674 = vmatpush1.bf16.msra.mxu0 %v8648
    %8675 = vmatprep.subr.bf16.mxu0 0
    %8676 = vmatpush2.bf16.msra.mxu0 0
    %8677 = vmatprep.subr.bf16.mxu0 0
    %8678 = vmatpush2.bf16.msra.mxu0 0
    %8679 = vmatprep.subr.bf16.mxu0 0
    %8680 = vmatpush2.bf16.msra.mxu0 0
    %8681 = vmatprep.subr.bf16.mxu0 0
    %8682 = vmatpush2.bf16.msra.mxu0 0
    %8683 = vmatprep.subr.bf16.mxu0 0
    %8684 = vmatpush2.bf16.msra.mxu0 0
    %8685 = vmatprep.subr.bf16.mxu0 0
    %8686 = vmatpush2.bf16.msra.mxu0 0
    %8687 = vmatprep.subr.bf16.mxu0 0
    %8688 = vmatpush2.bf16.msra.mxu0 0
    %8689 = vmatprep.subr.bf16.mxu0 0
    %8690 = vmatpush2.bf16.msra.mxu0 0
    %8691 = vmatprep.mubr.bf16.mxu0 0
    %8692 = vmatmul.mubr.bf16.gmra.mxu0 %v8657
    %v8693 = vpop.f32.mrf.mxu0
    %v8694 = vadd.f32 0.0, %v8693
    %v8695 = vpop.f32.mrf.mxu0
    %v8696 = vadd.f32 0.0, %v8695
    %v8697 = vpop.f32.mrf.mxu0
    %v8698 = vpop.f32.mrf.mxu0
    %8699 = vdwg.mxu0
    %8700 = vmatprep.subr.bf16.mxu0 0
    %8701 = vmatpush1.bf16.msra.mxu0 0
    %8702 = vmatprep.subr.bf16.mxu0 0
    %8703 = vmatpush1.bf16.msra.mxu0 0
    %8704 = vmatprep.subr.bf16.mxu0 0
    %8705 = vmatpush1.bf16.msra.mxu0 0
    %8706 = vmatprep.subr.bf16.mxu0 0
    %8707 = vmatpush1.bf16.msra.mxu0 0
    %8708 = vmatprep.subr.bf16.mxu0 0
    %8709 = vmatpush1.bf16.msra.mxu0 0
    %8710 = vmatprep.subr.bf16.mxu0 0
    %8711 = vmatpush1.bf16.msra.mxu0 0
    %8712 = vmatprep.subr.bf16.mxu0 0
    %8713 = vmatpush1.bf16.msra.mxu0 0
    %8714 = vmatprep.subr.bf16.mxu0 %v8651
    %8715 = vmatpush1.bf16.msra.mxu0 %v8650
    %8716 = vmatprep.subr.bf16.mxu0 0
    %8717 = vmatpush2.bf16.msra.mxu0 0
    %8718 = vmatprep.subr.bf16.mxu0 0
    %8719 = vmatpush2.bf16.msra.mxu0 0
    %8720 = vmatprep.subr.bf16.mxu0 0
    %8721 = vmatpush2.bf16.msra.mxu0 0
    %8722 = vmatprep.subr.bf16.mxu0 0
    %8723 = vmatpush2.bf16.msra.mxu0 0
    %8724 = vmatprep.subr.bf16.mxu0 0
    %8725 = vmatpush2.bf16.msra.mxu0 0
    %8726 = vmatprep.subr.bf16.mxu0 0
    %8727 = vmatpush2.bf16.msra.mxu0 0
    %8728 = vmatprep.subr.bf16.mxu0 0
    %8729 = vmatpush2.bf16.msra.mxu0 0
    %8730 = vmatprep.subr.bf16.mxu0 0
    %8731 = vmatpush2.bf16.msra.mxu0 0
    %8732 = vmatprep.mubr.bf16.mxu0 0
    %8733 = vmatmul.mubr.bf16.gmra.mxu0 %v8657
    %v8734 = vpop.f32.mrf.mxu0
    %v8735 = vadd.f32 0.0, %v8734
    %v8736 = vpop.f32.mrf.mxu0
    %v8737 = vadd.f32 0.0, %v8736
    %v8738 = vpop.f32.mrf.mxu0
    %v8739 = vpop.f32.mrf.mxu0
    %8740 = vdwg.mxu0
    %v8741 = vadd.f32 %v8625, %v8694
    %v8742 = vadd.f32 %v8626, %v8696
    %v8743 = vadd.f32 %v8627, %v8735
    %v8744 = vadd.f32 %v8628, %v8737
    %v8745 = vmax.f32 %v7637, 0.0
    %s8746 = scalar_lea.vmem %s11, 160
    %v8747 = vld [vmem:[%s8746] sm:$0xff]
    %v8748 = vld [vmem:[%s8746 + $0x8] sm:$0xff]
    %v8749 = vld [vmem:[%s8746 + $0x10] sm:$0xff]
    %v8750 = vld [vmem:[%s8746 + $0x18] sm:$0xff]
    %v8751 = vpack.c.bf16 %v8745, %v8745
    %v8756 = vunpack.c.l.b16 %v8747
    %v8757 = vunpack.c.h.b16 %v8747
    %v8758 = vunpack.c.l.b16 %v8748
    %v8759 = vunpack.c.h.b16 %v8748
    %v8760 = vunpack.c.l.b16 %v8749
    %v8761 = vunpack.c.h.b16 %v8749
    %v8762 = vunpack.c.l.b16 %v8750
    %v8763 = vunpack.c.h.b16 %v8750
    %v8764 = vpack.c.b16 %v8760, %v8756
    %v8765 = vpack.c.b16 %v8761, %v8757
    %v8766 = vpack.c.b16 %v8762, %v8758
    %v8767 = vpack.c.b16 %v8763, %v8759
    %v8773 = vsel %vm3765, %v8751, 0
    %8775 = vmatprep.subr.bf16.mxu0 0
    %8776 = vmatpush1.bf16.msra.mxu0 0
    %8777 = vmatprep.subr.bf16.mxu0 0
    %8778 = vmatpush1.bf16.msra.mxu0 0
    %8779 = vmatprep.subr.bf16.mxu0 0
    %8780 = vmatpush1.bf16.msra.mxu0 0
    %8781 = vmatprep.subr.bf16.mxu0 0
    %8782 = vmatpush1.bf16.msra.mxu0 0
    %8783 = vmatprep.subr.bf16.mxu0 0
    %8784 = vmatpush1.bf16.msra.mxu0 0
    %8785 = vmatprep.subr.bf16.mxu0 0
    %8786 = vmatpush1.bf16.msra.mxu0 0
    %8787 = vmatprep.subr.bf16.mxu0 0
    %8788 = vmatpush1.bf16.msra.mxu0 0
    %8789 = vmatprep.subr.bf16.mxu0 %v8765
    %8790 = vmatpush1.bf16.msra.mxu0 %v8764
    %8791 = vmatprep.subr.bf16.mxu0 0
    %8792 = vmatpush2.bf16.msra.mxu0 0
    %8793 = vmatprep.subr.bf16.mxu0 0
    %8794 = vmatpush2.bf16.msra.mxu0 0
    %8795 = vmatprep.subr.bf16.mxu0 0
    %8796 = vmatpush2.bf16.msra.mxu0 0
    %8797 = vmatprep.subr.bf16.mxu0 0
    %8798 = vmatpush2.bf16.msra.mxu0 0
    %8799 = vmatprep.subr.bf16.mxu0 0
    %8800 = vmatpush2.bf16.msra.mxu0 0
    %8801 = vmatprep.subr.bf16.mxu0 0
    %8802 = vmatpush2.bf16.msra.mxu0 0
    %8803 = vmatprep.subr.bf16.mxu0 0
    %8804 = vmatpush2.bf16.msra.mxu0 0
    %8805 = vmatprep.subr.bf16.mxu0 0
    %8806 = vmatpush2.bf16.msra.mxu0 0
    %8807 = vmatprep.mubr.bf16.mxu0 0
    %8808 = vmatmul.mubr.bf16.gmra.mxu0 %v8773
    %v8809 = vpop.f32.mrf.mxu0
    %v8810 = vadd.f32 0.0, %v8809
    %v8811 = vpop.f32.mrf.mxu0
    %v8812 = vadd.f32 0.0, %v8811
    %v8813 = vpop.f32.mrf.mxu0
    %v8814 = vpop.f32.mrf.mxu0
    %8815 = vdwg.mxu0
    %8816 = vmatprep.subr.bf16.mxu0 0
    %8817 = vmatpush1.bf16.msra.mxu0 0
    %8818 = vmatprep.subr.bf16.mxu0 0
    %8819 = vmatpush1.bf16.msra.mxu0 0
    %8820 = vmatprep.subr.bf16.mxu0 0
    %8821 = vmatpush1.bf16.msra.mxu0 0
    %8822 = vmatprep.subr.bf16.mxu0 0
    %8823 = vmatpush1.bf16.msra.mxu0 0
    %8824 = vmatprep.subr.bf16.mxu0 0
    %8825 = vmatpush1.bf16.msra.mxu0 0
    %8826 = vmatprep.subr.bf16.mxu0 0
    %8827 = vmatpush1.bf16.msra.mxu0 0
    %8828 = vmatprep.subr.bf16.mxu0 0
    %8829 = vmatpush1.bf16.msra.mxu0 0
    %8830 = vmatprep.subr.bf16.mxu0 %v8767
    %8831 = vmatpush1.bf16.msra.mxu0 %v8766
    %8832 = vmatprep.subr.bf16.mxu0 0
    %8833 = vmatpush2.bf16.msra.mxu0 0
    %8834 = vmatprep.subr.bf16.mxu0 0
    %8835 = vmatpush2.bf16.msra.mxu0 0
    %8836 = vmatprep.subr.bf16.mxu0 0
    %8837 = vmatpush2.bf16.msra.mxu0 0
    %8838 = vmatprep.subr.bf16.mxu0 0
    %8839 = vmatpush2.bf16.msra.mxu0 0
    %8840 = vmatprep.subr.bf16.mxu0 0
    %8841 = vmatpush2.bf16.msra.mxu0 0
    %8842 = vmatprep.subr.bf16.mxu0 0
    %8843 = vmatpush2.bf16.msra.mxu0 0
    %8844 = vmatprep.subr.bf16.mxu0 0
    %8845 = vmatpush2.bf16.msra.mxu0 0
    %8846 = vmatprep.subr.bf16.mxu0 0
    %8847 = vmatpush2.bf16.msra.mxu0 0
    %8848 = vmatprep.mubr.bf16.mxu0 0
    %8849 = vmatmul.mubr.bf16.gmra.mxu0 %v8773
    %v8850 = vpop.f32.mrf.mxu0
    %v8851 = vadd.f32 0.0, %v8850
    %v8852 = vpop.f32.mrf.mxu0
    %v8853 = vadd.f32 0.0, %v8852
    %v8854 = vpop.f32.mrf.mxu0
    %v8855 = vpop.f32.mrf.mxu0
    %8856 = vdwg.mxu0
    %v8857 = vadd.f32 %v8741, %v8810
    %v8858 = vadd.f32 %v8742, %v8812
    %v8859 = vadd.f32 %v8743, %v8851
    %v8860 = vadd.f32 %v8744, %v8853
    %v8861 = vmax.f32 %v7902, 0.0
    %s8862 = scalar_lea.vmem %s11, 192
    %v8863 = vld [vmem:[%s8862] sm:$0xff]
    %v8864 = vld [vmem:[%s8862 + $0x8] sm:$0xff]
    %v8865 = vld [vmem:[%s8862 + $0x10] sm:$0xff]
    %v8866 = vld [vmem:[%s8862 + $0x18] sm:$0xff]
    %v8867 = vpack.c.bf16 %v8861, %v8861
    %v8872 = vunpack.c.l.b16 %v8863
    %v8873 = vunpack.c.h.b16 %v8863
    %v8874 = vunpack.c.l.b16 %v8864
    %v8875 = vunpack.c.h.b16 %v8864
    %v8876 = vunpack.c.l.b16 %v8865
    %v8877 = vunpack.c.h.b16 %v8865
    %v8878 = vunpack.c.l.b16 %v8866
    %v8879 = vunpack.c.h.b16 %v8866
    %v8880 = vpack.c.b16 %v8876, %v8872
    %v8881 = vpack.c.b16 %v8877, %v8873
    %v8882 = vpack.c.b16 %v8878, %v8874
    %v8883 = vpack.c.b16 %v8879, %v8875
    %v8889 = vsel %vm3765, %v8867, 0
    %8891 = vmatprep.subr.bf16.mxu0 0
    %8892 = vmatpush1.bf16.msra.mxu0 0
    %8893 = vmatprep.subr.bf16.mxu0 0
    %8894 = vmatpush1.bf16.msra.mxu0 0
    %8895 = vmatprep.subr.bf16.mxu0 0
    %8896 = vmatpush1.bf16.msra.mxu0 0
    %8897 = vmatprep.subr.bf16.mxu0 0
    %8898 = vmatpush1.bf16.msra.mxu0 0
    %8899 = vmatprep.subr.bf16.mxu0 0
    %8900 = vmatpush1.bf16.msra.mxu0 0
    %8901 = vmatprep.subr.bf16.mxu0 0
    %8902 = vmatpush1.bf16.msra.mxu0 0
    %8903 = vmatprep.subr.bf16.mxu0 0
    %8904 = vmatpush1.bf16.msra.mxu0 0
    %8905 = vmatprep.subr.bf16.mxu0 %v8881
    %8906 = vmatpush1.bf16.msra.mxu0 %v8880
    %8907 = vmatprep.subr.bf16.mxu0 0
    %8908 = vmatpush2.bf16.msra.mxu0 0
    %8909 = vmatprep.subr.bf16.mxu0 0
    %8910 = vmatpush2.bf16.msra.mxu0 0
    %8911 = vmatprep.subr.bf16.mxu0 0
    %8912 = vmatpush2.bf16.msra.mxu0 0
    %8913 = vmatprep.subr.bf16.mxu0 0
    %8914 = vmatpush2.bf16.msra.mxu0 0
    %8915 = vmatprep.subr.bf16.mxu0 0
    %8916 = vmatpush2.bf16.msra.mxu0 0
    %8917 = vmatprep.subr.bf16.mxu0 0
    %8918 = vmatpush2.bf16.msra.mxu0 0
    %8919 = vmatprep.subr.bf16.mxu0 0
    %8920 = vmatpush2.bf16.msra.mxu0 0
    %8921 = vmatprep.subr.bf16.mxu0 0
    %8922 = vmatpush2.bf16.msra.mxu0 0
    %8923 = vmatprep.mubr.bf16.mxu0 0
    %8924 = vmatmul.mubr.bf16.gmra.mxu0 %v8889
    %v8925 = vpop.f32.mrf.mxu0
    %v8926 = vadd.f32 0.0, %v8925
    %v8927 = vpop.f32.mrf.mxu0
    %v8928 = vadd.f32 0.0, %v8927
    %v8929 = vpop.f32.mrf.mxu0
    %v8930 = vpop.f32.mrf.mxu0
    %8931 = vdwg.mxu0
    %8932 = vmatprep.subr.bf16.mxu0 0
    %8933 = vmatpush1.bf16.msra.mxu0 0
    %8934 = vmatprep.subr.bf16.mxu0 0
    %8935 = vmatpush1.bf16.msra.mxu0 0
    %8936 = vmatprep.subr.bf16.mxu0 0
    %8937 = vmatpush1.bf16.msra.mxu0 0
    %8938 = vmatprep.subr.bf16.mxu0 0
    %8939 = vmatpush1.bf16.msra.mxu0 0
    %8940 = vmatprep.subr.bf16.mxu0 0
    %8941 = vmatpush1.bf16.msra.mxu0 0
    %8942 = vmatprep.subr.bf16.mxu0 0
    %8943 = vmatpush1.bf16.msra.mxu0 0
    %8944 = vmatprep.subr.bf16.mxu0 0
    %8945 = vmatpush1.bf16.msra.mxu0 0
    %8946 = vmatprep.subr.bf16.mxu0 %v8883
    %8947 = vmatpush1.bf16.msra.mxu0 %v8882
    %8948 = vmatprep.subr.bf16.mxu0 0
    %8949 = vmatpush2.bf16.msra.mxu0 0
    %8950 = vmatprep.subr.bf16.mxu0 0
    %8951 = vmatpush2.bf16.msra.mxu0 0
    %8952 = vmatprep.subr.bf16.mxu0 0
    %8953 = vmatpush2.bf16.msra.mxu0 0
    %8954 = vmatprep.subr.bf16.mxu0 0
    %8955 = vmatpush2.bf16.msra.mxu0 0
    %8956 = vmatprep.subr.bf16.mxu0 0
    %8957 = vmatpush2.bf16.msra.mxu0 0
    %8958 = vmatprep.subr.bf16.mxu0 0
    %8959 = vmatpush2.bf16.msra.mxu0 0
    %8960 = vmatprep.subr.bf16.mxu0 0
    %8961 = vmatpush2.bf16.msra.mxu0 0
    %8962 = vmatprep.subr.bf16.mxu0 0
    %8963 = vmatpush2.bf16.msra.mxu0 0
    %8964 = vmatprep.mubr.bf16.mxu0 0
    %8965 = vmatmul.mubr.bf16.gmra.mxu0 %v8889
    %v8966 = vpop.f32.mrf.mxu0
    %v8967 = vadd.f32 0.0, %v8966
    %v8968 = vpop.f32.mrf.mxu0
    %v8969 = vadd.f32 0.0, %v8968
    %v8970 = vpop.f32.mrf.mxu0
    %v8971 = vpop.f32.mrf.mxu0
    %8972 = vdwg.mxu0
    %v8973 = vadd.f32 %v8857, %v8926
    %v8974 = vadd.f32 %v8858, %v8928
    %v8975 = vadd.f32 %v8859, %v8967
    %v8976 = vadd.f32 %v8860, %v8969
    %v8977 = vmax.f32 %v8171, 0.0
    %s8978 = scalar_lea.vmem %s11, 224
    %v8979 = vld [vmem:[%s8978] sm:$0xff]
    %v8980 = vld [vmem:[%s8978 + $0x8] sm:$0xff]
    %v8981 = vld [vmem:[%s8978 + $0x10] sm:$0xff]
    %v8982 = vld [vmem:[%s8978 + $0x18] sm:$0xff]
    %v8983 = vpack.c.bf16 %v8977, %v8977
    %v8988 = vunpack.c.l.b16 %v8979
    %v8989 = vunpack.c.h.b16 %v8979
    %v8990 = vunpack.c.l.b16 %v8980
    %v8991 = vunpack.c.h.b16 %v8980
    %v8992 = vunpack.c.l.b16 %v8981
    %v8993 = vunpack.c.h.b16 %v8981
    %v8994 = vunpack.c.l.b16 %v8982
    %v8995 = vunpack.c.h.b16 %v8982
    %v8996 = vpack.c.b16 %v8992, %v8988
    %v8997 = vpack.c.b16 %v8993, %v8989
    %v8998 = vpack.c.b16 %v8994, %v8990
    %v8999 = vpack.c.b16 %v8995, %v8991
    %v9005 = vsel %vm3765, %v8983, 0
    %9007 = vmatprep.subr.bf16.mxu0 0
    %9008 = vmatpush1.bf16.msra.mxu0 0
    %9009 = vmatprep.subr.bf16.mxu0 0
    %9010 = vmatpush1.bf16.msra.mxu0 0
    %9011 = vmatprep.subr.bf16.mxu0 0
    %9012 = vmatpush1.bf16.msra.mxu0 0
    %9013 = vmatprep.subr.bf16.mxu0 0
    %9014 = vmatpush1.bf16.msra.mxu0 0
    %9015 = vmatprep.subr.bf16.mxu0 0
    %9016 = vmatpush1.bf16.msra.mxu0 0
    %9017 = vmatprep.subr.bf16.mxu0 0
    %9018 = vmatpush1.bf16.msra.mxu0 0
    %9019 = vmatprep.subr.bf16.mxu0 0
    %9020 = vmatpush1.bf16.msra.mxu0 0
    %9021 = vmatprep.subr.bf16.mxu0 %v8997
    %9022 = vmatpush1.bf16.msra.mxu0 %v8996
    %9023 = vmatprep.subr.bf16.mxu0 0
    %9024 = vmatpush2.bf16.msra.mxu0 0
    %9025 = vmatprep.subr.bf16.mxu0 0
    %9026 = vmatpush2.bf16.msra.mxu0 0
    %9027 = vmatprep.subr.bf16.mxu0 0
    %9028 = vmatpush2.bf16.msra.mxu0 0
    %9029 = vmatprep.subr.bf16.mxu0 0
    %9030 = vmatpush2.bf16.msra.mxu0 0
    %9031 = vmatprep.subr.bf16.mxu0 0
    %9032 = vmatpush2.bf16.msra.mxu0 0
    %9033 = vmatprep.subr.bf16.mxu0 0
    %9034 = vmatpush2.bf16.msra.mxu0 0
    %9035 = vmatprep.subr.bf16.mxu0 0
    %9036 = vmatpush2.bf16.msra.mxu0 0
    %9037 = vmatprep.subr.bf16.mxu0 0
    %9038 = vmatpush2.bf16.msra.mxu0 0
    %9039 = vmatprep.mubr.bf16.mxu0 0
    %9040 = vmatmul.mubr.bf16.gmra.mxu0 %v9005
    %v9041 = vpop.f32.mrf.mxu0
    %v9042 = vadd.f32 0.0, %v9041
    %v9043 = vpop.f32.mrf.mxu0
    %v9044 = vadd.f32 0.0, %v9043
    %v9045 = vpop.f32.mrf.mxu0
    %v9046 = vpop.f32.mrf.mxu0
    %9047 = vdwg.mxu0
    %9048 = vmatprep.subr.bf16.mxu0 0
    %9049 = vmatpush1.bf16.msra.mxu0 0
    %9050 = vmatprep.subr.bf16.mxu0 0
    %9051 = vmatpush1.bf16.msra.mxu0 0
    %9052 = vmatprep.subr.bf16.mxu0 0
    %9053 = vmatpush1.bf16.msra.mxu0 0
    %9054 = vmatprep.subr.bf16.mxu0 0
    %9055 = vmatpush1.bf16.msra.mxu0 0
    %9056 = vmatprep.subr.bf16.mxu0 0
    %9057 = vmatpush1.bf16.msra.mxu0 0
    %9058 = vmatprep.subr.bf16.mxu0 0
    %9059 = vmatpush1.bf16.msra.mxu0 0
    %9060 = vmatprep.subr.bf16.mxu0 0
    %9061 = vmatpush1.bf16.msra.mxu0 0
    %9062 = vmatprep.subr.bf16.mxu0 %v8999
    %9063 = vmatpush1.bf16.msra.mxu0 %v8998
    %9064 = vmatprep.subr.bf16.mxu0 0
    %9065 = vmatpush2.bf16.msra.mxu0 0
    %9066 = vmatprep.subr.bf16.mxu0 0
    %9067 = vmatpush2.bf16.msra.mxu0 0
    %9068 = vmatprep.subr.bf16.mxu0 0
    %9069 = vmatpush2.bf16.msra.mxu0 0
    %9070 = vmatprep.subr.bf16.mxu0 0
    %9071 = vmatpush2.bf16.msra.mxu0 0
    %9072 = vmatprep.subr.bf16.mxu0 0
    %9073 = vmatpush2.bf16.msra.mxu0 0
    %9074 = vmatprep.subr.bf16.mxu0 0
    %9075 = vmatpush2.bf16.msra.mxu0 0
    %9076 = vmatprep.subr.bf16.mxu0 0
    %9077 = vmatpush2.bf16.msra.mxu0 0
    %9078 = vmatprep.subr.bf16.mxu0 0
    %9079 = vmatpush2.bf16.msra.mxu0 0
    %9080 = vmatprep.mubr.bf16.mxu0 0
    %9081 = vmatmul.mubr.bf16.gmra.mxu0 %v9005
    %v9082 = vpop.f32.mrf.mxu0
    %v9083 = vadd.f32 0.0, %v9082
    %v9084 = vpop.f32.mrf.mxu0
    %v9085 = vadd.f32 0.0, %v9084
    %v9086 = vpop.f32.mrf.mxu0
    %v9087 = vpop.f32.mrf.mxu0
    %9088 = vdwg.mxu0
    %v9089 = vadd.f32 %v8973, %v9042
    %v9090 = vadd.f32 %v8974, %v9044
    %v9091 = vadd.f32 %v8975, %v9083
    %v9092 = vadd.f32 %v8976, %v9085
    %v9093 = vld [vmem:[%s12] sm:$0xf]
    %v9095 = vlaneseq
    %v9096 = vshrl.u32 %v9095, 7
    %v9097 = vsub.s32 0, %v9096
    %v9098 = vrot.slane %v9093, %v9097
    %v9099 = vlaneseq
    %v9100 = vshrl.u32 %v9099, 7
    %v9101 = vsub.s32 1, %v9100
    %v9102 = vrot.slane %v9093, %v9101
    %v9103 = vlaneseq
    %v9104 = vshrl.u32 %v9103, 7
    %v9105 = vsub.s32 2, %v9104
    %v9106 = vrot.slane %v9093, %v9105
    %v9107 = vlaneseq
    %v9108 = vshrl.u32 %v9107, 7
    %v9109 = vsub.s32 3, %v9108
    %v9110 = vrot.slane %v9093, %v9109
    %v9115 = vadd.f32 %v9089, %v9098
    %v9116 = vadd.f32 %v9090, %v9102
    %v9117 = vadd.f32 %v9091, %v9106
    %v9118 = vadd.f32 %v9092, %v9110
    %v9119 = vmax.f32 %v9115, 0.0
    %v9120 = vmax.f32 %v9116, 0.0
    %v9121 = vmax.f32 %v9117, 0.0
    %v9122 = vmax.f32 %v9118, 0.0
    %v9123 = vld [vmem:[%s13] sm:$0xf]
    %v9124 = vld [vmem:[%s13 + $0x4] sm:$0xf]
    %v9125 = vld [vmem:[%s13 + $0x8] sm:$0xf]
    %v9126 = vld [vmem:[%s13 + $0xc] sm:$0xf]
    %v9127 = vld [vmem:[%s13 + $0x10] sm:$0xf]
    %v9128 = vld [vmem:[%s13 + $0x14] sm:$0xf]
    %v9129 = vld [vmem:[%s13 + $0x18] sm:$0xf]
    %v9130 = vld [vmem:[%s13 + $0x1c] sm:$0xf]
    %v9131 = vld [vmem:[%s13 + $0x20] sm:$0xf]
    %v9132 = vld [vmem:[%s13 + $0x24] sm:$0xf]
    %v9133 = vld [vmem:[%s13 + $0x28] sm:$0xf]
    %v9134 = vld [vmem:[%s13 + $0x2c] sm:$0xf]
    %v9135 = vld [vmem:[%s13 + $0x30] sm:$0xf]
    %v9136 = vld [vmem:[%s13 + $0x34] sm:$0xf]
    %v9137 = vld [vmem:[%s13 + $0x38] sm:$0xf]
    %v9138 = vld [vmem:[%s13 + $0x3c] sm:$0xf]
    %v9139 = vld [vmem:[%s13 + $0x40] sm:$0xf]
    %v9140 = vld [vmem:[%s13 + $0x44] sm:$0xf]
    %v9141 = vld [vmem:[%s13 + $0x48] sm:$0xf]
    %v9142 = vld [vmem:[%s13 + $0x4c] sm:$0xf]
    %v9143 = vld [vmem:[%s13 + $0x50] sm:$0xf]
    %v9144 = vld [vmem:[%s13 + $0x54] sm:$0xf]
    %v9145 = vld [vmem:[%s13 + $0x58] sm:$0xf]
    %v9146 = vld [vmem:[%s13 + $0x5c] sm:$0xf]
    %v9147 = vld [vmem:[%s13 + $0x60] sm:$0xf]
    %v9148 = vld [vmem:[%s13 + $0x64] sm:$0xf]
    %v9149 = vld [vmem:[%s13 + $0x68] sm:$0xf]
    %v9150 = vld [vmem:[%s13 + $0x6c] sm:$0xf]
    %v9151 = vld [vmem:[%s13 + $0x70] sm:$0xf]
    %v9152 = vld [vmem:[%s13 + $0x74] sm:$0xf]
    %v9153 = vld [vmem:[%s13 + $0x78] sm:$0xf]
    %v9154 = vld [vmem:[%s13 + $0x7c] sm:$0xf]
    %v9155 = vld [vmem:[%s13 + $0x80] sm:$0xf]
    %v9156 = vld [vmem:[%s13 + $0x84] sm:$0xf]
    %v9157 = vld [vmem:[%s13 + $0x88] sm:$0xf]
    %v9158 = vld [vmem:[%s13 + $0x8c] sm:$0xf]
    %v9159 = vld [vmem:[%s13 + $0x90] sm:$0xf]
    %v9160 = vld [vmem:[%s13 + $0x94] sm:$0xf]
    %v9161 = vld [vmem:[%s13 + $0x98] sm:$0xf]
    %v9162 = vld [vmem:[%s13 + $0x9c] sm:$0xf]
    %v9163 = vld [vmem:[%s13 + $0xa0] sm:$0xf]
    %v9164 = vld [vmem:[%s13 + $0xa4] sm:$0xf]
    %v9165 = vld [vmem:[%s13 + $0xa8] sm:$0xf]
    %v9166 = vld [vmem:[%s13 + $0xac] sm:$0xf]
    %v9167 = vld [vmem:[%s13 + $0xb0] sm:$0xf]
    %v9168 = vld [vmem:[%s13 + $0xb4] sm:$0xf]
    %v9169 = vld [vmem:[%s13 + $0xb8] sm:$0xf]
    %v9170 = vld [vmem:[%s13 + $0xbc] sm:$0xf]
    %v9171 = vld [vmem:[%s13 + $0xc0] sm:$0xf]
    %v9172 = vld [vmem:[%s13 + $0xc4] sm:$0xf]
    %v9173 = vld [vmem:[%s13 + $0xc8] sm:$0xf]
    %v9174 = vld [vmem:[%s13 + $0xcc] sm:$0xf]
    %v9175 = vld [vmem:[%s13 + $0xd0] sm:$0xf]
    %v9176 = vld [vmem:[%s13 + $0xd4] sm:$0xf]
    %v9177 = vld [vmem:[%s13 + $0xd8] sm:$0xf]
    %v9178 = vld [vmem:[%s13 + $0xdc] sm:$0xf]
    %v9179 = vld [vmem:[%s13 + $0xe0] sm:$0xf]
    %v9180 = vld [vmem:[%s13 + $0xe4] sm:$0xf]
    %v9181 = vld [vmem:[%s13 + $0xe8] sm:$0xf]
    %v9182 = vld [vmem:[%s13 + $0xec] sm:$0xf]
    %v9183 = vld [vmem:[%s13 + $0xf0] sm:$0xf]
    %v9184 = vld [vmem:[%s13 + $0xf4] sm:$0xf]
    %v9185 = vld [vmem:[%s13 + $0xf8] sm:$0xf]
    %v9186 = vld [vmem:[%s13 + $0xfc] sm:$0xf]
    %v9187 = vpack.c.bf16 %v9119, %v9119
    %v9188 = vpack.c.bf16 %v9120, %v9120
    %v9189 = vpack.c.bf16 %v9121, %v9121
    %v9190 = vpack.c.bf16 %v9122, %v9122
    %v9191 = vld [vmem:[%s14] sm:$0x1]
    %v9193 = vlaneseq
    %v9194 = vshrl.u32 %v9193, 7
    %v9195 = vsub.s32 0, %v9194
    %v9196 = vrot.slane %v9191, %v9195
    %v9262 = vunpack.c.l.b16 %v9123
    %v9263 = vunpack.c.l.b16 %v9124
    %v9264 = vunpack.c.l.b16 %v9125
    %v9265 = vunpack.c.l.b16 %v9126
    %v9266 = vunpack.c.l.b16 %v9127
    %v9267 = vunpack.c.l.b16 %v9128
    %v9268 = vunpack.c.l.b16 %v9129
    %v9269 = vunpack.c.l.b16 %v9130
    %v9270 = vunpack.c.l.b16 %v9131
    %v9271 = vunpack.c.l.b16 %v9132
    %v9272 = vunpack.c.l.b16 %v9133
    %v9273 = vunpack.c.l.b16 %v9134
    %v9274 = vunpack.c.l.b16 %v9135
    %v9275 = vunpack.c.l.b16 %v9136
    %v9276 = vunpack.c.l.b16 %v9137
    %v9277 = vunpack.c.l.b16 %v9138
    %v9278 = vunpack.c.l.b16 %v9139
    %v9279 = vunpack.c.l.b16 %v9140
    %v9280 = vunpack.c.l.b16 %v9141
    %v9281 = vunpack.c.l.b16 %v9142
    %v9282 = vunpack.c.l.b16 %v9143
    %v9283 = vunpack.c.l.b16 %v9144
    %v9284 = vunpack.c.l.b16 %v9145
    %v9285 = vunpack.c.l.b16 %v9146
    %v9286 = vunpack.c.l.b16 %v9147
    %v9287 = vunpack.c.l.b16 %v9148
    %v9288 = vunpack.c.l.b16 %v9149
    %v9289 = vunpack.c.l.b16 %v9150
    %v9290 = vunpack.c.l.b16 %v9151
    %v9291 = vunpack.c.l.b16 %v9152
    %v9292 = vunpack.c.l.b16 %v9153
    %v9293 = vunpack.c.l.b16 %v9154
    %v9294 = vunpack.c.l.b16 %v9155
    %v9295 = vunpack.c.l.b16 %v9156
    %v9296 = vunpack.c.l.b16 %v9157
    %v9297 = vunpack.c.l.b16 %v9158
    %v9298 = vunpack.c.l.b16 %v9159
    %v9299 = vunpack.c.l.b16 %v9160
    %v9300 = vunpack.c.l.b16 %v9161
    %v9301 = vunpack.c.l.b16 %v9162
    %v9302 = vunpack.c.l.b16 %v9163
    %v9303 = vunpack.c.l.b16 %v9164
    %v9304 = vunpack.c.l.b16 %v9165
    %v9305 = vunpack.c.l.b16 %v9166
    %v9306 = vunpack.c.l.b16 %v9167
    %v9307 = vunpack.c.l.b16 %v9168
    %v9308 = vunpack.c.l.b16 %v9169
    %v9309 = vunpack.c.l.b16 %v9170
    %v9310 = vunpack.c.l.b16 %v9171
    %v9311 = vunpack.c.l.b16 %v9172
    %v9312 = vunpack.c.l.b16 %v9173
    %v9313 = vunpack.c.l.b16 %v9174
    %v9314 = vunpack.c.l.b16 %v9175
    %v9315 = vunpack.c.l.b16 %v9176
    %v9316 = vunpack.c.l.b16 %v9177
    %v9317 = vunpack.c.l.b16 %v9178
    %v9318 = vunpack.c.l.b16 %v9179
    %v9319 = vunpack.c.l.b16 %v9180
    %v9320 = vunpack.c.l.b16 %v9181
    %v9321 = vunpack.c.l.b16 %v9182
    %v9322 = vunpack.c.l.b16 %v9183
    %v9323 = vunpack.c.l.b16 %v9184
    %v9324 = vunpack.c.l.b16 %v9185
    %v9325 = vunpack.c.l.b16 %v9186
    %v9326 = vpack.c.b16 %v9263, %v9262
    %v9327 = vpack.c.b16 %v9265, %v9264
    %v9328 = vpack.c.b16 %v9267, %v9266
    %v9329 = vpack.c.b16 %v9269, %v9268
    %v9330 = vpack.c.b16 %v9271, %v9270
    %v9331 = vpack.c.b16 %v9273, %v9272
    %v9332 = vpack.c.b16 %v9275, %v9274
    %v9333 = vpack.c.b16 %v9277, %v9276
    %v9334 = vpack.c.b16 %v9279, %v9278
    %v9335 = vpack.c.b16 %v9281, %v9280
    %v9336 = vpack.c.b16 %v9283, %v9282
    %v9337 = vpack.c.b16 %v9285, %v9284
    %v9338 = vpack.c.b16 %v9287, %v9286
    %v9339 = vpack.c.b16 %v9289, %v9288
    %v9340 = vpack.c.b16 %v9291, %v9290
    %v9341 = vpack.c.b16 %v9293, %v9292
    %v9342 = vpack.c.b16 %v9295, %v9294
    %v9343 = vpack.c.b16 %v9297, %v9296
    %v9344 = vpack.c.b16 %v9299, %v9298
    %v9345 = vpack.c.b16 %v9301, %v9300
    %v9346 = vpack.c.b16 %v9303, %v9302
    %v9347 = vpack.c.b16 %v9305, %v9304
    %v9348 = vpack.c.b16 %v9307, %v9306
    %v9349 = vpack.c.b16 %v9309, %v9308
    %v9350 = vpack.c.b16 %v9311, %v9310
    %v9351 = vpack.c.b16 %v9313, %v9312
    %v9352 = vpack.c.b16 %v9315, %v9314
    %v9353 = vpack.c.b16 %v9317, %v9316
    %v9354 = vpack.c.b16 %v9319, %v9318
    %v9355 = vpack.c.b16 %v9321, %v9320
    %v9356 = vpack.c.b16 %v9323, %v9322
    %v9357 = vpack.c.b16 %v9325, %v9324
    %9390 = vmatprep.subr.bf16.mxu0 0
    %9391 = vmatpush1.bf16.msra.mxu0 %v9333
    %9392 = vmatprep.subr.bf16.mxu0 0
    %9393 = vmatpush1.bf16.msra.mxu0 %v9332
    %9394 = vmatprep.subr.bf16.mxu0 0
    %9395 = vmatpush1.bf16.msra.mxu0 %v9331
    %9396 = vmatprep.subr.bf16.mxu0 0
    %9397 = vmatpush1.bf16.msra.mxu0 %v9330
    %9398 = vmatprep.subr.bf16.mxu0 0
    %9399 = vmatpush1.bf16.msra.mxu0 %v9329
    %9400 = vmatprep.subr.bf16.mxu0 0
    %9401 = vmatpush1.bf16.msra.mxu0 %v9328
    %9402 = vmatprep.subr.bf16.mxu0 0
    %9403 = vmatpush1.bf16.msra.mxu0 %v9327
    %9404 = vmatprep.subr.bf16.mxu0 0
    %9405 = vmatpush1.bf16.msra.mxu0 %v9326
    %9406 = vmatprep.subr.bf16.mxu0 0
    %9407 = vmatpush2.bf16.msra.mxu0 %v9341
    %9408 = vmatprep.subr.bf16.mxu0 0
    %9409 = vmatpush2.bf16.msra.mxu0 %v9340
    %9410 = vmatprep.subr.bf16.mxu0 0
    %9411 = vmatpush2.bf16.msra.mxu0 %v9339
    %9412 = vmatprep.subr.bf16.mxu0 0
    %9413 = vmatpush2.bf16.msra.mxu0 %v9338
    %9414 = vmatprep.subr.bf16.mxu0 0
    %9415 = vmatpush2.bf16.msra.mxu0 %v9337
    %9416 = vmatprep.subr.bf16.mxu0 0
    %9417 = vmatpush2.bf16.msra.mxu0 %v9336
    %9418 = vmatprep.subr.bf16.mxu0 0
    %9419 = vmatpush2.bf16.msra.mxu0 %v9335
    %9420 = vmatprep.subr.bf16.mxu0 0
    %9421 = vmatpush2.bf16.msra.mxu0 %v9334
    %9422 = vmatprep.mubr.bf16.mxu0 %v9188
    %9423 = vmatmul.mubr.bf16.gmra.mxu0 %v9187
    %v9424 = vpop.f32.mrf.mxu0
    %v9425 = vadd.f32 %v9196, %v9424
    %v9426 = vpop.f32.mrf.mxu0
    %v9427 = vpop.f32.mrf.mxu0
    %v9428 = vpop.f32.mrf.mxu0
    %9429 = vdwg.mxu0
    %9430 = vmatprep.subr.bf16.mxu0 0
    %9431 = vmatpush1.bf16.msra.mxu0 %v9349
    %9432 = vmatprep.subr.bf16.mxu0 0
    %9433 = vmatpush1.bf16.msra.mxu0 %v9348
    %9434 = vmatprep.subr.bf16.mxu0 0
    %9435 = vmatpush1.bf16.msra.mxu0 %v9347
    %9436 = vmatprep.subr.bf16.mxu0 0
    %9437 = vmatpush1.bf16.msra.mxu0 %v9346
    %9438 = vmatprep.subr.bf16.mxu0 0
    %9439 = vmatpush1.bf16.msra.mxu0 %v9345
    %9440 = vmatprep.subr.bf16.mxu0 0
    %9441 = vmatpush1.bf16.msra.mxu0 %v9344
    %9442 = vmatprep.subr.bf16.mxu0 0
    %9443 = vmatpush1.bf16.msra.mxu0 %v9343
    %9444 = vmatprep.subr.bf16.mxu0 0
    %9445 = vmatpush1.bf16.msra.mxu0 %v9342
    %9446 = vmatprep.subr.bf16.mxu0 0
    %9447 = vmatpush2.bf16.msra.mxu0 %v9357
    %9448 = vmatprep.subr.bf16.mxu0 0
    %9449 = vmatpush2.bf16.msra.mxu0 %v9356
    %9450 = vmatprep.subr.bf16.mxu0 0
    %9451 = vmatpush2.bf16.msra.mxu0 %v9355
    %9452 = vmatprep.subr.bf16.mxu0 0
    %9453 = vmatpush2.bf16.msra.mxu0 %v9354
    %9454 = vmatprep.subr.bf16.mxu0 0
    %9455 = vmatpush2.bf16.msra.mxu0 %v9353
    %9456 = vmatprep.subr.bf16.mxu0 0
    %9457 = vmatpush2.bf16.msra.mxu0 %v9352
    %9458 = vmatprep.subr.bf16.mxu0 0
    %9459 = vmatpush2.bf16.msra.mxu0 %v9351
    %9460 = vmatprep.subr.bf16.mxu0 0
    %9461 = vmatpush2.bf16.msra.mxu0 %v9350
    %9462 = vmatprep.mubr.bf16.mxu0 %v9190
    %9463 = vmatmul.mubr.bf16.gmra.mxu0 %v9189
    %v9464 = vpop.f32.mrf.mxu0
    %v9465 = vadd.f32 %v9425, %v9464
    %v9466 = vpop.f32.mrf.mxu0
    %v9467 = vpop.f32.mrf.mxu0
    %v9468 = vpop.f32.mrf.mxu0
    %9469 = vdwg.mxu0
    %vm9470 = vcmask 25600
    %9471 = vst.msk [vmem:[#allocation2] sm:$0x3] %vm9470, %v9465
    // Predicated region
    $region62: #{drqnet_forward.1} parent=1 // pred_check
      _
    $region63: #{drqnet_forward.1} parent=1 // pred_check_branch
      %9473 = sbr.rel (0) target = $region65
    $region64: #{drqnet_forward.1} parent=1 // pred_region
      %s9475 = ssub.s32 32, 32
      %9476 = vsyncadd [#allocation3], %s9475
      %s9478 = sshll.u32 [#allocation2], 4
      %s9479 = int_to_ptr.vmem [resolvable:$true] %s9478
      %9481 = dma.vmem_to_hbm [thread:$0]  %s9479, 32, %s15, [#allocation3]
    $region65: #{drqnet_forward.1} parent=1 // pred_fallthru
      _
    // Predicated region
    $region66: #{drqnet_forward.1} parent=1 // pred_check
      _
    $region67: #{drqnet_forward.1} parent=1 // pred_check_branch
      %9483 = sbr.rel (0) target = $region69
    $region68: #{drqnet_forward.1} parent=1 // pred_region
      %s9485 = ssub.s32 64, 64
      %9486 = vsyncadd [#allocation5], %s9485
      %s9487 = sshll.u32 [#allocation4], 4
      %s9488 = int_to_ptr.vmem [resolvable:$true] %s9487
      %9493 = dma.vmem_to_hbm [thread:$0]  %s9488, 64, %s16, [#allocation5], 32, 32, 2
    $region69: #{drqnet_forward.1} parent=1 // pred_fallthru
      _
    // Predicated region
    $region70: #{drqnet_forward.1} parent=1 // pred_check
      _
    $region71: #{drqnet_forward.1} parent=1 // pred_check_branch
      %9495 = sbr.rel (0) target = $region73
    $region72: #{drqnet_forward.1} parent=1 // pred_region
      %9496 = dma.done [#allocation3], 32
    $region73: #{drqnet_forward.1} parent=1 // pred_fallthru
      _
    // Predicated region
    $region74: #{drqnet_forward.1} parent=1 // pred_check
      _
    $region75: #{drqnet_forward.1} parent=1 // pred_check_branch
      %9498 = sbr.rel (0) target = $region77
    $region76: #{drqnet_forward.1} parent=1 // pred_region
      %9499 = dma.done [#allocation5], 64
    $region77: #{drqnet_forward.1} parent=1 // pred_fallthru
      _
    %9500 = vsyncpa [#allocation3], 1
    %9501 = vsyncpa [#allocation5], 1

</llo_original>
